<compile_context>
chip_gen: v7x
topology: tpu7x:2x2x1
jax: 0.10.0
libtpu: 0.0.40
codegen_flags: <defaults>
</compile_context>

<pallas_src>
import numpy as np

import jax
import jax.numpy as jnp
from jax.experimental import pallas as pl
from jax.experimental.pallas import tpu as pltpu


def _round_up(a, m):
    return ((a + m - 1) // m) * m


# ----------------------------------------------------------------------------
# Fused kernel: conv1+tanh -> conv2+tanh -> conv3+tanh -> conv4 -> FC
# Activation scratch layout: rows = (pixel_row_major * Cin + channel),
# lanes = batch tile.  So a contiguous horizontal 3-pixel window of one input
# row is a contiguous (3*Cin, TB) sublane slice -> one MXU dot, no copies.
# ----------------------------------------------------------------------------
def _digit_fused_kernel(x_ref, w1_ref, b1_ref, w2_ref, b2_ref, w3_ref, b3_ref,
                        w4_ref, b4_ref, wf_ref, bf_ref, out_ref,
                        a1_ref, a2_ref, a3_ref):
    f32 = jnp.float32
    tb = out_ref.shape[-1]          # batch tile (lane dim)
    cdt = a1_ref.dtype              # compute / scratch dtype (bf16 by default)

    def conv_pixel(in_ref, h_in, w_in, c_in, stride, w_ref, bias_b, ho, wo):
        """One 3x3 conv output pixel as <=3 accumulating MXU dots.

        Vertical padding  -> skip the row dot entirely.
        Horizontal padding-> narrower contiguous slice + matching weight
                             column sub-block (no zero tiles, no concat).
        """
        acc = bias_b                                            # (Cout, TB) f32
        for ki in range(3):
            hi = stride * ho + ki - 1
            if hi < 0 or hi >= h_in:
                continue
            wi0 = stride * wo - 1
            kj0 = 0
            if wi0 < 0:                                         # left edge
                kj0, wi0 = -wi0, 0
            width = min(stride * wo + 1, w_in - 1) - wi0 + 1    # 2 or 3
            row0 = (hi * w_in + wi0) * c_in
            xs = in_ref[row0: row0 + width * c_in, :]           # (width*Cin, TB)
            wk = w_ref[ki]                                      # (Cout, 3*Cin)
            if kj0 != 0 or width != 3:
                wk = wk[:, kj0 * c_in:(kj0 + width) * c_in]     # (Cout, width*Cin)
            acc = acc + jnp.dot(wk, xs, preferred_element_type=f32)
        return acc

    # ---- conv1: 1 -> 16, 3x3, s=1, p=1, + tanh, as ONE dense MXU GEMM.
    #      w1_ref is the pre-built (64*16, 64) dense map from the 64 input
    #      pixels to all (pixel, channel) outputs; evaluated in 64-row chunks
    #      (4 output pixels each) to keep intermediates vreg-friendly.
    xt = jnp.transpose(x_ref[...]).astype(cdt)                  # (64, TB)
    for r in range(16):
        r0, r1 = r * 64, (r + 1) * 64
        pre = jnp.dot(w1_ref[r0:r1, :], xt, preferred_element_type=f32)
        a1_ref[r0:r1, :] = jnp.tanh(pre + b1_ref[r0:r1, :]).astype(cdt)

    # ---- conv2: 16 -> 32, stride 2 (8x8 -> 4x4), + tanh
    b2b = jnp.broadcast_to(b2_ref[...], (32, tb))               # hoisted
    for ho in range(4):
        for wo in range(4):
            v = conv_pixel(a1_ref, 8, 8, 16, 2, w2_ref, b2b, ho, wo)
            p = ho * 4 + wo
            a2_ref[p * 32:(p + 1) * 32, :] = jnp.tanh(v).astype(cdt)

    # ---- conv3: 32 -> 16, stride 2 (4x4 -> 2x2), + tanh
    b3b = jnp.broadcast_to(b3_ref[...], (16, tb))
    for ho in range(2):
        for wo in range(2):
            v = conv_pixel(a2_ref, 4, 4, 32, 2, w3_ref, b3b, ho, wo)
            p = ho * 2 + wo
            a3_ref[p * 16:(p + 1) * 16, :] = jnp.tanh(v).astype(cdt)

    # ---- conv4: 16 -> 8, stride 1 (2x2 -> 2x2), no activation, fused with FC
    #      logits += Wf_block[p] @ conv4_pixel(p)   (no flatten / concat)
    b4b = jnp.broadcast_to(b4_ref[...], (8, tb))
    logits = jnp.broadcast_to(bf_ref[...], (10, tb))
    for ho in range(2):
        for wo in range(2):
            feat = conv_pixel(a3_ref, 2, 2, 16, 1, w4_ref, b4b, ho, wo)
            logits = logits + jnp.dot(wf_ref[ho * 2 + wo], feat.astype(cdt),
                                      preferred_element_type=f32)
    out_ref[...] = logits                                       # (10, TB) f32


# ----------------------------------------------------------------------------
# Wrapper: one-time weight re-layout + the single pallas_call
# ----------------------------------------------------------------------------
def _conv1_dense(w1):
    """(16,1,3,3) conv1 weights -> dense (64*16, 64); rows = (pixel, channel)."""
    rows, cols, ch, tap = [], [], [], []
    for ho in range(8):
        for wo in range(8):
            for ki in range(3):
                hi = ho + ki - 1
                if not 0 <= hi < 8:
                    continue
                for kj in range(3):
                    wi = wo + kj - 1
                    if not 0 <= wi < 8:
                        continue
                    for c in range(16):
                        rows.append((ho * 8 + wo) * 16 + c)
                        cols.append(hi * 8 + wi)
                        ch.append(c)
                        tap.append(ki * 3 + kj)
    vals = w1.reshape(16, 9)[np.asarray(ch), np.asarray(tap)]
    dense = jnp.zeros((64 * 16, 64), jnp.float32)
    return dense.at[np.asarray(rows), np.asarray(cols)].set(vals)


def digit_forward(params, x, *, batch_tile=512, compute_dtype=jnp.bfloat16):
    """Forward pass of `Digit`: x (B, 1, 8, 8) f32 -> logits (B, 10) f32."""
    w1, b1 = params["conv1"]     # (16,1,3,3), (16,)
    w2, b2 = params["conv2"]     # (32,16,3,3), (32,)
    w3, b3 = params["conv3"]     # (16,32,3,3), (16,)
    w4, b4 = params["conv4"]     # (8,16,3,3),  (8,)
    wf, bf = params["fc"]        # (10,32), (10,)

    B = x.shape[0]
    assert x.shape[1:] == (1, 8, 8), x.shape

    # --- batch tile selection: big lane-dense tiles, but keep >=2 grid steps
    #     when the batch allows so v7x megacore can split the parallel axis.
    b128 = _round_up(B, 128)
    bt = min(_round_up(batch_tile, 128), b128)
    if b128 // bt < 2 and b128 >= 256:
        bt = _round_up(b128 // 2, 128)
    bp = _round_up(B, bt)

    # --- input: free (B, 64) view of NCHW; pad the batch only when needed.
    xk = x.reshape(B, 64).astype(jnp.float32)
    if bp != B:
        xk = jnp.pad(xk, ((0, bp - B), (0, 0)))

    cdt = compute_dtype
    # Pre-flattened weights; tap/column order is (ki major, kj, ci) so the
    # kernel's contiguous (width*Cin) activation slices line up 1:1.
    w1k = _conv1_dense(w1).astype(cdt)                                   # (1024, 64)
    b1k = jnp.tile(b1.reshape(1, 16), (64, 1)).reshape(1024, 1).astype(jnp.float32)
    w2k = jnp.transpose(w2, (2, 0, 3, 1)).reshape(3, 32, 48).astype(cdt)  # (ki, O, kj*I)
    w3k = jnp.transpose(w3, (2, 0, 3, 1)).reshape(3, 16, 96).astype(cdt)
    w4k = jnp.transpose(w4, (2, 0, 3, 1)).reshape(3, 8, 48).astype(cdt)
    # FC columns: PyTorch flatten order is (c, h, w) -> split per pixel p=h*2+w.
    wfk = jnp.transpose(wf.reshape(10, 8, 4), (2, 0, 1)).astype(cdt)      # (4, 10, 8)
    b2k = b2.reshape(32, 1).astype(jnp.float32)
    b3k = b3.reshape(16, 1).astype(jnp.float32)
    b4k = b4.reshape(8, 1).astype(jnp.float32)
    bfk = bf.reshape(10, 1).astype(jnp.float32)

    def full(shape):
        return pl.BlockSpec(shape, lambda i: (0,) * len(shape))

    out = pl.pallas_call(
        _digit_fused_kernel,
        out_shape=jax.ShapeDtypeStruct((10, bp), jnp.float32),
        grid_spec=pltpu.PrefetchScalarGridSpec(
            num_scalar_prefetch=0,
            grid=(bp // bt,),
            in_specs=[
                pl.BlockSpec((bt, 64), lambda i: (i, 0)),   # input (batch-tiled)
                full((1024, 64)), full((1024, 1)),          # conv1 (dense) + bias
                full((3, 32, 48)), full((32, 1)),           # conv2
                full((3, 16, 96)), full((16, 1)),           # conv3
                full((3, 8, 48)), full((8, 1)),             # conv4
                full((4, 10, 8)), full((10, 1)),            # fc
            ],
            out_specs=pl.BlockSpec((10, bt), lambda i: (0, i)),
            scratch_shapes=[
                pltpu.VMEM((64 * 16, bt), cdt),             # a1: 8x8 x 16ch
                pltpu.VMEM((16 * 32, bt), cdt),             # a2: 4x4 x 32ch
                pltpu.VMEM((4 * 16, bt), cdt),              # a3: 2x2 x 16ch
            ],
        ),
        compiler_params=pltpu.CompilerParams(
            dimension_semantics=("parallel",),
        ),
    )(xk, w1k, b1k, w2k, b2k, w3k, b3k, w4k, b4k, wfk, bfk)

    return jnp.transpose(out)[:B]                            # (B, 10)


# ----------------------------------------------------------------------------
# Parameter init (deterministic, PyTorch-style uniform(-1/sqrt(fan_in), ...))
# ----------------------------------------------------------------------------
def _init_conv(key, c_out, c_in, kh, kw):
    k1, k2 = jax.random.split(key)
    bound = 1.0 / jnp.sqrt(c_in * kh * kw)
    w = jax.random.uniform(k1, (c_out, c_in, kh, kw), jnp.float32, -bound, bound)
    b = jax.random.uniform(k2, (c_out,), jnp.float32, -bound, bound)
    return w, b


def _init_linear(key, in_f, out_f):
    k1, k2 = jax.random.split(key)
    bound = 1.0 / jnp.sqrt(in_f)
    w = jax.random.uniform(k1, (out_f, in_f), jnp.float32, -bound, bound)
    b = jax.random.uniform(k2, (out_f,), jnp.float32, -bound, bound)
    return w, b


def init_digit_params(seed=0):
    keys = jax.random.split(jax.random.PRNGKey(seed), 5)
    return {
        "conv1": _init_conv(keys[0], 16, 1, 3, 3),
        "conv2": _init_conv(keys[1], 32, 16, 3, 3),
        "conv3": _init_conv(keys[2], 16, 32, 3, 3),
        "conv4": _init_conv(keys[3], 8, 16, 3, 3),
        "fc":    _init_linear(keys[4], 32, 10),
    }


# ----------------------------------------------------------------------------
# Pure-JAX reference (PyTorch semantics) for a correctness sanity check
# ----------------------------------------------------------------------------
def digit_forward_reference(params, x):
    def conv(y, w, b, stride):
        out = jax.lax.conv_general_dilated(
            y, w, window_strides=(stride, stride),
            padding=((1, 1), (1, 1)),
            dimension_numbers=("NCHW", "OIHW", "NCHW"),
            precision=jax.lax.Precision.HIGHEST)
        return out + b.reshape(1, -1, 1, 1)

    w1, b1 = params["conv1"]
    w2, b2 = params["conv2"]
    w3, b3 = params["conv3"]
    w4, b4 = params["conv4"]
    wf, bf = params["fc"]
    out = jnp.tanh(conv(x, w1, b1, 1))
    out = jnp.tanh(conv(out, w2, b2, 2))
    out = jnp.tanh(conv(out, w3, b3, 2))
    out = conv(out, w4, b4, 1)
    flat = out.reshape(out.shape[0], -1)
    return jnp.dot(flat, wf.T, precision=jax.lax.Precision.HIGHEST) + bf


if __name__ == "__main__":
    params = init_digit_params(seed=0)
    # Small input consistent with Linear(32, 10): batch=2, 1 channel, 8x8.
    x = jax.random.normal(jax.random.PRNGKey(0), (2, 1, 8, 8), jnp.float32)

    fwd = jax.jit(digit_forward)
    logits = fwd(params, x)
    jax.block_until_ready(logits)
    assert logits.shape == (2, 10) and logits.dtype == jnp.float32

    ref = jax.jit(digit_forward_reference)(params, x)
    err = float(jnp.max(jnp.abs(logits - ref)))
    assert err < 5e-2, f"kernel/reference mismatch: max abs err = {err}"

    # Exercise the multi-tile / padded-batch path (grid >= 2, batch padding).
    xb = jax.random.normal(jax.random.PRNGKey(1), (384, 1, 8, 8), jnp.float32)
    logits_b = fwd(params, xb)
    jax.block_until_ready(logits_b)
    ref_b = jax.jit(digit_forward_reference)(params, xb)
    err_b = float(jnp.max(jnp.abs(logits_b - ref_b)))
    assert err_b < 5e-2, f"large-batch mismatch: max abs err = {err_b}"

    print("KERNEL_OK")
</pallas_src>

<mosaic_0001>
module attributes {stable_mosaic.version = 11 : i64} {
  func.func @_digit_fused_kernel(%arg0: i32, %arg1: memref<128x64xf32, #tpu.memory_space<vmem>>, %arg2: memref<1024x64xbf16, #tpu.memory_space<vmem>>, %arg3: memref<1024x1xf32, #tpu.memory_space<vmem>>, %arg4: memref<3x32x48xbf16, #tpu.memory_space<vmem>>, %arg5: memref<32x1xf32, #tpu.memory_space<vmem>>, %arg6: memref<3x16x96xbf16, #tpu.memory_space<vmem>>, %arg7: memref<16x1xf32, #tpu.memory_space<vmem>>, %arg8: memref<3x8x48xbf16, #tpu.memory_space<vmem>>, %arg9: memref<8x1xf32, #tpu.memory_space<vmem>>, %arg10: memref<4x10x8xbf16, #tpu.memory_space<vmem>>, %arg11: memref<10x1xf32, #tpu.memory_space<vmem>>, %arg12: memref<10x128xf32, #tpu.memory_space<vmem>>, %arg13: memref<1024x128xbf16, #tpu.memory_space<vmem>>, %arg14: memref<512x128xbf16, #tpu.memory_space<vmem>>, %arg15: memref<64x128xbf16, #tpu.memory_space<vmem>>) attributes {dimension_semantics = [#tpu.dimension_semantics<parallel>], iteration_bounds = array<i64: 1>, scalar_prefetch = 0 : i64, scratch_operands = 3 : i64, tpu.core_type = #tpu.core_type<tc>, window_params = [{transform_indices = @transform_0, window_bounds = array<i64: 128, 64>}, {pipeline_mode = #tpu.pipeline_mode<synchronous>, transform_indices = @transform_1, window_bounds = array<i64: 1024, 64>}, {pipeline_mode = #tpu.pipeline_mode<synchronous>, transform_indices = @transform_2, window_bounds = array<i64: 1024, 1>}, {pipeline_mode = #tpu.pipeline_mode<synchronous>, transform_indices = @transform_3, window_bounds = array<i64: 3, 32, 48>}, {pipeline_mode = #tpu.pipeline_mode<synchronous>, transform_indices = @transform_4, window_bounds = array<i64: 32, 1>}, {pipeline_mode = #tpu.pipeline_mode<synchronous>, transform_indices = @transform_5, window_bounds = array<i64: 3, 16, 96>}, {pipeline_mode = #tpu.pipeline_mode<synchronous>, transform_indices = @transform_6, window_bounds = array<i64: 16, 1>}, {pipeline_mode = #tpu.pipeline_mode<synchronous>, transform_indices = @transform_7, window_bounds = array<i64: 3, 8, 48>}, {pipeline_mode = #tpu.pipeline_mode<synchronous>, transform_indices = @transform_8, window_bounds = array<i64: 8, 1>}, {pipeline_mode = #tpu.pipeline_mode<synchronous>, transform_indices = @transform_9, window_bounds = array<i64: 4, 10, 8>}, {pipeline_mode = #tpu.pipeline_mode<synchronous>, transform_indices = @transform_10, window_bounds = array<i64: 10, 1>}, {transform_indices = @transform_11, window_bounds = array<i64: 10, 128>}]} {
    %c0 = arith.constant 0 : index
    %c0_0 = arith.constant 0 : index
    %0 = vector.load %arg1[%c0, %c0_0] : memref<128x64xf32, #tpu.memory_space<vmem>>, vector<128x64xf32>
    %1 = tpu.transpose %0, [1, 0] : vector<128x64xf32> -> vector<64x128xf32>
    %2 = arith.truncf %1 : vector<64x128xf32> to vector<64x128xbf16>
    %c0_1 = arith.constant 0 : index
    %c0_2 = arith.constant 0 : index
    %3 = vector.load %arg2[%c0_1, %c0_2] : memref<1024x64xbf16, #tpu.memory_space<vmem>>, vector<64x64xbf16>
    %cst = arith.constant dense<0.000000e+00> : vector<64x128xf32>
    %4 = tpu.matmul %3, %2, %cst {dimension_numbers = #tpu.dot_dimension_numbers<[1], [0], [0], [1], [0, 0, 1, 1], [], []>} : vector<64x64xbf16>, vector<64x128xbf16>, vector<64x128xf32> -> vector<64x128xf32>
    %c0_3 = arith.constant 0 : index
    %c0_4 = arith.constant 0 : index
    %5 = vector.load %arg3[%c0_3, %c0_4] : memref<1024x1xf32, #tpu.memory_space<vmem>>, vector<64x1xf32>
    %6 = vector.broadcast %5 : vector<64x1xf32> to vector<64x128xf32>
    %7 = arith.addf %4, %6 : vector<64x128xf32>
    %8 = math.tanh %7 : vector<64x128xf32>
    %9 = arith.truncf %8 : vector<64x128xf32> to vector<64x128xbf16>
    %c0_5 = arith.constant 0 : index
    %c0_6 = arith.constant 0 : index
    %10 = vector.load %arg13[%c0_5, %c0_6] : memref<1024x128xbf16, #tpu.memory_space<vmem>>, vector<64x128xbf16>
    tpu.vector_store %arg13[%c0_5, %c0_6], %9 {strides = array<i32>} : memref<1024x128xbf16, #tpu.memory_space<vmem>>, vector<64x128xbf16>,
    %c64 = arith.constant 64 : index
    %c0_7 = arith.constant 0 : index
    %11 = vector.load %arg2[%c64, %c0_7] : memref<1024x64xbf16, #tpu.memory_space<vmem>>, vector<64x64xbf16>
    %cst_8 = arith.constant dense<0.000000e+00> : vector<64x128xf32>
    %12 = tpu.matmul %11, %2, %cst_8 {dimension_numbers = #tpu.dot_dimension_numbers<[1], [0], [0], [1], [0, 0, 1, 1], [], []>} : vector<64x64xbf16>, vector<64x128xbf16>, vector<64x128xf32> -> vector<64x128xf32>
    %c64_9 = arith.constant 64 : index
    %c0_10 = arith.constant 0 : index
    %13 = vector.load %arg3[%c64_9, %c0_10] : memref<1024x1xf32, #tpu.memory_space<vmem>>, vector<64x1xf32>
    %14 = vector.broadcast %13 : vector<64x1xf32> to vector<64x128xf32>
    %15 = arith.addf %12, %14 : vector<64x128xf32>
    %16 = math.tanh %15 : vector<64x128xf32>
    %17 = arith.truncf %16 : vector<64x128xf32> to vector<64x128xbf16>
    %c64_11 = arith.constant 64 : index
    %c0_12 = arith.constant 0 : index
    %18 = vector.load %arg13[%c64_11, %c0_12] : memref<1024x128xbf16, #tpu.memory_space<vmem>>, vector<64x128xbf16>
    tpu.vector_store %arg13[%c64_11, %c0_12], %17 {strides = array<i32>} : memref<1024x128xbf16, #tpu.memory_space<vmem>>, vector<64x128xbf16>,
    %c128 = arith.constant 128 : index
    %c0_13 = arith.constant 0 : index
    %19 = vector.load %arg2[%c128, %c0_13] : memref<1024x64xbf16, #tpu.memory_space<vmem>>, vector<64x64xbf16>
    %cst_14 = arith.constant dense<0.000000e+00> : vector<64x128xf32>
    %20 = tpu.matmul %19, %2, %cst_14 {dimension_numbers = #tpu.dot_dimension_numbers<[1], [0], [0], [1], [0, 0, 1, 1], [], []>} : vector<64x64xbf16>, vector<64x128xbf16>, vector<64x128xf32> -> vector<64x128xf32>
    %c128_15 = arith.constant 128 : index
    %c0_16 = arith.constant 0 : index
    %21 = vector.load %arg3[%c128_15, %c0_16] : memref<1024x1xf32, #tpu.memory_space<vmem>>, vector<64x1xf32>
    %22 = vector.broadcast %21 : vector<64x1xf32> to vector<64x128xf32>
    %23 = arith.addf %20, %22 : vector<64x128xf32>
    %24 = math.tanh %23 : vector<64x128xf32>
    %25 = arith.truncf %24 : vector<64x128xf32> to vector<64x128xbf16>
    %c128_17 = arith.constant 128 : index
    %c0_18 = arith.constant 0 : index
    %26 = vector.load %arg13[%c128_17, %c0_18] : memref<1024x128xbf16, #tpu.memory_space<vmem>>, vector<64x128xbf16>
    tpu.vector_store %arg13[%c128_17, %c0_18], %25 {strides = array<i32>} : memref<1024x128xbf16, #tpu.memory_space<vmem>>, vector<64x128xbf16>,
    %c192 = arith.constant 192 : index
    %c0_19 = arith.constant 0 : index
    %27 = vector.load %arg2[%c192, %c0_19] : memref<1024x64xbf16, #tpu.memory_space<vmem>>, vector<64x64xbf16>
    %cst_20 = arith.constant dense<0.000000e+00> : vector<64x128xf32>
    %28 = tpu.matmul %27, %2, %cst_20 {dimension_numbers = #tpu.dot_dimension_numbers<[1], [0], [0], [1], [0, 0, 1, 1], [], []>} : vector<64x64xbf16>, vector<64x128xbf16>, vector<64x128xf32> -> vector<64x128xf32>
    %c192_21 = arith.constant 192 : index
    %c0_22 = arith.constant 0 : index
    %29 = vector.load %arg3[%c192_21, %c0_22] : memref<1024x1xf32, #tpu.memory_space<vmem>>, vector<64x1xf32>
    %30 = vector.broadcast %29 : vector<64x1xf32> to vector<64x128xf32>
    %31 = arith.addf %28, %30 : vector<64x128xf32>
    %32 = math.tanh %31 : vector<64x128xf32>
    %33 = arith.truncf %32 : vector<64x128xf32> to vector<64x128xbf16>
    %c192_23 = arith.constant 192 : index
    %c0_24 = arith.constant 0 : index
    %34 = vector.load %arg13[%c192_23, %c0_24] : memref<1024x128xbf16, #tpu.memory_space<vmem>>, vector<64x128xbf16>
    tpu.vector_store %arg13[%c192_23, %c0_24], %33 {strides = array<i32>} : memref<1024x128xbf16, #tpu.memory_space<vmem>>, vector<64x128xbf16>,
    %c256 = arith.constant 256 : index
    %c0_25 = arith.constant 0 : index
    %35 = vector.load %arg2[%c256, %c0_25] : memref<1024x64xbf16, #tpu.memory_space<vmem>>, vector<64x64xbf16>
    %cst_26 = arith.constant dense<0.000000e+00> : vector<64x128xf32>
    %36 = tpu.matmul %35, %2, %cst_26 {dimension_numbers = #tpu.dot_dimension_numbers<[1], [0], [0], [1], [0, 0, 1, 1], [], []>} : vector<64x64xbf16>, vector<64x128xbf16>, vector<64x128xf32> -> vector<64x128xf32>
    %c256_27 = arith.constant 256 : index
    %c0_28 = arith.constant 0 : index
    %37 = vector.load %arg3[%c256_27, %c0_28] : memref<1024x1xf32, #tpu.memory_space<vmem>>, vector<64x1xf32>
    %38 = vector.broadcast %37 : vector<64x1xf32> to vector<64x128xf32>
    %39 = arith.addf %36, %38 : vector<64x128xf32>
    %40 = math.tanh %39 : vector<64x128xf32>
    %41 = arith.truncf %40 : vector<64x128xf32> to vector<64x128xbf16>
    %c256_29 = arith.constant 256 : index
    %c0_30 = arith.constant 0 : index
    %42 = vector.load %arg13[%c256_29, %c0_30] : memref<1024x128xbf16, #tpu.memory_space<vmem>>, vector<64x128xbf16>
    tpu.vector_store %arg13[%c256_29, %c0_30], %41 {strides = array<i32>} : memref<1024x128xbf16, #tpu.memory_space<vmem>>, vector<64x128xbf16>,
    %c320 = arith.constant 320 : index
    %c0_31 = arith.constant 0 : index
    %43 = vector.load %arg2[%c320, %c0_31] : memref<1024x64xbf16, #tpu.memory_space<vmem>>, vector<64x64xbf16>
    %cst_32 = arith.constant dense<0.000000e+00> : vector<64x128xf32>
    %44 = tpu.matmul %43, %2, %cst_32 {dimension_numbers = #tpu.dot_dimension_numbers<[1], [0], [0], [1], [0, 0, 1, 1], [], []>} : vector<64x64xbf16>, vector<64x128xbf16>, vector<64x128xf32> -> vector<64x128xf32>
    %c320_33 = arith.constant 320 : index
    %c0_34 = arith.constant 0 : index
    %45 = vector.load %arg3[%c320_33, %c0_34] : memref<1024x1xf32, #tpu.memory_space<vmem>>, vector<64x1xf32>
    %46 = vector.broadcast %45 : vector<64x1xf32> to vector<64x128xf32>
    %47 = arith.addf %44, %46 : vector<64x128xf32>
    %48 = math.tanh %47 : vector<64x128xf32>
    %49 = arith.truncf %48 : vector<64x128xf32> to vector<64x128xbf16>
    %c320_35 = arith.constant 320 : index
    %c0_36 = arith.constant 0 : index
    %50 = vector.load %arg13[%c320_35, %c0_36] : memref<1024x128xbf16, #tpu.memory_space<vmem>>, vector<64x128xbf16>
    tpu.vector_store %arg13[%c320_35, %c0_36], %49 {strides = array<i32>} : memref<1024x128xbf16, #tpu.memory_space<vmem>>, vector<64x128xbf16>,
    %c384 = arith.constant 384 : index
    %c0_37 = arith.constant 0 : index
    %51 = vector.load %arg2[%c384, %c0_37] : memref<1024x64xbf16, #tpu.memory_space<vmem>>, vector<64x64xbf16>
    %cst_38 = arith.constant dense<0.000000e+00> : vector<64x128xf32>
    %52 = tpu.matmul %51, %2, %cst_38 {dimension_numbers = #tpu.dot_dimension_numbers<[1], [0], [0], [1], [0, 0, 1, 1], [], []>} : vector<64x64xbf16>, vector<64x128xbf16>, vector<64x128xf32> -> vector<64x128xf32>
    %c384_39 = arith.constant 384 : index
    %c0_40 = arith.constant 0 : index
    %53 = vector.load %arg3[%c384_39, %c0_40] : memref<1024x1xf32, #tpu.memory_space<vmem>>, vector<64x1xf32>
    %54 = vector.broadcast %53 : vector<64x1xf32> to vector<64x128xf32>
    %55 = arith.addf %52, %54 : vector<64x128xf32>
    %56 = math.tanh %55 : vector<64x128xf32>
    %57 = arith.truncf %56 : vector<64x128xf32> to vector<64x128xbf16>
    %c384_41 = arith.constant 384 : index
    %c0_42 = arith.constant 0 : index
    %58 = vector.load %arg13[%c384_41, %c0_42] : memref<1024x128xbf16, #tpu.memory_space<vmem>>, vector<64x128xbf16>
    tpu.vector_store %arg13[%c384_41, %c0_42], %57 {strides = array<i32>} : memref<1024x128xbf16, #tpu.memory_space<vmem>>, vector<64x128xbf16>,
    %c448 = arith.constant 448 : index
    %c0_43 = arith.constant 0 : index
    %59 = vector.load %arg2[%c448, %c0_43] : memref<1024x64xbf16, #tpu.memory_space<vmem>>, vector<64x64xbf16>
    %cst_44 = arith.constant dense<0.000000e+00> : vector<64x128xf32>
    %60 = tpu.matmul %59, %2, %cst_44 {dimension_numbers = #tpu.dot_dimension_numbers<[1], [0], [0], [1], [0, 0, 1, 1], [], []>} : vector<64x64xbf16>, vector<64x128xbf16>, vector<64x128xf32> -> vector<64x128xf32>
    %c448_45 = arith.constant 448 : index
    %c0_46 = arith.constant 0 : index
    %61 = vector.load %arg3[%c448_45, %c0_46] : memref<1024x1xf32, #tpu.memory_space<vmem>>, vector<64x1xf32>
    %62 = vector.broadcast %61 : vector<64x1xf32> to vector<64x128xf32>
    %63 = arith.addf %60, %62 : vector<64x128xf32>
    %64 = math.tanh %63 : vector<64x128xf32>
    %65 = arith.truncf %64 : vector<64x128xf32> to vector<64x128xbf16>
    %c448_47 = arith.constant 448 : index
    %c0_48 = arith.constant 0 : index
    %66 = vector.load %arg13[%c448_47, %c0_48] : memref<1024x128xbf16, #tpu.memory_space<vmem>>, vector<64x128xbf16>
    tpu.vector_store %arg13[%c448_47, %c0_48], %65 {strides = array<i32>} : memref<1024x128xbf16, #tpu.memory_space<vmem>>, vector<64x128xbf16>,
    %c512 = arith.constant 512 : index
    %c0_49 = arith.constant 0 : index
    %67 = vector.load %arg2[%c512, %c0_49] : memref<1024x64xbf16, #tpu.memory_space<vmem>>, vector<64x64xbf16>
    %cst_50 = arith.constant dense<0.000000e+00> : vector<64x128xf32>
    %68 = tpu.matmul %67, %2, %cst_50 {dimension_numbers = #tpu.dot_dimension_numbers<[1], [0], [0], [1], [0, 0, 1, 1], [], []>} : vector<64x64xbf16>, vector<64x128xbf16>, vector<64x128xf32> -> vector<64x128xf32>
    %c512_51 = arith.constant 512 : index
    %c0_52 = arith.constant 0 : index
    %69 = vector.load %arg3[%c512_51, %c0_52] : memref<1024x1xf32, #tpu.memory_space<vmem>>, vector<64x1xf32>
    %70 = vector.broadcast %69 : vector<64x1xf32> to vector<64x128xf32>
    %71 = arith.addf %68, %70 : vector<64x128xf32>
    %72 = math.tanh %71 : vector<64x128xf32>
    %73 = arith.truncf %72 : vector<64x128xf32> to vector<64x128xbf16>
    %c512_53 = arith.constant 512 : index
    %c0_54 = arith.constant 0 : index
    %74 = vector.load %arg13[%c512_53, %c0_54] : memref<1024x128xbf16, #tpu.memory_space<vmem>>, vector<64x128xbf16>
    tpu.vector_store %arg13[%c512_53, %c0_54], %73 {strides = array<i32>} : memref<1024x128xbf16, #tpu.memory_space<vmem>>, vector<64x128xbf16>,
    %c576 = arith.constant 576 : index
    %c0_55 = arith.constant 0 : index
    %75 = vector.load %arg2[%c576, %c0_55] : memref<1024x64xbf16, #tpu.memory_space<vmem>>, vector<64x64xbf16>
    %cst_56 = arith.constant dense<0.000000e+00> : vector<64x128xf32>
    %76 = tpu.matmul %75, %2, %cst_56 {dimension_numbers = #tpu.dot_dimension_numbers<[1], [0], [0], [1], [0, 0, 1, 1], [], []>} : vector<64x64xbf16>, vector<64x128xbf16>, vector<64x128xf32> -> vector<64x128xf32>
    %c576_57 = arith.constant 576 : index
    %c0_58 = arith.constant 0 : index
    %77 = vector.load %arg3[%c576_57, %c0_58] : memref<1024x1xf32, #tpu.memory_space<vmem>>, vector<64x1xf32>
    %78 = vector.broadcast %77 : vector<64x1xf32> to vector<64x128xf32>
    %79 = arith.addf %76, %78 : vector<64x128xf32>
    %80 = math.tanh %79 : vector<64x128xf32>
    %81 = arith.truncf %80 : vector<64x128xf32> to vector<64x128xbf16>
    %c576_59 = arith.constant 576 : index
    %c0_60 = arith.constant 0 : index
    %82 = vector.load %arg13[%c576_59, %c0_60] : memref<1024x128xbf16, #tpu.memory_space<vmem>>, vector<64x128xbf16>
    tpu.vector_store %arg13[%c576_59, %c0_60], %81 {strides = array<i32>} : memref<1024x128xbf16, #tpu.memory_space<vmem>>, vector<64x128xbf16>,
    %c640 = arith.constant 640 : index
    %c0_61 = arith.constant 0 : index
    %83 = vector.load %arg2[%c640, %c0_61] : memref<1024x64xbf16, #tpu.memory_space<vmem>>, vector<64x64xbf16>
    %cst_62 = arith.constant dense<0.000000e+00> : vector<64x128xf32>
    %84 = tpu.matmul %83, %2, %cst_62 {dimension_numbers = #tpu.dot_dimension_numbers<[1], [0], [0], [1], [0, 0, 1, 1], [], []>} : vector<64x64xbf16>, vector<64x128xbf16>, vector<64x128xf32> -> vector<64x128xf32>
    %c640_63 = arith.constant 640 : index
    %c0_64 = arith.constant 0 : index
    %85 = vector.load %arg3[%c640_63, %c0_64] : memref<1024x1xf32, #tpu.memory_space<vmem>>, vector<64x1xf32>
    %86 = vector.broadcast %85 : vector<64x1xf32> to vector<64x128xf32>
    %87 = arith.addf %84, %86 : vector<64x128xf32>
    %88 = math.tanh %87 : vector<64x128xf32>
    %89 = arith.truncf %88 : vector<64x128xf32> to vector<64x128xbf16>
    %c640_65 = arith.constant 640 : index
    %c0_66 = arith.constant 0 : index
    %90 = vector.load %arg13[%c640_65, %c0_66] : memref<1024x128xbf16, #tpu.memory_space<vmem>>, vector<64x128xbf16>
    tpu.vector_store %arg13[%c640_65, %c0_66], %89 {strides = array<i32>} : memref<1024x128xbf16, #tpu.memory_space<vmem>>, vector<64x128xbf16>,
    %c704 = arith.constant 704 : index
    %c0_67 = arith.constant 0 : index
    %91 = vector.load %arg2[%c704, %c0_67] : memref<1024x64xbf16, #tpu.memory_space<vmem>>, vector<64x64xbf16>
    %cst_68 = arith.constant dense<0.000000e+00> : vector<64x128xf32>
    %92 = tpu.matmul %91, %2, %cst_68 {dimension_numbers = #tpu.dot_dimension_numbers<[1], [0], [0], [1], [0, 0, 1, 1], [], []>} : vector<64x64xbf16>, vector<64x128xbf16>, vector<64x128xf32> -> vector<64x128xf32>
    %c704_69 = arith.constant 704 : index
    %c0_70 = arith.constant 0 : index
    %93 = vector.load %arg3[%c704_69, %c0_70] : memref<1024x1xf32, #tpu.memory_space<vmem>>, vector<64x1xf32>
    %94 = vector.broadcast %93 : vector<64x1xf32> to vector<64x128xf32>
    %95 = arith.addf %92, %94 : vector<64x128xf32>
    %96 = math.tanh %95 : vector<64x128xf32>
    %97 = arith.truncf %96 : vector<64x128xf32> to vector<64x128xbf16>
    %c704_71 = arith.constant 704 : index
    %c0_72 = arith.constant 0 : index
    %98 = vector.load %arg13[%c704_71, %c0_72] : memref<1024x128xbf16, #tpu.memory_space<vmem>>, vector<64x128xbf16>
    tpu.vector_store %arg13[%c704_71, %c0_72], %97 {strides = array<i32>} : memref<1024x128xbf16, #tpu.memory_space<vmem>>, vector<64x128xbf16>,
    %c768 = arith.constant 768 : index
    %c0_73 = arith.constant 0 : index
    %99 = vector.load %arg2[%c768, %c0_73] : memref<1024x64xbf16, #tpu.memory_space<vmem>>, vector<64x64xbf16>
    %cst_74 = arith.constant dense<0.000000e+00> : vector<64x128xf32>
    %100 = tpu.matmul %99, %2, %cst_74 {dimension_numbers = #tpu.dot_dimension_numbers<[1], [0], [0], [1], [0, 0, 1, 1], [], []>} : vector<64x64xbf16>, vector<64x128xbf16>, vector<64x128xf32> -> vector<64x128xf32>
    %c768_75 = arith.constant 768 : index
    %c0_76 = arith.constant 0 : index
    %101 = vector.load %arg3[%c768_75, %c0_76] : memref<1024x1xf32, #tpu.memory_space<vmem>>, vector<64x1xf32>
    %102 = vector.broadcast %101 : vector<64x1xf32> to vector<64x128xf32>
    %103 = arith.addf %100, %102 : vector<64x128xf32>
    %104 = math.tanh %103 : vector<64x128xf32>
    %105 = arith.truncf %104 : vector<64x128xf32> to vector<64x128xbf16>
    %c768_77 = arith.constant 768 : index
    %c0_78 = arith.constant 0 : index
    %106 = vector.load %arg13[%c768_77, %c0_78] : memref<1024x128xbf16, #tpu.memory_space<vmem>>, vector<64x128xbf16>
    tpu.vector_store %arg13[%c768_77, %c0_78], %105 {strides = array<i32>} : memref<1024x128xbf16, #tpu.memory_space<vmem>>, vector<64x128xbf16>,
    %c832 = arith.constant 832 : index
    %c0_79 = arith.constant 0 : index
    %107 = vector.load %arg2[%c832, %c0_79] : memref<1024x64xbf16, #tpu.memory_space<vmem>>, vector<64x64xbf16>
    %cst_80 = arith.constant dense<0.000000e+00> : vector<64x128xf32>
    %108 = tpu.matmul %107, %2, %cst_80 {dimension_numbers = #tpu.dot_dimension_numbers<[1], [0], [0], [1], [0, 0, 1, 1], [], []>} : vector<64x64xbf16>, vector<64x128xbf16>, vector<64x128xf32> -> vector<64x128xf32>
    %c832_81 = arith.constant 832 : index
    %c0_82 = arith.constant 0 : index
    %109 = vector.load %arg3[%c832_81, %c0_82] : memref<1024x1xf32, #tpu.memory_space<vmem>>, vector<64x1xf32>
    %110 = vector.broadcast %109 : vector<64x1xf32> to vector<64x128xf32>
    %111 = arith.addf %108, %110 : vector<64x128xf32>
    %112 = math.tanh %111 : vector<64x128xf32>
    %113 = arith.truncf %112 : vector<64x128xf32> to vector<64x128xbf16>
    %c832_83 = arith.constant 832 : index
    %c0_84 = arith.constant 0 : index
    %114 = vector.load %arg13[%c832_83, %c0_84] : memref<1024x128xbf16, #tpu.memory_space<vmem>>, vector<64x128xbf16>
    tpu.vector_store %arg13[%c832_83, %c0_84], %113 {strides = array<i32>} : memref<1024x128xbf16, #tpu.memory_space<vmem>>, vector<64x128xbf16>,
    %c896 = arith.constant 896 : index
    %c0_85 = arith.constant 0 : index
    %115 = vector.load %arg2[%c896, %c0_85] : memref<1024x64xbf16, #tpu.memory_space<vmem>>, vector<64x64xbf16>
    %cst_86 = arith.constant dense<0.000000e+00> : vector<64x128xf32>
    %116 = tpu.matmul %115, %2, %cst_86 {dimension_numbers = #tpu.dot_dimension_numbers<[1], [0], [0], [1], [0, 0, 1, 1], [], []>} : vector<64x64xbf16>, vector<64x128xbf16>, vector<64x128xf32> -> vector<64x128xf32>
    %c896_87 = arith.constant 896 : index
    %c0_88 = arith.constant 0 : index
    %117 = vector.load %arg3[%c896_87, %c0_88] : memref<1024x1xf32, #tpu.memory_space<vmem>>, vector<64x1xf32>
    %118 = vector.broadcast %117 : vector<64x1xf32> to vector<64x128xf32>
    %119 = arith.addf %116, %118 : vector<64x128xf32>
    %120 = math.tanh %119 : vector<64x128xf32>
    %121 = arith.truncf %120 : vector<64x128xf32> to vector<64x128xbf16>
    %c896_89 = arith.constant 896 : index
    %c0_90 = arith.constant 0 : index
    %122 = vector.load %arg13[%c896_89, %c0_90] : memref<1024x128xbf16, #tpu.memory_space<vmem>>, vector<64x128xbf16>
    tpu.vector_store %arg13[%c896_89, %c0_90], %121 {strides = array<i32>} : memref<1024x128xbf16, #tpu.memory_space<vmem>>, vector<64x128xbf16>,
    %c960 = arith.constant 960 : index
    %c0_91 = arith.constant 0 : index
    %123 = vector.load %arg2[%c960, %c0_91] : memref<1024x64xbf16, #tpu.memory_space<vmem>>, vector<64x64xbf16>
    %cst_92 = arith.constant dense<0.000000e+00> : vector<64x128xf32>
    %124 = tpu.matmul %123, %2, %cst_92 {dimension_numbers = #tpu.dot_dimension_numbers<[1], [0], [0], [1], [0, 0, 1, 1], [], []>} : vector<64x64xbf16>, vector<64x128xbf16>, vector<64x128xf32> -> vector<64x128xf32>
    %c960_93 = arith.constant 960 : index
    %c0_94 = arith.constant 0 : index
    %125 = vector.load %arg3[%c960_93, %c0_94] : memref<1024x1xf32, #tpu.memory_space<vmem>>, vector<64x1xf32>
    %126 = vector.broadcast %125 : vector<64x1xf32> to vector<64x128xf32>
    %127 = arith.addf %124, %126 : vector<64x128xf32>
    %128 = math.tanh %127 : vector<64x128xf32>
    %129 = arith.truncf %128 : vector<64x128xf32> to vector<64x128xbf16>
    %c960_95 = arith.constant 960 : index
    %c0_96 = arith.constant 0 : index
    %130 = vector.load %arg13[%c960_95, %c0_96] : memref<1024x128xbf16, #tpu.memory_space<vmem>>, vector<64x128xbf16>
    tpu.vector_store %arg13[%c960_95, %c0_96], %129 {strides = array<i32>} : memref<1024x128xbf16, #tpu.memory_space<vmem>>, vector<64x128xbf16>,
    %c0_97 = arith.constant 0 : index
    %c0_98 = arith.constant 0 : index
    %131 = vector.load %arg5[%c0_97, %c0_98] : memref<32x1xf32, #tpu.memory_space<vmem>>, vector<32x1xf32>
    %132 = vector.shape_cast %131 : vector<32x1xf32> to vector<32x1xf32>
    %133 = vector.broadcast %132 : vector<32x1xf32> to vector<32x128xf32>
    %c0_99 = arith.constant 0 : index
    %c0_100 = arith.constant 0 : index
    %134 = vector.load %arg13[%c0_99, %c0_100] : memref<1024x128xbf16, #tpu.memory_space<vmem>>, vector<32x128xbf16>
    %c1 = arith.constant 1 : index
    %c0_101 = arith.constant 0 : index
    %c0_102 = arith.constant 0 : index
    %135 = vector.load %arg4[%c1, %c0_101, %c0_102] : memref<3x32x48xbf16, #tpu.memory_space<vmem>>, vector<1x32x48xbf16>
    %136 = vector.shape_cast %135 : vector<1x32x48xbf16> to vector<32x48xbf16>
    %137 = vector.extract_strided_slice %136 {offsets = [0, 16], sizes = [32, 32], strides = [1, 1]} : vector<32x48xbf16> to vector<32x32xbf16>
    %cst_103 = arith.constant dense<0.000000e+00> : vector<32x128xf32>
    %138 = tpu.matmul %137, %134, %cst_103 {dimension_numbers = #tpu.dot_dimension_numbers<[1], [0], [0], [1], [0, 0, 1, 1], [], []>} : vector<32x32xbf16>, vector<32x128xbf16>, vector<32x128xf32> -> vector<32x128xf32>
    %139 = arith.addf %133, %138 : vector<32x128xf32>
    %c128_104 = arith.constant 128 : index
    %c0_105 = arith.constant 0 : index
    %140 = vector.load %arg13[%c128_104, %c0_105] : memref<1024x128xbf16, #tpu.memory_space<vmem>>, vector<32x128xbf16>
    %c2 = arith.constant 2 : index
    %c0_106 = arith.constant 0 : index
    %c0_107 = arith.constant 0 : index
    %141 = vector.load %arg4[%c2, %c0_106, %c0_107] : memref<3x32x48xbf16, #tpu.memory_space<vmem>>, vector<1x32x48xbf16>
    %142 = vector.shape_cast %141 : vector<1x32x48xbf16> to vector<32x48xbf16>
    %143 = vector.extract_strided_slice %142 {offsets = [0, 16], sizes = [32, 32], strides = [1, 1]} : vector<32x48xbf16> to vector<32x32xbf16>
    %cst_108 = arith.constant dense<0.000000e+00> : vector<32x128xf32>
    %144 = tpu.matmul %143, %140, %cst_108 {dimension_numbers = #tpu.dot_dimension_numbers<[1], [0], [0], [1], [0, 0, 1, 1], [], []>} : vector<32x32xbf16>, vector<32x128xbf16>, vector<32x128xf32> -> vector<32x128xf32>
    %145 = arith.addf %139, %144 : vector<32x128xf32>
    %146 = math.tanh %145 : vector<32x128xf32>
    %147 = arith.truncf %146 : vector<32x128xf32> to vector<32x128xbf16>
    %c0_109 = arith.constant 0 : index
    %c0_110 = arith.constant 0 : index
    %148 = vector.load %arg14[%c0_109, %c0_110] : memref<512x128xbf16, #tpu.memory_space<vmem>>, vector<32x128xbf16>
    tpu.vector_store %arg14[%c0_109, %c0_110], %147 {strides = array<i32>} : memref<512x128xbf16, #tpu.memory_space<vmem>>, vector<32x128xbf16>,
    %c16 = arith.constant 16 : index
    %c0_111 = arith.constant 0 : index
    %149 = vector.load %arg13[%c16, %c0_111] : memref<1024x128xbf16, #tpu.memory_space<vmem>>, vector<48x128xbf16>
    %c1_112 = arith.constant 1 : index
    %c0_113 = arith.constant 0 : index
    %c0_114 = arith.constant 0 : index
    %150 = vector.load %arg4[%c1_112, %c0_113, %c0_114] : memref<3x32x48xbf16, #tpu.memory_space<vmem>>, vector<1x32x48xbf16>
    %151 = vector.shape_cast %150 : vector<1x32x48xbf16> to vector<32x48xbf16>
    %cst_115 = arith.constant dense<0.000000e+00> : vector<32x128xf32>
    %152 = tpu.matmul %151, %149, %cst_115 {dimension_numbers = #tpu.dot_dimension_numbers<[1], [0], [0], [1], [0, 0, 1, 1], [], []>} : vector<32x48xbf16>, vector<48x128xbf16>, vector<32x128xf32> -> vector<32x128xf32>
    %153 = arith.addf %133, %152 : vector<32x128xf32>
    %c144 = arith.constant 144 : index
    %c0_116 = arith.constant 0 : index
    %154 = vector.load %arg13[%c144, %c0_116] : memref<1024x128xbf16, #tpu.memory_space<vmem>>, vector<48x128xbf16>
    %c2_117 = arith.constant 2 : index
    %c0_118 = arith.constant 0 : index
    %c0_119 = arith.constant 0 : index
    %155 = vector.load %arg4[%c2_117, %c0_118, %c0_119] : memref<3x32x48xbf16, #tpu.memory_space<vmem>>, vector<1x32x48xbf16>
    %156 = vector.shape_cast %155 : vector<1x32x48xbf16> to vector<32x48xbf16>
    %cst_120 = arith.constant dense<0.000000e+00> : vector<32x128xf32>
    %157 = tpu.matmul %156, %154, %cst_120 {dimension_numbers = #tpu.dot_dimension_numbers<[1], [0], [0], [1], [0, 0, 1, 1], [], []>} : vector<32x48xbf16>, vector<48x128xbf16>, vector<32x128xf32> -> vector<32x128xf32>
    %158 = arith.addf %153, %157 : vector<32x128xf32>
    %159 = math.tanh %158 : vector<32x128xf32>
    %160 = arith.truncf %159 : vector<32x128xf32> to vector<32x128xbf16>
    %c32 = arith.constant 32 : index
    %c0_121 = arith.constant 0 : index
    %161 = vector.load %arg14[%c32, %c0_121] : memref<512x128xbf16, #tpu.memory_space<vmem>>, vector<32x128xbf16>
    tpu.vector_store %arg14[%c32, %c0_121], %160 {strides = array<i32>} : memref<512x128xbf16, #tpu.memory_space<vmem>>, vector<32x128xbf16>,
    %c48 = arith.constant 48 : index
    %c0_122 = arith.constant 0 : index
    %162 = vector.load %arg13[%c48, %c0_122] : memref<1024x128xbf16, #tpu.memory_space<vmem>>, vector<48x128xbf16>
    %c1_123 = arith.constant 1 : index
    %c0_124 = arith.constant 0 : index
    %c0_125 = arith.constant 0 : index
    %163 = vector.load %arg4[%c1_123, %c0_124, %c0_125] : memref<3x32x48xbf16, #tpu.memory_space<vmem>>, vector<1x32x48xbf16>
    %164 = vector.shape_cast %163 : vector<1x32x48xbf16> to vector<32x48xbf16>
    %cst_126 = arith.constant dense<0.000000e+00> : vector<32x128xf32>
    %165 = tpu.matmul %164, %162, %cst_126 {dimension_numbers = #tpu.dot_dimension_numbers<[1], [0], [0], [1], [0, 0, 1, 1], [], []>} : vector<32x48xbf16>, vector<48x128xbf16>, vector<32x128xf32> -> vector<32x128xf32>
    %166 = arith.addf %133, %165 : vector<32x128xf32>
    %c176 = arith.constant 176 : index
    %c0_127 = arith.constant 0 : index
    %167 = vector.load %arg13[%c176, %c0_127] : memref<1024x128xbf16, #tpu.memory_space<vmem>>, vector<48x128xbf16>
    %c2_128 = arith.constant 2 : index
    %c0_129 = arith.constant 0 : index
    %c0_130 = arith.constant 0 : index
    %168 = vector.load %arg4[%c2_128, %c0_129, %c0_130] : memref<3x32x48xbf16, #tpu.memory_space<vmem>>, vector<1x32x48xbf16>
    %169 = vector.shape_cast %168 : vector<1x32x48xbf16> to vector<32x48xbf16>
    %cst_131 = arith.constant dense<0.000000e+00> : vector<32x128xf32>
    %170 = tpu.matmul %169, %167, %cst_131 {dimension_numbers = #tpu.dot_dimension_numbers<[1], [0], [0], [1], [0, 0, 1, 1], [], []>} : vector<32x48xbf16>, vector<48x128xbf16>, vector<32x128xf32> -> vector<32x128xf32>
    %171 = arith.addf %166, %170 : vector<32x128xf32>
    %172 = math.tanh %171 : vector<32x128xf32>
    %173 = arith.truncf %172 : vector<32x128xf32> to vector<32x128xbf16>
    %c64_132 = arith.constant 64 : index
    %c0_133 = arith.constant 0 : index
    %174 = vector.load %arg14[%c64_132, %c0_133] : memref<512x128xbf16, #tpu.memory_space<vmem>>, vector<32x128xbf16>
    tpu.vector_store %arg14[%c64_132, %c0_133], %173 {strides = array<i32>} : memref<512x128xbf16, #tpu.memory_space<vmem>>, vector<32x128xbf16>,
    %c80 = arith.constant 80 : index
    %c0_134 = arith.constant 0 : index
    %175 = vector.load %arg13[%c80, %c0_134] : memref<1024x128xbf16, #tpu.memory_space<vmem>>, vector<48x128xbf16>
    %c1_135 = arith.constant 1 : index
    %c0_136 = arith.constant 0 : index
    %c0_137 = arith.constant 0 : index
    %176 = vector.load %arg4[%c1_135, %c0_136, %c0_137] : memref<3x32x48xbf16, #tpu.memory_space<vmem>>, vector<1x32x48xbf16>
    %177 = vector.shape_cast %176 : vector<1x32x48xbf16> to vector<32x48xbf16>
    %cst_138 = arith.constant dense<0.000000e+00> : vector<32x128xf32>
    %178 = tpu.matmul %177, %175, %cst_138 {dimension_numbers = #tpu.dot_dimension_numbers<[1], [0], [0], [1], [0, 0, 1, 1], [], []>} : vector<32x48xbf16>, vector<48x128xbf16>, vector<32x128xf32> -> vector<32x128xf32>
    %179 = arith.addf %133, %178 : vector<32x128xf32>
    %c208 = arith.constant 208 : index
    %c0_139 = arith.constant 0 : index
    %180 = vector.load %arg13[%c208, %c0_139] : memref<1024x128xbf16, #tpu.memory_space<vmem>>, vector<48x128xbf16>
    %c2_140 = arith.constant 2 : index
    %c0_141 = arith.constant 0 : index
    %c0_142 = arith.constant 0 : index
    %181 = vector.load %arg4[%c2_140, %c0_141, %c0_142] : memref<3x32x48xbf16, #tpu.memory_space<vmem>>, vector<1x32x48xbf16>
    %182 = vector.shape_cast %181 : vector<1x32x48xbf16> to vector<32x48xbf16>
    %cst_143 = arith.constant dense<0.000000e+00> : vector<32x128xf32>
    %183 = tpu.matmul %182, %180, %cst_143 {dimension_numbers = #tpu.dot_dimension_numbers<[1], [0], [0], [1], [0, 0, 1, 1], [], []>} : vector<32x48xbf16>, vector<48x128xbf16>, vector<32x128xf32> -> vector<32x128xf32>
    %184 = arith.addf %179, %183 : vector<32x128xf32>
    %185 = math.tanh %184 : vector<32x128xf32>
    %186 = arith.truncf %185 : vector<32x128xf32> to vector<32x128xbf16>
    %c96 = arith.constant 96 : index
    %c0_144 = arith.constant 0 : index
    %187 = vector.load %arg14[%c96, %c0_144] : memref<512x128xbf16, #tpu.memory_space<vmem>>, vector<32x128xbf16>
    tpu.vector_store %arg14[%c96, %c0_144], %186 {strides = array<i32>} : memref<512x128xbf16, #tpu.memory_space<vmem>>, vector<32x128xbf16>,
    %c128_145 = arith.constant 128 : index
    %c0_146 = arith.constant 0 : index
    %188 = vector.load %arg13[%c128_145, %c0_146] : memref<1024x128xbf16, #tpu.memory_space<vmem>>, vector<32x128xbf16>
    %c0_147 = arith.constant 0 : index
    %c0_148 = arith.constant 0 : index
    %c0_149 = arith.constant 0 : index
    %189 = vector.load %arg4[%c0_147, %c0_148, %c0_149] : memref<3x32x48xbf16, #tpu.memory_space<vmem>>, vector<1x32x48xbf16>
    %190 = vector.shape_cast %189 : vector<1x32x48xbf16> to vector<32x48xbf16>
    %191 = vector.extract_strided_slice %190 {offsets = [0, 16], sizes = [32, 32], strides = [1, 1]} : vector<32x48xbf16> to vector<32x32xbf16>
    %cst_150 = arith.constant dense<0.000000e+00> : vector<32x128xf32>
    %192 = tpu.matmul %191, %188, %cst_150 {dimension_numbers = #tpu.dot_dimension_numbers<[1], [0], [0], [1], [0, 0, 1, 1], [], []>} : vector<32x32xbf16>, vector<32x128xbf16>, vector<32x128xf32> -> vector<32x128xf32>
    %193 = arith.addf %133, %192 : vector<32x128xf32>
    %c256_151 = arith.constant 256 : index
    %c0_152 = arith.constant 0 : index
    %194 = vector.load %arg13[%c256_151, %c0_152] : memref<1024x128xbf16, #tpu.memory_space<vmem>>, vector<32x128xbf16>
    %c1_153 = arith.constant 1 : index
    %c0_154 = arith.constant 0 : index
    %c0_155 = arith.constant 0 : index
    %195 = vector.load %arg4[%c1_153, %c0_154, %c0_155] : memref<3x32x48xbf16, #tpu.memory_space<vmem>>, vector<1x32x48xbf16>
    %196 = vector.shape_cast %195 : vector<1x32x48xbf16> to vector<32x48xbf16>
    %197 = vector.extract_strided_slice %196 {offsets = [0, 16], sizes = [32, 32], strides = [1, 1]} : vector<32x48xbf16> to vector<32x32xbf16>
    %cst_156 = arith.constant dense<0.000000e+00> : vector<32x128xf32>
    %198 = tpu.matmul %197, %194, %cst_156 {dimension_numbers = #tpu.dot_dimension_numbers<[1], [0], [0], [1], [0, 0, 1, 1], [], []>} : vector<32x32xbf16>, vector<32x128xbf16>, vector<32x128xf32> -> vector<32x128xf32>
    %199 = arith.addf %193, %198 : vector<32x128xf32>
    %c384_157 = arith.constant 384 : index
    %c0_158 = arith.constant 0 : index
    %200 = vector.load %arg13[%c384_157, %c0_158] : memref<1024x128xbf16, #tpu.memory_space<vmem>>, vector<32x128xbf16>
    %c2_159 = arith.constant 2 : index
    %c0_160 = arith.constant 0 : index
    %c0_161 = arith.constant 0 : index
    %201 = vector.load %arg4[%c2_159, %c0_160, %c0_161] : memref<3x32x48xbf16, #tpu.memory_space<vmem>>, vector<1x32x48xbf16>
    %202 = vector.shape_cast %201 : vector<1x32x48xbf16> to vector<32x48xbf16>
    %203 = vector.extract_strided_slice %202 {offsets = [0, 16], sizes = [32, 32], strides = [1, 1]} : vector<32x48xbf16> to vector<32x32xbf16>
    %cst_162 = arith.constant dense<0.000000e+00> : vector<32x128xf32>
    %204 = tpu.matmul %203, %200, %cst_162 {dimension_numbers = #tpu.dot_dimension_numbers<[1], [0], [0], [1], [0, 0, 1, 1], [], []>} : vector<32x32xbf16>, vector<32x128xbf16>, vector<32x128xf32> -> vector<32x128xf32>
    %205 = arith.addf %199, %204 : vector<32x128xf32>
    %206 = math.tanh %205 : vector<32x128xf32>
    %207 = arith.truncf %206 : vector<32x128xf32> to vector<32x128xbf16>
    %c128_163 = arith.constant 128 : index
    %c0_164 = arith.constant 0 : index
    %208 = vector.load %arg14[%c128_163, %c0_164] : memref<512x128xbf16, #tpu.memory_space<vmem>>, vector<32x128xbf16>
    tpu.vector_store %arg14[%c128_163, %c0_164], %207 {strides = array<i32>} : memref<512x128xbf16, #tpu.memory_space<vmem>>, vector<32x128xbf16>,
    %c144_165 = arith.constant 144 : index
    %c0_166 = arith.constant 0 : index
    %209 = vector.load %arg13[%c144_165, %c0_166] : memref<1024x128xbf16, #tpu.memory_space<vmem>>, vector<48x128xbf16>
    %c0_167 = arith.constant 0 : index
    %c0_168 = arith.constant 0 : index
    %c0_169 = arith.constant 0 : index
    %210 = vector.load %arg4[%c0_167, %c0_168, %c0_169] : memref<3x32x48xbf16, #tpu.memory_space<vmem>>, vector<1x32x48xbf16>
    %211 = vector.shape_cast %210 : vector<1x32x48xbf16> to vector<32x48xbf16>
    %cst_170 = arith.constant dense<0.000000e+00> : vector<32x128xf32>
    %212 = tpu.matmul %211, %209, %cst_170 {dimension_numbers = #tpu.dot_dimension_numbers<[1], [0], [0], [1], [0, 0, 1, 1], [], []>} : vector<32x48xbf16>, vector<48x128xbf16>, vector<32x128xf32> -> vector<32x128xf32>
    %213 = arith.addf %133, %212 : vector<32x128xf32>
    %c272 = arith.constant 272 : index
    %c0_171 = arith.constant 0 : index
    %214 = vector.load %arg13[%c272, %c0_171] : memref<1024x128xbf16, #tpu.memory_space<vmem>>, vector<48x128xbf16>
    %c1_172 = arith.constant 1 : index
    %c0_173 = arith.constant 0 : index
    %c0_174 = arith.constant 0 : index
    %215 = vector.load %arg4[%c1_172, %c0_173, %c0_174] : memref<3x32x48xbf16, #tpu.memory_space<vmem>>, vector<1x32x48xbf16>
    %216 = vector.shape_cast %215 : vector<1x32x48xbf16> to vector<32x48xbf16>
    %cst_175 = arith.constant dense<0.000000e+00> : vector<32x128xf32>
    %217 = tpu.matmul %216, %214, %cst_175 {dimension_numbers = #tpu.dot_dimension_numbers<[1], [0], [0], [1], [0, 0, 1, 1], [], []>} : vector<32x48xbf16>, vector<48x128xbf16>, vector<32x128xf32> -> vector<32x128xf32>
    %218 = arith.addf %213, %217 : vector<32x128xf32>
    %c400 = arith.constant 400 : index
    %c0_176 = arith.constant 0 : index
    %219 = vector.load %arg13[%c400, %c0_176] : memref<1024x128xbf16, #tpu.memory_space<vmem>>, vector<48x128xbf16>
    %c2_177 = arith.constant 2 : index
    %c0_178 = arith.constant 0 : index
    %c0_179 = arith.constant 0 : index
    %220 = vector.load %arg4[%c2_177, %c0_178, %c0_179] : memref<3x32x48xbf16, #tpu.memory_space<vmem>>, vector<1x32x48xbf16>
    %221 = vector.shape_cast %220 : vector<1x32x48xbf16> to vector<32x48xbf16>
    %cst_180 = arith.constant dense<0.000000e+00> : vector<32x128xf32>
    %222 = tpu.matmul %221, %219, %cst_180 {dimension_numbers = #tpu.dot_dimension_numbers<[1], [0], [0], [1], [0, 0, 1, 1], [], []>} : vector<32x48xbf16>, vector<48x128xbf16>, vector<32x128xf32> -> vector<32x128xf32>
    %223 = arith.addf %218, %222 : vector<32x128xf32>
    %224 = math.tanh %223 : vector<32x128xf32>
    %225 = arith.truncf %224 : vector<32x128xf32> to vector<32x128xbf16>
    %c160 = arith.constant 160 : index
    %c0_181 = arith.constant 0 : index
    %226 = vector.load %arg14[%c160, %c0_181] : memref<512x128xbf16, #tpu.memory_space<vmem>>, vector<32x128xbf16>
    tpu.vector_store %arg14[%c160, %c0_181], %225 {strides = array<i32>} : memref<512x128xbf16, #tpu.memory_space<vmem>>, vector<32x128xbf16>,
    %c176_182 = arith.constant 176 : index
    %c0_183 = arith.constant 0 : index
    %227 = vector.load %arg13[%c176_182, %c0_183] : memref<1024x128xbf16, #tpu.memory_space<vmem>>, vector<48x128xbf16>
    %c0_184 = arith.constant 0 : index
    %c0_185 = arith.constant 0 : index
    %c0_186 = arith.constant 0 : index
    %228 = vector.load %arg4[%c0_184, %c0_185, %c0_186] : memref<3x32x48xbf16, #tpu.memory_space<vmem>>, vector<1x32x48xbf16>
    %229 = vector.shape_cast %228 : vector<1x32x48xbf16> to vector<32x48xbf16>
    %cst_187 = arith.constant dense<0.000000e+00> : vector<32x128xf32>
    %230 = tpu.matmul %229, %227, %cst_187 {dimension_numbers = #tpu.dot_dimension_numbers<[1], [0], [0], [1], [0, 0, 1, 1], [], []>} : vector<32x48xbf16>, vector<48x128xbf16>, vector<32x128xf32> -> vector<32x128xf32>
    %231 = arith.addf %133, %230 : vector<32x128xf32>
    %c304 = arith.constant 304 : index
    %c0_188 = arith.constant 0 : index
    %232 = vector.load %arg13[%c304, %c0_188] : memref<1024x128xbf16, #tpu.memory_space<vmem>>, vector<48x128xbf16>
    %c1_189 = arith.constant 1 : index
    %c0_190 = arith.constant 0 : index
    %c0_191 = arith.constant 0 : index
    %233 = vector.load %arg4[%c1_189, %c0_190, %c0_191] : memref<3x32x48xbf16, #tpu.memory_space<vmem>>, vector<1x32x48xbf16>
    %234 = vector.shape_cast %233 : vector<1x32x48xbf16> to vector<32x48xbf16>
    %cst_192 = arith.constant dense<0.000000e+00> : vector<32x128xf32>
    %235 = tpu.matmul %234, %232, %cst_192 {dimension_numbers = #tpu.dot_dimension_numbers<[1], [0], [0], [1], [0, 0, 1, 1], [], []>} : vector<32x48xbf16>, vector<48x128xbf16>, vector<32x128xf32> -> vector<32x128xf32>
    %236 = arith.addf %231, %235 : vector<32x128xf32>
    %c432 = arith.constant 432 : index
    %c0_193 = arith.constant 0 : index
    %237 = vector.load %arg13[%c432, %c0_193] : memref<1024x128xbf16, #tpu.memory_space<vmem>>, vector<48x128xbf16>
    %c2_194 = arith.constant 2 : index
    %c0_195 = arith.constant 0 : index
    %c0_196 = arith.constant 0 : index
    %238 = vector.load %arg4[%c2_194, %c0_195, %c0_196] : memref<3x32x48xbf16, #tpu.memory_space<vmem>>, vector<1x32x48xbf16>
    %239 = vector.shape_cast %238 : vector<1x32x48xbf16> to vector<32x48xbf16>
    %cst_197 = arith.constant dense<0.000000e+00> : vector<32x128xf32>
    %240 = tpu.matmul %239, %237, %cst_197 {dimension_numbers = #tpu.dot_dimension_numbers<[1], [0], [0], [1], [0, 0, 1, 1], [], []>} : vector<32x48xbf16>, vector<48x128xbf16>, vector<32x128xf32> -> vector<32x128xf32>
    %241 = arith.addf %236, %240 : vector<32x128xf32>
    %242 = math.tanh %241 : vector<32x128xf32>
    %243 = arith.truncf %242 : vector<32x128xf32> to vector<32x128xbf16>
    %c192_198 = arith.constant 192 : index
    %c0_199 = arith.constant 0 : index
    %244 = vector.load %arg14[%c192_198, %c0_199] : memref<512x128xbf16, #tpu.memory_space<vmem>>, vector<32x128xbf16>
    tpu.vector_store %arg14[%c192_198, %c0_199], %243 {strides = array<i32>} : memref<512x128xbf16, #tpu.memory_space<vmem>>, vector<32x128xbf16>,
    %c208_200 = arith.constant 208 : index
    %c0_201 = arith.constant 0 : index
    %245 = vector.load %arg13[%c208_200, %c0_201] : memref<1024x128xbf16, #tpu.memory_space<vmem>>, vector<48x128xbf16>
    %c0_202 = arith.constant 0 : index
    %c0_203 = arith.constant 0 : index
    %c0_204 = arith.constant 0 : index
    %246 = vector.load %arg4[%c0_202, %c0_203, %c0_204] : memref<3x32x48xbf16, #tpu.memory_space<vmem>>, vector<1x32x48xbf16>
    %247 = vector.shape_cast %246 : vector<1x32x48xbf16> to vector<32x48xbf16>
    %cst_205 = arith.constant dense<0.000000e+00> : vector<32x128xf32>
    %248 = tpu.matmul %247, %245, %cst_205 {dimension_numbers = #tpu.dot_dimension_numbers<[1], [0], [0], [1], [0, 0, 1, 1], [], []>} : vector<32x48xbf16>, vector<48x128xbf16>, vector<32x128xf32> -> vector<32x128xf32>
    %249 = arith.addf %133, %248 : vector<32x128xf32>
    %c336 = arith.constant 336 : index
    %c0_206 = arith.constant 0 : index
    %250 = vector.load %arg13[%c336, %c0_206] : memref<1024x128xbf16, #tpu.memory_space<vmem>>, vector<48x128xbf16>
    %c1_207 = arith.constant 1 : index
    %c0_208 = arith.constant 0 : index
    %c0_209 = arith.constant 0 : index
    %251 = vector.load %arg4[%c1_207, %c0_208, %c0_209] : memref<3x32x48xbf16, #tpu.memory_space<vmem>>, vector<1x32x48xbf16>
    %252 = vector.shape_cast %251 : vector<1x32x48xbf16> to vector<32x48xbf16>
    %cst_210 = arith.constant dense<0.000000e+00> : vector<32x128xf32>
    %253 = tpu.matmul %252, %250, %cst_210 {dimension_numbers = #tpu.dot_dimension_numbers<[1], [0], [0], [1], [0, 0, 1, 1], [], []>} : vector<32x48xbf16>, vector<48x128xbf16>, vector<32x128xf32> -> vector<32x128xf32>
    %254 = arith.addf %249, %253 : vector<32x128xf32>
    %c464 = arith.constant 464 : index
    %c0_211 = arith.constant 0 : index
    %255 = vector.load %arg13[%c464, %c0_211] : memref<1024x128xbf16, #tpu.memory_space<vmem>>, vector<48x128xbf16>
    %c2_212 = arith.constant 2 : index
    %c0_213 = arith.constant 0 : index
    %c0_214 = arith.constant 0 : index
    %256 = vector.load %arg4[%c2_212, %c0_213, %c0_214] : memref<3x32x48xbf16, #tpu.memory_space<vmem>>, vector<1x32x48xbf16>
    %257 = vector.shape_cast %256 : vector<1x32x48xbf16> to vector<32x48xbf16>
    %cst_215 = arith.constant dense<0.000000e+00> : vector<32x128xf32>
    %258 = tpu.matmul %257, %255, %cst_215 {dimension_numbers = #tpu.dot_dimension_numbers<[1], [0], [0], [1], [0, 0, 1, 1], [], []>} : vector<32x48xbf16>, vector<48x128xbf16>, vector<32x128xf32> -> vector<32x128xf32>
    %259 = arith.addf %254, %258 : vector<32x128xf32>
    %260 = math.tanh %259 : vector<32x128xf32>
    %261 = arith.truncf %260 : vector<32x128xf32> to vector<32x128xbf16>
    %c224 = arith.constant 224 : index
    %c0_216 = arith.constant 0 : index
    %262 = vector.load %arg14[%c224, %c0_216] : memref<512x128xbf16, #tpu.memory_space<vmem>>, vector<32x128xbf16>
    tpu.vector_store %arg14[%c224, %c0_216], %261 {strides = array<i32>} : memref<512x128xbf16, #tpu.memory_space<vmem>>, vector<32x128xbf16>,
    %c384_217 = arith.constant 384 : index
    %c0_218 = arith.constant 0 : index
    %263 = vector.load %arg13[%c384_217, %c0_218] : memref<1024x128xbf16, #tpu.memory_space<vmem>>, vector<32x128xbf16>
    %c0_219 = arith.constant 0 : index
    %c0_220 = arith.constant 0 : index
    %c0_221 = arith.constant 0 : index
    %264 = vector.load %arg4[%c0_219, %c0_220, %c0_221] : memref<3x32x48xbf16, #tpu.memory_space<vmem>>, vector<1x32x48xbf16>
    %265 = vector.shape_cast %264 : vector<1x32x48xbf16> to vector<32x48xbf16>
    %266 = vector.extract_strided_slice %265 {offsets = [0, 16], sizes = [32, 32], strides = [1, 1]} : vector<32x48xbf16> to vector<32x32xbf16>
    %cst_222 = arith.constant dense<0.000000e+00> : vector<32x128xf32>
    %267 = tpu.matmul %266, %263, %cst_222 {dimension_numbers = #tpu.dot_dimension_numbers<[1], [0], [0], [1], [0, 0, 1, 1], [], []>} : vector<32x32xbf16>, vector<32x128xbf16>, vector<32x128xf32> -> vector<32x128xf32>
    %268 = arith.addf %133, %267 : vector<32x128xf32>
    %c512_223 = arith.constant 512 : index
    %c0_224 = arith.constant 0 : index
    %269 = vector.load %arg13[%c512_223, %c0_224] : memref<1024x128xbf16, #tpu.memory_space<vmem>>, vector<32x128xbf16>
    %c1_225 = arith.constant 1 : index
    %c0_226 = arith.constant 0 : index
    %c0_227 = arith.constant 0 : index
    %270 = vector.load %arg4[%c1_225, %c0_226, %c0_227] : memref<3x32x48xbf16, #tpu.memory_space<vmem>>, vector<1x32x48xbf16>
    %271 = vector.shape_cast %270 : vector<1x32x48xbf16> to vector<32x48xbf16>
    %272 = vector.extract_strided_slice %271 {offsets = [0, 16], sizes = [32, 32], strides = [1, 1]} : vector<32x48xbf16> to vector<32x32xbf16>
    %cst_228 = arith.constant dense<0.000000e+00> : vector<32x128xf32>
    %273 = tpu.matmul %272, %269, %cst_228 {dimension_numbers = #tpu.dot_dimension_numbers<[1], [0], [0], [1], [0, 0, 1, 1], [], []>} : vector<32x32xbf16>, vector<32x128xbf16>, vector<32x128xf32> -> vector<32x128xf32>
    %274 = arith.addf %268, %273 : vector<32x128xf32>
    %c640_229 = arith.constant 640 : index
    %c0_230 = arith.constant 0 : index
    %275 = vector.load %arg13[%c640_229, %c0_230] : memref<1024x128xbf16, #tpu.memory_space<vmem>>, vector<32x128xbf16>
    %c2_231 = arith.constant 2 : index
    %c0_232 = arith.constant 0 : index
    %c0_233 = arith.constant 0 : index
    %276 = vector.load %arg4[%c2_231, %c0_232, %c0_233] : memref<3x32x48xbf16, #tpu.memory_space<vmem>>, vector<1x32x48xbf16>
    %277 = vector.shape_cast %276 : vector<1x32x48xbf16> to vector<32x48xbf16>
    %278 = vector.extract_strided_slice %277 {offsets = [0, 16], sizes = [32, 32], strides = [1, 1]} : vector<32x48xbf16> to vector<32x32xbf16>
    %cst_234 = arith.constant dense<0.000000e+00> : vector<32x128xf32>
    %279 = tpu.matmul %278, %275, %cst_234 {dimension_numbers = #tpu.dot_dimension_numbers<[1], [0], [0], [1], [0, 0, 1, 1], [], []>} : vector<32x32xbf16>, vector<32x128xbf16>, vector<32x128xf32> -> vector<32x128xf32>
    %280 = arith.addf %274, %279 : vector<32x128xf32>
    %281 = math.tanh %280 : vector<32x128xf32>
    %282 = arith.truncf %281 : vector<32x128xf32> to vector<32x128xbf16>
    %c256_235 = arith.constant 256 : index
    %c0_236 = arith.constant 0 : index
    %283 = vector.load %arg14[%c256_235, %c0_236] : memref<512x128xbf16, #tpu.memory_space<vmem>>, vector<32x128xbf16>
    tpu.vector_store %arg14[%c256_235, %c0_236], %282 {strides = array<i32>} : memref<512x128xbf16, #tpu.memory_space<vmem>>, vector<32x128xbf16>,
    %c400_237 = arith.constant 400 : index
    %c0_238 = arith.constant 0 : index
    %284 = vector.load %arg13[%c400_237, %c0_238] : memref<1024x128xbf16, #tpu.memory_space<vmem>>, vector<48x128xbf16>
    %c0_239 = arith.constant 0 : index
    %c0_240 = arith.constant 0 : index
    %c0_241 = arith.constant 0 : index
    %285 = vector.load %arg4[%c0_239, %c0_240, %c0_241] : memref<3x32x48xbf16, #tpu.memory_space<vmem>>, vector<1x32x48xbf16>
    %286 = vector.shape_cast %285 : vector<1x32x48xbf16> to vector<32x48xbf16>
    %cst_242 = arith.constant dense<0.000000e+00> : vector<32x128xf32>
    %287 = tpu.matmul %286, %284, %cst_242 {dimension_numbers = #tpu.dot_dimension_numbers<[1], [0], [0], [1], [0, 0, 1, 1], [], []>} : vector<32x48xbf16>, vector<48x128xbf16>, vector<32x128xf32> -> vector<32x128xf32>
    %288 = arith.addf %133, %287 : vector<32x128xf32>
    %c528 = arith.constant 528 : index
    %c0_243 = arith.constant 0 : index
    %289 = vector.load %arg13[%c528, %c0_243] : memref<1024x128xbf16, #tpu.memory_space<vmem>>, vector<48x128xbf16>
    %c1_244 = arith.constant 1 : index
    %c0_245 = arith.constant 0 : index
    %c0_246 = arith.constant 0 : index
    %290 = vector.load %arg4[%c1_244, %c0_245, %c0_246] : memref<3x32x48xbf16, #tpu.memory_space<vmem>>, vector<1x32x48xbf16>
    %291 = vector.shape_cast %290 : vector<1x32x48xbf16> to vector<32x48xbf16>
    %cst_247 = arith.constant dense<0.000000e+00> : vector<32x128xf32>
    %292 = tpu.matmul %291, %289, %cst_247 {dimension_numbers = #tpu.dot_dimension_numbers<[1], [0], [0], [1], [0, 0, 1, 1], [], []>} : vector<32x48xbf16>, vector<48x128xbf16>, vector<32x128xf32> -> vector<32x128xf32>
    %293 = arith.addf %288, %292 : vector<32x128xf32>
    %c656 = arith.constant 656 : index
    %c0_248 = arith.constant 0 : index
    %294 = vector.load %arg13[%c656, %c0_248] : memref<1024x128xbf16, #tpu.memory_space<vmem>>, vector<48x128xbf16>
    %c2_249 = arith.constant 2 : index
    %c0_250 = arith.constant 0 : index
    %c0_251 = arith.constant 0 : index
    %295 = vector.load %arg4[%c2_249, %c0_250, %c0_251] : memref<3x32x48xbf16, #tpu.memory_space<vmem>>, vector<1x32x48xbf16>
    %296 = vector.shape_cast %295 : vector<1x32x48xbf16> to vector<32x48xbf16>
    %cst_252 = arith.constant dense<0.000000e+00> : vector<32x128xf32>
    %297 = tpu.matmul %296, %294, %cst_252 {dimension_numbers = #tpu.dot_dimension_numbers<[1], [0], [0], [1], [0, 0, 1, 1], [], []>} : vector<32x48xbf16>, vector<48x128xbf16>, vector<32x128xf32> -> vector<32x128xf32>
    %298 = arith.addf %293, %297 : vector<32x128xf32>
    %299 = math.tanh %298 : vector<32x128xf32>
    %300 = arith.truncf %299 : vector<32x128xf32> to vector<32x128xbf16>
    %c288 = arith.constant 288 : index
    %c0_253 = arith.constant 0 : index
    %301 = vector.load %arg14[%c288, %c0_253] : memref<512x128xbf16, #tpu.memory_space<vmem>>, vector<32x128xbf16>
    tpu.vector_store %arg14[%c288, %c0_253], %300 {strides = array<i32>} : memref<512x128xbf16, #tpu.memory_space<vmem>>, vector<32x128xbf16>,
    %c432_254 = arith.constant 432 : index
    %c0_255 = arith.constant 0 : index
    %302 = vector.load %arg13[%c432_254, %c0_255] : memref<1024x128xbf16, #tpu.memory_space<vmem>>, vector<48x128xbf16>
    %c0_256 = arith.constant 0 : index
    %c0_257 = arith.constant 0 : index
    %c0_258 = arith.constant 0 : index
    %303 = vector.load %arg4[%c0_256, %c0_257, %c0_258] : memref<3x32x48xbf16, #tpu.memory_space<vmem>>, vector<1x32x48xbf16>
    %304 = vector.shape_cast %303 : vector<1x32x48xbf16> to vector<32x48xbf16>
    %cst_259 = arith.constant dense<0.000000e+00> : vector<32x128xf32>
    %305 = tpu.matmul %304, %302, %cst_259 {dimension_numbers = #tpu.dot_dimension_numbers<[1], [0], [0], [1], [0, 0, 1, 1], [], []>} : vector<32x48xbf16>, vector<48x128xbf16>, vector<32x128xf32> -> vector<32x128xf32>
    %306 = arith.addf %133, %305 : vector<32x128xf32>
    %c560 = arith.constant 560 : index
    %c0_260 = arith.constant 0 : index
    %307 = vector.load %arg13[%c560, %c0_260] : memref<1024x128xbf16, #tpu.memory_space<vmem>>, vector<48x128xbf16>
    %c1_261 = arith.constant 1 : index
    %c0_262 = arith.constant 0 : index
    %c0_263 = arith.constant 0 : index
    %308 = vector.load %arg4[%c1_261, %c0_262, %c0_263] : memref<3x32x48xbf16, #tpu.memory_space<vmem>>, vector<1x32x48xbf16>
    %309 = vector.shape_cast %308 : vector<1x32x48xbf16> to vector<32x48xbf16>
    %cst_264 = arith.constant dense<0.000000e+00> : vector<32x128xf32>
    %310 = tpu.matmul %309, %307, %cst_264 {dimension_numbers = #tpu.dot_dimension_numbers<[1], [0], [0], [1], [0, 0, 1, 1], [], []>} : vector<32x48xbf16>, vector<48x128xbf16>, vector<32x128xf32> -> vector<32x128xf32>
    %311 = arith.addf %306, %310 : vector<32x128xf32>
    %c688 = arith.constant 688 : index
    %c0_265 = arith.constant 0 : index
    %312 = vector.load %arg13[%c688, %c0_265] : memref<1024x128xbf16, #tpu.memory_space<vmem>>, vector<48x128xbf16>
    %c2_266 = arith.constant 2 : index
    %c0_267 = arith.constant 0 : index
    %c0_268 = arith.constant 0 : index
    %313 = vector.load %arg4[%c2_266, %c0_267, %c0_268] : memref<3x32x48xbf16, #tpu.memory_space<vmem>>, vector<1x32x48xbf16>
    %314 = vector.shape_cast %313 : vector<1x32x48xbf16> to vector<32x48xbf16>
    %cst_269 = arith.constant dense<0.000000e+00> : vector<32x128xf32>
    %315 = tpu.matmul %314, %312, %cst_269 {dimension_numbers = #tpu.dot_dimension_numbers<[1], [0], [0], [1], [0, 0, 1, 1], [], []>} : vector<32x48xbf16>, vector<48x128xbf16>, vector<32x128xf32> -> vector<32x128xf32>
    %316 = arith.addf %311, %315 : vector<32x128xf32>
    %317 = math.tanh %316 : vector<32x128xf32>
    %318 = arith.truncf %317 : vector<32x128xf32> to vector<32x128xbf16>
    %c320_270 = arith.constant 320 : index
    %c0_271 = arith.constant 0 : index
    %319 = vector.load %arg14[%c320_270, %c0_271] : memref<512x128xbf16, #tpu.memory_space<vmem>>, vector<32x128xbf16>
    tpu.vector_store %arg14[%c320_270, %c0_271], %318 {strides = array<i32>} : memref<512x128xbf16, #tpu.memory_space<vmem>>, vector<32x128xbf16>,
    %c464_272 = arith.constant 464 : index
    %c0_273 = arith.constant 0 : index
    %320 = vector.load %arg13[%c464_272, %c0_273] : memref<1024x128xbf16, #tpu.memory_space<vmem>>, vector<48x128xbf16>
    %c0_274 = arith.constant 0 : index
    %c0_275 = arith.constant 0 : index
    %c0_276 = arith.constant 0 : index
    %321 = vector.load %arg4[%c0_274, %c0_275, %c0_276] : memref<3x32x48xbf16, #tpu.memory_space<vmem>>, vector<1x32x48xbf16>
    %322 = vector.shape_cast %321 : vector<1x32x48xbf16> to vector<32x48xbf16>
    %cst_277 = arith.constant dense<0.000000e+00> : vector<32x128xf32>
    %323 = tpu.matmul %322, %320, %cst_277 {dimension_numbers = #tpu.dot_dimension_numbers<[1], [0], [0], [1], [0, 0, 1, 1], [], []>} : vector<32x48xbf16>, vector<48x128xbf16>, vector<32x128xf32> -> vector<32x128xf32>
    %324 = arith.addf %133, %323 : vector<32x128xf32>
    %c592 = arith.constant 592 : index
    %c0_278 = arith.constant 0 : index
    %325 = vector.load %arg13[%c592, %c0_278] : memref<1024x128xbf16, #tpu.memory_space<vmem>>, vector<48x128xbf16>
    %c1_279 = arith.constant 1 : index
    %c0_280 = arith.constant 0 : index
    %c0_281 = arith.constant 0 : index
    %326 = vector.load %arg4[%c1_279, %c0_280, %c0_281] : memref<3x32x48xbf16, #tpu.memory_space<vmem>>, vector<1x32x48xbf16>
    %327 = vector.shape_cast %326 : vector<1x32x48xbf16> to vector<32x48xbf16>
    %cst_282 = arith.constant dense<0.000000e+00> : vector<32x128xf32>
    %328 = tpu.matmul %327, %325, %cst_282 {dimension_numbers = #tpu.dot_dimension_numbers<[1], [0], [0], [1], [0, 0, 1, 1], [], []>} : vector<32x48xbf16>, vector<48x128xbf16>, vector<32x128xf32> -> vector<32x128xf32>
    %329 = arith.addf %324, %328 : vector<32x128xf32>
    %c720 = arith.constant 720 : index
    %c0_283 = arith.constant 0 : index
    %330 = vector.load %arg13[%c720, %c0_283] : memref<1024x128xbf16, #tpu.memory_space<vmem>>, vector<48x128xbf16>
    %c2_284 = arith.constant 2 : index
    %c0_285 = arith.constant 0 : index
    %c0_286 = arith.constant 0 : index
    %331 = vector.load %arg4[%c2_284, %c0_285, %c0_286] : memref<3x32x48xbf16, #tpu.memory_space<vmem>>, vector<1x32x48xbf16>
    %332 = vector.shape_cast %331 : vector<1x32x48xbf16> to vector<32x48xbf16>
    %cst_287 = arith.constant dense<0.000000e+00> : vector<32x128xf32>
    %333 = tpu.matmul %332, %330, %cst_287 {dimension_numbers = #tpu.dot_dimension_numbers<[1], [0], [0], [1], [0, 0, 1, 1], [], []>} : vector<32x48xbf16>, vector<48x128xbf16>, vector<32x128xf32> -> vector<32x128xf32>
    %334 = arith.addf %329, %333 : vector<32x128xf32>
    %335 = math.tanh %334 : vector<32x128xf32>
    %336 = arith.truncf %335 : vector<32x128xf32> to vector<32x128xbf16>
    %c352 = arith.constant 352 : index
    %c0_288 = arith.constant 0 : index
    %337 = vector.load %arg14[%c352, %c0_288] : memref<512x128xbf16, #tpu.memory_space<vmem>>, vector<32x128xbf16>
    tpu.vector_store %arg14[%c352, %c0_288], %336 {strides = array<i32>} : memref<512x128xbf16, #tpu.memory_space<vmem>>, vector<32x128xbf16>,
    %c640_289 = arith.constant 640 : index
    %c0_290 = arith.constant 0 : index
    %338 = vector.load %arg13[%c640_289, %c0_290] : memref<1024x128xbf16, #tpu.memory_space<vmem>>, vector<32x128xbf16>
    %c0_291 = arith.constant 0 : index
    %c0_292 = arith.constant 0 : index
    %c0_293 = arith.constant 0 : index
    %339 = vector.load %arg4[%c0_291, %c0_292, %c0_293] : memref<3x32x48xbf16, #tpu.memory_space<vmem>>, vector<1x32x48xbf16>
    %340 = vector.shape_cast %339 : vector<1x32x48xbf16> to vector<32x48xbf16>
    %341 = vector.extract_strided_slice %340 {offsets = [0, 16], sizes = [32, 32], strides = [1, 1]} : vector<32x48xbf16> to vector<32x32xbf16>
    %cst_294 = arith.constant dense<0.000000e+00> : vector<32x128xf32>
    %342 = tpu.matmul %341, %338, %cst_294 {dimension_numbers = #tpu.dot_dimension_numbers<[1], [0], [0], [1], [0, 0, 1, 1], [], []>} : vector<32x32xbf16>, vector<32x128xbf16>, vector<32x128xf32> -> vector<32x128xf32>
    %343 = arith.addf %133, %342 : vector<32x128xf32>
    %c768_295 = arith.constant 768 : index
    %c0_296 = arith.constant 0 : index
    %344 = vector.load %arg13[%c768_295, %c0_296] : memref<1024x128xbf16, #tpu.memory_space<vmem>>, vector<32x128xbf16>
    %c1_297 = arith.constant 1 : index
    %c0_298 = arith.constant 0 : index
    %c0_299 = arith.constant 0 : index
    %345 = vector.load %arg4[%c1_297, %c0_298, %c0_299] : memref<3x32x48xbf16, #tpu.memory_space<vmem>>, vector<1x32x48xbf16>
    %346 = vector.shape_cast %345 : vector<1x32x48xbf16> to vector<32x48xbf16>
    %347 = vector.extract_strided_slice %346 {offsets = [0, 16], sizes = [32, 32], strides = [1, 1]} : vector<32x48xbf16> to vector<32x32xbf16>
    %cst_300 = arith.constant dense<0.000000e+00> : vector<32x128xf32>
    %348 = tpu.matmul %347, %344, %cst_300 {dimension_numbers = #tpu.dot_dimension_numbers<[1], [0], [0], [1], [0, 0, 1, 1], [], []>} : vector<32x32xbf16>, vector<32x128xbf16>, vector<32x128xf32> -> vector<32x128xf32>
    %349 = arith.addf %343, %348 : vector<32x128xf32>
    %c896_301 = arith.constant 896 : index
    %c0_302 = arith.constant 0 : index
    %350 = vector.load %arg13[%c896_301, %c0_302] : memref<1024x128xbf16, #tpu.memory_space<vmem>>, vector<32x128xbf16>
    %c2_303 = arith.constant 2 : index
    %c0_304 = arith.constant 0 : index
    %c0_305 = arith.constant 0 : index
    %351 = vector.load %arg4[%c2_303, %c0_304, %c0_305] : memref<3x32x48xbf16, #tpu.memory_space<vmem>>, vector<1x32x48xbf16>
    %352 = vector.shape_cast %351 : vector<1x32x48xbf16> to vector<32x48xbf16>
    %353 = vector.extract_strided_slice %352 {offsets = [0, 16], sizes = [32, 32], strides = [1, 1]} : vector<32x48xbf16> to vector<32x32xbf16>
    %cst_306 = arith.constant dense<0.000000e+00> : vector<32x128xf32>
    %354 = tpu.matmul %353, %350, %cst_306 {dimension_numbers = #tpu.dot_dimension_numbers<[1], [0], [0], [1], [0, 0, 1, 1], [], []>} : vector<32x32xbf16>, vector<32x128xbf16>, vector<32x128xf32> -> vector<32x128xf32>
    %355 = arith.addf %349, %354 : vector<32x128xf32>
    %356 = math.tanh %355 : vector<32x128xf32>
    %357 = arith.truncf %356 : vector<32x128xf32> to vector<32x128xbf16>
    %c384_307 = arith.constant 384 : index
    %c0_308 = arith.constant 0 : index
    %358 = vector.load %arg14[%c384_307, %c0_308] : memref<512x128xbf16, #tpu.memory_space<vmem>>, vector<32x128xbf16>
    tpu.vector_store %arg14[%c384_307, %c0_308], %357 {strides = array<i32>} : memref<512x128xbf16, #tpu.memory_space<vmem>>, vector<32x128xbf16>,
    %c656_309 = arith.constant 656 : index
    %c0_310 = arith.constant 0 : index
    %359 = vector.load %arg13[%c656_309, %c0_310] : memref<1024x128xbf16, #tpu.memory_space<vmem>>, vector<48x128xbf16>
    %c0_311 = arith.constant 0 : index
    %c0_312 = arith.constant 0 : index
    %c0_313 = arith.constant 0 : index
    %360 = vector.load %arg4[%c0_311, %c0_312, %c0_313] : memref<3x32x48xbf16, #tpu.memory_space<vmem>>, vector<1x32x48xbf16>
    %361 = vector.shape_cast %360 : vector<1x32x48xbf16> to vector<32x48xbf16>
    %cst_314 = arith.constant dense<0.000000e+00> : vector<32x128xf32>
    %362 = tpu.matmul %361, %359, %cst_314 {dimension_numbers = #tpu.dot_dimension_numbers<[1], [0], [0], [1], [0, 0, 1, 1], [], []>} : vector<32x48xbf16>, vector<48x128xbf16>, vector<32x128xf32> -> vector<32x128xf32>
    %363 = arith.addf %133, %362 : vector<32x128xf32>
    %c784 = arith.constant 784 : index
    %c0_315 = arith.constant 0 : index
    %364 = vector.load %arg13[%c784, %c0_315] : memref<1024x128xbf16, #tpu.memory_space<vmem>>, vector<48x128xbf16>
    %c1_316 = arith.constant 1 : index
    %c0_317 = arith.constant 0 : index
    %c0_318 = arith.constant 0 : index
    %365 = vector.load %arg4[%c1_316, %c0_317, %c0_318] : memref<3x32x48xbf16, #tpu.memory_space<vmem>>, vector<1x32x48xbf16>
    %366 = vector.shape_cast %365 : vector<1x32x48xbf16> to vector<32x48xbf16>
    %cst_319 = arith.constant dense<0.000000e+00> : vector<32x128xf32>
    %367 = tpu.matmul %366, %364, %cst_319 {dimension_numbers = #tpu.dot_dimension_numbers<[1], [0], [0], [1], [0, 0, 1, 1], [], []>} : vector<32x48xbf16>, vector<48x128xbf16>, vector<32x128xf32> -> vector<32x128xf32>
    %368 = arith.addf %363, %367 : vector<32x128xf32>
    %c912 = arith.constant 912 : index
    %c0_320 = arith.constant 0 : index
    %369 = vector.load %arg13[%c912, %c0_320] : memref<1024x128xbf16, #tpu.memory_space<vmem>>, vector<48x128xbf16>
    %c2_321 = arith.constant 2 : index
    %c0_322 = arith.constant 0 : index
    %c0_323 = arith.constant 0 : index
    %370 = vector.load %arg4[%c2_321, %c0_322, %c0_323] : memref<3x32x48xbf16, #tpu.memory_space<vmem>>, vector<1x32x48xbf16>
    %371 = vector.shape_cast %370 : vector<1x32x48xbf16> to vector<32x48xbf16>
    %cst_324 = arith.constant dense<0.000000e+00> : vector<32x128xf32>
    %372 = tpu.matmul %371, %369, %cst_324 {dimension_numbers = #tpu.dot_dimension_numbers<[1], [0], [0], [1], [0, 0, 1, 1], [], []>} : vector<32x48xbf16>, vector<48x128xbf16>, vector<32x128xf32> -> vector<32x128xf32>
    %373 = arith.addf %368, %372 : vector<32x128xf32>
    %374 = math.tanh %373 : vector<32x128xf32>
    %375 = arith.truncf %374 : vector<32x128xf32> to vector<32x128xbf16>
    %c416 = arith.constant 416 : index
    %c0_325 = arith.constant 0 : index
    %376 = vector.load %arg14[%c416, %c0_325] : memref<512x128xbf16, #tpu.memory_space<vmem>>, vector<32x128xbf16>
    tpu.vector_store %arg14[%c416, %c0_325], %375 {strides = array<i32>} : memref<512x128xbf16, #tpu.memory_space<vmem>>, vector<32x128xbf16>,
    %c688_326 = arith.constant 688 : index
    %c0_327 = arith.constant 0 : index
    %377 = vector.load %arg13[%c688_326, %c0_327] : memref<1024x128xbf16, #tpu.memory_space<vmem>>, vector<48x128xbf16>
    %c0_328 = arith.constant 0 : index
    %c0_329 = arith.constant 0 : index
    %c0_330 = arith.constant 0 : index
    %378 = vector.load %arg4[%c0_328, %c0_329, %c0_330] : memref<3x32x48xbf16, #tpu.memory_space<vmem>>, vector<1x32x48xbf16>
    %379 = vector.shape_cast %378 : vector<1x32x48xbf16> to vector<32x48xbf16>
    %cst_331 = arith.constant dense<0.000000e+00> : vector<32x128xf32>
    %380 = tpu.matmul %379, %377, %cst_331 {dimension_numbers = #tpu.dot_dimension_numbers<[1], [0], [0], [1], [0, 0, 1, 1], [], []>} : vector<32x48xbf16>, vector<48x128xbf16>, vector<32x128xf32> -> vector<32x128xf32>
    %381 = arith.addf %133, %380 : vector<32x128xf32>
    %c816 = arith.constant 816 : index
    %c0_332 = arith.constant 0 : index
    %382 = vector.load %arg13[%c816, %c0_332] : memref<1024x128xbf16, #tpu.memory_space<vmem>>, vector<48x128xbf16>
    %c1_333 = arith.constant 1 : index
    %c0_334 = arith.constant 0 : index
    %c0_335 = arith.constant 0 : index
    %383 = vector.load %arg4[%c1_333, %c0_334, %c0_335] : memref<3x32x48xbf16, #tpu.memory_space<vmem>>, vector<1x32x48xbf16>
    %384 = vector.shape_cast %383 : vector<1x32x48xbf16> to vector<32x48xbf16>
    %cst_336 = arith.constant dense<0.000000e+00> : vector<32x128xf32>
    %385 = tpu.matmul %384, %382, %cst_336 {dimension_numbers = #tpu.dot_dimension_numbers<[1], [0], [0], [1], [0, 0, 1, 1], [], []>} : vector<32x48xbf16>, vector<48x128xbf16>, vector<32x128xf32> -> vector<32x128xf32>
    %386 = arith.addf %381, %385 : vector<32x128xf32>
    %c944 = arith.constant 944 : index
    %c0_337 = arith.constant 0 : index
    %387 = vector.load %arg13[%c944, %c0_337] : memref<1024x128xbf16, #tpu.memory_space<vmem>>, vector<48x128xbf16>
    %c2_338 = arith.constant 2 : index
    %c0_339 = arith.constant 0 : index
    %c0_340 = arith.constant 0 : index
    %388 = vector.load %arg4[%c2_338, %c0_339, %c0_340] : memref<3x32x48xbf16, #tpu.memory_space<vmem>>, vector<1x32x48xbf16>
    %389 = vector.shape_cast %388 : vector<1x32x48xbf16> to vector<32x48xbf16>
    %cst_341 = arith.constant dense<0.000000e+00> : vector<32x128xf32>
    %390 = tpu.matmul %389, %387, %cst_341 {dimension_numbers = #tpu.dot_dimension_numbers<[1], [0], [0], [1], [0, 0, 1, 1], [], []>} : vector<32x48xbf16>, vector<48x128xbf16>, vector<32x128xf32> -> vector<32x128xf32>
    %391 = arith.addf %386, %390 : vector<32x128xf32>
    %392 = math.tanh %391 : vector<32x128xf32>
    %393 = arith.truncf %392 : vector<32x128xf32> to vector<32x128xbf16>
    %c448_342 = arith.constant 448 : index
    %c0_343 = arith.constant 0 : index
    %394 = vector.load %arg14[%c448_342, %c0_343] : memref<512x128xbf16, #tpu.memory_space<vmem>>, vector<32x128xbf16>
    tpu.vector_store %arg14[%c448_342, %c0_343], %393 {strides = array<i32>} : memref<512x128xbf16, #tpu.memory_space<vmem>>, vector<32x128xbf16>,
    %c720_344 = arith.constant 720 : index
    %c0_345 = arith.constant 0 : index
    %395 = vector.load %arg13[%c720_344, %c0_345] : memref<1024x128xbf16, #tpu.memory_space<vmem>>, vector<48x128xbf16>
    %c0_346 = arith.constant 0 : index
    %c0_347 = arith.constant 0 : index
    %c0_348 = arith.constant 0 : index
    %396 = vector.load %arg4[%c0_346, %c0_347, %c0_348] : memref<3x32x48xbf16, #tpu.memory_space<vmem>>, vector<1x32x48xbf16>
    %397 = vector.shape_cast %396 : vector<1x32x48xbf16> to vector<32x48xbf16>
    %cst_349 = arith.constant dense<0.000000e+00> : vector<32x128xf32>
    %398 = tpu.matmul %397, %395, %cst_349 {dimension_numbers = #tpu.dot_dimension_numbers<[1], [0], [0], [1], [0, 0, 1, 1], [], []>} : vector<32x48xbf16>, vector<48x128xbf16>, vector<32x128xf32> -> vector<32x128xf32>
    %399 = arith.addf %133, %398 : vector<32x128xf32>
    %c848 = arith.constant 848 : index
    %c0_350 = arith.constant 0 : index
    %400 = vector.load %arg13[%c848, %c0_350] : memref<1024x128xbf16, #tpu.memory_space<vmem>>, vector<48x128xbf16>
    %c1_351 = arith.constant 1 : index
    %c0_352 = arith.constant 0 : index
    %c0_353 = arith.constant 0 : index
    %401 = vector.load %arg4[%c1_351, %c0_352, %c0_353] : memref<3x32x48xbf16, #tpu.memory_space<vmem>>, vector<1x32x48xbf16>
    %402 = vector.shape_cast %401 : vector<1x32x48xbf16> to vector<32x48xbf16>
    %cst_354 = arith.constant dense<0.000000e+00> : vector<32x128xf32>
    %403 = tpu.matmul %402, %400, %cst_354 {dimension_numbers = #tpu.dot_dimension_numbers<[1], [0], [0], [1], [0, 0, 1, 1], [], []>} : vector<32x48xbf16>, vector<48x128xbf16>, vector<32x128xf32> -> vector<32x128xf32>
    %404 = arith.addf %399, %403 : vector<32x128xf32>
    %c976 = arith.constant 976 : index
    %c0_355 = arith.constant 0 : index
    %405 = vector.load %arg13[%c976, %c0_355] : memref<1024x128xbf16, #tpu.memory_space<vmem>>, vector<48x128xbf16>
    %c2_356 = arith.constant 2 : index
    %c0_357 = arith.constant 0 : index
    %c0_358 = arith.constant 0 : index
    %406 = vector.load %arg4[%c2_356, %c0_357, %c0_358] : memref<3x32x48xbf16, #tpu.memory_space<vmem>>, vector<1x32x48xbf16>
    %407 = vector.shape_cast %406 : vector<1x32x48xbf16> to vector<32x48xbf16>
    %cst_359 = arith.constant dense<0.000000e+00> : vector<32x128xf32>
    %408 = tpu.matmul %407, %405, %cst_359 {dimension_numbers = #tpu.dot_dimension_numbers<[1], [0], [0], [1], [0, 0, 1, 1], [], []>} : vector<32x48xbf16>, vector<48x128xbf16>, vector<32x128xf32> -> vector<32x128xf32>
    %409 = arith.addf %404, %408 : vector<32x128xf32>
    %410 = math.tanh %409 : vector<32x128xf32>
    %411 = arith.truncf %410 : vector<32x128xf32> to vector<32x128xbf16>
    %c480 = arith.constant 480 : index
    %c0_360 = arith.constant 0 : index
    %412 = vector.load %arg14[%c480, %c0_360] : memref<512x128xbf16, #tpu.memory_space<vmem>>, vector<32x128xbf16>
    tpu.vector_store %arg14[%c480, %c0_360], %411 {strides = array<i32>} : memref<512x128xbf16, #tpu.memory_space<vmem>>, vector<32x128xbf16>,
    %c0_361 = arith.constant 0 : index
    %c0_362 = arith.constant 0 : index
    %413 = vector.load %arg7[%c0_361, %c0_362] : memref<16x1xf32, #tpu.memory_space<vmem>>, vector<16x1xf32>
    %414 = vector.shape_cast %413 : vector<16x1xf32> to vector<16x1xf32>
    %415 = vector.broadcast %414 : vector<16x1xf32> to vector<16x128xf32>
    %c0_363 = arith.constant 0 : index
    %c0_364 = arith.constant 0 : index
    %416 = vector.load %arg14[%c0_363, %c0_364] : memref<512x128xbf16, #tpu.memory_space<vmem>>, vector<64x128xbf16>
    %c1_365 = arith.constant 1 : index
    %c0_366 = arith.constant 0 : index
    %c0_367 = arith.constant 0 : index
    %417 = vector.load %arg6[%c1_365, %c0_366, %c0_367] : memref<3x16x96xbf16, #tpu.memory_space<vmem>>, vector<1x16x96xbf16>
    %418 = vector.shape_cast %417 : vector<1x16x96xbf16> to vector<16x96xbf16>
    %419 = vector.extract_strided_slice %418 {offsets = [0, 32], sizes = [16, 64], strides = [1, 1]} : vector<16x96xbf16> to vector<16x64xbf16>
    %cst_368 = arith.constant dense<0.000000e+00> : vector<16x128xf32>
    %420 = tpu.matmul %419, %416, %cst_368 {dimension_numbers = #tpu.dot_dimension_numbers<[1], [0], [0], [1], [0, 0, 1, 1], [], []>} : vector<16x64xbf16>, vector<64x128xbf16>, vector<16x128xf32> -> vector<16x128xf32>
    %421 = arith.addf %415, %420 : vector<16x128xf32>
    %c128_369 = arith.constant 128 : index
    %c0_370 = arith.constant 0 : index
    %422 = vector.load %arg14[%c128_369, %c0_370] : memref<512x128xbf16, #tpu.memory_space<vmem>>, vector<64x128xbf16>
    %c2_371 = arith.constant 2 : index
    %c0_372 = arith.constant 0 : index
    %c0_373 = arith.constant 0 : index
    %423 = vector.load %arg6[%c2_371, %c0_372, %c0_373] : memref<3x16x96xbf16, #tpu.memory_space<vmem>>, vector<1x16x96xbf16>
    %424 = vector.shape_cast %423 : vector<1x16x96xbf16> to vector<16x96xbf16>
    %425 = vector.extract_strided_slice %424 {offsets = [0, 32], sizes = [16, 64], strides = [1, 1]} : vector<16x96xbf16> to vector<16x64xbf16>
    %cst_374 = arith.constant dense<0.000000e+00> : vector<16x128xf32>
    %426 = tpu.matmul %425, %422, %cst_374 {dimension_numbers = #tpu.dot_dimension_numbers<[1], [0], [0], [1], [0, 0, 1, 1], [], []>} : vector<16x64xbf16>, vector<64x128xbf16>, vector<16x128xf32> -> vector<16x128xf32>
    %427 = arith.addf %421, %426 : vector<16x128xf32>
    %428 = math.tanh %427 : vector<16x128xf32>
    %429 = arith.truncf %428 : vector<16x128xf32> to vector<16x128xbf16>
    %c0_375 = arith.constant 0 : index
    %c0_376 = arith.constant 0 : index
    %430 = vector.load %arg15[%c0_375, %c0_376] : memref<64x128xbf16, #tpu.memory_space<vmem>>, vector<16x128xbf16>
    tpu.vector_store %arg15[%c0_375, %c0_376], %429 {strides = array<i32>} : memref<64x128xbf16, #tpu.memory_space<vmem>>, vector<16x128xbf16>,
    %c32_377 = arith.constant 32 : index
    %c0_378 = arith.constant 0 : index
    %431 = vector.load %arg14[%c32_377, %c0_378] : memref<512x128xbf16, #tpu.memory_space<vmem>>, vector<96x128xbf16>
    %c1_379 = arith.constant 1 : index
    %c0_380 = arith.constant 0 : index
    %c0_381 = arith.constant 0 : index
    %432 = vector.load %arg6[%c1_379, %c0_380, %c0_381] : memref<3x16x96xbf16, #tpu.memory_space<vmem>>, vector<1x16x96xbf16>
    %433 = vector.shape_cast %432 : vector<1x16x96xbf16> to vector<16x96xbf16>
    %cst_382 = arith.constant dense<0.000000e+00> : vector<16x128xf32>
    %434 = tpu.matmul %433, %431, %cst_382 {dimension_numbers = #tpu.dot_dimension_numbers<[1], [0], [0], [1], [0, 0, 1, 1], [], []>} : vector<16x96xbf16>, vector<96x128xbf16>, vector<16x128xf32> -> vector<16x128xf32>
    %435 = arith.addf %415, %434 : vector<16x128xf32>
    %c160_383 = arith.constant 160 : index
    %c0_384 = arith.constant 0 : index
    %436 = vector.load %arg14[%c160_383, %c0_384] : memref<512x128xbf16, #tpu.memory_space<vmem>>, vector<96x128xbf16>
    %c2_385 = arith.constant 2 : index
    %c0_386 = arith.constant 0 : index
    %c0_387 = arith.constant 0 : index
    %437 = vector.load %arg6[%c2_385, %c0_386, %c0_387] : memref<3x16x96xbf16, #tpu.memory_space<vmem>>, vector<1x16x96xbf16>
    %438 = vector.shape_cast %437 : vector<1x16x96xbf16> to vector<16x96xbf16>
    %cst_388 = arith.constant dense<0.000000e+00> : vector<16x128xf32>
    %439 = tpu.matmul %438, %436, %cst_388 {dimension_numbers = #tpu.dot_dimension_numbers<[1], [0], [0], [1], [0, 0, 1, 1], [], []>} : vector<16x96xbf16>, vector<96x128xbf16>, vector<16x128xf32> -> vector<16x128xf32>
    %440 = arith.addf %435, %439 : vector<16x128xf32>
    %441 = math.tanh %440 : vector<16x128xf32>
    %442 = arith.truncf %441 : vector<16x128xf32> to vector<16x128xbf16>
    %c16_389 = arith.constant 16 : index
    %c0_390 = arith.constant 0 : index
    %443 = vector.load %arg15[%c16_389, %c0_390] : memref<64x128xbf16, #tpu.memory_space<vmem>>, vector<16x128xbf16>
    tpu.vector_store %arg15[%c16_389, %c0_390], %442 {strides = array<i32>} : memref<64x128xbf16, #tpu.memory_space<vmem>>, vector<16x128xbf16>,
    %c128_391 = arith.constant 128 : index
    %c0_392 = arith.constant 0 : index
    %444 = vector.load %arg14[%c128_391, %c0_392] : memref<512x128xbf16, #tpu.memory_space<vmem>>, vector<64x128xbf16>
    %c0_393 = arith.constant 0 : index
    %c0_394 = arith.constant 0 : index
    %c0_395 = arith.constant 0 : index
    %445 = vector.load %arg6[%c0_393, %c0_394, %c0_395] : memref<3x16x96xbf16, #tpu.memory_space<vmem>>, vector<1x16x96xbf16>
    %446 = vector.shape_cast %445 : vector<1x16x96xbf16> to vector<16x96xbf16>
    %447 = vector.extract_strided_slice %446 {offsets = [0, 32], sizes = [16, 64], strides = [1, 1]} : vector<16x96xbf16> to vector<16x64xbf16>
    %cst_396 = arith.constant dense<0.000000e+00> : vector<16x128xf32>
    %448 = tpu.matmul %447, %444, %cst_396 {dimension_numbers = #tpu.dot_dimension_numbers<[1], [0], [0], [1], [0, 0, 1, 1], [], []>} : vector<16x64xbf16>, vector<64x128xbf16>, vector<16x128xf32> -> vector<16x128xf32>
    %449 = arith.addf %415, %448 : vector<16x128xf32>
    %c256_397 = arith.constant 256 : index
    %c0_398 = arith.constant 0 : index
    %450 = vector.load %arg14[%c256_397, %c0_398] : memref<512x128xbf16, #tpu.memory_space<vmem>>, vector<64x128xbf16>
    %c1_399 = arith.constant 1 : index
    %c0_400 = arith.constant 0 : index
    %c0_401 = arith.constant 0 : index
    %451 = vector.load %arg6[%c1_399, %c0_400, %c0_401] : memref<3x16x96xbf16, #tpu.memory_space<vmem>>, vector<1x16x96xbf16>
    %452 = vector.shape_cast %451 : vector<1x16x96xbf16> to vector<16x96xbf16>
    %453 = vector.extract_strided_slice %452 {offsets = [0, 32], sizes = [16, 64], strides = [1, 1]} : vector<16x96xbf16> to vector<16x64xbf16>
    %cst_402 = arith.constant dense<0.000000e+00> : vector<16x128xf32>
    %454 = tpu.matmul %453, %450, %cst_402 {dimension_numbers = #tpu.dot_dimension_numbers<[1], [0], [0], [1], [0, 0, 1, 1], [], []>} : vector<16x64xbf16>, vector<64x128xbf16>, vector<16x128xf32> -> vector<16x128xf32>
    %455 = arith.addf %449, %454 : vector<16x128xf32>
    %c384_403 = arith.constant 384 : index
    %c0_404 = arith.constant 0 : index
    %456 = vector.load %arg14[%c384_403, %c0_404] : memref<512x128xbf16, #tpu.memory_space<vmem>>, vector<64x128xbf16>
    %c2_405 = arith.constant 2 : index
    %c0_406 = arith.constant 0 : index
    %c0_407 = arith.constant 0 : index
    %457 = vector.load %arg6[%c2_405, %c0_406, %c0_407] : memref<3x16x96xbf16, #tpu.memory_space<vmem>>, vector<1x16x96xbf16>
    %458 = vector.shape_cast %457 : vector<1x16x96xbf16> to vector<16x96xbf16>
    %459 = vector.extract_strided_slice %458 {offsets = [0, 32], sizes = [16, 64], strides = [1, 1]} : vector<16x96xbf16> to vector<16x64xbf16>
    %cst_408 = arith.constant dense<0.000000e+00> : vector<16x128xf32>
    %460 = tpu.matmul %459, %456, %cst_408 {dimension_numbers = #tpu.dot_dimension_numbers<[1], [0], [0], [1], [0, 0, 1, 1], [], []>} : vector<16x64xbf16>, vector<64x128xbf16>, vector<16x128xf32> -> vector<16x128xf32>
    %461 = arith.addf %455, %460 : vector<16x128xf32>
    %462 = math.tanh %461 : vector<16x128xf32>
    %463 = arith.truncf %462 : vector<16x128xf32> to vector<16x128xbf16>
    %c32_409 = arith.constant 32 : index
    %c0_410 = arith.constant 0 : index
    %464 = vector.load %arg15[%c32_409, %c0_410] : memref<64x128xbf16, #tpu.memory_space<vmem>>, vector<16x128xbf16>
    tpu.vector_store %arg15[%c32_409, %c0_410], %463 {strides = array<i32>} : memref<64x128xbf16, #tpu.memory_space<vmem>>, vector<16x128xbf16>,
    %c160_411 = arith.constant 160 : index
    %c0_412 = arith.constant 0 : index
    %465 = vector.load %arg14[%c160_411, %c0_412] : memref<512x128xbf16, #tpu.memory_space<vmem>>, vector<96x128xbf16>
    %c0_413 = arith.constant 0 : index
    %c0_414 = arith.constant 0 : index
    %c0_415 = arith.constant 0 : index
    %466 = vector.load %arg6[%c0_413, %c0_414, %c0_415] : memref<3x16x96xbf16, #tpu.memory_space<vmem>>, vector<1x16x96xbf16>
    %467 = vector.shape_cast %466 : vector<1x16x96xbf16> to vector<16x96xbf16>
    %cst_416 = arith.constant dense<0.000000e+00> : vector<16x128xf32>
    %468 = tpu.matmul %467, %465, %cst_416 {dimension_numbers = #tpu.dot_dimension_numbers<[1], [0], [0], [1], [0, 0, 1, 1], [], []>} : vector<16x96xbf16>, vector<96x128xbf16>, vector<16x128xf32> -> vector<16x128xf32>
    %469 = arith.addf %415, %468 : vector<16x128xf32>
    %c288_417 = arith.constant 288 : index
    %c0_418 = arith.constant 0 : index
    %470 = vector.load %arg14[%c288_417, %c0_418] : memref<512x128xbf16, #tpu.memory_space<vmem>>, vector<96x128xbf16>
    %c1_419 = arith.constant 1 : index
    %c0_420 = arith.constant 0 : index
    %c0_421 = arith.constant 0 : index
    %471 = vector.load %arg6[%c1_419, %c0_420, %c0_421] : memref<3x16x96xbf16, #tpu.memory_space<vmem>>, vector<1x16x96xbf16>
    %472 = vector.shape_cast %471 : vector<1x16x96xbf16> to vector<16x96xbf16>
    %cst_422 = arith.constant dense<0.000000e+00> : vector<16x128xf32>
    %473 = tpu.matmul %472, %470, %cst_422 {dimension_numbers = #tpu.dot_dimension_numbers<[1], [0], [0], [1], [0, 0, 1, 1], [], []>} : vector<16x96xbf16>, vector<96x128xbf16>, vector<16x128xf32> -> vector<16x128xf32>
    %474 = arith.addf %469, %473 : vector<16x128xf32>
    %c416_423 = arith.constant 416 : index
    %c0_424 = arith.constant 0 : index
    %475 = vector.load %arg14[%c416_423, %c0_424] : memref<512x128xbf16, #tpu.memory_space<vmem>>, vector<96x128xbf16>
    %c2_425 = arith.constant 2 : index
    %c0_426 = arith.constant 0 : index
    %c0_427 = arith.constant 0 : index
    %476 = vector.load %arg6[%c2_425, %c0_426, %c0_427] : memref<3x16x96xbf16, #tpu.memory_space<vmem>>, vector<1x16x96xbf16>
    %477 = vector.shape_cast %476 : vector<1x16x96xbf16> to vector<16x96xbf16>
    %cst_428 = arith.constant dense<0.000000e+00> : vector<16x128xf32>
    %478 = tpu.matmul %477, %475, %cst_428 {dimension_numbers = #tpu.dot_dimension_numbers<[1], [0], [0], [1], [0, 0, 1, 1], [], []>} : vector<16x96xbf16>, vector<96x128xbf16>, vector<16x128xf32> -> vector<16x128xf32>
    %479 = arith.addf %474, %478 : vector<16x128xf32>
    %480 = math.tanh %479 : vector<16x128xf32>
    %481 = arith.truncf %480 : vector<16x128xf32> to vector<16x128xbf16>
    %c48_429 = arith.constant 48 : index
    %c0_430 = arith.constant 0 : index
    %482 = vector.load %arg15[%c48_429, %c0_430] : memref<64x128xbf16, #tpu.memory_space<vmem>>, vector<16x128xbf16>
    tpu.vector_store %arg15[%c48_429, %c0_430], %481 {strides = array<i32>} : memref<64x128xbf16, #tpu.memory_space<vmem>>, vector<16x128xbf16>,
    %c0_431 = arith.constant 0 : index
    %c0_432 = arith.constant 0 : index
    %483 = vector.load %arg9[%c0_431, %c0_432] : memref<8x1xf32, #tpu.memory_space<vmem>>, vector<8x1xf32>
    %484 = vector.shape_cast %483 : vector<8x1xf32> to vector<8x1xf32>
    %485 = vector.broadcast %484 : vector<8x1xf32> to vector<8x128xf32>
    %c0_433 = arith.constant 0 : index
    %c0_434 = arith.constant 0 : index
    %486 = vector.load %arg11[%c0_433, %c0_434] : memref<10x1xf32, #tpu.memory_space<vmem>>, vector<10x1xf32>
    %487 = vector.shape_cast %486 : vector<10x1xf32> to vector<10x1xf32>
    %488 = vector.broadcast %487 : vector<10x1xf32> to vector<10x128xf32>
    %c0_435 = arith.constant 0 : index
    %c0_436 = arith.constant 0 : index
    %489 = vector.load %arg15[%c0_435, %c0_436] : memref<64x128xbf16, #tpu.memory_space<vmem>>, vector<32x128xbf16>
    %c1_437 = arith.constant 1 : index
    %c0_438 = arith.constant 0 : index
    %c0_439 = arith.constant 0 : index
    %490 = vector.load %arg8[%c1_437, %c0_438, %c0_439] : memref<3x8x48xbf16, #tpu.memory_space<vmem>>, vector<1x8x48xbf16>
    %491 = vector.shape_cast %490 : vector<1x8x48xbf16> to vector<8x48xbf16>
    %492 = vector.extract_strided_slice %491 {offsets = [0, 16], sizes = [8, 32], strides = [1, 1]} : vector<8x48xbf16> to vector<8x32xbf16>
    %cst_440 = arith.constant dense<0.000000e+00> : vector<8x128xf32>
    %493 = tpu.matmul %492, %489, %cst_440 {dimension_numbers = #tpu.dot_dimension_numbers<[1], [0], [0], [1], [0, 0, 1, 1], [], []>} : vector<8x32xbf16>, vector<32x128xbf16>, vector<8x128xf32> -> vector<8x128xf32>
    %494 = arith.addf %485, %493 : vector<8x128xf32>
    %c32_441 = arith.constant 32 : index
    %c0_442 = arith.constant 0 : index
    %495 = vector.load %arg15[%c32_441, %c0_442] : memref<64x128xbf16, #tpu.memory_space<vmem>>, vector<32x128xbf16>
    %c2_443 = arith.constant 2 : index
    %c0_444 = arith.constant 0 : index
    %c0_445 = arith.constant 0 : index
    %496 = vector.load %arg8[%c2_443, %c0_444, %c0_445] : memref<3x8x48xbf16, #tpu.memory_space<vmem>>, vector<1x8x48xbf16>
    %497 = vector.shape_cast %496 : vector<1x8x48xbf16> to vector<8x48xbf16>
    %498 = vector.extract_strided_slice %497 {offsets = [0, 16], sizes = [8, 32], strides = [1, 1]} : vector<8x48xbf16> to vector<8x32xbf16>
    %cst_446 = arith.constant dense<0.000000e+00> : vector<8x128xf32>
    %499 = tpu.matmul %498, %495, %cst_446 {dimension_numbers = #tpu.dot_dimension_numbers<[1], [0], [0], [1], [0, 0, 1, 1], [], []>} : vector<8x32xbf16>, vector<32x128xbf16>, vector<8x128xf32> -> vector<8x128xf32>
    %500 = arith.addf %494, %499 : vector<8x128xf32>
    %c0_447 = arith.constant 0 : index
    %c0_448 = arith.constant 0 : index
    %c0_449 = arith.constant 0 : index
    %501 = vector.load %arg10[%c0_447, %c0_448, %c0_449] : memref<4x10x8xbf16, #tpu.memory_space<vmem>>, vector<1x10x8xbf16>
    %502 = vector.shape_cast %501 : vector<1x10x8xbf16> to vector<10x8xbf16>
    %503 = arith.truncf %500 : vector<8x128xf32> to vector<8x128xbf16>
    %cst_450 = arith.constant dense<0.000000e+00> : vector<10x128xf32>
    %504 = tpu.matmul %502, %503, %cst_450 {dimension_numbers = #tpu.dot_dimension_numbers<[1], [0], [0], [1], [0, 0, 1, 1], [], []>} : vector<10x8xbf16>, vector<8x128xbf16>, vector<10x128xf32> -> vector<10x128xf32>
    %505 = arith.addf %488, %504 : vector<10x128xf32>
    %c0_451 = arith.constant 0 : index
    %c0_452 = arith.constant 0 : index
    %506 = vector.load %arg15[%c0_451, %c0_452] : memref<64x128xbf16, #tpu.memory_space<vmem>>, vector<32x128xbf16>
    %c1_453 = arith.constant 1 : index
    %c0_454 = arith.constant 0 : index
    %c0_455 = arith.constant 0 : index
    %507 = vector.load %arg8[%c1_453, %c0_454, %c0_455] : memref<3x8x48xbf16, #tpu.memory_space<vmem>>, vector<1x8x48xbf16>
    %508 = vector.shape_cast %507 : vector<1x8x48xbf16> to vector<8x48xbf16>
    %509 = vector.extract_strided_slice %508 {offsets = [0, 0], sizes = [8, 32], strides = [1, 1]} : vector<8x48xbf16> to vector<8x32xbf16>
    %cst_456 = arith.constant dense<0.000000e+00> : vector<8x128xf32>
    %510 = tpu.matmul %509, %506, %cst_456 {dimension_numbers = #tpu.dot_dimension_numbers<[1], [0], [0], [1], [0, 0, 1, 1], [], []>} : vector<8x32xbf16>, vector<32x128xbf16>, vector<8x128xf32> -> vector<8x128xf32>
    %511 = arith.addf %485, %510 : vector<8x128xf32>
    %c32_457 = arith.constant 32 : index
    %c0_458 = arith.constant 0 : index
    %512 = vector.load %arg15[%c32_457, %c0_458] : memref<64x128xbf16, #tpu.memory_space<vmem>>, vector<32x128xbf16>
    %c2_459 = arith.constant 2 : index
    %c0_460 = arith.constant 0 : index
    %c0_461 = arith.constant 0 : index
    %513 = vector.load %arg8[%c2_459, %c0_460, %c0_461] : memref<3x8x48xbf16, #tpu.memory_space<vmem>>, vector<1x8x48xbf16>
    %514 = vector.shape_cast %513 : vector<1x8x48xbf16> to vector<8x48xbf16>
    %515 = vector.extract_strided_slice %514 {offsets = [0, 0], sizes = [8, 32], strides = [1, 1]} : vector<8x48xbf16> to vector<8x32xbf16>
    %cst_462 = arith.constant dense<0.000000e+00> : vector<8x128xf32>
    %516 = tpu.matmul %515, %512, %cst_462 {dimension_numbers = #tpu.dot_dimension_numbers<[1], [0], [0], [1], [0, 0, 1, 1], [], []>} : vector<8x32xbf16>, vector<32x128xbf16>, vector<8x128xf32> -> vector<8x128xf32>
    %517 = arith.addf %511, %516 : vector<8x128xf32>
    %c1_463 = arith.constant 1 : index
    %c0_464 = arith.constant 0 : index
    %c0_465 = arith.constant 0 : index
    %518 = vector.load %arg10[%c1_463, %c0_464, %c0_465] : memref<4x10x8xbf16, #tpu.memory_space<vmem>>, vector<1x10x8xbf16>
    %519 = vector.shape_cast %518 : vector<1x10x8xbf16> to vector<10x8xbf16>
    %520 = arith.truncf %517 : vector<8x128xf32> to vector<8x128xbf16>
    %cst_466 = arith.constant dense<0.000000e+00> : vector<10x128xf32>
    %521 = tpu.matmul %519, %520, %cst_466 {dimension_numbers = #tpu.dot_dimension_numbers<[1], [0], [0], [1], [0, 0, 1, 1], [], []>} : vector<10x8xbf16>, vector<8x128xbf16>, vector<10x128xf32> -> vector<10x128xf32>
    %522 = arith.addf %505, %521 : vector<10x128xf32>
    %c0_467 = arith.constant 0 : index
    %c0_468 = arith.constant 0 : index
    %523 = vector.load %arg15[%c0_467, %c0_468] : memref<64x128xbf16, #tpu.memory_space<vmem>>, vector<32x128xbf16>
    %c0_469 = arith.constant 0 : index
    %c0_470 = arith.constant 0 : index
    %c0_471 = arith.constant 0 : index
    %524 = vector.load %arg8[%c0_469, %c0_470, %c0_471] : memref<3x8x48xbf16, #tpu.memory_space<vmem>>, vector<1x8x48xbf16>
    %525 = vector.shape_cast %524 : vector<1x8x48xbf16> to vector<8x48xbf16>
    %526 = vector.extract_strided_slice %525 {offsets = [0, 16], sizes = [8, 32], strides = [1, 1]} : vector<8x48xbf16> to vector<8x32xbf16>
    %cst_472 = arith.constant dense<0.000000e+00> : vector<8x128xf32>
    %527 = tpu.matmul %526, %523, %cst_472 {dimension_numbers = #tpu.dot_dimension_numbers<[1], [0], [0], [1], [0, 0, 1, 1], [], []>} : vector<8x32xbf16>, vector<32x128xbf16>, vector<8x128xf32> -> vector<8x128xf32>
    %528 = arith.addf %485, %527 : vector<8x128xf32>
    %c32_473 = arith.constant 32 : index
    %c0_474 = arith.constant 0 : index
    %529 = vector.load %arg15[%c32_473, %c0_474] : memref<64x128xbf16, #tpu.memory_space<vmem>>, vector<32x128xbf16>
    %c1_475 = arith.constant 1 : index
    %c0_476 = arith.constant 0 : index
    %c0_477 = arith.constant 0 : index
    %530 = vector.load %arg8[%c1_475, %c0_476, %c0_477] : memref<3x8x48xbf16, #tpu.memory_space<vmem>>, vector<1x8x48xbf16>
    %531 = vector.shape_cast %530 : vector<1x8x48xbf16> to vector<8x48xbf16>
    %532 = vector.extract_strided_slice %531 {offsets = [0, 16], sizes = [8, 32], strides = [1, 1]} : vector<8x48xbf16> to vector<8x32xbf16>
    %cst_478 = arith.constant dense<0.000000e+00> : vector<8x128xf32>
    %533 = tpu.matmul %532, %529, %cst_478 {dimension_numbers = #tpu.dot_dimension_numbers<[1], [0], [0], [1], [0, 0, 1, 1], [], []>} : vector<8x32xbf16>, vector<32x128xbf16>, vector<8x128xf32> -> vector<8x128xf32>
    %534 = arith.addf %528, %533 : vector<8x128xf32>
    %c2_479 = arith.constant 2 : index
    %c0_480 = arith.constant 0 : index
    %c0_481 = arith.constant 0 : index
    %535 = vector.load %arg10[%c2_479, %c0_480, %c0_481] : memref<4x10x8xbf16, #tpu.memory_space<vmem>>, vector<1x10x8xbf16>
    %536 = vector.shape_cast %535 : vector<1x10x8xbf16> to vector<10x8xbf16>
    %537 = arith.truncf %534 : vector<8x128xf32> to vector<8x128xbf16>
    %cst_482 = arith.constant dense<0.000000e+00> : vector<10x128xf32>
    %538 = tpu.matmul %536, %537, %cst_482 {dimension_numbers = #tpu.dot_dimension_numbers<[1], [0], [0], [1], [0, 0, 1, 1], [], []>} : vector<10x8xbf16>, vector<8x128xbf16>, vector<10x128xf32> -> vector<10x128xf32>
    %539 = arith.addf %522, %538 : vector<10x128xf32>
    %c0_483 = arith.constant 0 : index
    %c0_484 = arith.constant 0 : index
    %540 = vector.load %arg15[%c0_483, %c0_484] : memref<64x128xbf16, #tpu.memory_space<vmem>>, vector<32x128xbf16>
    %c0_485 = arith.constant 0 : index
    %c0_486 = arith.constant 0 : index
    %c0_487 = arith.constant 0 : index
    %541 = vector.load %arg8[%c0_485, %c0_486, %c0_487] : memref<3x8x48xbf16, #tpu.memory_space<vmem>>, vector<1x8x48xbf16>
    %542 = vector.shape_cast %541 : vector<1x8x48xbf16> to vector<8x48xbf16>
    %543 = vector.extract_strided_slice %542 {offsets = [0, 0], sizes = [8, 32], strides = [1, 1]} : vector<8x48xbf16> to vector<8x32xbf16>
    %cst_488 = arith.constant dense<0.000000e+00> : vector<8x128xf32>
    %544 = tpu.matmul %543, %540, %cst_488 {dimension_numbers = #tpu.dot_dimension_numbers<[1], [0], [0], [1], [0, 0, 1, 1], [], []>} : vector<8x32xbf16>, vector<32x128xbf16>, vector<8x128xf32> -> vector<8x128xf32>
    %545 = arith.addf %485, %544 : vector<8x128xf32>
    %c32_489 = arith.constant 32 : index
    %c0_490 = arith.constant 0 : index
    %546 = vector.load %arg15[%c32_489, %c0_490] : memref<64x128xbf16, #tpu.memory_space<vmem>>, vector<32x128xbf16>
    %c1_491 = arith.constant 1 : index
    %c0_492 = arith.constant 0 : index
    %c0_493 = arith.constant 0 : index
    %547 = vector.load %arg8[%c1_491, %c0_492, %c0_493] : memref<3x8x48xbf16, #tpu.memory_space<vmem>>, vector<1x8x48xbf16>
    %548 = vector.shape_cast %547 : vector<1x8x48xbf16> to vector<8x48xbf16>
    %549 = vector.extract_strided_slice %548 {offsets = [0, 0], sizes = [8, 32], strides = [1, 1]} : vector<8x48xbf16> to vector<8x32xbf16>
    %cst_494 = arith.constant dense<0.000000e+00> : vector<8x128xf32>
    %550 = tpu.matmul %549, %546, %cst_494 {dimension_numbers = #tpu.dot_dimension_numbers<[1], [0], [0], [1], [0, 0, 1, 1], [], []>} : vector<8x32xbf16>, vector<32x128xbf16>, vector<8x128xf32> -> vector<8x128xf32>
    %551 = arith.addf %545, %550 : vector<8x128xf32>
    %c3 = arith.constant 3 : index
    %c0_495 = arith.constant 0 : index
    %c0_496 = arith.constant 0 : index
    %552 = vector.load %arg10[%c3, %c0_495, %c0_496] : memref<4x10x8xbf16, #tpu.memory_space<vmem>>, vector<1x10x8xbf16>
    %553 = vector.shape_cast %552 : vector<1x10x8xbf16> to vector<10x8xbf16>
    %554 = arith.truncf %551 : vector<8x128xf32> to vector<8x128xbf16>
    %cst_497 = arith.constant dense<0.000000e+00> : vector<10x128xf32>
    %555 = tpu.matmul %553, %554, %cst_497 {dimension_numbers = #tpu.dot_dimension_numbers<[1], [0], [0], [1], [0, 0, 1, 1], [], []>} : vector<10x8xbf16>, vector<8x128xbf16>, vector<10x128xf32> -> vector<10x128xf32>
    %556 = arith.addf %539, %555 : vector<10x128xf32>
    %c0_498 = arith.constant 0 : index
    %c0_499 = arith.constant 0 : index
    %557 = vector.load %arg12[%c0_498, %c0_499] : memref<10x128xf32, #tpu.memory_space<vmem>>, vector<10x128xf32>
    tpu.vector_store %arg12[%c0_498, %c0_499], %556 {strides = array<i32>} : memref<10x128xf32, #tpu.memory_space<vmem>>, vector<10x128xf32>,
    return
  }
  func.func @transform_0(%arg0: i32) -> (i32, i32) {
    %c0_i32 = arith.constant 0 : i32
    %c0_i32_0 = arith.constant 0 : i32
    return %arg0, %c0_i32 : i32, i32
  }
  func.func @transform_1(%arg0: i32) -> (i32, i32) {
    %c0_i32 = arith.constant 0 : i32
    %c0_i32_0 = arith.constant 0 : i32
    %c0_i32_1 = arith.constant 0 : i32
    return %c0_i32, %c0_i32_0 : i32, i32
  }
  func.func @transform_2(%arg0: i32) -> (i32, i32) {
    %c0_i32 = arith.constant 0 : i32
    %c0_i32_0 = arith.constant 0 : i32
    %c0_i32_1 = arith.constant 0 : i32
    return %c0_i32, %c0_i32_0 : i32, i32
  }
  func.func @transform_3(%arg0: i32) -> (i32, i32, i32) {
    %c0_i32 = arith.constant 0 : i32
    %c0_i32_0 = arith.constant 0 : i32
    %c0_i32_1 = arith.constant 0 : i32
    %c0_i32_2 = arith.constant 0 : i32
    return %c0_i32, %c0_i32_0, %c0_i32_1 : i32, i32, i32
  }
  func.func @transform_4(%arg0: i32) -> (i32, i32) {
    %c0_i32 = arith.constant 0 : i32
    %c0_i32_0 = arith.constant 0 : i32
    %c0_i32_1 = arith.constant 0 : i32
    return %c0_i32, %c0_i32_0 : i32, i32
  }
  func.func @transform_5(%arg0: i32) -> (i32, i32, i32) {
    %c0_i32 = arith.constant 0 : i32
    %c0_i32_0 = arith.constant 0 : i32
    %c0_i32_1 = arith.constant 0 : i32
    %c0_i32_2 = arith.constant 0 : i32
    return %c0_i32, %c0_i32_0, %c0_i32_1 : i32, i32, i32
  }
  func.func @transform_6(%arg0: i32) -> (i32, i32) {
    %c0_i32 = arith.constant 0 : i32
    %c0_i32_0 = arith.constant 0 : i32
    %c0_i32_1 = arith.constant 0 : i32
    return %c0_i32, %c0_i32_0 : i32, i32
  }
  func.func @transform_7(%arg0: i32) -> (i32, i32, i32) {
    %c0_i32 = arith.constant 0 : i32
    %c0_i32_0 = arith.constant 0 : i32
    %c0_i32_1 = arith.constant 0 : i32
    %c0_i32_2 = arith.constant 0 : i32
    return %c0_i32, %c0_i32_0, %c0_i32_1 : i32, i32, i32
  }
  func.func @transform_8(%arg0: i32) -> (i32, i32) {
    %c0_i32 = arith.constant 0 : i32
    %c0_i32_0 = arith.constant 0 : i32
    %c0_i32_1 = arith.constant 0 : i32
    return %c0_i32, %c0_i32_0 : i32, i32
  }
  func.func @transform_9(%arg0: i32) -> (i32, i32, i32) {
    %c0_i32 = arith.constant 0 : i32
    %c0_i32_0 = arith.constant 0 : i32
    %c0_i32_1 = arith.constant 0 : i32
    %c0_i32_2 = arith.constant 0 : i32
    return %c0_i32, %c0_i32_0, %c0_i32_1 : i32, i32, i32
  }
  func.func @transform_10(%arg0: i32) -> (i32, i32) {
    %c0_i32 = arith.constant 0 : i32
    %c0_i32_0 = arith.constant 0 : i32
    %c0_i32_1 = arith.constant 0 : i32
    return %c0_i32, %c0_i32_0 : i32, i32
  }
  func.func @transform_11(%arg0: i32) -> (i32, i32) {
    %c0_i32 = arith.constant 0 : i32
    %c0_i32_0 = arith.constant 0 : i32
    return %c0_i32, %arg0 : i32, i32
  }
}

</mosaic_0001>

<llo_original>
// kernel: tile.6
$region0: #{tile.6}
  #allocation0 [shape = 's32[1]{0}', space=sflag, size = 0x4, scoped, tag = 'scoped memory for tile.6']
  %s0 = inlined_call_operand.vmem [shape: f32[16], index: 0, kind: input, shape index: {}]
  %s1 = inlined_call_operand.vmem [shape: f32[64,1,1,16], index: 1, kind: output, shape index: {}]
  // Predicated region
  $region2: #{tile.6} parent=0 // pred_check
    _
  $region3: #{tile.6} parent=0 // pred_check_branch
    %3 = sbr.rel (0) target = $region5
  $region4: #{tile.6} parent=0 // pred_region
    _
  $region5: #{tile.6} parent=0 // pred_fallthru
    _
  %v4 = vld [vmem:[%s0] ss:$0 sm:$0xff]
  %5 = vst [vmem:[%s1] sm:$0xff] %v4
  %s6 = scalar_lea.vmem %s1, 8
  %7 = vst [vmem:[%s6] sm:$0xff] %v4
  %s8 = scalar_lea.vmem %s1, 16
  %9 = vst [vmem:[%s8] sm:$0xff] %v4
  %s10 = scalar_lea.vmem %s1, 24
  %11 = vst [vmem:[%s10] sm:$0xff] %v4
  %s12 = scalar_lea.vmem %s1, 32
  %13 = vst [vmem:[%s12] sm:$0xff] %v4
  %s14 = scalar_lea.vmem %s1, 40
  %15 = vst [vmem:[%s14] sm:$0xff] %v4
  %s16 = scalar_lea.vmem %s1, 48
  %17 = vst [vmem:[%s16] sm:$0xff] %v4
  %s18 = scalar_lea.vmem %s1, 56
  %19 = vst [vmem:[%s18] sm:$0xff] %v4

// kernel: tile.0
$region0: #{tile.0}
  %s0 = inlined_call_operand.vmem [shape: f32[64,1,1,16], index: 0, kind: input, shape index: {}]
  %s1 = inlined_call_operand.vmem [shape: f32[1024,1], index: 1, kind: output, shape index: {}]
  %v2 = vld [vmem:[%s0] sm:$0xff]
  %vm3 = vcmask 7168
  %4 = vst.msk [vmem:[%s1] ss:$16 sm:$0x3] %vm3, %v2
  %5 = vst.msk [vmem:[%s1] ss:$16 sm:$0xc] %vm3, %v2
  %6 = vst.msk [vmem:[%s1] ss:$16 sm:$0x30] %vm3, %v2
  %7 = vst.msk [vmem:[%s1] ss:$16 sm:$0xc0] %vm3, %v2
  %s8 = scalar_lea.vmem %s0, 8
  %v9 = vld [vmem:[%s8] sm:$0xff]
  %vm10 = vcmask 7168
  %s11 = scalar_lea.vmem %s1, 128
  %12 = vst.msk [vmem:[%s11] ss:$16 sm:$0x3] %vm10, %v9
  %s13 = scalar_lea.vmem %s1, 128
  %14 = vst.msk [vmem:[%s13] ss:$16 sm:$0xc] %vm10, %v9
  %s15 = scalar_lea.vmem %s1, 128
  %16 = vst.msk [vmem:[%s15] ss:$16 sm:$0x30] %vm10, %v9
  %s17 = scalar_lea.vmem %s1, 128
  %18 = vst.msk [vmem:[%s17] ss:$16 sm:$0xc0] %vm10, %v9
  %s19 = scalar_lea.vmem %s0, 16
  %v20 = vld [vmem:[%s19] sm:$0xff]
  %vm21 = vcmask 7168
  %s22 = scalar_lea.vmem %s1, 256
  %23 = vst.msk [vmem:[%s22] ss:$16 sm:$0x3] %vm21, %v20
  %s24 = scalar_lea.vmem %s1, 256
  %25 = vst.msk [vmem:[%s24] ss:$16 sm:$0xc] %vm21, %v20
  %s26 = scalar_lea.vmem %s1, 256
  %27 = vst.msk [vmem:[%s26] ss:$16 sm:$0x30] %vm21, %v20
  %s28 = scalar_lea.vmem %s1, 256
  %29 = vst.msk [vmem:[%s28] ss:$16 sm:$0xc0] %vm21, %v20
  %s30 = scalar_lea.vmem %s0, 24
  %v31 = vld [vmem:[%s30] sm:$0xff]
  %vm32 = vcmask 7168
  %s33 = scalar_lea.vmem %s1, 384
  %34 = vst.msk [vmem:[%s33] ss:$16 sm:$0x3] %vm32, %v31
  %s35 = scalar_lea.vmem %s1, 384
  %36 = vst.msk [vmem:[%s35] ss:$16 sm:$0xc] %vm32, %v31
  %s37 = scalar_lea.vmem %s1, 384
  %38 = vst.msk [vmem:[%s37] ss:$16 sm:$0x30] %vm32, %v31
  %s39 = scalar_lea.vmem %s1, 384
  %40 = vst.msk [vmem:[%s39] ss:$16 sm:$0xc0] %vm32, %v31
  %s41 = scalar_lea.vmem %s0, 32
  %v42 = vld [vmem:[%s41] sm:$0xff]
  %vm43 = vcmask 7168
  %s44 = scalar_lea.vmem %s1, 512
  %45 = vst.msk [vmem:[%s44] ss:$16 sm:$0x3] %vm43, %v42
  %s46 = scalar_lea.vmem %s1, 512
  %47 = vst.msk [vmem:[%s46] ss:$16 sm:$0xc] %vm43, %v42
  %s48 = scalar_lea.vmem %s1, 512
  %49 = vst.msk [vmem:[%s48] ss:$16 sm:$0x30] %vm43, %v42
  %s50 = scalar_lea.vmem %s1, 512
  %51 = vst.msk [vmem:[%s50] ss:$16 sm:$0xc0] %vm43, %v42
  %s52 = scalar_lea.vmem %s0, 40
  %v53 = vld [vmem:[%s52] sm:$0xff]
  %vm54 = vcmask 7168
  %s55 = scalar_lea.vmem %s1, 640
  %56 = vst.msk [vmem:[%s55] ss:$16 sm:$0x3] %vm54, %v53
  %s57 = scalar_lea.vmem %s1, 640
  %58 = vst.msk [vmem:[%s57] ss:$16 sm:$0xc] %vm54, %v53
  %s59 = scalar_lea.vmem %s1, 640
  %60 = vst.msk [vmem:[%s59] ss:$16 sm:$0x30] %vm54, %v53
  %s61 = scalar_lea.vmem %s1, 640
  %62 = vst.msk [vmem:[%s61] ss:$16 sm:$0xc0] %vm54, %v53
  %s63 = scalar_lea.vmem %s0, 48
  %v64 = vld [vmem:[%s63] sm:$0xff]
  %vm65 = vcmask 7168
  %s66 = scalar_lea.vmem %s1, 768
  %67 = vst.msk [vmem:[%s66] ss:$16 sm:$0x3] %vm65, %v64
  %s68 = scalar_lea.vmem %s1, 768
  %69 = vst.msk [vmem:[%s68] ss:$16 sm:$0xc] %vm65, %v64
  %s70 = scalar_lea.vmem %s1, 768
  %71 = vst.msk [vmem:[%s70] ss:$16 sm:$0x30] %vm65, %v64
  %s72 = scalar_lea.vmem %s1, 768
  %73 = vst.msk [vmem:[%s72] ss:$16 sm:$0xc0] %vm65, %v64
  %s74 = scalar_lea.vmem %s0, 56
  %v75 = vld [vmem:[%s74] sm:$0xff]
  %vm76 = vcmask 7168
  %s77 = scalar_lea.vmem %s1, 896
  %78 = vst.msk [vmem:[%s77] ss:$16 sm:$0x3] %vm76, %v75
  %s79 = scalar_lea.vmem %s1, 896
  %80 = vst.msk [vmem:[%s79] ss:$16 sm:$0xc] %vm76, %v75
  %s81 = scalar_lea.vmem %s1, 896
  %82 = vst.msk [vmem:[%s81] ss:$16 sm:$0x30] %vm76, %v75
  %s83 = scalar_lea.vmem %s1, 896
  %84 = vst.msk [vmem:[%s83] ss:$16 sm:$0xc0] %vm76, %v75
  %v85 = vld [vmem:[%s0] sm:$0xff]
  %86 = vrot.lane.b32.xlu0 %v85, 127
  %v87 = vpop.permute.xlu0 %86
  %vm88 = vcmask 7168
  %s89 = scalar_lea.vmem %s1, 1
  %90 = vst.msk [vmem:[%s89] ss:$16 sm:$0x3] %vm88, %v87
  %s91 = scalar_lea.vmem %s1, 1
  %92 = vst.msk [vmem:[%s91] ss:$16 sm:$0xc] %vm88, %v87
  %s93 = scalar_lea.vmem %s1, 1
  %94 = vst.msk [vmem:[%s93] ss:$16 sm:$0x30] %vm88, %v87
  %s95 = scalar_lea.vmem %s1, 1
  %96 = vst.msk [vmem:[%s95] ss:$16 sm:$0xc0] %vm88, %v87
  %s97 = scalar_lea.vmem %s0, 8
  %v98 = vld [vmem:[%s97] sm:$0xff]
  %99 = vrot.lane.b32.xlu0 %v98, 127
  %v100 = vpop.permute.xlu0 %99
  %vm101 = vcmask 7168
  %s102 = scalar_lea.vmem %s1, 129
  %103 = vst.msk [vmem:[%s102] ss:$16 sm:$0x3] %vm101, %v100
  %s104 = scalar_lea.vmem %s1, 129
  %105 = vst.msk [vmem:[%s104] ss:$16 sm:$0xc] %vm101, %v100
  %s106 = scalar_lea.vmem %s1, 129
  %107 = vst.msk [vmem:[%s106] ss:$16 sm:$0x30] %vm101, %v100
  %s108 = scalar_lea.vmem %s1, 129
  %109 = vst.msk [vmem:[%s108] ss:$16 sm:$0xc0] %vm101, %v100
  %s110 = scalar_lea.vmem %s0, 16
  %v111 = vld [vmem:[%s110] sm:$0xff]
  %112 = vrot.lane.b32.xlu0 %v111, 127
  %v113 = vpop.permute.xlu0 %112
  %vm114 = vcmask 7168
  %s115 = scalar_lea.vmem %s1, 257
  %116 = vst.msk [vmem:[%s115] ss:$16 sm:$0x3] %vm114, %v113
  %s117 = scalar_lea.vmem %s1, 257
  %118 = vst.msk [vmem:[%s117] ss:$16 sm:$0xc] %vm114, %v113
  %s119 = scalar_lea.vmem %s1, 257
  %120 = vst.msk [vmem:[%s119] ss:$16 sm:$0x30] %vm114, %v113
  %s121 = scalar_lea.vmem %s1, 257
  %122 = vst.msk [vmem:[%s121] ss:$16 sm:$0xc0] %vm114, %v113
  %s123 = scalar_lea.vmem %s0, 24
  %v124 = vld [vmem:[%s123] sm:$0xff]
  %125 = vrot.lane.b32.xlu0 %v124, 127
  %v126 = vpop.permute.xlu0 %125
  %vm127 = vcmask 7168
  %s128 = scalar_lea.vmem %s1, 385
  %129 = vst.msk [vmem:[%s128] ss:$16 sm:$0x3] %vm127, %v126
  %s130 = scalar_lea.vmem %s1, 385
  %131 = vst.msk [vmem:[%s130] ss:$16 sm:$0xc] %vm127, %v126
  %s132 = scalar_lea.vmem %s1, 385
  %133 = vst.msk [vmem:[%s132] ss:$16 sm:$0x30] %vm127, %v126
  %s134 = scalar_lea.vmem %s1, 385
  %135 = vst.msk [vmem:[%s134] ss:$16 sm:$0xc0] %vm127, %v126
  %s136 = scalar_lea.vmem %s0, 32
  %v137 = vld [vmem:[%s136] sm:$0xff]
  %138 = vrot.lane.b32.xlu0 %v137, 127
  %v139 = vpop.permute.xlu0 %138
  %vm140 = vcmask 7168
  %s141 = scalar_lea.vmem %s1, 513
  %142 = vst.msk [vmem:[%s141] ss:$16 sm:$0x3] %vm140, %v139
  %s143 = scalar_lea.vmem %s1, 513
  %144 = vst.msk [vmem:[%s143] ss:$16 sm:$0xc] %vm140, %v139
  %s145 = scalar_lea.vmem %s1, 513
  %146 = vst.msk [vmem:[%s145] ss:$16 sm:$0x30] %vm140, %v139
  %s147 = scalar_lea.vmem %s1, 513
  %148 = vst.msk [vmem:[%s147] ss:$16 sm:$0xc0] %vm140, %v139
  %s149 = scalar_lea.vmem %s0, 40
  %v150 = vld [vmem:[%s149] sm:$0xff]
  %151 = vrot.lane.b32.xlu0 %v150, 127
  %v152 = vpop.permute.xlu0 %151
  %vm153 = vcmask 7168
  %s154 = scalar_lea.vmem %s1, 641
  %155 = vst.msk [vmem:[%s154] ss:$16 sm:$0x3] %vm153, %v152
  %s156 = scalar_lea.vmem %s1, 641
  %157 = vst.msk [vmem:[%s156] ss:$16 sm:$0xc] %vm153, %v152
  %s158 = scalar_lea.vmem %s1, 641
  %159 = vst.msk [vmem:[%s158] ss:$16 sm:$0x30] %vm153, %v152
  %s160 = scalar_lea.vmem %s1, 641
  %161 = vst.msk [vmem:[%s160] ss:$16 sm:$0xc0] %vm153, %v152
  %s162 = scalar_lea.vmem %s0, 48
  %v163 = vld [vmem:[%s162] sm:$0xff]
  %164 = vrot.lane.b32.xlu0 %v163, 127
  %v165 = vpop.permute.xlu0 %164
  %vm166 = vcmask 7168
  %s167 = scalar_lea.vmem %s1, 769
  %168 = vst.msk [vmem:[%s167] ss:$16 sm:$0x3] %vm166, %v165
  %s169 = scalar_lea.vmem %s1, 769
  %170 = vst.msk [vmem:[%s169] ss:$16 sm:$0xc] %vm166, %v165
  %s171 = scalar_lea.vmem %s1, 769
  %172 = vst.msk [vmem:[%s171] ss:$16 sm:$0x30] %vm166, %v165
  %s173 = scalar_lea.vmem %s1, 769
  %174 = vst.msk [vmem:[%s173] ss:$16 sm:$0xc0] %vm166, %v165
  %s175 = scalar_lea.vmem %s0, 56
  %v176 = vld [vmem:[%s175] sm:$0xff]
  %177 = vrot.lane.b32.xlu0 %v176, 127
  %v178 = vpop.permute.xlu0 %177
  %vm179 = vcmask 7168
  %s180 = scalar_lea.vmem %s1, 897
  %181 = vst.msk [vmem:[%s180] ss:$16 sm:$0x3] %vm179, %v178
  %s182 = scalar_lea.vmem %s1, 897
  %183 = vst.msk [vmem:[%s182] ss:$16 sm:$0xc] %vm179, %v178
  %s184 = scalar_lea.vmem %s1, 897
  %185 = vst.msk [vmem:[%s184] ss:$16 sm:$0x30] %vm179, %v178
  %s186 = scalar_lea.vmem %s1, 897
  %187 = vst.msk [vmem:[%s186] ss:$16 sm:$0xc0] %vm179, %v178
  %v188 = vld [vmem:[%s0] sm:$0xff]
  %189 = vrot.lane.b32.xlu0 %v188, 126
  %v190 = vpop.permute.xlu0 %189
  %vm191 = vcmask 7168
  %s192 = scalar_lea.vmem %s1, 2
  %193 = vst.msk [vmem:[%s192] ss:$16 sm:$0x3] %vm191, %v190
  %s194 = scalar_lea.vmem %s1, 2
  %195 = vst.msk [vmem:[%s194] ss:$16 sm:$0xc] %vm191, %v190
  %s196 = scalar_lea.vmem %s1, 2
  %197 = vst.msk [vmem:[%s196] ss:$16 sm:$0x30] %vm191, %v190
  %s198 = scalar_lea.vmem %s1, 2
  %199 = vst.msk [vmem:[%s198] ss:$16 sm:$0xc0] %vm191, %v190
  %s200 = scalar_lea.vmem %s0, 8
  %v201 = vld [vmem:[%s200] sm:$0xff]
  %202 = vrot.lane.b32.xlu0 %v201, 126
  %v203 = vpop.permute.xlu0 %202
  %vm204 = vcmask 7168
  %s205 = scalar_lea.vmem %s1, 130
  %206 = vst.msk [vmem:[%s205] ss:$16 sm:$0x3] %vm204, %v203
  %s207 = scalar_lea.vmem %s1, 130
  %208 = vst.msk [vmem:[%s207] ss:$16 sm:$0xc] %vm204, %v203
  %s209 = scalar_lea.vmem %s1, 130
  %210 = vst.msk [vmem:[%s209] ss:$16 sm:$0x30] %vm204, %v203
  %s211 = scalar_lea.vmem %s1, 130
  %212 = vst.msk [vmem:[%s211] ss:$16 sm:$0xc0] %vm204, %v203
  %s213 = scalar_lea.vmem %s0, 16
  %v214 = vld [vmem:[%s213] sm:$0xff]
  %215 = vrot.lane.b32.xlu0 %v214, 126
  %v216 = vpop.permute.xlu0 %215
  %vm217 = vcmask 7168
  %s218 = scalar_lea.vmem %s1, 258
  %219 = vst.msk [vmem:[%s218] ss:$16 sm:$0x3] %vm217, %v216
  %s220 = scalar_lea.vmem %s1, 258
  %221 = vst.msk [vmem:[%s220] ss:$16 sm:$0xc] %vm217, %v216
  %s222 = scalar_lea.vmem %s1, 258
  %223 = vst.msk [vmem:[%s222] ss:$16 sm:$0x30] %vm217, %v216
  %s224 = scalar_lea.vmem %s1, 258
  %225 = vst.msk [vmem:[%s224] ss:$16 sm:$0xc0] %vm217, %v216
  %s226 = scalar_lea.vmem %s0, 24
  %v227 = vld [vmem:[%s226] sm:$0xff]
  %228 = vrot.lane.b32.xlu0 %v227, 126
  %v229 = vpop.permute.xlu0 %228
  %vm230 = vcmask 7168
  %s231 = scalar_lea.vmem %s1, 386
  %232 = vst.msk [vmem:[%s231] ss:$16 sm:$0x3] %vm230, %v229
  %s233 = scalar_lea.vmem %s1, 386
  %234 = vst.msk [vmem:[%s233] ss:$16 sm:$0xc] %vm230, %v229
  %s235 = scalar_lea.vmem %s1, 386
  %236 = vst.msk [vmem:[%s235] ss:$16 sm:$0x30] %vm230, %v229
  %s237 = scalar_lea.vmem %s1, 386
  %238 = vst.msk [vmem:[%s237] ss:$16 sm:$0xc0] %vm230, %v229
  %s239 = scalar_lea.vmem %s0, 32
  %v240 = vld [vmem:[%s239] sm:$0xff]
  %241 = vrot.lane.b32.xlu0 %v240, 126
  %v242 = vpop.permute.xlu0 %241
  %vm243 = vcmask 7168
  %s244 = scalar_lea.vmem %s1, 514
  %245 = vst.msk [vmem:[%s244] ss:$16 sm:$0x3] %vm243, %v242
  %s246 = scalar_lea.vmem %s1, 514
  %247 = vst.msk [vmem:[%s246] ss:$16 sm:$0xc] %vm243, %v242
  %s248 = scalar_lea.vmem %s1, 514
  %249 = vst.msk [vmem:[%s248] ss:$16 sm:$0x30] %vm243, %v242
  %s250 = scalar_lea.vmem %s1, 514
  %251 = vst.msk [vmem:[%s250] ss:$16 sm:$0xc0] %vm243, %v242
  %s252 = scalar_lea.vmem %s0, 40
  %v253 = vld [vmem:[%s252] sm:$0xff]
  %254 = vrot.lane.b32.xlu0 %v253, 126
  %v255 = vpop.permute.xlu0 %254
  %vm256 = vcmask 7168
  %s257 = scalar_lea.vmem %s1, 642
  %258 = vst.msk [vmem:[%s257] ss:$16 sm:$0x3] %vm256, %v255
  %s259 = scalar_lea.vmem %s1, 642
  %260 = vst.msk [vmem:[%s259] ss:$16 sm:$0xc] %vm256, %v255
  %s261 = scalar_lea.vmem %s1, 642
  %262 = vst.msk [vmem:[%s261] ss:$16 sm:$0x30] %vm256, %v255
  %s263 = scalar_lea.vmem %s1, 642
  %264 = vst.msk [vmem:[%s263] ss:$16 sm:$0xc0] %vm256, %v255
  %s265 = scalar_lea.vmem %s0, 48
  %v266 = vld [vmem:[%s265] sm:$0xff]
  %267 = vrot.lane.b32.xlu0 %v266, 126
  %v268 = vpop.permute.xlu0 %267
  %vm269 = vcmask 7168
  %s270 = scalar_lea.vmem %s1, 770
  %271 = vst.msk [vmem:[%s270] ss:$16 sm:$0x3] %vm269, %v268
  %s272 = scalar_lea.vmem %s1, 770
  %273 = vst.msk [vmem:[%s272] ss:$16 sm:$0xc] %vm269, %v268
  %s274 = scalar_lea.vmem %s1, 770
  %275 = vst.msk [vmem:[%s274] ss:$16 sm:$0x30] %vm269, %v268
  %s276 = scalar_lea.vmem %s1, 770
  %277 = vst.msk [vmem:[%s276] ss:$16 sm:$0xc0] %vm269, %v268
  %s278 = scalar_lea.vmem %s0, 56
  %v279 = vld [vmem:[%s278] sm:$0xff]
  %280 = vrot.lane.b32.xlu0 %v279, 126
  %v281 = vpop.permute.xlu0 %280
  %vm282 = vcmask 7168
  %s283 = scalar_lea.vmem %s1, 898
  %284 = vst.msk [vmem:[%s283] ss:$16 sm:$0x3] %vm282, %v281
  %s285 = scalar_lea.vmem %s1, 898
  %286 = vst.msk [vmem:[%s285] ss:$16 sm:$0xc] %vm282, %v281
  %s287 = scalar_lea.vmem %s1, 898
  %288 = vst.msk [vmem:[%s287] ss:$16 sm:$0x30] %vm282, %v281
  %s289 = scalar_lea.vmem %s1, 898
  %290 = vst.msk [vmem:[%s289] ss:$16 sm:$0xc0] %vm282, %v281
  %v291 = vld [vmem:[%s0] sm:$0xff]
  %292 = vrot.lane.b32.xlu0 %v291, 125
  %v293 = vpop.permute.xlu0 %292
  %vm294 = vcmask 7168
  %s295 = scalar_lea.vmem %s1, 3
  %296 = vst.msk [vmem:[%s295] ss:$16 sm:$0x3] %vm294, %v293
  %s297 = scalar_lea.vmem %s1, 3
  %298 = vst.msk [vmem:[%s297] ss:$16 sm:$0xc] %vm294, %v293
  %s299 = scalar_lea.vmem %s1, 3
  %300 = vst.msk [vmem:[%s299] ss:$16 sm:$0x30] %vm294, %v293
  %s301 = scalar_lea.vmem %s1, 3
  %302 = vst.msk [vmem:[%s301] ss:$16 sm:$0xc0] %vm294, %v293
  %s303 = scalar_lea.vmem %s0, 8
  %v304 = vld [vmem:[%s303] sm:$0xff]
  %305 = vrot.lane.b32.xlu0 %v304, 125
  %v306 = vpop.permute.xlu0 %305
  %vm307 = vcmask 7168
  %s308 = scalar_lea.vmem %s1, 131
  %309 = vst.msk [vmem:[%s308] ss:$16 sm:$0x3] %vm307, %v306
  %s310 = scalar_lea.vmem %s1, 131
  %311 = vst.msk [vmem:[%s310] ss:$16 sm:$0xc] %vm307, %v306
  %s312 = scalar_lea.vmem %s1, 131
  %313 = vst.msk [vmem:[%s312] ss:$16 sm:$0x30] %vm307, %v306
  %s314 = scalar_lea.vmem %s1, 131
  %315 = vst.msk [vmem:[%s314] ss:$16 sm:$0xc0] %vm307, %v306
  %s316 = scalar_lea.vmem %s0, 16
  %v317 = vld [vmem:[%s316] sm:$0xff]
  %318 = vrot.lane.b32.xlu0 %v317, 125
  %v319 = vpop.permute.xlu0 %318
  %vm320 = vcmask 7168
  %s321 = scalar_lea.vmem %s1, 259
  %322 = vst.msk [vmem:[%s321] ss:$16 sm:$0x3] %vm320, %v319
  %s323 = scalar_lea.vmem %s1, 259
  %324 = vst.msk [vmem:[%s323] ss:$16 sm:$0xc] %vm320, %v319
  %s325 = scalar_lea.vmem %s1, 259
  %326 = vst.msk [vmem:[%s325] ss:$16 sm:$0x30] %vm320, %v319
  %s327 = scalar_lea.vmem %s1, 259
  %328 = vst.msk [vmem:[%s327] ss:$16 sm:$0xc0] %vm320, %v319
  %s329 = scalar_lea.vmem %s0, 24
  %v330 = vld [vmem:[%s329] sm:$0xff]
  %331 = vrot.lane.b32.xlu0 %v330, 125
  %v332 = vpop.permute.xlu0 %331
  %vm333 = vcmask 7168
  %s334 = scalar_lea.vmem %s1, 387
  %335 = vst.msk [vmem:[%s334] ss:$16 sm:$0x3] %vm333, %v332
  %s336 = scalar_lea.vmem %s1, 387
  %337 = vst.msk [vmem:[%s336] ss:$16 sm:$0xc] %vm333, %v332
  %s338 = scalar_lea.vmem %s1, 387
  %339 = vst.msk [vmem:[%s338] ss:$16 sm:$0x30] %vm333, %v332
  %s340 = scalar_lea.vmem %s1, 387
  %341 = vst.msk [vmem:[%s340] ss:$16 sm:$0xc0] %vm333, %v332
  %s342 = scalar_lea.vmem %s0, 32
  %v343 = vld [vmem:[%s342] sm:$0xff]
  %344 = vrot.lane.b32.xlu0 %v343, 125
  %v345 = vpop.permute.xlu0 %344
  %vm346 = vcmask 7168
  %s347 = scalar_lea.vmem %s1, 515
  %348 = vst.msk [vmem:[%s347] ss:$16 sm:$0x3] %vm346, %v345
  %s349 = scalar_lea.vmem %s1, 515
  %350 = vst.msk [vmem:[%s349] ss:$16 sm:$0xc] %vm346, %v345
  %s351 = scalar_lea.vmem %s1, 515
  %352 = vst.msk [vmem:[%s351] ss:$16 sm:$0x30] %vm346, %v345
  %s353 = scalar_lea.vmem %s1, 515
  %354 = vst.msk [vmem:[%s353] ss:$16 sm:$0xc0] %vm346, %v345
  %s355 = scalar_lea.vmem %s0, 40
  %v356 = vld [vmem:[%s355] sm:$0xff]
  %357 = vrot.lane.b32.xlu0 %v356, 125
  %v358 = vpop.permute.xlu0 %357
  %vm359 = vcmask 7168
  %s360 = scalar_lea.vmem %s1, 643
  %361 = vst.msk [vmem:[%s360] ss:$16 sm:$0x3] %vm359, %v358
  %s362 = scalar_lea.vmem %s1, 643
  %363 = vst.msk [vmem:[%s362] ss:$16 sm:$0xc] %vm359, %v358
  %s364 = scalar_lea.vmem %s1, 643
  %365 = vst.msk [vmem:[%s364] ss:$16 sm:$0x30] %vm359, %v358
  %s366 = scalar_lea.vmem %s1, 643
  %367 = vst.msk [vmem:[%s366] ss:$16 sm:$0xc0] %vm359, %v358
  %s368 = scalar_lea.vmem %s0, 48
  %v369 = vld [vmem:[%s368] sm:$0xff]
  %370 = vrot.lane.b32.xlu0 %v369, 125
  %v371 = vpop.permute.xlu0 %370
  %vm372 = vcmask 7168
  %s373 = scalar_lea.vmem %s1, 771
  %374 = vst.msk [vmem:[%s373] ss:$16 sm:$0x3] %vm372, %v371
  %s375 = scalar_lea.vmem %s1, 771
  %376 = vst.msk [vmem:[%s375] ss:$16 sm:$0xc] %vm372, %v371
  %s377 = scalar_lea.vmem %s1, 771
  %378 = vst.msk [vmem:[%s377] ss:$16 sm:$0x30] %vm372, %v371
  %s379 = scalar_lea.vmem %s1, 771
  %380 = vst.msk [vmem:[%s379] ss:$16 sm:$0xc0] %vm372, %v371
  %s381 = scalar_lea.vmem %s0, 56
  %v382 = vld [vmem:[%s381] sm:$0xff]
  %383 = vrot.lane.b32.xlu0 %v382, 125
  %v384 = vpop.permute.xlu0 %383
  %vm385 = vcmask 7168
  %s386 = scalar_lea.vmem %s1, 899
  %387 = vst.msk [vmem:[%s386] ss:$16 sm:$0x3] %vm385, %v384
  %s388 = scalar_lea.vmem %s1, 899
  %389 = vst.msk [vmem:[%s388] ss:$16 sm:$0xc] %vm385, %v384
  %s390 = scalar_lea.vmem %s1, 899
  %391 = vst.msk [vmem:[%s390] ss:$16 sm:$0x30] %vm385, %v384
  %s392 = scalar_lea.vmem %s1, 899
  %393 = vst.msk [vmem:[%s392] ss:$16 sm:$0xc0] %vm385, %v384
  %v394 = vld [vmem:[%s0] sm:$0xff]
  %395 = vrot.lane.b32.xlu0 %v394, 124
  %v396 = vpop.permute.xlu0 %395
  %vm397 = vcmask 7168
  %s398 = scalar_lea.vmem %s1, 4
  %399 = vst.msk [vmem:[%s398] ss:$16 sm:$0x3] %vm397, %v396
  %s400 = scalar_lea.vmem %s1, 4
  %401 = vst.msk [vmem:[%s400] ss:$16 sm:$0xc] %vm397, %v396
  %s402 = scalar_lea.vmem %s1, 4
  %403 = vst.msk [vmem:[%s402] ss:$16 sm:$0x30] %vm397, %v396
  %s404 = scalar_lea.vmem %s1, 4
  %405 = vst.msk [vmem:[%s404] ss:$16 sm:$0xc0] %vm397, %v396
  %s406 = scalar_lea.vmem %s0, 8
  %v407 = vld [vmem:[%s406] sm:$0xff]
  %408 = vrot.lane.b32.xlu0 %v407, 124
  %v409 = vpop.permute.xlu0 %408
  %vm410 = vcmask 7168
  %s411 = scalar_lea.vmem %s1, 132
  %412 = vst.msk [vmem:[%s411] ss:$16 sm:$0x3] %vm410, %v409
  %s413 = scalar_lea.vmem %s1, 132
  %414 = vst.msk [vmem:[%s413] ss:$16 sm:$0xc] %vm410, %v409
  %s415 = scalar_lea.vmem %s1, 132
  %416 = vst.msk [vmem:[%s415] ss:$16 sm:$0x30] %vm410, %v409
  %s417 = scalar_lea.vmem %s1, 132
  %418 = vst.msk [vmem:[%s417] ss:$16 sm:$0xc0] %vm410, %v409
  %s419 = scalar_lea.vmem %s0, 16
  %v420 = vld [vmem:[%s419] sm:$0xff]
  %421 = vrot.lane.b32.xlu0 %v420, 124
  %v422 = vpop.permute.xlu0 %421
  %vm423 = vcmask 7168
  %s424 = scalar_lea.vmem %s1, 260
  %425 = vst.msk [vmem:[%s424] ss:$16 sm:$0x3] %vm423, %v422
  %s426 = scalar_lea.vmem %s1, 260
  %427 = vst.msk [vmem:[%s426] ss:$16 sm:$0xc] %vm423, %v422
  %s428 = scalar_lea.vmem %s1, 260
  %429 = vst.msk [vmem:[%s428] ss:$16 sm:$0x30] %vm423, %v422
  %s430 = scalar_lea.vmem %s1, 260
  %431 = vst.msk [vmem:[%s430] ss:$16 sm:$0xc0] %vm423, %v422
  %s432 = scalar_lea.vmem %s0, 24
  %v433 = vld [vmem:[%s432] sm:$0xff]
  %434 = vrot.lane.b32.xlu0 %v433, 124
  %v435 = vpop.permute.xlu0 %434
  %vm436 = vcmask 7168
  %s437 = scalar_lea.vmem %s1, 388
  %438 = vst.msk [vmem:[%s437] ss:$16 sm:$0x3] %vm436, %v435
  %s439 = scalar_lea.vmem %s1, 388
  %440 = vst.msk [vmem:[%s439] ss:$16 sm:$0xc] %vm436, %v435
  %s441 = scalar_lea.vmem %s1, 388
  %442 = vst.msk [vmem:[%s441] ss:$16 sm:$0x30] %vm436, %v435
  %s443 = scalar_lea.vmem %s1, 388
  %444 = vst.msk [vmem:[%s443] ss:$16 sm:$0xc0] %vm436, %v435
  %s445 = scalar_lea.vmem %s0, 32
  %v446 = vld [vmem:[%s445] sm:$0xff]
  %447 = vrot.lane.b32.xlu0 %v446, 124
  %v448 = vpop.permute.xlu0 %447
  %vm449 = vcmask 7168
  %s450 = scalar_lea.vmem %s1, 516
  %451 = vst.msk [vmem:[%s450] ss:$16 sm:$0x3] %vm449, %v448
  %s452 = scalar_lea.vmem %s1, 516
  %453 = vst.msk [vmem:[%s452] ss:$16 sm:$0xc] %vm449, %v448
  %s454 = scalar_lea.vmem %s1, 516
  %455 = vst.msk [vmem:[%s454] ss:$16 sm:$0x30] %vm449, %v448
  %s456 = scalar_lea.vmem %s1, 516
  %457 = vst.msk [vmem:[%s456] ss:$16 sm:$0xc0] %vm449, %v448
  %s458 = scalar_lea.vmem %s0, 40
  %v459 = vld [vmem:[%s458] sm:$0xff]
  %460 = vrot.lane.b32.xlu0 %v459, 124
  %v461 = vpop.permute.xlu0 %460
  %vm462 = vcmask 7168
  %s463 = scalar_lea.vmem %s1, 644
  %464 = vst.msk [vmem:[%s463] ss:$16 sm:$0x3] %vm462, %v461
  %s465 = scalar_lea.vmem %s1, 644
  %466 = vst.msk [vmem:[%s465] ss:$16 sm:$0xc] %vm462, %v461
  %s467 = scalar_lea.vmem %s1, 644
  %468 = vst.msk [vmem:[%s467] ss:$16 sm:$0x30] %vm462, %v461
  %s469 = scalar_lea.vmem %s1, 644
  %470 = vst.msk [vmem:[%s469] ss:$16 sm:$0xc0] %vm462, %v461
  %s471 = scalar_lea.vmem %s0, 48
  %v472 = vld [vmem:[%s471] sm:$0xff]
  %473 = vrot.lane.b32.xlu0 %v472, 124
  %v474 = vpop.permute.xlu0 %473
  %vm475 = vcmask 7168
  %s476 = scalar_lea.vmem %s1, 772
  %477 = vst.msk [vmem:[%s476] ss:$16 sm:$0x3] %vm475, %v474
  %s478 = scalar_lea.vmem %s1, 772
  %479 = vst.msk [vmem:[%s478] ss:$16 sm:$0xc] %vm475, %v474
  %s480 = scalar_lea.vmem %s1, 772
  %481 = vst.msk [vmem:[%s480] ss:$16 sm:$0x30] %vm475, %v474
  %s482 = scalar_lea.vmem %s1, 772
  %483 = vst.msk [vmem:[%s482] ss:$16 sm:$0xc0] %vm475, %v474
  %s484 = scalar_lea.vmem %s0, 56
  %v485 = vld [vmem:[%s484] sm:$0xff]
  %486 = vrot.lane.b32.xlu0 %v485, 124
  %v487 = vpop.permute.xlu0 %486
  %vm488 = vcmask 7168
  %s489 = scalar_lea.vmem %s1, 900
  %490 = vst.msk [vmem:[%s489] ss:$16 sm:$0x3] %vm488, %v487
  %s491 = scalar_lea.vmem %s1, 900
  %492 = vst.msk [vmem:[%s491] ss:$16 sm:$0xc] %vm488, %v487
  %s493 = scalar_lea.vmem %s1, 900
  %494 = vst.msk [vmem:[%s493] ss:$16 sm:$0x30] %vm488, %v487
  %s495 = scalar_lea.vmem %s1, 900
  %496 = vst.msk [vmem:[%s495] ss:$16 sm:$0xc0] %vm488, %v487
  %v497 = vld [vmem:[%s0] sm:$0xff]
  %498 = vrot.lane.b32.xlu0 %v497, 123
  %v499 = vpop.permute.xlu0 %498
  %vm500 = vcmask 7168
  %s501 = scalar_lea.vmem %s1, 5
  %502 = vst.msk [vmem:[%s501] ss:$16 sm:$0x3] %vm500, %v499
  %s503 = scalar_lea.vmem %s1, 5
  %504 = vst.msk [vmem:[%s503] ss:$16 sm:$0xc] %vm500, %v499
  %s505 = scalar_lea.vmem %s1, 5
  %506 = vst.msk [vmem:[%s505] ss:$16 sm:$0x30] %vm500, %v499
  %s507 = scalar_lea.vmem %s1, 5
  %508 = vst.msk [vmem:[%s507] ss:$16 sm:$0xc0] %vm500, %v499
  %s509 = scalar_lea.vmem %s0, 8
  %v510 = vld [vmem:[%s509] sm:$0xff]
  %511 = vrot.lane.b32.xlu0 %v510, 123
  %v512 = vpop.permute.xlu0 %511
  %vm513 = vcmask 7168
  %s514 = scalar_lea.vmem %s1, 133
  %515 = vst.msk [vmem:[%s514] ss:$16 sm:$0x3] %vm513, %v512
  %s516 = scalar_lea.vmem %s1, 133
  %517 = vst.msk [vmem:[%s516] ss:$16 sm:$0xc] %vm513, %v512
  %s518 = scalar_lea.vmem %s1, 133
  %519 = vst.msk [vmem:[%s518] ss:$16 sm:$0x30] %vm513, %v512
  %s520 = scalar_lea.vmem %s1, 133
  %521 = vst.msk [vmem:[%s520] ss:$16 sm:$0xc0] %vm513, %v512
  %s522 = scalar_lea.vmem %s0, 16
  %v523 = vld [vmem:[%s522] sm:$0xff]
  %524 = vrot.lane.b32.xlu0 %v523, 123
  %v525 = vpop.permute.xlu0 %524
  %vm526 = vcmask 7168
  %s527 = scalar_lea.vmem %s1, 261
  %528 = vst.msk [vmem:[%s527] ss:$16 sm:$0x3] %vm526, %v525
  %s529 = scalar_lea.vmem %s1, 261
  %530 = vst.msk [vmem:[%s529] ss:$16 sm:$0xc] %vm526, %v525
  %s531 = scalar_lea.vmem %s1, 261
  %532 = vst.msk [vmem:[%s531] ss:$16 sm:$0x30] %vm526, %v525
  %s533 = scalar_lea.vmem %s1, 261
  %534 = vst.msk [vmem:[%s533] ss:$16 sm:$0xc0] %vm526, %v525
  %s535 = scalar_lea.vmem %s0, 24
  %v536 = vld [vmem:[%s535] sm:$0xff]
  %537 = vrot.lane.b32.xlu0 %v536, 123
  %v538 = vpop.permute.xlu0 %537
  %vm539 = vcmask 7168
  %s540 = scalar_lea.vmem %s1, 389
  %541 = vst.msk [vmem:[%s540] ss:$16 sm:$0x3] %vm539, %v538
  %s542 = scalar_lea.vmem %s1, 389
  %543 = vst.msk [vmem:[%s542] ss:$16 sm:$0xc] %vm539, %v538
  %s544 = scalar_lea.vmem %s1, 389
  %545 = vst.msk [vmem:[%s544] ss:$16 sm:$0x30] %vm539, %v538
  %s546 = scalar_lea.vmem %s1, 389
  %547 = vst.msk [vmem:[%s546] ss:$16 sm:$0xc0] %vm539, %v538
  %s548 = scalar_lea.vmem %s0, 32
  %v549 = vld [vmem:[%s548] sm:$0xff]
  %550 = vrot.lane.b32.xlu0 %v549, 123
  %v551 = vpop.permute.xlu0 %550
  %vm552 = vcmask 7168
  %s553 = scalar_lea.vmem %s1, 517
  %554 = vst.msk [vmem:[%s553] ss:$16 sm:$0x3] %vm552, %v551
  %s555 = scalar_lea.vmem %s1, 517
  %556 = vst.msk [vmem:[%s555] ss:$16 sm:$0xc] %vm552, %v551
  %s557 = scalar_lea.vmem %s1, 517
  %558 = vst.msk [vmem:[%s557] ss:$16 sm:$0x30] %vm552, %v551
  %s559 = scalar_lea.vmem %s1, 517
  %560 = vst.msk [vmem:[%s559] ss:$16 sm:$0xc0] %vm552, %v551
  %s561 = scalar_lea.vmem %s0, 40
  %v562 = vld [vmem:[%s561] sm:$0xff]
  %563 = vrot.lane.b32.xlu0 %v562, 123
  %v564 = vpop.permute.xlu0 %563
  %vm565 = vcmask 7168
  %s566 = scalar_lea.vmem %s1, 645
  %567 = vst.msk [vmem:[%s566] ss:$16 sm:$0x3] %vm565, %v564
  %s568 = scalar_lea.vmem %s1, 645
  %569 = vst.msk [vmem:[%s568] ss:$16 sm:$0xc] %vm565, %v564
  %s570 = scalar_lea.vmem %s1, 645
  %571 = vst.msk [vmem:[%s570] ss:$16 sm:$0x30] %vm565, %v564
  %s572 = scalar_lea.vmem %s1, 645
  %573 = vst.msk [vmem:[%s572] ss:$16 sm:$0xc0] %vm565, %v564
  %s574 = scalar_lea.vmem %s0, 48
  %v575 = vld [vmem:[%s574] sm:$0xff]
  %576 = vrot.lane.b32.xlu0 %v575, 123
  %v577 = vpop.permute.xlu0 %576
  %vm578 = vcmask 7168
  %s579 = scalar_lea.vmem %s1, 773
  %580 = vst.msk [vmem:[%s579] ss:$16 sm:$0x3] %vm578, %v577
  %s581 = scalar_lea.vmem %s1, 773
  %582 = vst.msk [vmem:[%s581] ss:$16 sm:$0xc] %vm578, %v577
  %s583 = scalar_lea.vmem %s1, 773
  %584 = vst.msk [vmem:[%s583] ss:$16 sm:$0x30] %vm578, %v577
  %s585 = scalar_lea.vmem %s1, 773
  %586 = vst.msk [vmem:[%s585] ss:$16 sm:$0xc0] %vm578, %v577
  %s587 = scalar_lea.vmem %s0, 56
  %v588 = vld [vmem:[%s587] sm:$0xff]
  %589 = vrot.lane.b32.xlu0 %v588, 123
  %v590 = vpop.permute.xlu0 %589
  %vm591 = vcmask 7168
  %s592 = scalar_lea.vmem %s1, 901
  %593 = vst.msk [vmem:[%s592] ss:$16 sm:$0x3] %vm591, %v590
  %s594 = scalar_lea.vmem %s1, 901
  %595 = vst.msk [vmem:[%s594] ss:$16 sm:$0xc] %vm591, %v590
  %s596 = scalar_lea.vmem %s1, 901
  %597 = vst.msk [vmem:[%s596] ss:$16 sm:$0x30] %vm591, %v590
  %s598 = scalar_lea.vmem %s1, 901
  %599 = vst.msk [vmem:[%s598] ss:$16 sm:$0xc0] %vm591, %v590
  %v600 = vld [vmem:[%s0] sm:$0xff]
  %601 = vrot.lane.b32.xlu0 %v600, 122
  %v602 = vpop.permute.xlu0 %601
  %vm603 = vcmask 7168
  %s604 = scalar_lea.vmem %s1, 6
  %605 = vst.msk [vmem:[%s604] ss:$16 sm:$0x3] %vm603, %v602
  %s606 = scalar_lea.vmem %s1, 6
  %607 = vst.msk [vmem:[%s606] ss:$16 sm:$0xc] %vm603, %v602
  %s608 = scalar_lea.vmem %s1, 6
  %609 = vst.msk [vmem:[%s608] ss:$16 sm:$0x30] %vm603, %v602
  %s610 = scalar_lea.vmem %s1, 6
  %611 = vst.msk [vmem:[%s610] ss:$16 sm:$0xc0] %vm603, %v602
  %s612 = scalar_lea.vmem %s0, 8
  %v613 = vld [vmem:[%s612] sm:$0xff]
  %614 = vrot.lane.b32.xlu0 %v613, 122
  %v615 = vpop.permute.xlu0 %614
  %vm616 = vcmask 7168
  %s617 = scalar_lea.vmem %s1, 134
  %618 = vst.msk [vmem:[%s617] ss:$16 sm:$0x3] %vm616, %v615
  %s619 = scalar_lea.vmem %s1, 134
  %620 = vst.msk [vmem:[%s619] ss:$16 sm:$0xc] %vm616, %v615
  %s621 = scalar_lea.vmem %s1, 134
  %622 = vst.msk [vmem:[%s621] ss:$16 sm:$0x30] %vm616, %v615
  %s623 = scalar_lea.vmem %s1, 134
  %624 = vst.msk [vmem:[%s623] ss:$16 sm:$0xc0] %vm616, %v615
  %s625 = scalar_lea.vmem %s0, 16
  %v626 = vld [vmem:[%s625] sm:$0xff]
  %627 = vrot.lane.b32.xlu0 %v626, 122
  %v628 = vpop.permute.xlu0 %627
  %vm629 = vcmask 7168
  %s630 = scalar_lea.vmem %s1, 262
  %631 = vst.msk [vmem:[%s630] ss:$16 sm:$0x3] %vm629, %v628
  %s632 = scalar_lea.vmem %s1, 262
  %633 = vst.msk [vmem:[%s632] ss:$16 sm:$0xc] %vm629, %v628
  %s634 = scalar_lea.vmem %s1, 262
  %635 = vst.msk [vmem:[%s634] ss:$16 sm:$0x30] %vm629, %v628
  %s636 = scalar_lea.vmem %s1, 262
  %637 = vst.msk [vmem:[%s636] ss:$16 sm:$0xc0] %vm629, %v628
  %s638 = scalar_lea.vmem %s0, 24
  %v639 = vld [vmem:[%s638] sm:$0xff]
  %640 = vrot.lane.b32.xlu0 %v639, 122
  %v641 = vpop.permute.xlu0 %640
  %vm642 = vcmask 7168
  %s643 = scalar_lea.vmem %s1, 390
  %644 = vst.msk [vmem:[%s643] ss:$16 sm:$0x3] %vm642, %v641
  %s645 = scalar_lea.vmem %s1, 390
  %646 = vst.msk [vmem:[%s645] ss:$16 sm:$0xc] %vm642, %v641
  %s647 = scalar_lea.vmem %s1, 390
  %648 = vst.msk [vmem:[%s647] ss:$16 sm:$0x30] %vm642, %v641
  %s649 = scalar_lea.vmem %s1, 390
  %650 = vst.msk [vmem:[%s649] ss:$16 sm:$0xc0] %vm642, %v641
  %s651 = scalar_lea.vmem %s0, 32
  %v652 = vld [vmem:[%s651] sm:$0xff]
  %653 = vrot.lane.b32.xlu0 %v652, 122
  %v654 = vpop.permute.xlu0 %653
  %vm655 = vcmask 7168
  %s656 = scalar_lea.vmem %s1, 518
  %657 = vst.msk [vmem:[%s656] ss:$16 sm:$0x3] %vm655, %v654
  %s658 = scalar_lea.vmem %s1, 518
  %659 = vst.msk [vmem:[%s658] ss:$16 sm:$0xc] %vm655, %v654
  %s660 = scalar_lea.vmem %s1, 518
  %661 = vst.msk [vmem:[%s660] ss:$16 sm:$0x30] %vm655, %v654
  %s662 = scalar_lea.vmem %s1, 518
  %663 = vst.msk [vmem:[%s662] ss:$16 sm:$0xc0] %vm655, %v654
  %s664 = scalar_lea.vmem %s0, 40
  %v665 = vld [vmem:[%s664] sm:$0xff]
  %666 = vrot.lane.b32.xlu0 %v665, 122
  %v667 = vpop.permute.xlu0 %666
  %vm668 = vcmask 7168
  %s669 = scalar_lea.vmem %s1, 646
  %670 = vst.msk [vmem:[%s669] ss:$16 sm:$0x3] %vm668, %v667
  %s671 = scalar_lea.vmem %s1, 646
  %672 = vst.msk [vmem:[%s671] ss:$16 sm:$0xc] %vm668, %v667
  %s673 = scalar_lea.vmem %s1, 646
  %674 = vst.msk [vmem:[%s673] ss:$16 sm:$0x30] %vm668, %v667
  %s675 = scalar_lea.vmem %s1, 646
  %676 = vst.msk [vmem:[%s675] ss:$16 sm:$0xc0] %vm668, %v667
  %s677 = scalar_lea.vmem %s0, 48
  %v678 = vld [vmem:[%s677] sm:$0xff]
  %679 = vrot.lane.b32.xlu0 %v678, 122
  %v680 = vpop.permute.xlu0 %679
  %vm681 = vcmask 7168
  %s682 = scalar_lea.vmem %s1, 774
  %683 = vst.msk [vmem:[%s682] ss:$16 sm:$0x3] %vm681, %v680
  %s684 = scalar_lea.vmem %s1, 774
  %685 = vst.msk [vmem:[%s684] ss:$16 sm:$0xc] %vm681, %v680
  %s686 = scalar_lea.vmem %s1, 774
  %687 = vst.msk [vmem:[%s686] ss:$16 sm:$0x30] %vm681, %v680
  %s688 = scalar_lea.vmem %s1, 774
  %689 = vst.msk [vmem:[%s688] ss:$16 sm:$0xc0] %vm681, %v680
  %s690 = scalar_lea.vmem %s0, 56
  %v691 = vld [vmem:[%s690] sm:$0xff]
  %692 = vrot.lane.b32.xlu0 %v691, 122
  %v693 = vpop.permute.xlu0 %692
  %vm694 = vcmask 7168
  %s695 = scalar_lea.vmem %s1, 902
  %696 = vst.msk [vmem:[%s695] ss:$16 sm:$0x3] %vm694, %v693
  %s697 = scalar_lea.vmem %s1, 902
  %698 = vst.msk [vmem:[%s697] ss:$16 sm:$0xc] %vm694, %v693
  %s699 = scalar_lea.vmem %s1, 902
  %700 = vst.msk [vmem:[%s699] ss:$16 sm:$0x30] %vm694, %v693
  %s701 = scalar_lea.vmem %s1, 902
  %702 = vst.msk [vmem:[%s701] ss:$16 sm:$0xc0] %vm694, %v693
  %v703 = vld [vmem:[%s0] sm:$0xff]
  %704 = vrot.lane.b32.xlu0 %v703, 121
  %v705 = vpop.permute.xlu0 %704
  %vm706 = vcmask 7168
  %s707 = scalar_lea.vmem %s1, 7
  %708 = vst.msk [vmem:[%s707] ss:$16 sm:$0x3] %vm706, %v705
  %s709 = scalar_lea.vmem %s1, 7
  %710 = vst.msk [vmem:[%s709] ss:$16 sm:$0xc] %vm706, %v705
  %s711 = scalar_lea.vmem %s1, 7
  %712 = vst.msk [vmem:[%s711] ss:$16 sm:$0x30] %vm706, %v705
  %s713 = scalar_lea.vmem %s1, 7
  %714 = vst.msk [vmem:[%s713] ss:$16 sm:$0xc0] %vm706, %v705
  %s715 = scalar_lea.vmem %s0, 8
  %v716 = vld [vmem:[%s715] sm:$0xff]
  %717 = vrot.lane.b32.xlu0 %v716, 121
  %v718 = vpop.permute.xlu0 %717
  %vm719 = vcmask 7168
  %s720 = scalar_lea.vmem %s1, 135
  %721 = vst.msk [vmem:[%s720] ss:$16 sm:$0x3] %vm719, %v718
  %s722 = scalar_lea.vmem %s1, 135
  %723 = vst.msk [vmem:[%s722] ss:$16 sm:$0xc] %vm719, %v718
  %s724 = scalar_lea.vmem %s1, 135
  %725 = vst.msk [vmem:[%s724] ss:$16 sm:$0x30] %vm719, %v718
  %s726 = scalar_lea.vmem %s1, 135
  %727 = vst.msk [vmem:[%s726] ss:$16 sm:$0xc0] %vm719, %v718
  %s728 = scalar_lea.vmem %s0, 16
  %v729 = vld [vmem:[%s728] sm:$0xff]
  %730 = vrot.lane.b32.xlu0 %v729, 121
  %v731 = vpop.permute.xlu0 %730
  %vm732 = vcmask 7168
  %s733 = scalar_lea.vmem %s1, 263
  %734 = vst.msk [vmem:[%s733] ss:$16 sm:$0x3] %vm732, %v731
  %s735 = scalar_lea.vmem %s1, 263
  %736 = vst.msk [vmem:[%s735] ss:$16 sm:$0xc] %vm732, %v731
  %s737 = scalar_lea.vmem %s1, 263
  %738 = vst.msk [vmem:[%s737] ss:$16 sm:$0x30] %vm732, %v731
  %s739 = scalar_lea.vmem %s1, 263
  %740 = vst.msk [vmem:[%s739] ss:$16 sm:$0xc0] %vm732, %v731
  %s741 = scalar_lea.vmem %s0, 24
  %v742 = vld [vmem:[%s741] sm:$0xff]
  %743 = vrot.lane.b32.xlu0 %v742, 121
  %v744 = vpop.permute.xlu0 %743
  %vm745 = vcmask 7168
  %s746 = scalar_lea.vmem %s1, 391
  %747 = vst.msk [vmem:[%s746] ss:$16 sm:$0x3] %vm745, %v744
  %s748 = scalar_lea.vmem %s1, 391
  %749 = vst.msk [vmem:[%s748] ss:$16 sm:$0xc] %vm745, %v744
  %s750 = scalar_lea.vmem %s1, 391
  %751 = vst.msk [vmem:[%s750] ss:$16 sm:$0x30] %vm745, %v744
  %s752 = scalar_lea.vmem %s1, 391
  %753 = vst.msk [vmem:[%s752] ss:$16 sm:$0xc0] %vm745, %v744
  %s754 = scalar_lea.vmem %s0, 32
  %v755 = vld [vmem:[%s754] sm:$0xff]
  %756 = vrot.lane.b32.xlu0 %v755, 121
  %v757 = vpop.permute.xlu0 %756
  %vm758 = vcmask 7168
  %s759 = scalar_lea.vmem %s1, 519
  %760 = vst.msk [vmem:[%s759] ss:$16 sm:$0x3] %vm758, %v757
  %s761 = scalar_lea.vmem %s1, 519
  %762 = vst.msk [vmem:[%s761] ss:$16 sm:$0xc] %vm758, %v757
  %s763 = scalar_lea.vmem %s1, 519
  %764 = vst.msk [vmem:[%s763] ss:$16 sm:$0x30] %vm758, %v757
  %s765 = scalar_lea.vmem %s1, 519
  %766 = vst.msk [vmem:[%s765] ss:$16 sm:$0xc0] %vm758, %v757
  %s767 = scalar_lea.vmem %s0, 40
  %v768 = vld [vmem:[%s767] sm:$0xff]
  %769 = vrot.lane.b32.xlu0 %v768, 121
  %v770 = vpop.permute.xlu0 %769
  %vm771 = vcmask 7168
  %s772 = scalar_lea.vmem %s1, 647
  %773 = vst.msk [vmem:[%s772] ss:$16 sm:$0x3] %vm771, %v770
  %s774 = scalar_lea.vmem %s1, 647
  %775 = vst.msk [vmem:[%s774] ss:$16 sm:$0xc] %vm771, %v770
  %s776 = scalar_lea.vmem %s1, 647
  %777 = vst.msk [vmem:[%s776] ss:$16 sm:$0x30] %vm771, %v770
  %s778 = scalar_lea.vmem %s1, 647
  %779 = vst.msk [vmem:[%s778] ss:$16 sm:$0xc0] %vm771, %v770
  %s780 = scalar_lea.vmem %s0, 48
  %v781 = vld [vmem:[%s780] sm:$0xff]
  %782 = vrot.lane.b32.xlu0 %v781, 121
  %v783 = vpop.permute.xlu0 %782
  %vm784 = vcmask 7168
  %s785 = scalar_lea.vmem %s1, 775
  %786 = vst.msk [vmem:[%s785] ss:$16 sm:$0x3] %vm784, %v783
  %s787 = scalar_lea.vmem %s1, 775
  %788 = vst.msk [vmem:[%s787] ss:$16 sm:$0xc] %vm784, %v783
  %s789 = scalar_lea.vmem %s1, 775
  %790 = vst.msk [vmem:[%s789] ss:$16 sm:$0x30] %vm784, %v783
  %s791 = scalar_lea.vmem %s1, 775
  %792 = vst.msk [vmem:[%s791] ss:$16 sm:$0xc0] %vm784, %v783
  %s793 = scalar_lea.vmem %s0, 56
  %v794 = vld [vmem:[%s793] sm:$0xff]
  %795 = vrot.lane.b32.xlu0 %v794, 121
  %v796 = vpop.permute.xlu0 %795
  %vm797 = vcmask 7168
  %s798 = scalar_lea.vmem %s1, 903
  %799 = vst.msk [vmem:[%s798] ss:$16 sm:$0x3] %vm797, %v796
  %s800 = scalar_lea.vmem %s1, 903
  %801 = vst.msk [vmem:[%s800] ss:$16 sm:$0xc] %vm797, %v796
  %s802 = scalar_lea.vmem %s1, 903
  %803 = vst.msk [vmem:[%s802] ss:$16 sm:$0x30] %vm797, %v796
  %s804 = scalar_lea.vmem %s1, 903
  %805 = vst.msk [vmem:[%s804] ss:$16 sm:$0xc0] %vm797, %v796
  %v806 = vld [vmem:[%s0] sm:$0xff]
  %807 = vrot.lane.b32.xlu0 %v806, 120
  %v808 = vpop.permute.xlu0 %807
  %vm809 = vcmask 7168
  %s810 = scalar_lea.vmem %s1, 8
  %811 = vst.msk [vmem:[%s810] ss:$16 sm:$0x3] %vm809, %v808
  %s812 = scalar_lea.vmem %s1, 8
  %813 = vst.msk [vmem:[%s812] ss:$16 sm:$0xc] %vm809, %v808
  %s814 = scalar_lea.vmem %s1, 8
  %815 = vst.msk [vmem:[%s814] ss:$16 sm:$0x30] %vm809, %v808
  %s816 = scalar_lea.vmem %s1, 8
  %817 = vst.msk [vmem:[%s816] ss:$16 sm:$0xc0] %vm809, %v808
  %s818 = scalar_lea.vmem %s0, 8
  %v819 = vld [vmem:[%s818] sm:$0xff]
  %820 = vrot.lane.b32.xlu0 %v819, 120
  %v821 = vpop.permute.xlu0 %820
  %vm822 = vcmask 7168
  %s823 = scalar_lea.vmem %s1, 136
  %824 = vst.msk [vmem:[%s823] ss:$16 sm:$0x3] %vm822, %v821
  %s825 = scalar_lea.vmem %s1, 136
  %826 = vst.msk [vmem:[%s825] ss:$16 sm:$0xc] %vm822, %v821
  %s827 = scalar_lea.vmem %s1, 136
  %828 = vst.msk [vmem:[%s827] ss:$16 sm:$0x30] %vm822, %v821
  %s829 = scalar_lea.vmem %s1, 136
  %830 = vst.msk [vmem:[%s829] ss:$16 sm:$0xc0] %vm822, %v821
  %s831 = scalar_lea.vmem %s0, 16
  %v832 = vld [vmem:[%s831] sm:$0xff]
  %833 = vrot.lane.b32.xlu0 %v832, 120
  %v834 = vpop.permute.xlu0 %833
  %vm835 = vcmask 7168
  %s836 = scalar_lea.vmem %s1, 264
  %837 = vst.msk [vmem:[%s836] ss:$16 sm:$0x3] %vm835, %v834
  %s838 = scalar_lea.vmem %s1, 264
  %839 = vst.msk [vmem:[%s838] ss:$16 sm:$0xc] %vm835, %v834
  %s840 = scalar_lea.vmem %s1, 264
  %841 = vst.msk [vmem:[%s840] ss:$16 sm:$0x30] %vm835, %v834
  %s842 = scalar_lea.vmem %s1, 264
  %843 = vst.msk [vmem:[%s842] ss:$16 sm:$0xc0] %vm835, %v834
  %s844 = scalar_lea.vmem %s0, 24
  %v845 = vld [vmem:[%s844] sm:$0xff]
  %846 = vrot.lane.b32.xlu0 %v845, 120
  %v847 = vpop.permute.xlu0 %846
  %vm848 = vcmask 7168
  %s849 = scalar_lea.vmem %s1, 392
  %850 = vst.msk [vmem:[%s849] ss:$16 sm:$0x3] %vm848, %v847
  %s851 = scalar_lea.vmem %s1, 392
  %852 = vst.msk [vmem:[%s851] ss:$16 sm:$0xc] %vm848, %v847
  %s853 = scalar_lea.vmem %s1, 392
  %854 = vst.msk [vmem:[%s853] ss:$16 sm:$0x30] %vm848, %v847
  %s855 = scalar_lea.vmem %s1, 392
  %856 = vst.msk [vmem:[%s855] ss:$16 sm:$0xc0] %vm848, %v847
  %s857 = scalar_lea.vmem %s0, 32
  %v858 = vld [vmem:[%s857] sm:$0xff]
  %859 = vrot.lane.b32.xlu0 %v858, 120
  %v860 = vpop.permute.xlu0 %859
  %vm861 = vcmask 7168
  %s862 = scalar_lea.vmem %s1, 520
  %863 = vst.msk [vmem:[%s862] ss:$16 sm:$0x3] %vm861, %v860
  %s864 = scalar_lea.vmem %s1, 520
  %865 = vst.msk [vmem:[%s864] ss:$16 sm:$0xc] %vm861, %v860
  %s866 = scalar_lea.vmem %s1, 520
  %867 = vst.msk [vmem:[%s866] ss:$16 sm:$0x30] %vm861, %v860
  %s868 = scalar_lea.vmem %s1, 520
  %869 = vst.msk [vmem:[%s868] ss:$16 sm:$0xc0] %vm861, %v860
  %s870 = scalar_lea.vmem %s0, 40
  %v871 = vld [vmem:[%s870] sm:$0xff]
  %872 = vrot.lane.b32.xlu0 %v871, 120
  %v873 = vpop.permute.xlu0 %872
  %vm874 = vcmask 7168
  %s875 = scalar_lea.vmem %s1, 648
  %876 = vst.msk [vmem:[%s875] ss:$16 sm:$0x3] %vm874, %v873
  %s877 = scalar_lea.vmem %s1, 648
  %878 = vst.msk [vmem:[%s877] ss:$16 sm:$0xc] %vm874, %v873
  %s879 = scalar_lea.vmem %s1, 648
  %880 = vst.msk [vmem:[%s879] ss:$16 sm:$0x30] %vm874, %v873
  %s881 = scalar_lea.vmem %s1, 648
  %882 = vst.msk [vmem:[%s881] ss:$16 sm:$0xc0] %vm874, %v873
  %s883 = scalar_lea.vmem %s0, 48
  %v884 = vld [vmem:[%s883] sm:$0xff]
  %885 = vrot.lane.b32.xlu0 %v884, 120
  %v886 = vpop.permute.xlu0 %885
  %vm887 = vcmask 7168
  %s888 = scalar_lea.vmem %s1, 776
  %889 = vst.msk [vmem:[%s888] ss:$16 sm:$0x3] %vm887, %v886
  %s890 = scalar_lea.vmem %s1, 776
  %891 = vst.msk [vmem:[%s890] ss:$16 sm:$0xc] %vm887, %v886
  %s892 = scalar_lea.vmem %s1, 776
  %893 = vst.msk [vmem:[%s892] ss:$16 sm:$0x30] %vm887, %v886
  %s894 = scalar_lea.vmem %s1, 776
  %895 = vst.msk [vmem:[%s894] ss:$16 sm:$0xc0] %vm887, %v886
  %s896 = scalar_lea.vmem %s0, 56
  %v897 = vld [vmem:[%s896] sm:$0xff]
  %898 = vrot.lane.b32.xlu0 %v897, 120
  %v899 = vpop.permute.xlu0 %898
  %vm900 = vcmask 7168
  %s901 = scalar_lea.vmem %s1, 904
  %902 = vst.msk [vmem:[%s901] ss:$16 sm:$0x3] %vm900, %v899
  %s903 = scalar_lea.vmem %s1, 904
  %904 = vst.msk [vmem:[%s903] ss:$16 sm:$0xc] %vm900, %v899
  %s905 = scalar_lea.vmem %s1, 904
  %906 = vst.msk [vmem:[%s905] ss:$16 sm:$0x30] %vm900, %v899
  %s907 = scalar_lea.vmem %s1, 904
  %908 = vst.msk [vmem:[%s907] ss:$16 sm:$0xc0] %vm900, %v899
  %v909 = vld [vmem:[%s0] sm:$0xff]
  %910 = vrot.lane.b32.xlu0 %v909, 119
  %v911 = vpop.permute.xlu0 %910
  %vm912 = vcmask 7168
  %s913 = scalar_lea.vmem %s1, 9
  %914 = vst.msk [vmem:[%s913] ss:$16 sm:$0x3] %vm912, %v911
  %s915 = scalar_lea.vmem %s1, 9
  %916 = vst.msk [vmem:[%s915] ss:$16 sm:$0xc] %vm912, %v911
  %s917 = scalar_lea.vmem %s1, 9
  %918 = vst.msk [vmem:[%s917] ss:$16 sm:$0x30] %vm912, %v911
  %s919 = scalar_lea.vmem %s1, 9
  %920 = vst.msk [vmem:[%s919] ss:$16 sm:$0xc0] %vm912, %v911
  %s921 = scalar_lea.vmem %s0, 8
  %v922 = vld [vmem:[%s921] sm:$0xff]
  %923 = vrot.lane.b32.xlu0 %v922, 119
  %v924 = vpop.permute.xlu0 %923
  %vm925 = vcmask 7168
  %s926 = scalar_lea.vmem %s1, 137
  %927 = vst.msk [vmem:[%s926] ss:$16 sm:$0x3] %vm925, %v924
  %s928 = scalar_lea.vmem %s1, 137
  %929 = vst.msk [vmem:[%s928] ss:$16 sm:$0xc] %vm925, %v924
  %s930 = scalar_lea.vmem %s1, 137
  %931 = vst.msk [vmem:[%s930] ss:$16 sm:$0x30] %vm925, %v924
  %s932 = scalar_lea.vmem %s1, 137
  %933 = vst.msk [vmem:[%s932] ss:$16 sm:$0xc0] %vm925, %v924
  %s934 = scalar_lea.vmem %s0, 16
  %v935 = vld [vmem:[%s934] sm:$0xff]
  %936 = vrot.lane.b32.xlu0 %v935, 119
  %v937 = vpop.permute.xlu0 %936
  %vm938 = vcmask 7168
  %s939 = scalar_lea.vmem %s1, 265
  %940 = vst.msk [vmem:[%s939] ss:$16 sm:$0x3] %vm938, %v937
  %s941 = scalar_lea.vmem %s1, 265
  %942 = vst.msk [vmem:[%s941] ss:$16 sm:$0xc] %vm938, %v937
  %s943 = scalar_lea.vmem %s1, 265
  %944 = vst.msk [vmem:[%s943] ss:$16 sm:$0x30] %vm938, %v937
  %s945 = scalar_lea.vmem %s1, 265
  %946 = vst.msk [vmem:[%s945] ss:$16 sm:$0xc0] %vm938, %v937
  %s947 = scalar_lea.vmem %s0, 24
  %v948 = vld [vmem:[%s947] sm:$0xff]
  %949 = vrot.lane.b32.xlu0 %v948, 119
  %v950 = vpop.permute.xlu0 %949
  %vm951 = vcmask 7168
  %s952 = scalar_lea.vmem %s1, 393
  %953 = vst.msk [vmem:[%s952] ss:$16 sm:$0x3] %vm951, %v950
  %s954 = scalar_lea.vmem %s1, 393
  %955 = vst.msk [vmem:[%s954] ss:$16 sm:$0xc] %vm951, %v950
  %s956 = scalar_lea.vmem %s1, 393
  %957 = vst.msk [vmem:[%s956] ss:$16 sm:$0x30] %vm951, %v950
  %s958 = scalar_lea.vmem %s1, 393
  %959 = vst.msk [vmem:[%s958] ss:$16 sm:$0xc0] %vm951, %v950
  %s960 = scalar_lea.vmem %s0, 32
  %v961 = vld [vmem:[%s960] sm:$0xff]
  %962 = vrot.lane.b32.xlu0 %v961, 119
  %v963 = vpop.permute.xlu0 %962
  %vm964 = vcmask 7168
  %s965 = scalar_lea.vmem %s1, 521
  %966 = vst.msk [vmem:[%s965] ss:$16 sm:$0x3] %vm964, %v963
  %s967 = scalar_lea.vmem %s1, 521
  %968 = vst.msk [vmem:[%s967] ss:$16 sm:$0xc] %vm964, %v963
  %s969 = scalar_lea.vmem %s1, 521
  %970 = vst.msk [vmem:[%s969] ss:$16 sm:$0x30] %vm964, %v963
  %s971 = scalar_lea.vmem %s1, 521
  %972 = vst.msk [vmem:[%s971] ss:$16 sm:$0xc0] %vm964, %v963
  %s973 = scalar_lea.vmem %s0, 40
  %v974 = vld [vmem:[%s973] sm:$0xff]
  %975 = vrot.lane.b32.xlu0 %v974, 119
  %v976 = vpop.permute.xlu0 %975
  %vm977 = vcmask 7168
  %s978 = scalar_lea.vmem %s1, 649
  %979 = vst.msk [vmem:[%s978] ss:$16 sm:$0x3] %vm977, %v976
  %s980 = scalar_lea.vmem %s1, 649
  %981 = vst.msk [vmem:[%s980] ss:$16 sm:$0xc] %vm977, %v976
  %s982 = scalar_lea.vmem %s1, 649
  %983 = vst.msk [vmem:[%s982] ss:$16 sm:$0x30] %vm977, %v976
  %s984 = scalar_lea.vmem %s1, 649
  %985 = vst.msk [vmem:[%s984] ss:$16 sm:$0xc0] %vm977, %v976
  %s986 = scalar_lea.vmem %s0, 48
  %v987 = vld [vmem:[%s986] sm:$0xff]
  %988 = vrot.lane.b32.xlu0 %v987, 119
  %v989 = vpop.permute.xlu0 %988
  %vm990 = vcmask 7168
  %s991 = scalar_lea.vmem %s1, 777
  %992 = vst.msk [vmem:[%s991] ss:$16 sm:$0x3] %vm990, %v989
  %s993 = scalar_lea.vmem %s1, 777
  %994 = vst.msk [vmem:[%s993] ss:$16 sm:$0xc] %vm990, %v989
  %s995 = scalar_lea.vmem %s1, 777
  %996 = vst.msk [vmem:[%s995] ss:$16 sm:$0x30] %vm990, %v989
  %s997 = scalar_lea.vmem %s1, 777
  %998 = vst.msk [vmem:[%s997] ss:$16 sm:$0xc0] %vm990, %v989
  %s999 = scalar_lea.vmem %s0, 56
  %v1000 = vld [vmem:[%s999] sm:$0xff]
  %1001 = vrot.lane.b32.xlu0 %v1000, 119
  %v1002 = vpop.permute.xlu0 %1001
  %vm1003 = vcmask 7168
  %s1004 = scalar_lea.vmem %s1, 905
  %1005 = vst.msk [vmem:[%s1004] ss:$16 sm:$0x3] %vm1003, %v1002
  %s1006 = scalar_lea.vmem %s1, 905
  %1007 = vst.msk [vmem:[%s1006] ss:$16 sm:$0xc] %vm1003, %v1002
  %s1008 = scalar_lea.vmem %s1, 905
  %1009 = vst.msk [vmem:[%s1008] ss:$16 sm:$0x30] %vm1003, %v1002
  %s1010 = scalar_lea.vmem %s1, 905
  %1011 = vst.msk [vmem:[%s1010] ss:$16 sm:$0xc0] %vm1003, %v1002
  %v1012 = vld [vmem:[%s0] sm:$0xff]
  %1013 = vrot.lane.b32.xlu0 %v1012, 118
  %v1014 = vpop.permute.xlu0 %1013
  %vm1015 = vcmask 7168
  %s1016 = scalar_lea.vmem %s1, 10
  %1017 = vst.msk [vmem:[%s1016] ss:$16 sm:$0x3] %vm1015, %v1014
  %s1018 = scalar_lea.vmem %s1, 10
  %1019 = vst.msk [vmem:[%s1018] ss:$16 sm:$0xc] %vm1015, %v1014
  %s1020 = scalar_lea.vmem %s1, 10
  %1021 = vst.msk [vmem:[%s1020] ss:$16 sm:$0x30] %vm1015, %v1014
  %s1022 = scalar_lea.vmem %s1, 10
  %1023 = vst.msk [vmem:[%s1022] ss:$16 sm:$0xc0] %vm1015, %v1014
  %s1024 = scalar_lea.vmem %s0, 8
  %v1025 = vld [vmem:[%s1024] sm:$0xff]
  %1026 = vrot.lane.b32.xlu0 %v1025, 118
  %v1027 = vpop.permute.xlu0 %1026
  %vm1028 = vcmask 7168
  %s1029 = scalar_lea.vmem %s1, 138
  %1030 = vst.msk [vmem:[%s1029] ss:$16 sm:$0x3] %vm1028, %v1027
  %s1031 = scalar_lea.vmem %s1, 138
  %1032 = vst.msk [vmem:[%s1031] ss:$16 sm:$0xc] %vm1028, %v1027
  %s1033 = scalar_lea.vmem %s1, 138
  %1034 = vst.msk [vmem:[%s1033] ss:$16 sm:$0x30] %vm1028, %v1027
  %s1035 = scalar_lea.vmem %s1, 138
  %1036 = vst.msk [vmem:[%s1035] ss:$16 sm:$0xc0] %vm1028, %v1027
  %s1037 = scalar_lea.vmem %s0, 16
  %v1038 = vld [vmem:[%s1037] sm:$0xff]
  %1039 = vrot.lane.b32.xlu0 %v1038, 118
  %v1040 = vpop.permute.xlu0 %1039
  %vm1041 = vcmask 7168
  %s1042 = scalar_lea.vmem %s1, 266
  %1043 = vst.msk [vmem:[%s1042] ss:$16 sm:$0x3] %vm1041, %v1040
  %s1044 = scalar_lea.vmem %s1, 266
  %1045 = vst.msk [vmem:[%s1044] ss:$16 sm:$0xc] %vm1041, %v1040
  %s1046 = scalar_lea.vmem %s1, 266
  %1047 = vst.msk [vmem:[%s1046] ss:$16 sm:$0x30] %vm1041, %v1040
  %s1048 = scalar_lea.vmem %s1, 266
  %1049 = vst.msk [vmem:[%s1048] ss:$16 sm:$0xc0] %vm1041, %v1040
  %s1050 = scalar_lea.vmem %s0, 24
  %v1051 = vld [vmem:[%s1050] sm:$0xff]
  %1052 = vrot.lane.b32.xlu0 %v1051, 118
  %v1053 = vpop.permute.xlu0 %1052
  %vm1054 = vcmask 7168
  %s1055 = scalar_lea.vmem %s1, 394
  %1056 = vst.msk [vmem:[%s1055] ss:$16 sm:$0x3] %vm1054, %v1053
  %s1057 = scalar_lea.vmem %s1, 394
  %1058 = vst.msk [vmem:[%s1057] ss:$16 sm:$0xc] %vm1054, %v1053
  %s1059 = scalar_lea.vmem %s1, 394
  %1060 = vst.msk [vmem:[%s1059] ss:$16 sm:$0x30] %vm1054, %v1053
  %s1061 = scalar_lea.vmem %s1, 394
  %1062 = vst.msk [vmem:[%s1061] ss:$16 sm:$0xc0] %vm1054, %v1053
  %s1063 = scalar_lea.vmem %s0, 32
  %v1064 = vld [vmem:[%s1063] sm:$0xff]
  %1065 = vrot.lane.b32.xlu0 %v1064, 118
  %v1066 = vpop.permute.xlu0 %1065
  %vm1067 = vcmask 7168
  %s1068 = scalar_lea.vmem %s1, 522
  %1069 = vst.msk [vmem:[%s1068] ss:$16 sm:$0x3] %vm1067, %v1066
  %s1070 = scalar_lea.vmem %s1, 522
  %1071 = vst.msk [vmem:[%s1070] ss:$16 sm:$0xc] %vm1067, %v1066
  %s1072 = scalar_lea.vmem %s1, 522
  %1073 = vst.msk [vmem:[%s1072] ss:$16 sm:$0x30] %vm1067, %v1066
  %s1074 = scalar_lea.vmem %s1, 522
  %1075 = vst.msk [vmem:[%s1074] ss:$16 sm:$0xc0] %vm1067, %v1066
  %s1076 = scalar_lea.vmem %s0, 40
  %v1077 = vld [vmem:[%s1076] sm:$0xff]
  %1078 = vrot.lane.b32.xlu0 %v1077, 118
  %v1079 = vpop.permute.xlu0 %1078
  %vm1080 = vcmask 7168
  %s1081 = scalar_lea.vmem %s1, 650
  %1082 = vst.msk [vmem:[%s1081] ss:$16 sm:$0x3] %vm1080, %v1079
  %s1083 = scalar_lea.vmem %s1, 650
  %1084 = vst.msk [vmem:[%s1083] ss:$16 sm:$0xc] %vm1080, %v1079
  %s1085 = scalar_lea.vmem %s1, 650
  %1086 = vst.msk [vmem:[%s1085] ss:$16 sm:$0x30] %vm1080, %v1079
  %s1087 = scalar_lea.vmem %s1, 650
  %1088 = vst.msk [vmem:[%s1087] ss:$16 sm:$0xc0] %vm1080, %v1079
  %s1089 = scalar_lea.vmem %s0, 48
  %v1090 = vld [vmem:[%s1089] sm:$0xff]
  %1091 = vrot.lane.b32.xlu0 %v1090, 118
  %v1092 = vpop.permute.xlu0 %1091
  %vm1093 = vcmask 7168
  %s1094 = scalar_lea.vmem %s1, 778
  %1095 = vst.msk [vmem:[%s1094] ss:$16 sm:$0x3] %vm1093, %v1092
  %s1096 = scalar_lea.vmem %s1, 778
  %1097 = vst.msk [vmem:[%s1096] ss:$16 sm:$0xc] %vm1093, %v1092
  %s1098 = scalar_lea.vmem %s1, 778
  %1099 = vst.msk [vmem:[%s1098] ss:$16 sm:$0x30] %vm1093, %v1092
  %s1100 = scalar_lea.vmem %s1, 778
  %1101 = vst.msk [vmem:[%s1100] ss:$16 sm:$0xc0] %vm1093, %v1092
  %s1102 = scalar_lea.vmem %s0, 56
  %v1103 = vld [vmem:[%s1102] sm:$0xff]
  %1104 = vrot.lane.b32.xlu0 %v1103, 118
  %v1105 = vpop.permute.xlu0 %1104
  %vm1106 = vcmask 7168
  %s1107 = scalar_lea.vmem %s1, 906
  %1108 = vst.msk [vmem:[%s1107] ss:$16 sm:$0x3] %vm1106, %v1105
  %s1109 = scalar_lea.vmem %s1, 906
  %1110 = vst.msk [vmem:[%s1109] ss:$16 sm:$0xc] %vm1106, %v1105
  %s1111 = scalar_lea.vmem %s1, 906
  %1112 = vst.msk [vmem:[%s1111] ss:$16 sm:$0x30] %vm1106, %v1105
  %s1113 = scalar_lea.vmem %s1, 906
  %1114 = vst.msk [vmem:[%s1113] ss:$16 sm:$0xc0] %vm1106, %v1105
  %v1115 = vld [vmem:[%s0] sm:$0xff]
  %1116 = vrot.lane.b32.xlu0 %v1115, 117
  %v1117 = vpop.permute.xlu0 %1116
  %vm1118 = vcmask 7168
  %s1119 = scalar_lea.vmem %s1, 11
  %1120 = vst.msk [vmem:[%s1119] ss:$16 sm:$0x3] %vm1118, %v1117
  %s1121 = scalar_lea.vmem %s1, 11
  %1122 = vst.msk [vmem:[%s1121] ss:$16 sm:$0xc] %vm1118, %v1117
  %s1123 = scalar_lea.vmem %s1, 11
  %1124 = vst.msk [vmem:[%s1123] ss:$16 sm:$0x30] %vm1118, %v1117
  %s1125 = scalar_lea.vmem %s1, 11
  %1126 = vst.msk [vmem:[%s1125] ss:$16 sm:$0xc0] %vm1118, %v1117
  %s1127 = scalar_lea.vmem %s0, 8
  %v1128 = vld [vmem:[%s1127] sm:$0xff]
  %1129 = vrot.lane.b32.xlu0 %v1128, 117
  %v1130 = vpop.permute.xlu0 %1129
  %vm1131 = vcmask 7168
  %s1132 = scalar_lea.vmem %s1, 139
  %1133 = vst.msk [vmem:[%s1132] ss:$16 sm:$0x3] %vm1131, %v1130
  %s1134 = scalar_lea.vmem %s1, 139
  %1135 = vst.msk [vmem:[%s1134] ss:$16 sm:$0xc] %vm1131, %v1130
  %s1136 = scalar_lea.vmem %s1, 139
  %1137 = vst.msk [vmem:[%s1136] ss:$16 sm:$0x30] %vm1131, %v1130
  %s1138 = scalar_lea.vmem %s1, 139
  %1139 = vst.msk [vmem:[%s1138] ss:$16 sm:$0xc0] %vm1131, %v1130
  %s1140 = scalar_lea.vmem %s0, 16
  %v1141 = vld [vmem:[%s1140] sm:$0xff]
  %1142 = vrot.lane.b32.xlu0 %v1141, 117
  %v1143 = vpop.permute.xlu0 %1142
  %vm1144 = vcmask 7168
  %s1145 = scalar_lea.vmem %s1, 267
  %1146 = vst.msk [vmem:[%s1145] ss:$16 sm:$0x3] %vm1144, %v1143
  %s1147 = scalar_lea.vmem %s1, 267
  %1148 = vst.msk [vmem:[%s1147] ss:$16 sm:$0xc] %vm1144, %v1143
  %s1149 = scalar_lea.vmem %s1, 267
  %1150 = vst.msk [vmem:[%s1149] ss:$16 sm:$0x30] %vm1144, %v1143
  %s1151 = scalar_lea.vmem %s1, 267
  %1152 = vst.msk [vmem:[%s1151] ss:$16 sm:$0xc0] %vm1144, %v1143
  %s1153 = scalar_lea.vmem %s0, 24
  %v1154 = vld [vmem:[%s1153] sm:$0xff]
  %1155 = vrot.lane.b32.xlu0 %v1154, 117
  %v1156 = vpop.permute.xlu0 %1155
  %vm1157 = vcmask 7168
  %s1158 = scalar_lea.vmem %s1, 395
  %1159 = vst.msk [vmem:[%s1158] ss:$16 sm:$0x3] %vm1157, %v1156
  %s1160 = scalar_lea.vmem %s1, 395
  %1161 = vst.msk [vmem:[%s1160] ss:$16 sm:$0xc] %vm1157, %v1156
  %s1162 = scalar_lea.vmem %s1, 395
  %1163 = vst.msk [vmem:[%s1162] ss:$16 sm:$0x30] %vm1157, %v1156
  %s1164 = scalar_lea.vmem %s1, 395
  %1165 = vst.msk [vmem:[%s1164] ss:$16 sm:$0xc0] %vm1157, %v1156
  %s1166 = scalar_lea.vmem %s0, 32
  %v1167 = vld [vmem:[%s1166] sm:$0xff]
  %1168 = vrot.lane.b32.xlu0 %v1167, 117
  %v1169 = vpop.permute.xlu0 %1168
  %vm1170 = vcmask 7168
  %s1171 = scalar_lea.vmem %s1, 523
  %1172 = vst.msk [vmem:[%s1171] ss:$16 sm:$0x3] %vm1170, %v1169
  %s1173 = scalar_lea.vmem %s1, 523
  %1174 = vst.msk [vmem:[%s1173] ss:$16 sm:$0xc] %vm1170, %v1169
  %s1175 = scalar_lea.vmem %s1, 523
  %1176 = vst.msk [vmem:[%s1175] ss:$16 sm:$0x30] %vm1170, %v1169
  %s1177 = scalar_lea.vmem %s1, 523
  %1178 = vst.msk [vmem:[%s1177] ss:$16 sm:$0xc0] %vm1170, %v1169
  %s1179 = scalar_lea.vmem %s0, 40
  %v1180 = vld [vmem:[%s1179] sm:$0xff]
  %1181 = vrot.lane.b32.xlu0 %v1180, 117
  %v1182 = vpop.permute.xlu0 %1181
  %vm1183 = vcmask 7168
  %s1184 = scalar_lea.vmem %s1, 651
  %1185 = vst.msk [vmem:[%s1184] ss:$16 sm:$0x3] %vm1183, %v1182
  %s1186 = scalar_lea.vmem %s1, 651
  %1187 = vst.msk [vmem:[%s1186] ss:$16 sm:$0xc] %vm1183, %v1182
  %s1188 = scalar_lea.vmem %s1, 651
  %1189 = vst.msk [vmem:[%s1188] ss:$16 sm:$0x30] %vm1183, %v1182
  %s1190 = scalar_lea.vmem %s1, 651
  %1191 = vst.msk [vmem:[%s1190] ss:$16 sm:$0xc0] %vm1183, %v1182
  %s1192 = scalar_lea.vmem %s0, 48
  %v1193 = vld [vmem:[%s1192] sm:$0xff]
  %1194 = vrot.lane.b32.xlu0 %v1193, 117
  %v1195 = vpop.permute.xlu0 %1194
  %vm1196 = vcmask 7168
  %s1197 = scalar_lea.vmem %s1, 779
  %1198 = vst.msk [vmem:[%s1197] ss:$16 sm:$0x3] %vm1196, %v1195
  %s1199 = scalar_lea.vmem %s1, 779
  %1200 = vst.msk [vmem:[%s1199] ss:$16 sm:$0xc] %vm1196, %v1195
  %s1201 = scalar_lea.vmem %s1, 779
  %1202 = vst.msk [vmem:[%s1201] ss:$16 sm:$0x30] %vm1196, %v1195
  %s1203 = scalar_lea.vmem %s1, 779
  %1204 = vst.msk [vmem:[%s1203] ss:$16 sm:$0xc0] %vm1196, %v1195
  %s1205 = scalar_lea.vmem %s0, 56
  %v1206 = vld [vmem:[%s1205] sm:$0xff]
  %1207 = vrot.lane.b32.xlu0 %v1206, 117
  %v1208 = vpop.permute.xlu0 %1207
  %vm1209 = vcmask 7168
  %s1210 = scalar_lea.vmem %s1, 907
  %1211 = vst.msk [vmem:[%s1210] ss:$16 sm:$0x3] %vm1209, %v1208
  %s1212 = scalar_lea.vmem %s1, 907
  %1213 = vst.msk [vmem:[%s1212] ss:$16 sm:$0xc] %vm1209, %v1208
  %s1214 = scalar_lea.vmem %s1, 907
  %1215 = vst.msk [vmem:[%s1214] ss:$16 sm:$0x30] %vm1209, %v1208
  %s1216 = scalar_lea.vmem %s1, 907
  %1217 = vst.msk [vmem:[%s1216] ss:$16 sm:$0xc0] %vm1209, %v1208
  %v1218 = vld [vmem:[%s0] sm:$0xff]
  %1219 = vrot.lane.b32.xlu0 %v1218, 116
  %v1220 = vpop.permute.xlu0 %1219
  %vm1221 = vcmask 7168
  %s1222 = scalar_lea.vmem %s1, 12
  %1223 = vst.msk [vmem:[%s1222] ss:$16 sm:$0x3] %vm1221, %v1220
  %s1224 = scalar_lea.vmem %s1, 12
  %1225 = vst.msk [vmem:[%s1224] ss:$16 sm:$0xc] %vm1221, %v1220
  %s1226 = scalar_lea.vmem %s1, 12
  %1227 = vst.msk [vmem:[%s1226] ss:$16 sm:$0x30] %vm1221, %v1220
  %s1228 = scalar_lea.vmem %s1, 12
  %1229 = vst.msk [vmem:[%s1228] ss:$16 sm:$0xc0] %vm1221, %v1220
  %s1230 = scalar_lea.vmem %s0, 8
  %v1231 = vld [vmem:[%s1230] sm:$0xff]
  %1232 = vrot.lane.b32.xlu0 %v1231, 116
  %v1233 = vpop.permute.xlu0 %1232
  %vm1234 = vcmask 7168
  %s1235 = scalar_lea.vmem %s1, 140
  %1236 = vst.msk [vmem:[%s1235] ss:$16 sm:$0x3] %vm1234, %v1233
  %s1237 = scalar_lea.vmem %s1, 140
  %1238 = vst.msk [vmem:[%s1237] ss:$16 sm:$0xc] %vm1234, %v1233
  %s1239 = scalar_lea.vmem %s1, 140
  %1240 = vst.msk [vmem:[%s1239] ss:$16 sm:$0x30] %vm1234, %v1233
  %s1241 = scalar_lea.vmem %s1, 140
  %1242 = vst.msk [vmem:[%s1241] ss:$16 sm:$0xc0] %vm1234, %v1233
  %s1243 = scalar_lea.vmem %s0, 16
  %v1244 = vld [vmem:[%s1243] sm:$0xff]
  %1245 = vrot.lane.b32.xlu0 %v1244, 116
  %v1246 = vpop.permute.xlu0 %1245
  %vm1247 = vcmask 7168
  %s1248 = scalar_lea.vmem %s1, 268
  %1249 = vst.msk [vmem:[%s1248] ss:$16 sm:$0x3] %vm1247, %v1246
  %s1250 = scalar_lea.vmem %s1, 268
  %1251 = vst.msk [vmem:[%s1250] ss:$16 sm:$0xc] %vm1247, %v1246
  %s1252 = scalar_lea.vmem %s1, 268
  %1253 = vst.msk [vmem:[%s1252] ss:$16 sm:$0x30] %vm1247, %v1246
  %s1254 = scalar_lea.vmem %s1, 268
  %1255 = vst.msk [vmem:[%s1254] ss:$16 sm:$0xc0] %vm1247, %v1246
  %s1256 = scalar_lea.vmem %s0, 24
  %v1257 = vld [vmem:[%s1256] sm:$0xff]
  %1258 = vrot.lane.b32.xlu0 %v1257, 116
  %v1259 = vpop.permute.xlu0 %1258
  %vm1260 = vcmask 7168
  %s1261 = scalar_lea.vmem %s1, 396
  %1262 = vst.msk [vmem:[%s1261] ss:$16 sm:$0x3] %vm1260, %v1259
  %s1263 = scalar_lea.vmem %s1, 396
  %1264 = vst.msk [vmem:[%s1263] ss:$16 sm:$0xc] %vm1260, %v1259
  %s1265 = scalar_lea.vmem %s1, 396
  %1266 = vst.msk [vmem:[%s1265] ss:$16 sm:$0x30] %vm1260, %v1259
  %s1267 = scalar_lea.vmem %s1, 396
  %1268 = vst.msk [vmem:[%s1267] ss:$16 sm:$0xc0] %vm1260, %v1259
  %s1269 = scalar_lea.vmem %s0, 32
  %v1270 = vld [vmem:[%s1269] sm:$0xff]
  %1271 = vrot.lane.b32.xlu0 %v1270, 116
  %v1272 = vpop.permute.xlu0 %1271
  %vm1273 = vcmask 7168
  %s1274 = scalar_lea.vmem %s1, 524
  %1275 = vst.msk [vmem:[%s1274] ss:$16 sm:$0x3] %vm1273, %v1272
  %s1276 = scalar_lea.vmem %s1, 524
  %1277 = vst.msk [vmem:[%s1276] ss:$16 sm:$0xc] %vm1273, %v1272
  %s1278 = scalar_lea.vmem %s1, 524
  %1279 = vst.msk [vmem:[%s1278] ss:$16 sm:$0x30] %vm1273, %v1272
  %s1280 = scalar_lea.vmem %s1, 524
  %1281 = vst.msk [vmem:[%s1280] ss:$16 sm:$0xc0] %vm1273, %v1272
  %s1282 = scalar_lea.vmem %s0, 40
  %v1283 = vld [vmem:[%s1282] sm:$0xff]
  %1284 = vrot.lane.b32.xlu0 %v1283, 116
  %v1285 = vpop.permute.xlu0 %1284
  %vm1286 = vcmask 7168
  %s1287 = scalar_lea.vmem %s1, 652
  %1288 = vst.msk [vmem:[%s1287] ss:$16 sm:$0x3] %vm1286, %v1285
  %s1289 = scalar_lea.vmem %s1, 652
  %1290 = vst.msk [vmem:[%s1289] ss:$16 sm:$0xc] %vm1286, %v1285
  %s1291 = scalar_lea.vmem %s1, 652
  %1292 = vst.msk [vmem:[%s1291] ss:$16 sm:$0x30] %vm1286, %v1285
  %s1293 = scalar_lea.vmem %s1, 652
  %1294 = vst.msk [vmem:[%s1293] ss:$16 sm:$0xc0] %vm1286, %v1285
  %s1295 = scalar_lea.vmem %s0, 48
  %v1296 = vld [vmem:[%s1295] sm:$0xff]
  %1297 = vrot.lane.b32.xlu0 %v1296, 116
  %v1298 = vpop.permute.xlu0 %1297
  %vm1299 = vcmask 7168
  %s1300 = scalar_lea.vmem %s1, 780
  %1301 = vst.msk [vmem:[%s1300] ss:$16 sm:$0x3] %vm1299, %v1298
  %s1302 = scalar_lea.vmem %s1, 780
  %1303 = vst.msk [vmem:[%s1302] ss:$16 sm:$0xc] %vm1299, %v1298
  %s1304 = scalar_lea.vmem %s1, 780
  %1305 = vst.msk [vmem:[%s1304] ss:$16 sm:$0x30] %vm1299, %v1298
  %s1306 = scalar_lea.vmem %s1, 780
  %1307 = vst.msk [vmem:[%s1306] ss:$16 sm:$0xc0] %vm1299, %v1298
  %s1308 = scalar_lea.vmem %s0, 56
  %v1309 = vld [vmem:[%s1308] sm:$0xff]
  %1310 = vrot.lane.b32.xlu0 %v1309, 116
  %v1311 = vpop.permute.xlu0 %1310
  %vm1312 = vcmask 7168
  %s1313 = scalar_lea.vmem %s1, 908
  %1314 = vst.msk [vmem:[%s1313] ss:$16 sm:$0x3] %vm1312, %v1311
  %s1315 = scalar_lea.vmem %s1, 908
  %1316 = vst.msk [vmem:[%s1315] ss:$16 sm:$0xc] %vm1312, %v1311
  %s1317 = scalar_lea.vmem %s1, 908
  %1318 = vst.msk [vmem:[%s1317] ss:$16 sm:$0x30] %vm1312, %v1311
  %s1319 = scalar_lea.vmem %s1, 908
  %1320 = vst.msk [vmem:[%s1319] ss:$16 sm:$0xc0] %vm1312, %v1311
  %v1321 = vld [vmem:[%s0] sm:$0xff]
  %1322 = vrot.lane.b32.xlu0 %v1321, 115
  %v1323 = vpop.permute.xlu0 %1322
  %vm1324 = vcmask 7168
  %s1325 = scalar_lea.vmem %s1, 13
  %1326 = vst.msk [vmem:[%s1325] ss:$16 sm:$0x3] %vm1324, %v1323
  %s1327 = scalar_lea.vmem %s1, 13
  %1328 = vst.msk [vmem:[%s1327] ss:$16 sm:$0xc] %vm1324, %v1323
  %s1329 = scalar_lea.vmem %s1, 13
  %1330 = vst.msk [vmem:[%s1329] ss:$16 sm:$0x30] %vm1324, %v1323
  %s1331 = scalar_lea.vmem %s1, 13
  %1332 = vst.msk [vmem:[%s1331] ss:$16 sm:$0xc0] %vm1324, %v1323
  %s1333 = scalar_lea.vmem %s0, 8
  %v1334 = vld [vmem:[%s1333] sm:$0xff]
  %1335 = vrot.lane.b32.xlu0 %v1334, 115
  %v1336 = vpop.permute.xlu0 %1335
  %vm1337 = vcmask 7168
  %s1338 = scalar_lea.vmem %s1, 141
  %1339 = vst.msk [vmem:[%s1338] ss:$16 sm:$0x3] %vm1337, %v1336
  %s1340 = scalar_lea.vmem %s1, 141
  %1341 = vst.msk [vmem:[%s1340] ss:$16 sm:$0xc] %vm1337, %v1336
  %s1342 = scalar_lea.vmem %s1, 141
  %1343 = vst.msk [vmem:[%s1342] ss:$16 sm:$0x30] %vm1337, %v1336
  %s1344 = scalar_lea.vmem %s1, 141
  %1345 = vst.msk [vmem:[%s1344] ss:$16 sm:$0xc0] %vm1337, %v1336
  %s1346 = scalar_lea.vmem %s0, 16
  %v1347 = vld [vmem:[%s1346] sm:$0xff]
  %1348 = vrot.lane.b32.xlu0 %v1347, 115
  %v1349 = vpop.permute.xlu0 %1348
  %vm1350 = vcmask 7168
  %s1351 = scalar_lea.vmem %s1, 269
  %1352 = vst.msk [vmem:[%s1351] ss:$16 sm:$0x3] %vm1350, %v1349
  %s1353 = scalar_lea.vmem %s1, 269
  %1354 = vst.msk [vmem:[%s1353] ss:$16 sm:$0xc] %vm1350, %v1349
  %s1355 = scalar_lea.vmem %s1, 269
  %1356 = vst.msk [vmem:[%s1355] ss:$16 sm:$0x30] %vm1350, %v1349
  %s1357 = scalar_lea.vmem %s1, 269
  %1358 = vst.msk [vmem:[%s1357] ss:$16 sm:$0xc0] %vm1350, %v1349
  %s1359 = scalar_lea.vmem %s0, 24
  %v1360 = vld [vmem:[%s1359] sm:$0xff]
  %1361 = vrot.lane.b32.xlu0 %v1360, 115
  %v1362 = vpop.permute.xlu0 %1361
  %vm1363 = vcmask 7168
  %s1364 = scalar_lea.vmem %s1, 397
  %1365 = vst.msk [vmem:[%s1364] ss:$16 sm:$0x3] %vm1363, %v1362
  %s1366 = scalar_lea.vmem %s1, 397
  %1367 = vst.msk [vmem:[%s1366] ss:$16 sm:$0xc] %vm1363, %v1362
  %s1368 = scalar_lea.vmem %s1, 397
  %1369 = vst.msk [vmem:[%s1368] ss:$16 sm:$0x30] %vm1363, %v1362
  %s1370 = scalar_lea.vmem %s1, 397
  %1371 = vst.msk [vmem:[%s1370] ss:$16 sm:$0xc0] %vm1363, %v1362
  %s1372 = scalar_lea.vmem %s0, 32
  %v1373 = vld [vmem:[%s1372] sm:$0xff]
  %1374 = vrot.lane.b32.xlu0 %v1373, 115
  %v1375 = vpop.permute.xlu0 %1374
  %vm1376 = vcmask 7168
  %s1377 = scalar_lea.vmem %s1, 525
  %1378 = vst.msk [vmem:[%s1377] ss:$16 sm:$0x3] %vm1376, %v1375
  %s1379 = scalar_lea.vmem %s1, 525
  %1380 = vst.msk [vmem:[%s1379] ss:$16 sm:$0xc] %vm1376, %v1375
  %s1381 = scalar_lea.vmem %s1, 525
  %1382 = vst.msk [vmem:[%s1381] ss:$16 sm:$0x30] %vm1376, %v1375
  %s1383 = scalar_lea.vmem %s1, 525
  %1384 = vst.msk [vmem:[%s1383] ss:$16 sm:$0xc0] %vm1376, %v1375
  %s1385 = scalar_lea.vmem %s0, 40
  %v1386 = vld [vmem:[%s1385] sm:$0xff]
  %1387 = vrot.lane.b32.xlu0 %v1386, 115
  %v1388 = vpop.permute.xlu0 %1387
  %vm1389 = vcmask 7168
  %s1390 = scalar_lea.vmem %s1, 653
  %1391 = vst.msk [vmem:[%s1390] ss:$16 sm:$0x3] %vm1389, %v1388
  %s1392 = scalar_lea.vmem %s1, 653
  %1393 = vst.msk [vmem:[%s1392] ss:$16 sm:$0xc] %vm1389, %v1388
  %s1394 = scalar_lea.vmem %s1, 653
  %1395 = vst.msk [vmem:[%s1394] ss:$16 sm:$0x30] %vm1389, %v1388
  %s1396 = scalar_lea.vmem %s1, 653
  %1397 = vst.msk [vmem:[%s1396] ss:$16 sm:$0xc0] %vm1389, %v1388
  %s1398 = scalar_lea.vmem %s0, 48
  %v1399 = vld [vmem:[%s1398] sm:$0xff]
  %1400 = vrot.lane.b32.xlu0 %v1399, 115
  %v1401 = vpop.permute.xlu0 %1400
  %vm1402 = vcmask 7168
  %s1403 = scalar_lea.vmem %s1, 781
  %1404 = vst.msk [vmem:[%s1403] ss:$16 sm:$0x3] %vm1402, %v1401
  %s1405 = scalar_lea.vmem %s1, 781
  %1406 = vst.msk [vmem:[%s1405] ss:$16 sm:$0xc] %vm1402, %v1401
  %s1407 = scalar_lea.vmem %s1, 781
  %1408 = vst.msk [vmem:[%s1407] ss:$16 sm:$0x30] %vm1402, %v1401
  %s1409 = scalar_lea.vmem %s1, 781
  %1410 = vst.msk [vmem:[%s1409] ss:$16 sm:$0xc0] %vm1402, %v1401
  %s1411 = scalar_lea.vmem %s0, 56
  %v1412 = vld [vmem:[%s1411] sm:$0xff]
  %1413 = vrot.lane.b32.xlu0 %v1412, 115
  %v1414 = vpop.permute.xlu0 %1413
  %vm1415 = vcmask 7168
  %s1416 = scalar_lea.vmem %s1, 909
  %1417 = vst.msk [vmem:[%s1416] ss:$16 sm:$0x3] %vm1415, %v1414
  %s1418 = scalar_lea.vmem %s1, 909
  %1419 = vst.msk [vmem:[%s1418] ss:$16 sm:$0xc] %vm1415, %v1414
  %s1420 = scalar_lea.vmem %s1, 909
  %1421 = vst.msk [vmem:[%s1420] ss:$16 sm:$0x30] %vm1415, %v1414
  %s1422 = scalar_lea.vmem %s1, 909
  %1423 = vst.msk [vmem:[%s1422] ss:$16 sm:$0xc0] %vm1415, %v1414
  %v1424 = vld [vmem:[%s0] sm:$0xff]
  %1425 = vrot.lane.b32.xlu0 %v1424, 114
  %v1426 = vpop.permute.xlu0 %1425
  %vm1427 = vcmask 7168
  %s1428 = scalar_lea.vmem %s1, 14
  %1429 = vst.msk [vmem:[%s1428] ss:$16 sm:$0x3] %vm1427, %v1426
  %s1430 = scalar_lea.vmem %s1, 14
  %1431 = vst.msk [vmem:[%s1430] ss:$16 sm:$0xc] %vm1427, %v1426
  %s1432 = scalar_lea.vmem %s1, 14
  %1433 = vst.msk [vmem:[%s1432] ss:$16 sm:$0x30] %vm1427, %v1426
  %s1434 = scalar_lea.vmem %s1, 14
  %1435 = vst.msk [vmem:[%s1434] ss:$16 sm:$0xc0] %vm1427, %v1426
  %s1436 = scalar_lea.vmem %s0, 8
  %v1437 = vld [vmem:[%s1436] sm:$0xff]
  %1438 = vrot.lane.b32.xlu0 %v1437, 114
  %v1439 = vpop.permute.xlu0 %1438
  %vm1440 = vcmask 7168
  %s1441 = scalar_lea.vmem %s1, 142
  %1442 = vst.msk [vmem:[%s1441] ss:$16 sm:$0x3] %vm1440, %v1439
  %s1443 = scalar_lea.vmem %s1, 142
  %1444 = vst.msk [vmem:[%s1443] ss:$16 sm:$0xc] %vm1440, %v1439
  %s1445 = scalar_lea.vmem %s1, 142
  %1446 = vst.msk [vmem:[%s1445] ss:$16 sm:$0x30] %vm1440, %v1439
  %s1447 = scalar_lea.vmem %s1, 142
  %1448 = vst.msk [vmem:[%s1447] ss:$16 sm:$0xc0] %vm1440, %v1439
  %s1449 = scalar_lea.vmem %s0, 16
  %v1450 = vld [vmem:[%s1449] sm:$0xff]
  %1451 = vrot.lane.b32.xlu0 %v1450, 114
  %v1452 = vpop.permute.xlu0 %1451
  %vm1453 = vcmask 7168
  %s1454 = scalar_lea.vmem %s1, 270
  %1455 = vst.msk [vmem:[%s1454] ss:$16 sm:$0x3] %vm1453, %v1452
  %s1456 = scalar_lea.vmem %s1, 270
  %1457 = vst.msk [vmem:[%s1456] ss:$16 sm:$0xc] %vm1453, %v1452
  %s1458 = scalar_lea.vmem %s1, 270
  %1459 = vst.msk [vmem:[%s1458] ss:$16 sm:$0x30] %vm1453, %v1452
  %s1460 = scalar_lea.vmem %s1, 270
  %1461 = vst.msk [vmem:[%s1460] ss:$16 sm:$0xc0] %vm1453, %v1452
  %s1462 = scalar_lea.vmem %s0, 24
  %v1463 = vld [vmem:[%s1462] sm:$0xff]
  %1464 = vrot.lane.b32.xlu0 %v1463, 114
  %v1465 = vpop.permute.xlu0 %1464
  %vm1466 = vcmask 7168
  %s1467 = scalar_lea.vmem %s1, 398
  %1468 = vst.msk [vmem:[%s1467] ss:$16 sm:$0x3] %vm1466, %v1465
  %s1469 = scalar_lea.vmem %s1, 398
  %1470 = vst.msk [vmem:[%s1469] ss:$16 sm:$0xc] %vm1466, %v1465
  %s1471 = scalar_lea.vmem %s1, 398
  %1472 = vst.msk [vmem:[%s1471] ss:$16 sm:$0x30] %vm1466, %v1465
  %s1473 = scalar_lea.vmem %s1, 398
  %1474 = vst.msk [vmem:[%s1473] ss:$16 sm:$0xc0] %vm1466, %v1465
  %s1475 = scalar_lea.vmem %s0, 32
  %v1476 = vld [vmem:[%s1475] sm:$0xff]
  %1477 = vrot.lane.b32.xlu0 %v1476, 114
  %v1478 = vpop.permute.xlu0 %1477
  %vm1479 = vcmask 7168
  %s1480 = scalar_lea.vmem %s1, 526
  %1481 = vst.msk [vmem:[%s1480] ss:$16 sm:$0x3] %vm1479, %v1478
  %s1482 = scalar_lea.vmem %s1, 526
  %1483 = vst.msk [vmem:[%s1482] ss:$16 sm:$0xc] %vm1479, %v1478
  %s1484 = scalar_lea.vmem %s1, 526
  %1485 = vst.msk [vmem:[%s1484] ss:$16 sm:$0x30] %vm1479, %v1478
  %s1486 = scalar_lea.vmem %s1, 526
  %1487 = vst.msk [vmem:[%s1486] ss:$16 sm:$0xc0] %vm1479, %v1478
  %s1488 = scalar_lea.vmem %s0, 40
  %v1489 = vld [vmem:[%s1488] sm:$0xff]
  %1490 = vrot.lane.b32.xlu0 %v1489, 114
  %v1491 = vpop.permute.xlu0 %1490
  %vm1492 = vcmask 7168
  %s1493 = scalar_lea.vmem %s1, 654
  %1494 = vst.msk [vmem:[%s1493] ss:$16 sm:$0x3] %vm1492, %v1491
  %s1495 = scalar_lea.vmem %s1, 654
  %1496 = vst.msk [vmem:[%s1495] ss:$16 sm:$0xc] %vm1492, %v1491
  %s1497 = scalar_lea.vmem %s1, 654
  %1498 = vst.msk [vmem:[%s1497] ss:$16 sm:$0x30] %vm1492, %v1491
  %s1499 = scalar_lea.vmem %s1, 654
  %1500 = vst.msk [vmem:[%s1499] ss:$16 sm:$0xc0] %vm1492, %v1491
  %s1501 = scalar_lea.vmem %s0, 48
  %v1502 = vld [vmem:[%s1501] sm:$0xff]
  %1503 = vrot.lane.b32.xlu0 %v1502, 114
  %v1504 = vpop.permute.xlu0 %1503
  %vm1505 = vcmask 7168
  %s1506 = scalar_lea.vmem %s1, 782
  %1507 = vst.msk [vmem:[%s1506] ss:$16 sm:$0x3] %vm1505, %v1504
  %s1508 = scalar_lea.vmem %s1, 782
  %1509 = vst.msk [vmem:[%s1508] ss:$16 sm:$0xc] %vm1505, %v1504
  %s1510 = scalar_lea.vmem %s1, 782
  %1511 = vst.msk [vmem:[%s1510] ss:$16 sm:$0x30] %vm1505, %v1504
  %s1512 = scalar_lea.vmem %s1, 782
  %1513 = vst.msk [vmem:[%s1512] ss:$16 sm:$0xc0] %vm1505, %v1504
  %s1514 = scalar_lea.vmem %s0, 56
  %v1515 = vld [vmem:[%s1514] sm:$0xff]
  %1516 = vrot.lane.b32.xlu0 %v1515, 114
  %v1517 = vpop.permute.xlu0 %1516
  %vm1518 = vcmask 7168
  %s1519 = scalar_lea.vmem %s1, 910
  %1520 = vst.msk [vmem:[%s1519] ss:$16 sm:$0x3] %vm1518, %v1517
  %s1521 = scalar_lea.vmem %s1, 910
  %1522 = vst.msk [vmem:[%s1521] ss:$16 sm:$0xc] %vm1518, %v1517
  %s1523 = scalar_lea.vmem %s1, 910
  %1524 = vst.msk [vmem:[%s1523] ss:$16 sm:$0x30] %vm1518, %v1517
  %s1525 = scalar_lea.vmem %s1, 910
  %1526 = vst.msk [vmem:[%s1525] ss:$16 sm:$0xc0] %vm1518, %v1517
  %v1527 = vld [vmem:[%s0] sm:$0xff]
  %1528 = vrot.lane.b32.xlu0 %v1527, 113
  %v1529 = vpop.permute.xlu0 %1528
  %vm1530 = vcmask 7168
  %s1531 = scalar_lea.vmem %s1, 15
  %1532 = vst.msk [vmem:[%s1531] ss:$16 sm:$0x3] %vm1530, %v1529
  %s1533 = scalar_lea.vmem %s1, 15
  %1534 = vst.msk [vmem:[%s1533] ss:$16 sm:$0xc] %vm1530, %v1529
  %s1535 = scalar_lea.vmem %s1, 15
  %1536 = vst.msk [vmem:[%s1535] ss:$16 sm:$0x30] %vm1530, %v1529
  %s1537 = scalar_lea.vmem %s1, 15
  %1538 = vst.msk [vmem:[%s1537] ss:$16 sm:$0xc0] %vm1530, %v1529
  %s1539 = scalar_lea.vmem %s0, 8
  %v1540 = vld [vmem:[%s1539] sm:$0xff]
  %1541 = vrot.lane.b32.xlu0 %v1540, 113
  %v1542 = vpop.permute.xlu0 %1541
  %vm1543 = vcmask 7168
  %s1544 = scalar_lea.vmem %s1, 143
  %1545 = vst.msk [vmem:[%s1544] ss:$16 sm:$0x3] %vm1543, %v1542
  %s1546 = scalar_lea.vmem %s1, 143
  %1547 = vst.msk [vmem:[%s1546] ss:$16 sm:$0xc] %vm1543, %v1542
  %s1548 = scalar_lea.vmem %s1, 143
  %1549 = vst.msk [vmem:[%s1548] ss:$16 sm:$0x30] %vm1543, %v1542
  %s1550 = scalar_lea.vmem %s1, 143
  %1551 = vst.msk [vmem:[%s1550] ss:$16 sm:$0xc0] %vm1543, %v1542
  %s1552 = scalar_lea.vmem %s0, 16
  %v1553 = vld [vmem:[%s1552] sm:$0xff]
  %1554 = vrot.lane.b32.xlu0 %v1553, 113
  %v1555 = vpop.permute.xlu0 %1554
  %vm1556 = vcmask 7168
  %s1557 = scalar_lea.vmem %s1, 271
  %1558 = vst.msk [vmem:[%s1557] ss:$16 sm:$0x3] %vm1556, %v1555
  %s1559 = scalar_lea.vmem %s1, 271
  %1560 = vst.msk [vmem:[%s1559] ss:$16 sm:$0xc] %vm1556, %v1555
  %s1561 = scalar_lea.vmem %s1, 271
  %1562 = vst.msk [vmem:[%s1561] ss:$16 sm:$0x30] %vm1556, %v1555
  %s1563 = scalar_lea.vmem %s1, 271
  %1564 = vst.msk [vmem:[%s1563] ss:$16 sm:$0xc0] %vm1556, %v1555
  %s1565 = scalar_lea.vmem %s0, 24
  %v1566 = vld [vmem:[%s1565] sm:$0xff]
  %1567 = vrot.lane.b32.xlu0 %v1566, 113
  %v1568 = vpop.permute.xlu0 %1567
  %vm1569 = vcmask 7168
  %s1570 = scalar_lea.vmem %s1, 399
  %1571 = vst.msk [vmem:[%s1570] ss:$16 sm:$0x3] %vm1569, %v1568
  %s1572 = scalar_lea.vmem %s1, 399
  %1573 = vst.msk [vmem:[%s1572] ss:$16 sm:$0xc] %vm1569, %v1568
  %s1574 = scalar_lea.vmem %s1, 399
  %1575 = vst.msk [vmem:[%s1574] ss:$16 sm:$0x30] %vm1569, %v1568
  %s1576 = scalar_lea.vmem %s1, 399
  %1577 = vst.msk [vmem:[%s1576] ss:$16 sm:$0xc0] %vm1569, %v1568
  %s1578 = scalar_lea.vmem %s0, 32
  %v1579 = vld [vmem:[%s1578] sm:$0xff]
  %1580 = vrot.lane.b32.xlu0 %v1579, 113
  %v1581 = vpop.permute.xlu0 %1580
  %vm1582 = vcmask 7168
  %s1583 = scalar_lea.vmem %s1, 527
  %1584 = vst.msk [vmem:[%s1583] ss:$16 sm:$0x3] %vm1582, %v1581
  %s1585 = scalar_lea.vmem %s1, 527
  %1586 = vst.msk [vmem:[%s1585] ss:$16 sm:$0xc] %vm1582, %v1581
  %s1587 = scalar_lea.vmem %s1, 527
  %1588 = vst.msk [vmem:[%s1587] ss:$16 sm:$0x30] %vm1582, %v1581
  %s1589 = scalar_lea.vmem %s1, 527
  %1590 = vst.msk [vmem:[%s1589] ss:$16 sm:$0xc0] %vm1582, %v1581
  %s1591 = scalar_lea.vmem %s0, 40
  %v1592 = vld [vmem:[%s1591] sm:$0xff]
  %1593 = vrot.lane.b32.xlu0 %v1592, 113
  %v1594 = vpop.permute.xlu0 %1593
  %vm1595 = vcmask 7168
  %s1596 = scalar_lea.vmem %s1, 655
  %1597 = vst.msk [vmem:[%s1596] ss:$16 sm:$0x3] %vm1595, %v1594
  %s1598 = scalar_lea.vmem %s1, 655
  %1599 = vst.msk [vmem:[%s1598] ss:$16 sm:$0xc] %vm1595, %v1594
  %s1600 = scalar_lea.vmem %s1, 655
  %1601 = vst.msk [vmem:[%s1600] ss:$16 sm:$0x30] %vm1595, %v1594
  %s1602 = scalar_lea.vmem %s1, 655
  %1603 = vst.msk [vmem:[%s1602] ss:$16 sm:$0xc0] %vm1595, %v1594
  %s1604 = scalar_lea.vmem %s0, 48
  %v1605 = vld [vmem:[%s1604] sm:$0xff]
  %1606 = vrot.lane.b32.xlu0 %v1605, 113
  %v1607 = vpop.permute.xlu0 %1606
  %vm1608 = vcmask 7168
  %s1609 = scalar_lea.vmem %s1, 783
  %1610 = vst.msk [vmem:[%s1609] ss:$16 sm:$0x3] %vm1608, %v1607
  %s1611 = scalar_lea.vmem %s1, 783
  %1612 = vst.msk [vmem:[%s1611] ss:$16 sm:$0xc] %vm1608, %v1607
  %s1613 = scalar_lea.vmem %s1, 783
  %1614 = vst.msk [vmem:[%s1613] ss:$16 sm:$0x30] %vm1608, %v1607
  %s1615 = scalar_lea.vmem %s1, 783
  %1616 = vst.msk [vmem:[%s1615] ss:$16 sm:$0xc0] %vm1608, %v1607
  %s1617 = scalar_lea.vmem %s0, 56
  %v1618 = vld [vmem:[%s1617] sm:$0xff]
  %1619 = vrot.lane.b32.xlu0 %v1618, 113
  %v1620 = vpop.permute.xlu0 %1619
  %vm1621 = vcmask 7168
  %s1622 = scalar_lea.vmem %s1, 911
  %1623 = vst.msk [vmem:[%s1622] ss:$16 sm:$0x3] %vm1621, %v1620
  %s1624 = scalar_lea.vmem %s1, 911
  %1625 = vst.msk [vmem:[%s1624] ss:$16 sm:$0xc] %vm1621, %v1620
  %s1626 = scalar_lea.vmem %s1, 911
  %1627 = vst.msk [vmem:[%s1626] ss:$16 sm:$0x30] %vm1621, %v1620
  %s1628 = scalar_lea.vmem %s1, 911
  %1629 = vst.msk [vmem:[%s1628] ss:$16 sm:$0xc0] %vm1621, %v1620

// kernel: digit_forward.1
$region0: #{digit_forward.1}
  #allocation0 [shape = 'u32[]', space=smem, size = 0x4, offset = 0x4, fixed_abs, tag = 'smem constant byte address 0x4 - core index']
  #allocation1 [shape = 'u32[144,128]{1,0:T(1,128)}', space=vmem, size = 0x12000, scoped, tag = 'internal scratch']
  #allocation2 [shape = 'bf16[1024,128]{1,0:T(16,128)(2,1)}', space=vmem, size = 0x40000, scoped, tag = 'scratch operand']
  #allocation3 [shape = 'bf16[512,128]{1,0:T(16,128)(2,1)}', space=vmem, size = 0x20000, scoped, tag = 'scratch operand']
  #allocation4 [shape = 'bf16[64,128]{1,0:T(16,128)(2,1)}', space=vmem, size = 0x4000, scoped, tag = 'scratch operand']
  %s0 = inlined_call_operand.vmem [shape: f32[128,64], index: 0, kind: input, shape index: {}]
  %s1 = inlined_call_operand.vmem [shape: bf16[1024,64], index: 1, kind: input, shape index: {}]
  %s2 = inlined_call_operand.vmem [shape: f32[1024,1], index: 2, kind: input, shape index: {}]
  %s3 = inlined_call_operand.vmem [shape: bf16[3,32,48], index: 3, kind: input, shape index: {}]
  %s4 = inlined_call_operand.vmem [shape: f32[32,1], index: 4, kind: input, shape index: {}]
  %s5 = inlined_call_operand.vmem [shape: bf16[3,16,96], index: 5, kind: input, shape index: {}]
  %s6 = inlined_call_operand.vmem [shape: f32[16,1], index: 6, kind: input, shape index: {}]
  %s7 = inlined_call_operand.vmem [shape: bf16[3,8,48], index: 7, kind: input, shape index: {}]
  %s8 = inlined_call_operand.vmem [shape: f32[8,1], index: 8, kind: input, shape index: {}]
  %s9 = inlined_call_operand.vmem [shape: bf16[4,10,8], index: 9, kind: input, shape index: {}]
  %s10 = inlined_call_operand.vmem [shape: f32[10,1], index: 10, kind: input, shape index: {}]
  %s11 = inlined_call_operand.vmem [shape: f32[10,128], index: 11, kind: output, shape index: {}]
  %s12 = sld [smem:[#allocation0]]
  $region54: #{digit_forward.1} parent=0
    _
  %s14 = ssub.s32 1, %s12
  %s15 = scalar_select 0, %s14, %s12
  // Predicated region
  $region2: #{digit_forward.1} parent=0 // pred_check
    _
  $region3: #{digit_forward.1} parent=0 // pred_check_branch
    %17 = sbr.rel (0) target = $region5
  $region4: #{digit_forward.1} parent=0 // pred_region
    _
  $region5: #{digit_forward.1} parent=0 // pred_fallthru
    _
  // Predicated region
  $region6: #{digit_forward.1} parent=0 // pred_check
    _
  $region7: #{digit_forward.1} parent=0 // pred_check_branch
    %19 = sbr.rel (0) target = $region9
  $region8: #{digit_forward.1} parent=0 // pred_region
    _
  $region9: #{digit_forward.1} parent=0 // pred_fallthru
    _
  // Predicated region
  $region10: #{digit_forward.1} parent=0 // pred_check
    _
  $region11: #{digit_forward.1} parent=0 // pred_check_branch
    %21 = sbr.rel (0) target = $region13
  $region12: #{digit_forward.1} parent=0 // pred_region
    _
  $region13: #{digit_forward.1} parent=0 // pred_fallthru
    _
  // Predicated region
  $region14: #{digit_forward.1} parent=0 // pred_check
    _
  $region15: #{digit_forward.1} parent=0 // pred_check_branch
    %23 = sbr.rel (0) target = $region17
  $region16: #{digit_forward.1} parent=0 // pred_region
    _
  $region17: #{digit_forward.1} parent=0 // pred_fallthru
    _
  // Predicated region
  $region18: #{digit_forward.1} parent=0 // pred_check
    _
  $region19: #{digit_forward.1} parent=0 // pred_check_branch
    %25 = sbr.rel (0) target = $region21
  $region20: #{digit_forward.1} parent=0 // pred_region
    _
  $region21: #{digit_forward.1} parent=0 // pred_fallthru
    _
  // Predicated region
  $region22: #{digit_forward.1} parent=0 // pred_check
    _
  $region23: #{digit_forward.1} parent=0 // pred_check_branch
    %27 = sbr.rel (0) target = $region25
  $region24: #{digit_forward.1} parent=0 // pred_region
    _
  $region25: #{digit_forward.1} parent=0 // pred_fallthru
    _
  // Predicated region
  $region26: #{digit_forward.1} parent=0 // pred_check
    _
  $region27: #{digit_forward.1} parent=0 // pred_check_branch
    %29 = sbr.rel (0) target = $region29
  $region28: #{digit_forward.1} parent=0 // pred_region
    _
  $region29: #{digit_forward.1} parent=0 // pred_fallthru
    _
  // Predicated region
  $region30: #{digit_forward.1} parent=0 // pred_check
    _
  $region31: #{digit_forward.1} parent=0 // pred_check_branch
    %31 = sbr.rel (0) target = $region33
  $region32: #{digit_forward.1} parent=0 // pred_region
    _
  $region33: #{digit_forward.1} parent=0 // pred_fallthru
    _
  // Predicated region
  $region34: #{digit_forward.1} parent=0 // pred_check
    _
  $region35: #{digit_forward.1} parent=0 // pred_check_branch
    %33 = sbr.rel (0) target = $region37
  $region36: #{digit_forward.1} parent=0 // pred_region
    _
  $region37: #{digit_forward.1} parent=0 // pred_fallthru
    _
  // Predicated region
  $region38: #{digit_forward.1} parent=0 // pred_check
    _
  $region39: #{digit_forward.1} parent=0 // pred_check_branch
    %35 = sbr.rel (0) target = $region41
  $region40: #{digit_forward.1} parent=0 // pred_region
    _
  $region41: #{digit_forward.1} parent=0 // pred_fallthru
    _
  // Predicated region
  $region42: #{digit_forward.1} parent=0 // pred_check
    _
  $region43: #{digit_forward.1} parent=0 // pred_check_branch
    %37 = sbr.rel (0) target = $region45
  $region44: #{digit_forward.1} parent=0 // pred_region
    _
  $region45: #{digit_forward.1} parent=0 // pred_fallthru
    _
  %v39 = vld [vmem:[%s0] sm:$0xff]
  %v40 = vld [vmem:[%s0 + $0x8] sm:$0xff]
  %v41 = vld [vmem:[%s0 + $0x10] sm:$0xff]
  %v42 = vld [vmem:[%s0 + $0x18] sm:$0xff]
  %v43 = vld [vmem:[%s0 + $0x20] sm:$0xff]
  %v44 = vld [vmem:[%s0 + $0x28] sm:$0xff]
  %v45 = vld [vmem:[%s0 + $0x30] sm:$0xff]
  %v46 = vld [vmem:[%s0 + $0x38] sm:$0xff]
  %v47 = vld [vmem:[%s0 + $0x40] sm:$0xff]
  %v48 = vld [vmem:[%s0 + $0x48] sm:$0xff]
  %v49 = vld [vmem:[%s0 + $0x50] sm:$0xff]
  %v50 = vld [vmem:[%s0 + $0x58] sm:$0xff]
  %v51 = vld [vmem:[%s0 + $0x60] sm:$0xff]
  %v52 = vld [vmem:[%s0 + $0x68] sm:$0xff]
  %v53 = vld [vmem:[%s0 + $0x70] sm:$0xff]
  %v54 = vld [vmem:[%s0 + $0x78] sm:$0xff]
  %55 = vxpose.xlu0.b32.start [1/16] %v39, 128
  %56 = vxpose.xlu0.b32.cont [2/16] %v40, 128
  %57 = vxpose.xlu0.b32.cont [3/16] %v41, 128
  %58 = vxpose.xlu0.b32.cont [4/16] %v42, 128
  %59 = vxpose.xlu0.b32.cont [5/16] %v43, 128
  %60 = vxpose.xlu0.b32.cont [6/16] %v44, 128
  %61 = vxpose.xlu0.b32.cont [7/16] %v45, 128
  %62 = vxpose.xlu0.b32.cont [8/16] %v46, 128
  %63 = vxpose.xlu0.b32.cont [9/16] %v47, 128
  %64 = vxpose.xlu0.b32.cont [10/16] %v48, 128
  %65 = vxpose.xlu0.b32.cont [11/16] %v49, 128
  %66 = vxpose.xlu0.b32.cont [12/16] %v50, 128
  %67 = vxpose.xlu0.b32.cont [13/16] %v51, 128
  %68 = vxpose.xlu0.b32.cont [14/16] %v52, 128
  %69 = vxpose.xlu0.b32.cont [15/16] %v53, 128
  %70 = vxpose.xlu0.b32.end [16/16] %v54, 128
  %v71 = vpop.trf.xlu0
  %v72 = vpop.trf.xlu0
  %v73 = vpop.trf.xlu0
  %v74 = vpop.trf.xlu0
  %v75 = vpop.trf.xlu0
  %v76 = vpop.trf.xlu0
  %v77 = vpop.trf.xlu0
  %v78 = vpop.trf.xlu0
  %v79 = vpop.trf.xlu0
  %v80 = vpop.trf.xlu0
  %v81 = vpop.trf.xlu0
  %v82 = vpop.trf.xlu0
  %v83 = vpop.trf.xlu0
  %v84 = vpop.trf.xlu0
  %v85 = vpop.trf.xlu0
  %v86 = vpop.trf.xlu0
  %v87 = vpack.c.bf16 %v72, %v71
  %v88 = vpack.c.bf16 %v74, %v73
  %v89 = vpack.c.bf16 %v76, %v75
  %v90 = vpack.c.bf16 %v78, %v77
  %v91 = vld [vmem:[%s1] sm:$0xf]
  %v92 = vld [vmem:[%s1 + $0x4] sm:$0xf]
  %v93 = vld [vmem:[%s1 + $0x8] sm:$0xf]
  %v94 = vld [vmem:[%s1 + $0xc] sm:$0xf]
  %v95 = vld [vmem:[%s1 + $0x10] sm:$0xf]
  %v96 = vld [vmem:[%s1 + $0x14] sm:$0xf]
  %v97 = vld [vmem:[%s1 + $0x18] sm:$0xf]
  %v98 = vld [vmem:[%s1 + $0x1c] sm:$0xf]
  %v99 = vld [vmem:[%s2] sm:$0xff]
  %v100 = vld [vmem:[%s2 + $0x8] sm:$0xff]
  %v101 = vld [vmem:[%s2 + $0x10] sm:$0xff]
  %v102 = vld [vmem:[%s2 + $0x18] sm:$0xff]
  %v103 = vld [vmem:[%s2 + $0x20] sm:$0xff]
  %v104 = vld [vmem:[%s2 + $0x28] sm:$0xff]
  %v105 = vld [vmem:[%s2 + $0x30] sm:$0xff]
  %v106 = vld [vmem:[%s2 + $0x38] sm:$0xff]
  %108 = vset.pattern.permute.xlu0 0
  %109 = vperm.xlu0 %108, %v99
  %v110 = vpop.permute.xlu0 %109
  %113 = vset.pattern.permute.xlu0 0
  %114 = vperm.xlu0 %113, %v100
  %v115 = vpop.permute.xlu0 %114
  %118 = vset.pattern.permute.xlu0 0
  %119 = vperm.xlu0 %118, %v101
  %v120 = vpop.permute.xlu0 %119
  %123 = vset.pattern.permute.xlu0 0
  %124 = vperm.xlu0 %123, %v102
  %v125 = vpop.permute.xlu0 %124
  %128 = vset.pattern.permute.xlu0 0
  %129 = vperm.xlu0 %128, %v103
  %v130 = vpop.permute.xlu0 %129
  %133 = vset.pattern.permute.xlu0 0
  %134 = vperm.xlu0 %133, %v104
  %v135 = vpop.permute.xlu0 %134
  %138 = vset.pattern.permute.xlu0 0
  %139 = vperm.xlu0 %138, %v105
  %v140 = vpop.permute.xlu0 %139
  %143 = vset.pattern.permute.xlu0 0
  %144 = vperm.xlu0 %143, %v106
  %v145 = vpop.permute.xlu0 %144
  %v155 = vunpack.c.l.b16 %v91
  %v156 = vunpack.c.l.b16 %v92
  %v157 = vunpack.c.l.b16 %v93
  %v158 = vunpack.c.l.b16 %v94
  %v159 = vunpack.c.l.b16 %v95
  %v160 = vunpack.c.l.b16 %v96
  %v161 = vunpack.c.l.b16 %v97
  %v162 = vunpack.c.l.b16 %v98
  %v163 = vpack.c.b16 %v156, %v155
  %v164 = vpack.c.b16 %v158, %v157
  %v165 = vpack.c.b16 %v160, %v159
  %v166 = vpack.c.b16 %v162, %v161
  %vm167 = vcmask 523264
  %v169 = vsel %vm167, %v163, 0
  %v172 = vsel %vm167, %v164, 0
  %v175 = vsel %vm167, %v165, 0
  %v178 = vsel %vm167, %v166, 0
  %180 = vmatprep.subr.bf16.mxu0 0
  %181 = vmatpush1.bf16.msra.mxu0 %v87
  %182 = vmatprep.subr.bf16.mxu0 0
  %183 = vmatpush1.bf16.msra.mxu0 %v88
  %184 = vmatprep.subr.bf16.mxu0 0
  %185 = vmatpush1.bf16.msra.mxu0 %v89
  %186 = vmatprep.subr.bf16.mxu0 0
  %187 = vmatpush1.bf16.msra.mxu0 %v90
  %188 = vmatprep.subr.bf16.mxu0 0
  %189 = vmatpush1.bf16.msra.mxu0 0
  %190 = vmatprep.subr.bf16.mxu0 0
  %191 = vmatpush1.bf16.msra.mxu0 0
  %192 = vmatprep.subr.bf16.mxu0 0
  %193 = vmatpush1.bf16.msra.mxu0 0
  %194 = vmatprep.subr.bf16.mxu0 0
  %195 = vmatpush1.bf16.msra.mxu0 0
  %196 = vmatprep.subr.bf16.mxu0 0
  %197 = vmatpush1.bf16.msra.mxu0 0
  %198 = vmatprep.subr.bf16.mxu0 0
  %199 = vmatpush1.bf16.msra.mxu0 0
  %200 = vmatprep.subr.bf16.mxu0 0
  %201 = vmatpush1.bf16.msra.mxu0 0
  %202 = vmatprep.subr.bf16.mxu0 0
  %203 = vmatpush1.bf16.msra.mxu0 0
  %204 = vmatprep.subr.bf16.mxu0 0
  %205 = vmatpush1.bf16.msra.mxu0 0
  %206 = vmatprep.subr.bf16.mxu0 0
  %207 = vmatpush1.bf16.msra.mxu0 0
  %208 = vmatprep.subr.bf16.mxu0 0
  %209 = vmatpush1.bf16.msra.mxu0 0
  %210 = vmatprep.subr.bf16.mxu0 0
  %211 = vmatpush1.bf16.msra.mxu0 0
  %212 = vmatprep.mubr.bf16.mxu0 0
  %213 = vmatmul.mubr.bf16.gmra.mrb[0].mxu0 %v169
  %v214 = vpop.f32.mrb[0].mxu0
  %v215 = vadd.f32 %v110, %v214
  %v216 = vpop.f32.mrb[0].mxu0
  %v217 = vpop.f32.mrb[0].mxu0
  %v218 = vadd.f32 %v115, %v217
  %v219 = vpop.f32.mrb[0].mxu0
  %220 = vmatprep.mubr.bf16.mxu0 0
  %221 = vmatmul.mubr.bf16.gmra.mrb[0].mxu0 %v172
  %v222 = vpop.f32.mrb[0].mxu0
  %v223 = vadd.f32 %v120, %v222
  %v224 = vpop.f32.mrb[0].mxu0
  %v225 = vpop.f32.mrb[0].mxu0
  %v226 = vadd.f32 %v125, %v225
  %v227 = vpop.f32.mrb[0].mxu0
  %228 = vmatprep.mubr.bf16.mxu0 0
  %229 = vmatmul.mubr.bf16.gmra.mrb[0].mxu0 %v175
  %v230 = vpop.f32.mrb[0].mxu0
  %v231 = vadd.f32 %v130, %v230
  %v232 = vpop.f32.mrb[0].mxu0
  %v233 = vpop.f32.mrb[0].mxu0
  %v234 = vadd.f32 %v135, %v233
  %v235 = vpop.f32.mrb[0].mxu0
  %236 = vmatprep.mubr.bf16.mxu0 0
  %237 = vmatmul.mubr.bf16.gmra.mrb[0].mxu0 %v178
  %v238 = vpop.f32.mrb[0].mxu0
  %v239 = vadd.f32 %v140, %v238
  %v240 = vpop.f32.mrb[0].mxu0
  %v241 = vpop.f32.mrb[0].mxu0
  %v242 = vadd.f32 %v145, %v241
  %v243 = vpop.f32.mrb[0].mxu0
  %244 = vdwg.mxu0
  %v245 = vtanh.pop %v215
  %v246 = vtanh.pop %v218
  %v247 = vtanh.pop %v223
  %v248 = vtanh.pop %v226
  %v249 = vtanh.pop %v231
  %v250 = vtanh.pop %v234
  %v251 = vtanh.pop %v239
  %v252 = vtanh.pop %v242
  %v253 = vpack.c.bf16 %v246, %v245
  %v254 = vpack.c.bf16 %v248, %v247
  %v255 = vpack.c.bf16 %v250, %v249
  %v256 = vpack.c.bf16 %v252, %v251
  %257 = vst [vmem:[#allocation2] sm:$0xff] %v253
  %258 = vst [vmem:[#allocation2 + $0x8] sm:$0xff] %v254
  %259 = vst [vmem:[#allocation2 + $0x10] sm:$0xff] %v255
  %260 = vst [vmem:[#allocation2 + $0x18] sm:$0xff] %v256
  %v261 = vld [vmem:[%s1 + $0x20] sm:$0xf]
  %v262 = vld [vmem:[%s1 + $0x24] sm:$0xf]
  %v263 = vld [vmem:[%s1 + $0x28] sm:$0xf]
  %v264 = vld [vmem:[%s1 + $0x2c] sm:$0xf]
  %v265 = vld [vmem:[%s1 + $0x30] sm:$0xf]
  %v266 = vld [vmem:[%s1 + $0x34] sm:$0xf]
  %v267 = vld [vmem:[%s1 + $0x38] sm:$0xf]
  %v268 = vld [vmem:[%s1 + $0x3c] sm:$0xf]
  %v269 = vld [vmem:[%s2 + $0x40] sm:$0xff]
  %v270 = vld [vmem:[%s2 + $0x48] sm:$0xff]
  %v271 = vld [vmem:[%s2 + $0x50] sm:$0xff]
  %v272 = vld [vmem:[%s2 + $0x58] sm:$0xff]
  %v273 = vld [vmem:[%s2 + $0x60] sm:$0xff]
  %v274 = vld [vmem:[%s2 + $0x68] sm:$0xff]
  %v275 = vld [vmem:[%s2 + $0x70] sm:$0xff]
  %v276 = vld [vmem:[%s2 + $0x78] sm:$0xff]
  %278 = vset.pattern.permute.xlu0 0
  %279 = vperm.xlu0 %278, %v269
  %v280 = vpop.permute.xlu0 %279
  %283 = vset.pattern.permute.xlu0 0
  %284 = vperm.xlu0 %283, %v270
  %v285 = vpop.permute.xlu0 %284
  %288 = vset.pattern.permute.xlu0 0
  %289 = vperm.xlu0 %288, %v271
  %v290 = vpop.permute.xlu0 %289
  %293 = vset.pattern.permute.xlu0 0
  %294 = vperm.xlu0 %293, %v272
  %v295 = vpop.permute.xlu0 %294
  %298 = vset.pattern.permute.xlu0 0
  %299 = vperm.xlu0 %298, %v273
  %v300 = vpop.permute.xlu0 %299
  %303 = vset.pattern.permute.xlu0 0
  %304 = vperm.xlu0 %303, %v274
  %v305 = vpop.permute.xlu0 %304
  %308 = vset.pattern.permute.xlu0 0
  %309 = vperm.xlu0 %308, %v275
  %v310 = vpop.permute.xlu0 %309
  %313 = vset.pattern.permute.xlu0 0
  %314 = vperm.xlu0 %313, %v276
  %v315 = vpop.permute.xlu0 %314
  %v325 = vunpack.c.l.b16 %v261
  %v326 = vunpack.c.l.b16 %v262
  %v327 = vunpack.c.l.b16 %v263
  %v328 = vunpack.c.l.b16 %v264
  %v329 = vunpack.c.l.b16 %v265
  %v330 = vunpack.c.l.b16 %v266
  %v331 = vunpack.c.l.b16 %v267
  %v332 = vunpack.c.l.b16 %v268
  %v333 = vpack.c.b16 %v326, %v325
  %v334 = vpack.c.b16 %v328, %v327
  %v335 = vpack.c.b16 %v330, %v329
  %v336 = vpack.c.b16 %v332, %v331
  %v338 = vsel %vm167, %v333, 0
  %v341 = vsel %vm167, %v334, 0
  %v344 = vsel %vm167, %v335, 0
  %v347 = vsel %vm167, %v336, 0
  %349 = vmatprep.subr.bf16.mxu0 0
  %350 = vmatpush1.bf16.msra.mxu0 %v87
  %351 = vmatprep.subr.bf16.mxu0 0
  %352 = vmatpush1.bf16.msra.mxu0 %v88
  %353 = vmatprep.subr.bf16.mxu0 0
  %354 = vmatpush1.bf16.msra.mxu0 %v89
  %355 = vmatprep.subr.bf16.mxu0 0
  %356 = vmatpush1.bf16.msra.mxu0 %v90
  %357 = vmatprep.subr.bf16.mxu0 0
  %358 = vmatpush1.bf16.msra.mxu0 0
  %359 = vmatprep.subr.bf16.mxu0 0
  %360 = vmatpush1.bf16.msra.mxu0 0
  %361 = vmatprep.subr.bf16.mxu0 0
  %362 = vmatpush1.bf16.msra.mxu0 0
  %363 = vmatprep.subr.bf16.mxu0 0
  %364 = vmatpush1.bf16.msra.mxu0 0
  %365 = vmatprep.subr.bf16.mxu0 0
  %366 = vmatpush1.bf16.msra.mxu0 0
  %367 = vmatprep.subr.bf16.mxu0 0
  %368 = vmatpush1.bf16.msra.mxu0 0
  %369 = vmatprep.subr.bf16.mxu0 0
  %370 = vmatpush1.bf16.msra.mxu0 0
  %371 = vmatprep.subr.bf16.mxu0 0
  %372 = vmatpush1.bf16.msra.mxu0 0
  %373 = vmatprep.subr.bf16.mxu0 0
  %374 = vmatpush1.bf16.msra.mxu0 0
  %375 = vmatprep.subr.bf16.mxu0 0
  %376 = vmatpush1.bf16.msra.mxu0 0
  %377 = vmatprep.subr.bf16.mxu0 0
  %378 = vmatpush1.bf16.msra.mxu0 0
  %379 = vmatprep.subr.bf16.mxu0 0
  %380 = vmatpush1.bf16.msra.mxu0 0
  %381 = vmatprep.mubr.bf16.mxu0 0
  %382 = vmatmul.mubr.bf16.gmra.mrb[0].mxu0 %v338
  %v383 = vpop.f32.mrb[0].mxu0
  %v384 = vadd.f32 %v280, %v383
  %v385 = vpop.f32.mrb[0].mxu0
  %v386 = vpop.f32.mrb[0].mxu0
  %v387 = vadd.f32 %v285, %v386
  %v388 = vpop.f32.mrb[0].mxu0
  %389 = vmatprep.mubr.bf16.mxu0 0
  %390 = vmatmul.mubr.bf16.gmra.mrb[0].mxu0 %v341
  %v391 = vpop.f32.mrb[0].mxu0
  %v392 = vadd.f32 %v290, %v391
  %v393 = vpop.f32.mrb[0].mxu0
  %v394 = vpop.f32.mrb[0].mxu0
  %v395 = vadd.f32 %v295, %v394
  %v396 = vpop.f32.mrb[0].mxu0
  %397 = vmatprep.mubr.bf16.mxu0 0
  %398 = vmatmul.mubr.bf16.gmra.mrb[0].mxu0 %v344
  %v399 = vpop.f32.mrb[0].mxu0
  %v400 = vadd.f32 %v300, %v399
  %v401 = vpop.f32.mrb[0].mxu0
  %v402 = vpop.f32.mrb[0].mxu0
  %v403 = vadd.f32 %v305, %v402
  %v404 = vpop.f32.mrb[0].mxu0
  %405 = vmatprep.mubr.bf16.mxu0 0
  %406 = vmatmul.mubr.bf16.gmra.mrb[0].mxu0 %v347
  %v407 = vpop.f32.mrb[0].mxu0
  %v408 = vadd.f32 %v310, %v407
  %v409 = vpop.f32.mrb[0].mxu0
  %v410 = vpop.f32.mrb[0].mxu0
  %v411 = vadd.f32 %v315, %v410
  %v412 = vpop.f32.mrb[0].mxu0
  %413 = vdwg.mxu0
  %v414 = vtanh.pop %v384
  %v415 = vtanh.pop %v387
  %v416 = vtanh.pop %v392
  %v417 = vtanh.pop %v395
  %v418 = vtanh.pop %v400
  %v419 = vtanh.pop %v403
  %v420 = vtanh.pop %v408
  %v421 = vtanh.pop %v411
  %v422 = vpack.c.bf16 %v415, %v414
  %v423 = vpack.c.bf16 %v417, %v416
  %v424 = vpack.c.bf16 %v419, %v418
  %v425 = vpack.c.bf16 %v421, %v420
  %426 = vst [vmem:[#allocation2 + $0x20] sm:$0xff] %v422
  %427 = vst [vmem:[#allocation2 + $0x28] sm:$0xff] %v423
  %428 = vst [vmem:[#allocation2 + $0x30] sm:$0xff] %v424
  %429 = vst [vmem:[#allocation2 + $0x38] sm:$0xff] %v425
  %v430 = vld [vmem:[%s1 + $0x40] sm:$0xf]
  %v431 = vld [vmem:[%s1 + $0x44] sm:$0xf]
  %v432 = vld [vmem:[%s1 + $0x48] sm:$0xf]
  %v433 = vld [vmem:[%s1 + $0x4c] sm:$0xf]
  %v434 = vld [vmem:[%s1 + $0x50] sm:$0xf]
  %v435 = vld [vmem:[%s1 + $0x54] sm:$0xf]
  %v436 = vld [vmem:[%s1 + $0x58] sm:$0xf]
  %v437 = vld [vmem:[%s1 + $0x5c] sm:$0xf]
  %v438 = vld [vmem:[%s2 + $0x80] sm:$0xff]
  %v439 = vld [vmem:[%s2 + $0x88] sm:$0xff]
  %v440 = vld [vmem:[%s2 + $0x90] sm:$0xff]
  %v441 = vld [vmem:[%s2 + $0x98] sm:$0xff]
  %v442 = vld [vmem:[%s2 + $0xa0] sm:$0xff]
  %v443 = vld [vmem:[%s2 + $0xa8] sm:$0xff]
  %v444 = vld [vmem:[%s2 + $0xb0] sm:$0xff]
  %v445 = vld [vmem:[%s2 + $0xb8] sm:$0xff]
  %447 = vset.pattern.permute.xlu0 0
  %448 = vperm.xlu0 %447, %v438
  %v449 = vpop.permute.xlu0 %448
  %452 = vset.pattern.permute.xlu0 0
  %453 = vperm.xlu0 %452, %v439
  %v454 = vpop.permute.xlu0 %453
  %457 = vset.pattern.permute.xlu0 0
  %458 = vperm.xlu0 %457, %v440
  %v459 = vpop.permute.xlu0 %458
  %462 = vset.pattern.permute.xlu0 0
  %463 = vperm.xlu0 %462, %v441
  %v464 = vpop.permute.xlu0 %463
  %467 = vset.pattern.permute.xlu0 0
  %468 = vperm.xlu0 %467, %v442
  %v469 = vpop.permute.xlu0 %468
  %472 = vset.pattern.permute.xlu0 0
  %473 = vperm.xlu0 %472, %v443
  %v474 = vpop.permute.xlu0 %473
  %477 = vset.pattern.permute.xlu0 0
  %478 = vperm.xlu0 %477, %v444
  %v479 = vpop.permute.xlu0 %478
  %482 = vset.pattern.permute.xlu0 0
  %483 = vperm.xlu0 %482, %v445
  %v484 = vpop.permute.xlu0 %483
  %v494 = vunpack.c.l.b16 %v430
  %v495 = vunpack.c.l.b16 %v431
  %v496 = vunpack.c.l.b16 %v432
  %v497 = vunpack.c.l.b16 %v433
  %v498 = vunpack.c.l.b16 %v434
  %v499 = vunpack.c.l.b16 %v435
  %v500 = vunpack.c.l.b16 %v436
  %v501 = vunpack.c.l.b16 %v437
  %v502 = vpack.c.b16 %v495, %v494
  %v503 = vpack.c.b16 %v497, %v496
  %v504 = vpack.c.b16 %v499, %v498
  %v505 = vpack.c.b16 %v501, %v500
  %v507 = vsel %vm167, %v502, 0
  %v510 = vsel %vm167, %v503, 0
  %v513 = vsel %vm167, %v504, 0
  %v516 = vsel %vm167, %v505, 0
  %518 = vmatprep.subr.bf16.mxu0 0
  %519 = vmatpush1.bf16.msra.mxu0 %v87
  %520 = vmatprep.subr.bf16.mxu0 0
  %521 = vmatpush1.bf16.msra.mxu0 %v88
  %522 = vmatprep.subr.bf16.mxu0 0
  %523 = vmatpush1.bf16.msra.mxu0 %v89
  %524 = vmatprep.subr.bf16.mxu0 0
  %525 = vmatpush1.bf16.msra.mxu0 %v90
  %526 = vmatprep.subr.bf16.mxu0 0
  %527 = vmatpush1.bf16.msra.mxu0 0
  %528 = vmatprep.subr.bf16.mxu0 0
  %529 = vmatpush1.bf16.msra.mxu0 0
  %530 = vmatprep.subr.bf16.mxu0 0
  %531 = vmatpush1.bf16.msra.mxu0 0
  %532 = vmatprep.subr.bf16.mxu0 0
  %533 = vmatpush1.bf16.msra.mxu0 0
  %534 = vmatprep.subr.bf16.mxu0 0
  %535 = vmatpush1.bf16.msra.mxu0 0
  %536 = vmatprep.subr.bf16.mxu0 0
  %537 = vmatpush1.bf16.msra.mxu0 0
  %538 = vmatprep.subr.bf16.mxu0 0
  %539 = vmatpush1.bf16.msra.mxu0 0
  %540 = vmatprep.subr.bf16.mxu0 0
  %541 = vmatpush1.bf16.msra.mxu0 0
  %542 = vmatprep.subr.bf16.mxu0 0
  %543 = vmatpush1.bf16.msra.mxu0 0
  %544 = vmatprep.subr.bf16.mxu0 0
  %545 = vmatpush1.bf16.msra.mxu0 0
  %546 = vmatprep.subr.bf16.mxu0 0
  %547 = vmatpush1.bf16.msra.mxu0 0
  %548 = vmatprep.subr.bf16.mxu0 0
  %549 = vmatpush1.bf16.msra.mxu0 0
  %550 = vmatprep.mubr.bf16.mxu0 0
  %551 = vmatmul.mubr.bf16.gmra.mrb[0].mxu0 %v507
  %v552 = vpop.f32.mrb[0].mxu0
  %v553 = vadd.f32 %v449, %v552
  %v554 = vpop.f32.mrb[0].mxu0
  %v555 = vpop.f32.mrb[0].mxu0
  %v556 = vadd.f32 %v454, %v555
  %v557 = vpop.f32.mrb[0].mxu0
  %558 = vmatprep.mubr.bf16.mxu0 0
  %559 = vmatmul.mubr.bf16.gmra.mrb[0].mxu0 %v510
  %v560 = vpop.f32.mrb[0].mxu0
  %v561 = vadd.f32 %v459, %v560
  %v562 = vpop.f32.mrb[0].mxu0
  %v563 = vpop.f32.mrb[0].mxu0
  %v564 = vadd.f32 %v464, %v563
  %v565 = vpop.f32.mrb[0].mxu0
  %566 = vmatprep.mubr.bf16.mxu0 0
  %567 = vmatmul.mubr.bf16.gmra.mrb[0].mxu0 %v513
  %v568 = vpop.f32.mrb[0].mxu0
  %v569 = vadd.f32 %v469, %v568
  %v570 = vpop.f32.mrb[0].mxu0
  %v571 = vpop.f32.mrb[0].mxu0
  %v572 = vadd.f32 %v474, %v571
  %v573 = vpop.f32.mrb[0].mxu0
  %574 = vmatprep.mubr.bf16.mxu0 0
  %575 = vmatmul.mubr.bf16.gmra.mrb[0].mxu0 %v516
  %v576 = vpop.f32.mrb[0].mxu0
  %v577 = vadd.f32 %v479, %v576
  %v578 = vpop.f32.mrb[0].mxu0
  %v579 = vpop.f32.mrb[0].mxu0
  %v580 = vadd.f32 %v484, %v579
  %v581 = vpop.f32.mrb[0].mxu0
  %582 = vdwg.mxu0
  %v583 = vtanh.pop %v553
  %v584 = vtanh.pop %v556
  %v585 = vtanh.pop %v561
  %v586 = vtanh.pop %v564
  %v587 = vtanh.pop %v569
  %v588 = vtanh.pop %v572
  %v589 = vtanh.pop %v577
  %v590 = vtanh.pop %v580
  %v591 = vpack.c.bf16 %v584, %v583
  %v592 = vpack.c.bf16 %v586, %v585
  %v593 = vpack.c.bf16 %v588, %v587
  %v594 = vpack.c.bf16 %v590, %v589
  %595 = vst [vmem:[#allocation2 + $0x40] sm:$0xff] %v591
  %596 = vst [vmem:[#allocation2 + $0x48] sm:$0xff] %v592
  %597 = vst [vmem:[#allocation2 + $0x50] sm:$0xff] %v593
  %598 = vst [vmem:[#allocation2 + $0x58] sm:$0xff] %v594
  %v599 = vld [vmem:[%s1 + $0x60] sm:$0xf]
  %v600 = vld [vmem:[%s1 + $0x64] sm:$0xf]
  %v601 = vld [vmem:[%s1 + $0x68] sm:$0xf]
  %v602 = vld [vmem:[%s1 + $0x6c] sm:$0xf]
  %v603 = vld [vmem:[%s1 + $0x70] sm:$0xf]
  %v604 = vld [vmem:[%s1 + $0x74] sm:$0xf]
  %v605 = vld [vmem:[%s1 + $0x78] sm:$0xf]
  %v606 = vld [vmem:[%s1 + $0x7c] sm:$0xf]
  %v607 = vld [vmem:[%s2 + $0xc0] sm:$0xff]
  %v608 = vld [vmem:[%s2 + $0xc8] sm:$0xff]
  %v609 = vld [vmem:[%s2 + $0xd0] sm:$0xff]
  %v610 = vld [vmem:[%s2 + $0xd8] sm:$0xff]
  %v611 = vld [vmem:[%s2 + $0xe0] sm:$0xff]
  %v612 = vld [vmem:[%s2 + $0xe8] sm:$0xff]
  %v613 = vld [vmem:[%s2 + $0xf0] sm:$0xff]
  %v614 = vld [vmem:[%s2 + $0xf8] sm:$0xff]
  %616 = vset.pattern.permute.xlu0 0
  %617 = vperm.xlu0 %616, %v607
  %v618 = vpop.permute.xlu0 %617
  %621 = vset.pattern.permute.xlu0 0
  %622 = vperm.xlu0 %621, %v608
  %v623 = vpop.permute.xlu0 %622
  %626 = vset.pattern.permute.xlu0 0
  %627 = vperm.xlu0 %626, %v609
  %v628 = vpop.permute.xlu0 %627
  %631 = vset.pattern.permute.xlu0 0
  %632 = vperm.xlu0 %631, %v610
  %v633 = vpop.permute.xlu0 %632
  %636 = vset.pattern.permute.xlu0 0
  %637 = vperm.xlu0 %636, %v611
  %v638 = vpop.permute.xlu0 %637
  %641 = vset.pattern.permute.xlu0 0
  %642 = vperm.xlu0 %641, %v612
  %v643 = vpop.permute.xlu0 %642
  %646 = vset.pattern.permute.xlu0 0
  %647 = vperm.xlu0 %646, %v613
  %v648 = vpop.permute.xlu0 %647
  %651 = vset.pattern.permute.xlu0 0
  %652 = vperm.xlu0 %651, %v614
  %v653 = vpop.permute.xlu0 %652
  %v663 = vunpack.c.l.b16 %v599
  %v664 = vunpack.c.l.b16 %v600
  %v665 = vunpack.c.l.b16 %v601
  %v666 = vunpack.c.l.b16 %v602
  %v667 = vunpack.c.l.b16 %v603
  %v668 = vunpack.c.l.b16 %v604
  %v669 = vunpack.c.l.b16 %v605
  %v670 = vunpack.c.l.b16 %v606
  %v671 = vpack.c.b16 %v664, %v663
  %v672 = vpack.c.b16 %v666, %v665
  %v673 = vpack.c.b16 %v668, %v667
  %v674 = vpack.c.b16 %v670, %v669
  %v676 = vsel %vm167, %v671, 0
  %v679 = vsel %vm167, %v672, 0
  %v682 = vsel %vm167, %v673, 0
  %v685 = vsel %vm167, %v674, 0
  %687 = vmatprep.subr.bf16.mxu0 0
  %688 = vmatpush1.bf16.msra.mxu0 %v87
  %689 = vmatprep.subr.bf16.mxu0 0
  %690 = vmatpush1.bf16.msra.mxu0 %v88
  %691 = vmatprep.subr.bf16.mxu0 0
  %692 = vmatpush1.bf16.msra.mxu0 %v89
  %693 = vmatprep.subr.bf16.mxu0 0
  %694 = vmatpush1.bf16.msra.mxu0 %v90
  %695 = vmatprep.subr.bf16.mxu0 0
  %696 = vmatpush1.bf16.msra.mxu0 0
  %697 = vmatprep.subr.bf16.mxu0 0
  %698 = vmatpush1.bf16.msra.mxu0 0
  %699 = vmatprep.subr.bf16.mxu0 0
  %700 = vmatpush1.bf16.msra.mxu0 0
  %701 = vmatprep.subr.bf16.mxu0 0
  %702 = vmatpush1.bf16.msra.mxu0 0
  %703 = vmatprep.subr.bf16.mxu0 0
  %704 = vmatpush1.bf16.msra.mxu0 0
  %705 = vmatprep.subr.bf16.mxu0 0
  %706 = vmatpush1.bf16.msra.mxu0 0
  %707 = vmatprep.subr.bf16.mxu0 0
  %708 = vmatpush1.bf16.msra.mxu0 0
  %709 = vmatprep.subr.bf16.mxu0 0
  %710 = vmatpush1.bf16.msra.mxu0 0
  %711 = vmatprep.subr.bf16.mxu0 0
  %712 = vmatpush1.bf16.msra.mxu0 0
  %713 = vmatprep.subr.bf16.mxu0 0
  %714 = vmatpush1.bf16.msra.mxu0 0
  %715 = vmatprep.subr.bf16.mxu0 0
  %716 = vmatpush1.bf16.msra.mxu0 0
  %717 = vmatprep.subr.bf16.mxu0 0
  %718 = vmatpush1.bf16.msra.mxu0 0
  %719 = vmatprep.mubr.bf16.mxu0 0
  %720 = vmatmul.mubr.bf16.gmra.mrb[0].mxu0 %v676
  %v721 = vpop.f32.mrb[0].mxu0
  %v722 = vadd.f32 %v618, %v721
  %v723 = vpop.f32.mrb[0].mxu0
  %v724 = vpop.f32.mrb[0].mxu0
  %v725 = vadd.f32 %v623, %v724
  %v726 = vpop.f32.mrb[0].mxu0
  %727 = vmatprep.mubr.bf16.mxu0 0
  %728 = vmatmul.mubr.bf16.gmra.mrb[0].mxu0 %v679
  %v729 = vpop.f32.mrb[0].mxu0
  %v730 = vadd.f32 %v628, %v729
  %v731 = vpop.f32.mrb[0].mxu0
  %v732 = vpop.f32.mrb[0].mxu0
  %v733 = vadd.f32 %v633, %v732
  %v734 = vpop.f32.mrb[0].mxu0
  %735 = vmatprep.mubr.bf16.mxu0 0
  %736 = vmatmul.mubr.bf16.gmra.mrb[0].mxu0 %v682
  %v737 = vpop.f32.mrb[0].mxu0
  %v738 = vadd.f32 %v638, %v737
  %v739 = vpop.f32.mrb[0].mxu0
  %v740 = vpop.f32.mrb[0].mxu0
  %v741 = vadd.f32 %v643, %v740
  %v742 = vpop.f32.mrb[0].mxu0
  %743 = vmatprep.mubr.bf16.mxu0 0
  %744 = vmatmul.mubr.bf16.gmra.mrb[0].mxu0 %v685
  %v745 = vpop.f32.mrb[0].mxu0
  %v746 = vadd.f32 %v648, %v745
  %v747 = vpop.f32.mrb[0].mxu0
  %v748 = vpop.f32.mrb[0].mxu0
  %v749 = vadd.f32 %v653, %v748
  %v750 = vpop.f32.mrb[0].mxu0
  %751 = vdwg.mxu0
  %v752 = vtanh.pop %v722
  %v753 = vtanh.pop %v725
  %v754 = vtanh.pop %v730
  %v755 = vtanh.pop %v733
  %v756 = vtanh.pop %v738
  %v757 = vtanh.pop %v741
  %v758 = vtanh.pop %v746
  %v759 = vtanh.pop %v749
  %v760 = vpack.c.bf16 %v753, %v752
  %v761 = vpack.c.bf16 %v755, %v754
  %v762 = vpack.c.bf16 %v757, %v756
  %v763 = vpack.c.bf16 %v759, %v758
  %764 = vst [vmem:[#allocation2 + $0x60] sm:$0xff] %v760
  %765 = vst [vmem:[#allocation2 + $0x68] sm:$0xff] %v761
  %766 = vst [vmem:[#allocation2 + $0x70] sm:$0xff] %v762
  %767 = vst [vmem:[#allocation2 + $0x78] sm:$0xff] %v763
  %v768 = vld [vmem:[%s1 + $0x80] sm:$0xf]
  %v769 = vld [vmem:[%s1 + $0x84] sm:$0xf]
  %v770 = vld [vmem:[%s1 + $0x88] sm:$0xf]
  %v771 = vld [vmem:[%s1 + $0x8c] sm:$0xf]
  %v772 = vld [vmem:[%s1 + $0x90] sm:$0xf]
  %v773 = vld [vmem:[%s1 + $0x94] sm:$0xf]
  %v774 = vld [vmem:[%s1 + $0x98] sm:$0xf]
  %v775 = vld [vmem:[%s1 + $0x9c] sm:$0xf]
  %v776 = vld [vmem:[%s2 + $0x100] sm:$0xff]
  %v777 = vld [vmem:[%s2 + $0x108] sm:$0xff]
  %v778 = vld [vmem:[%s2 + $0x110] sm:$0xff]
  %v779 = vld [vmem:[%s2 + $0x118] sm:$0xff]
  %v780 = vld [vmem:[%s2 + $0x120] sm:$0xff]
  %v781 = vld [vmem:[%s2 + $0x128] sm:$0xff]
  %v782 = vld [vmem:[%s2 + $0x130] sm:$0xff]
  %v783 = vld [vmem:[%s2 + $0x138] sm:$0xff]
  %785 = vset.pattern.permute.xlu0 0
  %786 = vperm.xlu0 %785, %v776
  %v787 = vpop.permute.xlu0 %786
  %790 = vset.pattern.permute.xlu0 0
  %791 = vperm.xlu0 %790, %v777
  %v792 = vpop.permute.xlu0 %791
  %795 = vset.pattern.permute.xlu0 0
  %796 = vperm.xlu0 %795, %v778
  %v797 = vpop.permute.xlu0 %796
  %800 = vset.pattern.permute.xlu0 0
  %801 = vperm.xlu0 %800, %v779
  %v802 = vpop.permute.xlu0 %801
  %805 = vset.pattern.permute.xlu0 0
  %806 = vperm.xlu0 %805, %v780
  %v807 = vpop.permute.xlu0 %806
  %810 = vset.pattern.permute.xlu0 0
  %811 = vperm.xlu0 %810, %v781
  %v812 = vpop.permute.xlu0 %811
  %815 = vset.pattern.permute.xlu0 0
  %816 = vperm.xlu0 %815, %v782
  %v817 = vpop.permute.xlu0 %816
  %820 = vset.pattern.permute.xlu0 0
  %821 = vperm.xlu0 %820, %v783
  %v822 = vpop.permute.xlu0 %821
  %v832 = vunpack.c.l.b16 %v768
  %v833 = vunpack.c.l.b16 %v769
  %v834 = vunpack.c.l.b16 %v770
  %v835 = vunpack.c.l.b16 %v771
  %v836 = vunpack.c.l.b16 %v772
  %v837 = vunpack.c.l.b16 %v773
  %v838 = vunpack.c.l.b16 %v774
  %v839 = vunpack.c.l.b16 %v775
  %v840 = vpack.c.b16 %v833, %v832
  %v841 = vpack.c.b16 %v835, %v834
  %v842 = vpack.c.b16 %v837, %v836
  %v843 = vpack.c.b16 %v839, %v838
  %v845 = vsel %vm167, %v840, 0
  %v848 = vsel %vm167, %v841, 0
  %v851 = vsel %vm167, %v842, 0
  %v854 = vsel %vm167, %v843, 0
  %856 = vmatprep.subr.bf16.mxu0 0
  %857 = vmatpush1.bf16.msra.mxu0 %v87
  %858 = vmatprep.subr.bf16.mxu0 0
  %859 = vmatpush1.bf16.msra.mxu0 %v88
  %860 = vmatprep.subr.bf16.mxu0 0
  %861 = vmatpush1.bf16.msra.mxu0 %v89
  %862 = vmatprep.subr.bf16.mxu0 0
  %863 = vmatpush1.bf16.msra.mxu0 %v90
  %864 = vmatprep.subr.bf16.mxu0 0
  %865 = vmatpush1.bf16.msra.mxu0 0
  %866 = vmatprep.subr.bf16.mxu0 0
  %867 = vmatpush1.bf16.msra.mxu0 0
  %868 = vmatprep.subr.bf16.mxu0 0
  %869 = vmatpush1.bf16.msra.mxu0 0
  %870 = vmatprep.subr.bf16.mxu0 0
  %871 = vmatpush1.bf16.msra.mxu0 0
  %872 = vmatprep.subr.bf16.mxu0 0
  %873 = vmatpush1.bf16.msra.mxu0 0
  %874 = vmatprep.subr.bf16.mxu0 0
  %875 = vmatpush1.bf16.msra.mxu0 0
  %876 = vmatprep.subr.bf16.mxu0 0
  %877 = vmatpush1.bf16.msra.mxu0 0
  %878 = vmatprep.subr.bf16.mxu0 0
  %879 = vmatpush1.bf16.msra.mxu0 0
  %880 = vmatprep.subr.bf16.mxu0 0
  %881 = vmatpush1.bf16.msra.mxu0 0
  %882 = vmatprep.subr.bf16.mxu0 0
  %883 = vmatpush1.bf16.msra.mxu0 0
  %884 = vmatprep.subr.bf16.mxu0 0
  %885 = vmatpush1.bf16.msra.mxu0 0
  %886 = vmatprep.subr.bf16.mxu0 0
  %887 = vmatpush1.bf16.msra.mxu0 0
  %888 = vmatprep.mubr.bf16.mxu0 0
  %889 = vmatmul.mubr.bf16.gmra.mrb[0].mxu0 %v845
  %v890 = vpop.f32.mrb[0].mxu0
  %v891 = vadd.f32 %v787, %v890
  %v892 = vpop.f32.mrb[0].mxu0
  %v893 = vpop.f32.mrb[0].mxu0
  %v894 = vadd.f32 %v792, %v893
  %v895 = vpop.f32.mrb[0].mxu0
  %896 = vmatprep.mubr.bf16.mxu0 0
  %897 = vmatmul.mubr.bf16.gmra.mrb[0].mxu0 %v848
  %v898 = vpop.f32.mrb[0].mxu0
  %v899 = vadd.f32 %v797, %v898
  %v900 = vpop.f32.mrb[0].mxu0
  %v901 = vpop.f32.mrb[0].mxu0
  %v902 = vadd.f32 %v802, %v901
  %v903 = vpop.f32.mrb[0].mxu0
  %904 = vmatprep.mubr.bf16.mxu0 0
  %905 = vmatmul.mubr.bf16.gmra.mrb[0].mxu0 %v851
  %v906 = vpop.f32.mrb[0].mxu0
  %v907 = vadd.f32 %v807, %v906
  %v908 = vpop.f32.mrb[0].mxu0
  %v909 = vpop.f32.mrb[0].mxu0
  %v910 = vadd.f32 %v812, %v909
  %v911 = vpop.f32.mrb[0].mxu0
  %912 = vmatprep.mubr.bf16.mxu0 0
  %913 = vmatmul.mubr.bf16.gmra.mrb[0].mxu0 %v854
  %v914 = vpop.f32.mrb[0].mxu0
  %v915 = vadd.f32 %v817, %v914
  %v916 = vpop.f32.mrb[0].mxu0
  %v917 = vpop.f32.mrb[0].mxu0
  %v918 = vadd.f32 %v822, %v917
  %v919 = vpop.f32.mrb[0].mxu0
  %920 = vdwg.mxu0
  %v921 = vtanh.pop %v891
  %v922 = vtanh.pop %v894
  %v923 = vtanh.pop %v899
  %v924 = vtanh.pop %v902
  %v925 = vtanh.pop %v907
  %v926 = vtanh.pop %v910
  %v927 = vtanh.pop %v915
  %v928 = vtanh.pop %v918
  %v929 = vpack.c.bf16 %v922, %v921
  %v930 = vpack.c.bf16 %v924, %v923
  %v931 = vpack.c.bf16 %v926, %v925
  %v932 = vpack.c.bf16 %v928, %v927
  %933 = vst [vmem:[#allocation2 + $0x80] sm:$0xff] %v929
  %934 = vst [vmem:[#allocation2 + $0x88] sm:$0xff] %v930
  %935 = vst [vmem:[#allocation2 + $0x90] sm:$0xff] %v931
  %936 = vst [vmem:[#allocation2 + $0x98] sm:$0xff] %v932
  %v937 = vld [vmem:[%s1 + $0xa0] sm:$0xf]
  %v938 = vld [vmem:[%s1 + $0xa4] sm:$0xf]
  %v939 = vld [vmem:[%s1 + $0xa8] sm:$0xf]
  %v940 = vld [vmem:[%s1 + $0xac] sm:$0xf]
  %v941 = vld [vmem:[%s1 + $0xb0] sm:$0xf]
  %v942 = vld [vmem:[%s1 + $0xb4] sm:$0xf]
  %v943 = vld [vmem:[%s1 + $0xb8] sm:$0xf]
  %v944 = vld [vmem:[%s1 + $0xbc] sm:$0xf]
  %v945 = vld [vmem:[%s2 + $0x140] sm:$0xff]
  %v946 = vld [vmem:[%s2 + $0x148] sm:$0xff]
  %v947 = vld [vmem:[%s2 + $0x150] sm:$0xff]
  %v948 = vld [vmem:[%s2 + $0x158] sm:$0xff]
  %v949 = vld [vmem:[%s2 + $0x160] sm:$0xff]
  %v950 = vld [vmem:[%s2 + $0x168] sm:$0xff]
  %v951 = vld [vmem:[%s2 + $0x170] sm:$0xff]
  %v952 = vld [vmem:[%s2 + $0x178] sm:$0xff]
  %954 = vset.pattern.permute.xlu0 0
  %955 = vperm.xlu0 %954, %v945
  %v956 = vpop.permute.xlu0 %955
  %959 = vset.pattern.permute.xlu0 0
  %960 = vperm.xlu0 %959, %v946
  %v961 = vpop.permute.xlu0 %960
  %964 = vset.pattern.permute.xlu0 0
  %965 = vperm.xlu0 %964, %v947
  %v966 = vpop.permute.xlu0 %965
  %969 = vset.pattern.permute.xlu0 0
  %970 = vperm.xlu0 %969, %v948
  %v971 = vpop.permute.xlu0 %970
  %974 = vset.pattern.permute.xlu0 0
  %975 = vperm.xlu0 %974, %v949
  %v976 = vpop.permute.xlu0 %975
  %979 = vset.pattern.permute.xlu0 0
  %980 = vperm.xlu0 %979, %v950
  %v981 = vpop.permute.xlu0 %980
  %984 = vset.pattern.permute.xlu0 0
  %985 = vperm.xlu0 %984, %v951
  %v986 = vpop.permute.xlu0 %985
  %989 = vset.pattern.permute.xlu0 0
  %990 = vperm.xlu0 %989, %v952
  %v991 = vpop.permute.xlu0 %990
  %v1001 = vunpack.c.l.b16 %v937
  %v1002 = vunpack.c.l.b16 %v938
  %v1003 = vunpack.c.l.b16 %v939
  %v1004 = vunpack.c.l.b16 %v940
  %v1005 = vunpack.c.l.b16 %v941
  %v1006 = vunpack.c.l.b16 %v942
  %v1007 = vunpack.c.l.b16 %v943
  %v1008 = vunpack.c.l.b16 %v944
  %v1009 = vpack.c.b16 %v1002, %v1001
  %v1010 = vpack.c.b16 %v1004, %v1003
  %v1011 = vpack.c.b16 %v1006, %v1005
  %v1012 = vpack.c.b16 %v1008, %v1007
  %v1014 = vsel %vm167, %v1009, 0
  %v1017 = vsel %vm167, %v1010, 0
  %v1020 = vsel %vm167, %v1011, 0
  %v1023 = vsel %vm167, %v1012, 0
  %1025 = vmatprep.subr.bf16.mxu0 0
  %1026 = vmatpush1.bf16.msra.mxu0 %v87
  %1027 = vmatprep.subr.bf16.mxu0 0
  %1028 = vmatpush1.bf16.msra.mxu0 %v88
  %1029 = vmatprep.subr.bf16.mxu0 0
  %1030 = vmatpush1.bf16.msra.mxu0 %v89
  %1031 = vmatprep.subr.bf16.mxu0 0
  %1032 = vmatpush1.bf16.msra.mxu0 %v90
  %1033 = vmatprep.subr.bf16.mxu0 0
  %1034 = vmatpush1.bf16.msra.mxu0 0
  %1035 = vmatprep.subr.bf16.mxu0 0
  %1036 = vmatpush1.bf16.msra.mxu0 0
  %1037 = vmatprep.subr.bf16.mxu0 0
  %1038 = vmatpush1.bf16.msra.mxu0 0
  %1039 = vmatprep.subr.bf16.mxu0 0
  %1040 = vmatpush1.bf16.msra.mxu0 0
  %1041 = vmatprep.subr.bf16.mxu0 0
  %1042 = vmatpush1.bf16.msra.mxu0 0
  %1043 = vmatprep.subr.bf16.mxu0 0
  %1044 = vmatpush1.bf16.msra.mxu0 0
  %1045 = vmatprep.subr.bf16.mxu0 0
  %1046 = vmatpush1.bf16.msra.mxu0 0
  %1047 = vmatprep.subr.bf16.mxu0 0
  %1048 = vmatpush1.bf16.msra.mxu0 0
  %1049 = vmatprep.subr.bf16.mxu0 0
  %1050 = vmatpush1.bf16.msra.mxu0 0
  %1051 = vmatprep.subr.bf16.mxu0 0
  %1052 = vmatpush1.bf16.msra.mxu0 0
  %1053 = vmatprep.subr.bf16.mxu0 0
  %1054 = vmatpush1.bf16.msra.mxu0 0
  %1055 = vmatprep.subr.bf16.mxu0 0
  %1056 = vmatpush1.bf16.msra.mxu0 0
  %1057 = vmatprep.mubr.bf16.mxu0 0
  %1058 = vmatmul.mubr.bf16.gmra.mrb[0].mxu0 %v1014
  %v1059 = vpop.f32.mrb[0].mxu0
  %v1060 = vadd.f32 %v956, %v1059
  %v1061 = vpop.f32.mrb[0].mxu0
  %v1062 = vpop.f32.mrb[0].mxu0
  %v1063 = vadd.f32 %v961, %v1062
  %v1064 = vpop.f32.mrb[0].mxu0
  %1065 = vmatprep.mubr.bf16.mxu0 0
  %1066 = vmatmul.mubr.bf16.gmra.mrb[0].mxu0 %v1017
  %v1067 = vpop.f32.mrb[0].mxu0
  %v1068 = vadd.f32 %v966, %v1067
  %v1069 = vpop.f32.mrb[0].mxu0
  %v1070 = vpop.f32.mrb[0].mxu0
  %v1071 = vadd.f32 %v971, %v1070
  %v1072 = vpop.f32.mrb[0].mxu0
  %1073 = vmatprep.mubr.bf16.mxu0 0
  %1074 = vmatmul.mubr.bf16.gmra.mrb[0].mxu0 %v1020
  %v1075 = vpop.f32.mrb[0].mxu0
  %v1076 = vadd.f32 %v976, %v1075
  %v1077 = vpop.f32.mrb[0].mxu0
  %v1078 = vpop.f32.mrb[0].mxu0
  %v1079 = vadd.f32 %v981, %v1078
  %v1080 = vpop.f32.mrb[0].mxu0
  %1081 = vmatprep.mubr.bf16.mxu0 0
  %1082 = vmatmul.mubr.bf16.gmra.mrb[0].mxu0 %v1023
  %v1083 = vpop.f32.mrb[0].mxu0
  %v1084 = vadd.f32 %v986, %v1083
  %v1085 = vpop.f32.mrb[0].mxu0
  %v1086 = vpop.f32.mrb[0].mxu0
  %v1087 = vadd.f32 %v991, %v1086
  %v1088 = vpop.f32.mrb[0].mxu0
  %1089 = vdwg.mxu0
  %v1090 = vtanh.pop %v1060
  %v1091 = vtanh.pop %v1063
  %v1092 = vtanh.pop %v1068
  %v1093 = vtanh.pop %v1071
  %v1094 = vtanh.pop %v1076
  %v1095 = vtanh.pop %v1079
  %v1096 = vtanh.pop %v1084
  %v1097 = vtanh.pop %v1087
  %v1098 = vpack.c.bf16 %v1091, %v1090
  %v1099 = vpack.c.bf16 %v1093, %v1092
  %v1100 = vpack.c.bf16 %v1095, %v1094
  %v1101 = vpack.c.bf16 %v1097, %v1096
  %1102 = vst [vmem:[#allocation2 + $0xa0] sm:$0xff] %v1098
  %1103 = vst [vmem:[#allocation2 + $0xa8] sm:$0xff] %v1099
  %1104 = vst [vmem:[#allocation2 + $0xb0] sm:$0xff] %v1100
  %1105 = vst [vmem:[#allocation2 + $0xb8] sm:$0xff] %v1101
  %v1106 = vld [vmem:[%s1 + $0xc0] sm:$0xf]
  %v1107 = vld [vmem:[%s1 + $0xc4] sm:$0xf]
  %v1108 = vld [vmem:[%s1 + $0xc8] sm:$0xf]
  %v1109 = vld [vmem:[%s1 + $0xcc] sm:$0xf]
  %v1110 = vld [vmem:[%s1 + $0xd0] sm:$0xf]
  %v1111 = vld [vmem:[%s1 + $0xd4] sm:$0xf]
  %v1112 = vld [vmem:[%s1 + $0xd8] sm:$0xf]
  %v1113 = vld [vmem:[%s1 + $0xdc] sm:$0xf]
  %v1114 = vld [vmem:[%s2 + $0x180] sm:$0xff]
  %v1115 = vld [vmem:[%s2 + $0x188] sm:$0xff]
  %v1116 = vld [vmem:[%s2 + $0x190] sm:$0xff]
  %v1117 = vld [vmem:[%s2 + $0x198] sm:$0xff]
  %v1118 = vld [vmem:[%s2 + $0x1a0] sm:$0xff]
  %v1119 = vld [vmem:[%s2 + $0x1a8] sm:$0xff]
  %v1120 = vld [vmem:[%s2 + $0x1b0] sm:$0xff]
  %v1121 = vld [vmem:[%s2 + $0x1b8] sm:$0xff]
  %1123 = vset.pattern.permute.xlu0 0
  %1124 = vperm.xlu0 %1123, %v1114
  %v1125 = vpop.permute.xlu0 %1124
  %1128 = vset.pattern.permute.xlu0 0
  %1129 = vperm.xlu0 %1128, %v1115
  %v1130 = vpop.permute.xlu0 %1129
  %1133 = vset.pattern.permute.xlu0 0
  %1134 = vperm.xlu0 %1133, %v1116
  %v1135 = vpop.permute.xlu0 %1134
  %1138 = vset.pattern.permute.xlu0 0
  %1139 = vperm.xlu0 %1138, %v1117
  %v1140 = vpop.permute.xlu0 %1139
  %1143 = vset.pattern.permute.xlu0 0
  %1144 = vperm.xlu0 %1143, %v1118
  %v1145 = vpop.permute.xlu0 %1144
  %1148 = vset.pattern.permute.xlu0 0
  %1149 = vperm.xlu0 %1148, %v1119
  %v1150 = vpop.permute.xlu0 %1149
  %1153 = vset.pattern.permute.xlu0 0
  %1154 = vperm.xlu0 %1153, %v1120
  %v1155 = vpop.permute.xlu0 %1154
  %1158 = vset.pattern.permute.xlu0 0
  %1159 = vperm.xlu0 %1158, %v1121
  %v1160 = vpop.permute.xlu0 %1159
  %v1170 = vunpack.c.l.b16 %v1106
  %v1171 = vunpack.c.l.b16 %v1107
  %v1172 = vunpack.c.l.b16 %v1108
  %v1173 = vunpack.c.l.b16 %v1109
  %v1174 = vunpack.c.l.b16 %v1110
  %v1175 = vunpack.c.l.b16 %v1111
  %v1176 = vunpack.c.l.b16 %v1112
  %v1177 = vunpack.c.l.b16 %v1113
  %v1178 = vpack.c.b16 %v1171, %v1170
  %v1179 = vpack.c.b16 %v1173, %v1172
  %v1180 = vpack.c.b16 %v1175, %v1174
  %v1181 = vpack.c.b16 %v1177, %v1176
  %v1183 = vsel %vm167, %v1178, 0
  %v1186 = vsel %vm167, %v1179, 0
  %v1189 = vsel %vm167, %v1180, 0
  %v1192 = vsel %vm167, %v1181, 0
  %1194 = vmatprep.subr.bf16.mxu0 0
  %1195 = vmatpush1.bf16.msra.mxu0 %v87
  %1196 = vmatprep.subr.bf16.mxu0 0
  %1197 = vmatpush1.bf16.msra.mxu0 %v88
  %1198 = vmatprep.subr.bf16.mxu0 0
  %1199 = vmatpush1.bf16.msra.mxu0 %v89
  %1200 = vmatprep.subr.bf16.mxu0 0
  %1201 = vmatpush1.bf16.msra.mxu0 %v90
  %1202 = vmatprep.subr.bf16.mxu0 0
  %1203 = vmatpush1.bf16.msra.mxu0 0
  %1204 = vmatprep.subr.bf16.mxu0 0
  %1205 = vmatpush1.bf16.msra.mxu0 0
  %1206 = vmatprep.subr.bf16.mxu0 0
  %1207 = vmatpush1.bf16.msra.mxu0 0
  %1208 = vmatprep.subr.bf16.mxu0 0
  %1209 = vmatpush1.bf16.msra.mxu0 0
  %1210 = vmatprep.subr.bf16.mxu0 0
  %1211 = vmatpush1.bf16.msra.mxu0 0
  %1212 = vmatprep.subr.bf16.mxu0 0
  %1213 = vmatpush1.bf16.msra.mxu0 0
  %1214 = vmatprep.subr.bf16.mxu0 0
  %1215 = vmatpush1.bf16.msra.mxu0 0
  %1216 = vmatprep.subr.bf16.mxu0 0
  %1217 = vmatpush1.bf16.msra.mxu0 0
  %1218 = vmatprep.subr.bf16.mxu0 0
  %1219 = vmatpush1.bf16.msra.mxu0 0
  %1220 = vmatprep.subr.bf16.mxu0 0
  %1221 = vmatpush1.bf16.msra.mxu0 0
  %1222 = vmatprep.subr.bf16.mxu0 0
  %1223 = vmatpush1.bf16.msra.mxu0 0
  %1224 = vmatprep.subr.bf16.mxu0 0
  %1225 = vmatpush1.bf16.msra.mxu0 0
  %1226 = vmatprep.mubr.bf16.mxu0 0
  %1227 = vmatmul.mubr.bf16.gmra.mrb[0].mxu0 %v1183
  %v1228 = vpop.f32.mrb[0].mxu0
  %v1229 = vadd.f32 %v1125, %v1228
  %v1230 = vpop.f32.mrb[0].mxu0
  %v1231 = vpop.f32.mrb[0].mxu0
  %v1232 = vadd.f32 %v1130, %v1231
  %v1233 = vpop.f32.mrb[0].mxu0
  %1234 = vmatprep.mubr.bf16.mxu0 0
  %1235 = vmatmul.mubr.bf16.gmra.mrb[0].mxu0 %v1186
  %v1236 = vpop.f32.mrb[0].mxu0
  %v1237 = vadd.f32 %v1135, %v1236
  %v1238 = vpop.f32.mrb[0].mxu0
  %v1239 = vpop.f32.mrb[0].mxu0
  %v1240 = vadd.f32 %v1140, %v1239
  %v1241 = vpop.f32.mrb[0].mxu0
  %1242 = vmatprep.mubr.bf16.mxu0 0
  %1243 = vmatmul.mubr.bf16.gmra.mrb[0].mxu0 %v1189
  %v1244 = vpop.f32.mrb[0].mxu0
  %v1245 = vadd.f32 %v1145, %v1244
  %v1246 = vpop.f32.mrb[0].mxu0
  %v1247 = vpop.f32.mrb[0].mxu0
  %v1248 = vadd.f32 %v1150, %v1247
  %v1249 = vpop.f32.mrb[0].mxu0
  %1250 = vmatprep.mubr.bf16.mxu0 0
  %1251 = vmatmul.mubr.bf16.gmra.mrb[0].mxu0 %v1192
  %v1252 = vpop.f32.mrb[0].mxu0
  %v1253 = vadd.f32 %v1155, %v1252
  %v1254 = vpop.f32.mrb[0].mxu0
  %v1255 = vpop.f32.mrb[0].mxu0
  %v1256 = vadd.f32 %v1160, %v1255
  %v1257 = vpop.f32.mrb[0].mxu0
  %1258 = vdwg.mxu0
  %v1259 = vtanh.pop %v1229
  %v1260 = vtanh.pop %v1232
  %v1261 = vtanh.pop %v1237
  %v1262 = vtanh.pop %v1240
  %v1263 = vtanh.pop %v1245
  %v1264 = vtanh.pop %v1248
  %v1265 = vtanh.pop %v1253
  %v1266 = vtanh.pop %v1256
  %v1267 = vpack.c.bf16 %v1260, %v1259
  %v1268 = vpack.c.bf16 %v1262, %v1261
  %v1269 = vpack.c.bf16 %v1264, %v1263
  %v1270 = vpack.c.bf16 %v1266, %v1265
  %1271 = vst [vmem:[#allocation2 + $0xc0] sm:$0xff] %v1267
  %1272 = vst [vmem:[#allocation2 + $0xc8] sm:$0xff] %v1268
  %1273 = vst [vmem:[#allocation2 + $0xd0] sm:$0xff] %v1269
  %1274 = vst [vmem:[#allocation2 + $0xd8] sm:$0xff] %v1270
  %v1275 = vld [vmem:[%s1 + $0xe0] sm:$0xf]
  %v1276 = vld [vmem:[%s1 + $0xe4] sm:$0xf]
  %v1277 = vld [vmem:[%s1 + $0xe8] sm:$0xf]
  %v1278 = vld [vmem:[%s1 + $0xec] sm:$0xf]
  %v1279 = vld [vmem:[%s1 + $0xf0] sm:$0xf]
  %v1280 = vld [vmem:[%s1 + $0xf4] sm:$0xf]
  %v1281 = vld [vmem:[%s1 + $0xf8] sm:$0xf]
  %v1282 = vld [vmem:[%s1 + $0xfc] sm:$0xf]
  %v1283 = vld [vmem:[%s2 + $0x1c0] sm:$0xff]
  %v1284 = vld [vmem:[%s2 + $0x1c8] sm:$0xff]
  %v1285 = vld [vmem:[%s2 + $0x1d0] sm:$0xff]
  %v1286 = vld [vmem:[%s2 + $0x1d8] sm:$0xff]
  %v1287 = vld [vmem:[%s2 + $0x1e0] sm:$0xff]
  %v1288 = vld [vmem:[%s2 + $0x1e8] sm:$0xff]
  %v1289 = vld [vmem:[%s2 + $0x1f0] sm:$0xff]
  %v1290 = vld [vmem:[%s2 + $0x1f8] sm:$0xff]
  %1292 = vset.pattern.permute.xlu0 0
  %1293 = vperm.xlu0 %1292, %v1283
  %v1294 = vpop.permute.xlu0 %1293
  %1297 = vset.pattern.permute.xlu0 0
  %1298 = vperm.xlu0 %1297, %v1284
  %v1299 = vpop.permute.xlu0 %1298
  %1302 = vset.pattern.permute.xlu0 0
  %1303 = vperm.xlu0 %1302, %v1285
  %v1304 = vpop.permute.xlu0 %1303
  %1307 = vset.pattern.permute.xlu0 0
  %1308 = vperm.xlu0 %1307, %v1286
  %v1309 = vpop.permute.xlu0 %1308
  %1312 = vset.pattern.permute.xlu0 0
  %1313 = vperm.xlu0 %1312, %v1287
  %v1314 = vpop.permute.xlu0 %1313
  %1317 = vset.pattern.permute.xlu0 0
  %1318 = vperm.xlu0 %1317, %v1288
  %v1319 = vpop.permute.xlu0 %1318
  %1322 = vset.pattern.permute.xlu0 0
  %1323 = vperm.xlu0 %1322, %v1289
  %v1324 = vpop.permute.xlu0 %1323
  %1327 = vset.pattern.permute.xlu0 0
  %1328 = vperm.xlu0 %1327, %v1290
  %v1329 = vpop.permute.xlu0 %1328
  %v1339 = vunpack.c.l.b16 %v1275
  %v1340 = vunpack.c.l.b16 %v1276
  %v1341 = vunpack.c.l.b16 %v1277
  %v1342 = vunpack.c.l.b16 %v1278
  %v1343 = vunpack.c.l.b16 %v1279
  %v1344 = vunpack.c.l.b16 %v1280
  %v1345 = vunpack.c.l.b16 %v1281
  %v1346 = vunpack.c.l.b16 %v1282
  %v1347 = vpack.c.b16 %v1340, %v1339
  %v1348 = vpack.c.b16 %v1342, %v1341
  %v1349 = vpack.c.b16 %v1344, %v1343
  %v1350 = vpack.c.b16 %v1346, %v1345
  %v1352 = vsel %vm167, %v1347, 0
  %v1355 = vsel %vm167, %v1348, 0
  %v1358 = vsel %vm167, %v1349, 0
  %v1361 = vsel %vm167, %v1350, 0
  %1363 = vmatprep.subr.bf16.mxu0 0
  %1364 = vmatpush1.bf16.msra.mxu0 %v87
  %1365 = vmatprep.subr.bf16.mxu0 0
  %1366 = vmatpush1.bf16.msra.mxu0 %v88
  %1367 = vmatprep.subr.bf16.mxu0 0
  %1368 = vmatpush1.bf16.msra.mxu0 %v89
  %1369 = vmatprep.subr.bf16.mxu0 0
  %1370 = vmatpush1.bf16.msra.mxu0 %v90
  %1371 = vmatprep.subr.bf16.mxu0 0
  %1372 = vmatpush1.bf16.msra.mxu0 0
  %1373 = vmatprep.subr.bf16.mxu0 0
  %1374 = vmatpush1.bf16.msra.mxu0 0
  %1375 = vmatprep.subr.bf16.mxu0 0
  %1376 = vmatpush1.bf16.msra.mxu0 0
  %1377 = vmatprep.subr.bf16.mxu0 0
  %1378 = vmatpush1.bf16.msra.mxu0 0
  %1379 = vmatprep.subr.bf16.mxu0 0
  %1380 = vmatpush1.bf16.msra.mxu0 0
  %1381 = vmatprep.subr.bf16.mxu0 0
  %1382 = vmatpush1.bf16.msra.mxu0 0
  %1383 = vmatprep.subr.bf16.mxu0 0
  %1384 = vmatpush1.bf16.msra.mxu0 0
  %1385 = vmatprep.subr.bf16.mxu0 0
  %1386 = vmatpush1.bf16.msra.mxu0 0
  %1387 = vmatprep.subr.bf16.mxu0 0
  %1388 = vmatpush1.bf16.msra.mxu0 0
  %1389 = vmatprep.subr.bf16.mxu0 0
  %1390 = vmatpush1.bf16.msra.mxu0 0
  %1391 = vmatprep.subr.bf16.mxu0 0
  %1392 = vmatpush1.bf16.msra.mxu0 0
  %1393 = vmatprep.subr.bf16.mxu0 0
  %1394 = vmatpush1.bf16.msra.mxu0 0
  %1395 = vmatprep.mubr.bf16.mxu0 0
  %1396 = vmatmul.mubr.bf16.gmra.mrb[0].mxu0 %v1352
  %v1397 = vpop.f32.mrb[0].mxu0
  %v1398 = vadd.f32 %v1294, %v1397
  %v1399 = vpop.f32.mrb[0].mxu0
  %v1400 = vpop.f32.mrb[0].mxu0
  %v1401 = vadd.f32 %v1299, %v1400
  %v1402 = vpop.f32.mrb[0].mxu0
  %1403 = vmatprep.mubr.bf16.mxu0 0
  %1404 = vmatmul.mubr.bf16.gmra.mrb[0].mxu0 %v1355
  %v1405 = vpop.f32.mrb[0].mxu0
  %v1406 = vadd.f32 %v1304, %v1405
  %v1407 = vpop.f32.mrb[0].mxu0
  %v1408 = vpop.f32.mrb[0].mxu0
  %v1409 = vadd.f32 %v1309, %v1408
  %v1410 = vpop.f32.mrb[0].mxu0
  %1411 = vmatprep.mubr.bf16.mxu0 0
  %1412 = vmatmul.mubr.bf16.gmra.mrb[0].mxu0 %v1358
  %v1413 = vpop.f32.mrb[0].mxu0
  %v1414 = vadd.f32 %v1314, %v1413
  %v1415 = vpop.f32.mrb[0].mxu0
  %v1416 = vpop.f32.mrb[0].mxu0
  %v1417 = vadd.f32 %v1319, %v1416
  %v1418 = vpop.f32.mrb[0].mxu0
  %1419 = vmatprep.mubr.bf16.mxu0 0
  %1420 = vmatmul.mubr.bf16.gmra.mrb[0].mxu0 %v1361
  %v1421 = vpop.f32.mrb[0].mxu0
  %v1422 = vadd.f32 %v1324, %v1421
  %v1423 = vpop.f32.mrb[0].mxu0
  %v1424 = vpop.f32.mrb[0].mxu0
  %v1425 = vadd.f32 %v1329, %v1424
  %v1426 = vpop.f32.mrb[0].mxu0
  %1427 = vdwg.mxu0
  %v1428 = vtanh.pop %v1398
  %v1429 = vtanh.pop %v1401
  %v1430 = vtanh.pop %v1406
  %v1431 = vtanh.pop %v1409
  %v1432 = vtanh.pop %v1414
  %v1433 = vtanh.pop %v1417
  %v1434 = vtanh.pop %v1422
  %v1435 = vtanh.pop %v1425
  %v1436 = vpack.c.bf16 %v1429, %v1428
  %v1437 = vpack.c.bf16 %v1431, %v1430
  %v1438 = vpack.c.bf16 %v1433, %v1432
  %v1439 = vpack.c.bf16 %v1435, %v1434
  %1440 = vst [vmem:[#allocation2 + $0xe0] sm:$0xff] %v1436
  %1441 = vst [vmem:[#allocation2 + $0xe8] sm:$0xff] %v1437
  %1442 = vst [vmem:[#allocation2 + $0xf0] sm:$0xff] %v1438
  %1443 = vst [vmem:[#allocation2 + $0xf8] sm:$0xff] %v1439
  %v1444 = vld [vmem:[%s1 + $0x100] sm:$0xf]
  %v1445 = vld [vmem:[%s1 + $0x104] sm:$0xf]
  %v1446 = vld [vmem:[%s1 + $0x108] sm:$0xf]
  %v1447 = vld [vmem:[%s1 + $0x10c] sm:$0xf]
  %v1448 = vld [vmem:[%s1 + $0x110] sm:$0xf]
  %v1449 = vld [vmem:[%s1 + $0x114] sm:$0xf]
  %v1450 = vld [vmem:[%s1 + $0x118] sm:$0xf]
  %v1451 = vld [vmem:[%s1 + $0x11c] sm:$0xf]
  %v1452 = vld [vmem:[%s2 + $0x200] sm:$0xff]
  %v1453 = vld [vmem:[%s2 + $0x208] sm:$0xff]
  %v1454 = vld [vmem:[%s2 + $0x210] sm:$0xff]
  %v1455 = vld [vmem:[%s2 + $0x218] sm:$0xff]
  %v1456 = vld [vmem:[%s2 + $0x220] sm:$0xff]
  %v1457 = vld [vmem:[%s2 + $0x228] sm:$0xff]
  %v1458 = vld [vmem:[%s2 + $0x230] sm:$0xff]
  %v1459 = vld [vmem:[%s2 + $0x238] sm:$0xff]
  %1461 = vset.pattern.permute.xlu0 0
  %1462 = vperm.xlu0 %1461, %v1452
  %v1463 = vpop.permute.xlu0 %1462
  %1466 = vset.pattern.permute.xlu0 0
  %1467 = vperm.xlu0 %1466, %v1453
  %v1468 = vpop.permute.xlu0 %1467
  %1471 = vset.pattern.permute.xlu0 0
  %1472 = vperm.xlu0 %1471, %v1454
  %v1473 = vpop.permute.xlu0 %1472
  %1476 = vset.pattern.permute.xlu0 0
  %1477 = vperm.xlu0 %1476, %v1455
  %v1478 = vpop.permute.xlu0 %1477
  %1481 = vset.pattern.permute.xlu0 0
  %1482 = vperm.xlu0 %1481, %v1456
  %v1483 = vpop.permute.xlu0 %1482
  %1486 = vset.pattern.permute.xlu0 0
  %1487 = vperm.xlu0 %1486, %v1457
  %v1488 = vpop.permute.xlu0 %1487
  %1491 = vset.pattern.permute.xlu0 0
  %1492 = vperm.xlu0 %1491, %v1458
  %v1493 = vpop.permute.xlu0 %1492
  %1496 = vset.pattern.permute.xlu0 0
  %1497 = vperm.xlu0 %1496, %v1459
  %v1498 = vpop.permute.xlu0 %1497
  %v1508 = vunpack.c.l.b16 %v1444
  %v1509 = vunpack.c.l.b16 %v1445
  %v1510 = vunpack.c.l.b16 %v1446
  %v1511 = vunpack.c.l.b16 %v1447
  %v1512 = vunpack.c.l.b16 %v1448
  %v1513 = vunpack.c.l.b16 %v1449
  %v1514 = vunpack.c.l.b16 %v1450
  %v1515 = vunpack.c.l.b16 %v1451
  %v1516 = vpack.c.b16 %v1509, %v1508
  %v1517 = vpack.c.b16 %v1511, %v1510
  %v1518 = vpack.c.b16 %v1513, %v1512
  %v1519 = vpack.c.b16 %v1515, %v1514
  %v1521 = vsel %vm167, %v1516, 0
  %v1524 = vsel %vm167, %v1517, 0
  %v1527 = vsel %vm167, %v1518, 0
  %v1530 = vsel %vm167, %v1519, 0
  %1532 = vmatprep.subr.bf16.mxu0 0
  %1533 = vmatpush1.bf16.msra.mxu0 %v87
  %1534 = vmatprep.subr.bf16.mxu0 0
  %1535 = vmatpush1.bf16.msra.mxu0 %v88
  %1536 = vmatprep.subr.bf16.mxu0 0
  %1537 = vmatpush1.bf16.msra.mxu0 %v89
  %1538 = vmatprep.subr.bf16.mxu0 0
  %1539 = vmatpush1.bf16.msra.mxu0 %v90
  %1540 = vmatprep.subr.bf16.mxu0 0
  %1541 = vmatpush1.bf16.msra.mxu0 0
  %1542 = vmatprep.subr.bf16.mxu0 0
  %1543 = vmatpush1.bf16.msra.mxu0 0
  %1544 = vmatprep.subr.bf16.mxu0 0
  %1545 = vmatpush1.bf16.msra.mxu0 0
  %1546 = vmatprep.subr.bf16.mxu0 0
  %1547 = vmatpush1.bf16.msra.mxu0 0
  %1548 = vmatprep.subr.bf16.mxu0 0
  %1549 = vmatpush1.bf16.msra.mxu0 0
  %1550 = vmatprep.subr.bf16.mxu0 0
  %1551 = vmatpush1.bf16.msra.mxu0 0
  %1552 = vmatprep.subr.bf16.mxu0 0
  %1553 = vmatpush1.bf16.msra.mxu0 0
  %1554 = vmatprep.subr.bf16.mxu0 0
  %1555 = vmatpush1.bf16.msra.mxu0 0
  %1556 = vmatprep.subr.bf16.mxu0 0
  %1557 = vmatpush1.bf16.msra.mxu0 0
  %1558 = vmatprep.subr.bf16.mxu0 0
  %1559 = vmatpush1.bf16.msra.mxu0 0
  %1560 = vmatprep.subr.bf16.mxu0 0
  %1561 = vmatpush1.bf16.msra.mxu0 0
  %1562 = vmatprep.subr.bf16.mxu0 0
  %1563 = vmatpush1.bf16.msra.mxu0 0
  %1564 = vmatprep.mubr.bf16.mxu0 0
  %1565 = vmatmul.mubr.bf16.gmra.mrb[0].mxu0 %v1521
  %v1566 = vpop.f32.mrb[0].mxu0
  %v1567 = vadd.f32 %v1463, %v1566
  %v1568 = vpop.f32.mrb[0].mxu0
  %v1569 = vpop.f32.mrb[0].mxu0
  %v1570 = vadd.f32 %v1468, %v1569
  %v1571 = vpop.f32.mrb[0].mxu0
  %1572 = vmatprep.mubr.bf16.mxu0 0
  %1573 = vmatmul.mubr.bf16.gmra.mrb[0].mxu0 %v1524
  %v1574 = vpop.f32.mrb[0].mxu0
  %v1575 = vadd.f32 %v1473, %v1574
  %v1576 = vpop.f32.mrb[0].mxu0
  %v1577 = vpop.f32.mrb[0].mxu0
  %v1578 = vadd.f32 %v1478, %v1577
  %v1579 = vpop.f32.mrb[0].mxu0
  %1580 = vmatprep.mubr.bf16.mxu0 0
  %1581 = vmatmul.mubr.bf16.gmra.mrb[0].mxu0 %v1527
  %v1582 = vpop.f32.mrb[0].mxu0
  %v1583 = vadd.f32 %v1483, %v1582
  %v1584 = vpop.f32.mrb[0].mxu0
  %v1585 = vpop.f32.mrb[0].mxu0
  %v1586 = vadd.f32 %v1488, %v1585
  %v1587 = vpop.f32.mrb[0].mxu0
  %1588 = vmatprep.mubr.bf16.mxu0 0
  %1589 = vmatmul.mubr.bf16.gmra.mrb[0].mxu0 %v1530
  %v1590 = vpop.f32.mrb[0].mxu0
  %v1591 = vadd.f32 %v1493, %v1590
  %v1592 = vpop.f32.mrb[0].mxu0
  %v1593 = vpop.f32.mrb[0].mxu0
  %v1594 = vadd.f32 %v1498, %v1593
  %v1595 = vpop.f32.mrb[0].mxu0
  %1596 = vdwg.mxu0
  %v1597 = vtanh.pop %v1567
  %v1598 = vtanh.pop %v1570
  %v1599 = vtanh.pop %v1575
  %v1600 = vtanh.pop %v1578
  %v1601 = vtanh.pop %v1583
  %v1602 = vtanh.pop %v1586
  %v1603 = vtanh.pop %v1591
  %v1604 = vtanh.pop %v1594
  %v1605 = vpack.c.bf16 %v1598, %v1597
  %v1606 = vpack.c.bf16 %v1600, %v1599
  %v1607 = vpack.c.bf16 %v1602, %v1601
  %v1608 = vpack.c.bf16 %v1604, %v1603
  %1609 = vst [vmem:[#allocation2 + $0x100] sm:$0xff] %v1605
  %1610 = vst [vmem:[#allocation2 + $0x108] sm:$0xff] %v1606
  %1611 = vst [vmem:[#allocation2 + $0x110] sm:$0xff] %v1607
  %1612 = vst [vmem:[#allocation2 + $0x118] sm:$0xff] %v1608
  %v1613 = vld [vmem:[%s1 + $0x120] sm:$0xf]
  %v1614 = vld [vmem:[%s1 + $0x124] sm:$0xf]
  %v1615 = vld [vmem:[%s1 + $0x128] sm:$0xf]
  %v1616 = vld [vmem:[%s1 + $0x12c] sm:$0xf]
  %v1617 = vld [vmem:[%s1 + $0x130] sm:$0xf]
  %v1618 = vld [vmem:[%s1 + $0x134] sm:$0xf]
  %v1619 = vld [vmem:[%s1 + $0x138] sm:$0xf]
  %v1620 = vld [vmem:[%s1 + $0x13c] sm:$0xf]
  %v1621 = vld [vmem:[%s2 + $0x240] sm:$0xff]
  %v1622 = vld [vmem:[%s2 + $0x248] sm:$0xff]
  %v1623 = vld [vmem:[%s2 + $0x250] sm:$0xff]
  %v1624 = vld [vmem:[%s2 + $0x258] sm:$0xff]
  %v1625 = vld [vmem:[%s2 + $0x260] sm:$0xff]
  %v1626 = vld [vmem:[%s2 + $0x268] sm:$0xff]
  %v1627 = vld [vmem:[%s2 + $0x270] sm:$0xff]
  %v1628 = vld [vmem:[%s2 + $0x278] sm:$0xff]
  %1630 = vset.pattern.permute.xlu0 0
  %1631 = vperm.xlu0 %1630, %v1621
  %v1632 = vpop.permute.xlu0 %1631
  %1635 = vset.pattern.permute.xlu0 0
  %1636 = vperm.xlu0 %1635, %v1622
  %v1637 = vpop.permute.xlu0 %1636
  %1640 = vset.pattern.permute.xlu0 0
  %1641 = vperm.xlu0 %1640, %v1623
  %v1642 = vpop.permute.xlu0 %1641
  %1645 = vset.pattern.permute.xlu0 0
  %1646 = vperm.xlu0 %1645, %v1624
  %v1647 = vpop.permute.xlu0 %1646
  %1650 = vset.pattern.permute.xlu0 0
  %1651 = vperm.xlu0 %1650, %v1625
  %v1652 = vpop.permute.xlu0 %1651
  %1655 = vset.pattern.permute.xlu0 0
  %1656 = vperm.xlu0 %1655, %v1626
  %v1657 = vpop.permute.xlu0 %1656
  %1660 = vset.pattern.permute.xlu0 0
  %1661 = vperm.xlu0 %1660, %v1627
  %v1662 = vpop.permute.xlu0 %1661
  %1665 = vset.pattern.permute.xlu0 0
  %1666 = vperm.xlu0 %1665, %v1628
  %v1667 = vpop.permute.xlu0 %1666
  %v1677 = vunpack.c.l.b16 %v1613
  %v1678 = vunpack.c.l.b16 %v1614
  %v1679 = vunpack.c.l.b16 %v1615
  %v1680 = vunpack.c.l.b16 %v1616
  %v1681 = vunpack.c.l.b16 %v1617
  %v1682 = vunpack.c.l.b16 %v1618
  %v1683 = vunpack.c.l.b16 %v1619
  %v1684 = vunpack.c.l.b16 %v1620
  %v1685 = vpack.c.b16 %v1678, %v1677
  %v1686 = vpack.c.b16 %v1680, %v1679
  %v1687 = vpack.c.b16 %v1682, %v1681
  %v1688 = vpack.c.b16 %v1684, %v1683
  %v1690 = vsel %vm167, %v1685, 0
  %v1693 = vsel %vm167, %v1686, 0
  %v1696 = vsel %vm167, %v1687, 0
  %v1699 = vsel %vm167, %v1688, 0
  %1701 = vmatprep.subr.bf16.mxu0 0
  %1702 = vmatpush1.bf16.msra.mxu0 %v87
  %1703 = vmatprep.subr.bf16.mxu0 0
  %1704 = vmatpush1.bf16.msra.mxu0 %v88
  %1705 = vmatprep.subr.bf16.mxu0 0
  %1706 = vmatpush1.bf16.msra.mxu0 %v89
  %1707 = vmatprep.subr.bf16.mxu0 0
  %1708 = vmatpush1.bf16.msra.mxu0 %v90
  %1709 = vmatprep.subr.bf16.mxu0 0
  %1710 = vmatpush1.bf16.msra.mxu0 0
  %1711 = vmatprep.subr.bf16.mxu0 0
  %1712 = vmatpush1.bf16.msra.mxu0 0
  %1713 = vmatprep.subr.bf16.mxu0 0
  %1714 = vmatpush1.bf16.msra.mxu0 0
  %1715 = vmatprep.subr.bf16.mxu0 0
  %1716 = vmatpush1.bf16.msra.mxu0 0
  %1717 = vmatprep.subr.bf16.mxu0 0
  %1718 = vmatpush1.bf16.msra.mxu0 0
  %1719 = vmatprep.subr.bf16.mxu0 0
  %1720 = vmatpush1.bf16.msra.mxu0 0
  %1721 = vmatprep.subr.bf16.mxu0 0
  %1722 = vmatpush1.bf16.msra.mxu0 0
  %1723 = vmatprep.subr.bf16.mxu0 0
  %1724 = vmatpush1.bf16.msra.mxu0 0
  %1725 = vmatprep.subr.bf16.mxu0 0
  %1726 = vmatpush1.bf16.msra.mxu0 0
  %1727 = vmatprep.subr.bf16.mxu0 0
  %1728 = vmatpush1.bf16.msra.mxu0 0
  %1729 = vmatprep.subr.bf16.mxu0 0
  %1730 = vmatpush1.bf16.msra.mxu0 0
  %1731 = vmatprep.subr.bf16.mxu0 0
  %1732 = vmatpush1.bf16.msra.mxu0 0
  %1733 = vmatprep.mubr.bf16.mxu0 0
  %1734 = vmatmul.mubr.bf16.gmra.mrb[0].mxu0 %v1690
  %v1735 = vpop.f32.mrb[0].mxu0
  %v1736 = vadd.f32 %v1632, %v1735
  %v1737 = vpop.f32.mrb[0].mxu0
  %v1738 = vpop.f32.mrb[0].mxu0
  %v1739 = vadd.f32 %v1637, %v1738
  %v1740 = vpop.f32.mrb[0].mxu0
  %1741 = vmatprep.mubr.bf16.mxu0 0
  %1742 = vmatmul.mubr.bf16.gmra.mrb[0].mxu0 %v1693
  %v1743 = vpop.f32.mrb[0].mxu0
  %v1744 = vadd.f32 %v1642, %v1743
  %v1745 = vpop.f32.mrb[0].mxu0
  %v1746 = vpop.f32.mrb[0].mxu0
  %v1747 = vadd.f32 %v1647, %v1746
  %v1748 = vpop.f32.mrb[0].mxu0
  %1749 = vmatprep.mubr.bf16.mxu0 0
  %1750 = vmatmul.mubr.bf16.gmra.mrb[0].mxu0 %v1696
  %v1751 = vpop.f32.mrb[0].mxu0
  %v1752 = vadd.f32 %v1652, %v1751
  %v1753 = vpop.f32.mrb[0].mxu0
  %v1754 = vpop.f32.mrb[0].mxu0
  %v1755 = vadd.f32 %v1657, %v1754
  %v1756 = vpop.f32.mrb[0].mxu0
  %1757 = vmatprep.mubr.bf16.mxu0 0
  %1758 = vmatmul.mubr.bf16.gmra.mrb[0].mxu0 %v1699
  %v1759 = vpop.f32.mrb[0].mxu0
  %v1760 = vadd.f32 %v1662, %v1759
  %v1761 = vpop.f32.mrb[0].mxu0
  %v1762 = vpop.f32.mrb[0].mxu0
  %v1763 = vadd.f32 %v1667, %v1762
  %v1764 = vpop.f32.mrb[0].mxu0
  %1765 = vdwg.mxu0
  %v1766 = vtanh.pop %v1736
  %v1767 = vtanh.pop %v1739
  %v1768 = vtanh.pop %v1744
  %v1769 = vtanh.pop %v1747
  %v1770 = vtanh.pop %v1752
  %v1771 = vtanh.pop %v1755
  %v1772 = vtanh.pop %v1760
  %v1773 = vtanh.pop %v1763
  %v1774 = vpack.c.bf16 %v1767, %v1766
  %v1775 = vpack.c.bf16 %v1769, %v1768
  %v1776 = vpack.c.bf16 %v1771, %v1770
  %v1777 = vpack.c.bf16 %v1773, %v1772
  %1778 = vst [vmem:[#allocation2 + $0x120] sm:$0xff] %v1774
  %1779 = vst [vmem:[#allocation2 + $0x128] sm:$0xff] %v1775
  %1780 = vst [vmem:[#allocation2 + $0x130] sm:$0xff] %v1776
  %1781 = vst [vmem:[#allocation2 + $0x138] sm:$0xff] %v1777
  %v1782 = vld [vmem:[%s1 + $0x140] sm:$0xf]
  %v1783 = vld [vmem:[%s1 + $0x144] sm:$0xf]
  %v1784 = vld [vmem:[%s1 + $0x148] sm:$0xf]
  %v1785 = vld [vmem:[%s1 + $0x14c] sm:$0xf]
  %v1786 = vld [vmem:[%s1 + $0x150] sm:$0xf]
  %v1787 = vld [vmem:[%s1 + $0x154] sm:$0xf]
  %v1788 = vld [vmem:[%s1 + $0x158] sm:$0xf]
  %v1789 = vld [vmem:[%s1 + $0x15c] sm:$0xf]
  %v1790 = vld [vmem:[%s2 + $0x280] sm:$0xff]
  %v1791 = vld [vmem:[%s2 + $0x288] sm:$0xff]
  %v1792 = vld [vmem:[%s2 + $0x290] sm:$0xff]
  %v1793 = vld [vmem:[%s2 + $0x298] sm:$0xff]
  %v1794 = vld [vmem:[%s2 + $0x2a0] sm:$0xff]
  %v1795 = vld [vmem:[%s2 + $0x2a8] sm:$0xff]
  %v1796 = vld [vmem:[%s2 + $0x2b0] sm:$0xff]
  %v1797 = vld [vmem:[%s2 + $0x2b8] sm:$0xff]
  %1799 = vset.pattern.permute.xlu0 0
  %1800 = vperm.xlu0 %1799, %v1790
  %v1801 = vpop.permute.xlu0 %1800
  %1804 = vset.pattern.permute.xlu0 0
  %1805 = vperm.xlu0 %1804, %v1791
  %v1806 = vpop.permute.xlu0 %1805
  %1809 = vset.pattern.permute.xlu0 0
  %1810 = vperm.xlu0 %1809, %v1792
  %v1811 = vpop.permute.xlu0 %1810
  %1814 = vset.pattern.permute.xlu0 0
  %1815 = vperm.xlu0 %1814, %v1793
  %v1816 = vpop.permute.xlu0 %1815
  %1819 = vset.pattern.permute.xlu0 0
  %1820 = vperm.xlu0 %1819, %v1794
  %v1821 = vpop.permute.xlu0 %1820
  %1824 = vset.pattern.permute.xlu0 0
  %1825 = vperm.xlu0 %1824, %v1795
  %v1826 = vpop.permute.xlu0 %1825
  %1829 = vset.pattern.permute.xlu0 0
  %1830 = vperm.xlu0 %1829, %v1796
  %v1831 = vpop.permute.xlu0 %1830
  %1834 = vset.pattern.permute.xlu0 0
  %1835 = vperm.xlu0 %1834, %v1797
  %v1836 = vpop.permute.xlu0 %1835
  %v1846 = vunpack.c.l.b16 %v1782
  %v1847 = vunpack.c.l.b16 %v1783
  %v1848 = vunpack.c.l.b16 %v1784
  %v1849 = vunpack.c.l.b16 %v1785
  %v1850 = vunpack.c.l.b16 %v1786
  %v1851 = vunpack.c.l.b16 %v1787
  %v1852 = vunpack.c.l.b16 %v1788
  %v1853 = vunpack.c.l.b16 %v1789
  %v1854 = vpack.c.b16 %v1847, %v1846
  %v1855 = vpack.c.b16 %v1849, %v1848
  %v1856 = vpack.c.b16 %v1851, %v1850
  %v1857 = vpack.c.b16 %v1853, %v1852
  %v1859 = vsel %vm167, %v1854, 0
  %v1862 = vsel %vm167, %v1855, 0
  %v1865 = vsel %vm167, %v1856, 0
  %v1868 = vsel %vm167, %v1857, 0
  %1870 = vmatprep.subr.bf16.mxu0 0
  %1871 = vmatpush1.bf16.msra.mxu0 %v87
  %1872 = vmatprep.subr.bf16.mxu0 0
  %1873 = vmatpush1.bf16.msra.mxu0 %v88
  %1874 = vmatprep.subr.bf16.mxu0 0
  %1875 = vmatpush1.bf16.msra.mxu0 %v89
  %1876 = vmatprep.subr.bf16.mxu0 0
  %1877 = vmatpush1.bf16.msra.mxu0 %v90
  %1878 = vmatprep.subr.bf16.mxu0 0
  %1879 = vmatpush1.bf16.msra.mxu0 0
  %1880 = vmatprep.subr.bf16.mxu0 0
  %1881 = vmatpush1.bf16.msra.mxu0 0
  %1882 = vmatprep.subr.bf16.mxu0 0
  %1883 = vmatpush1.bf16.msra.mxu0 0
  %1884 = vmatprep.subr.bf16.mxu0 0
  %1885 = vmatpush1.bf16.msra.mxu0 0
  %1886 = vmatprep.subr.bf16.mxu0 0
  %1887 = vmatpush1.bf16.msra.mxu0 0
  %1888 = vmatprep.subr.bf16.mxu0 0
  %1889 = vmatpush1.bf16.msra.mxu0 0
  %1890 = vmatprep.subr.bf16.mxu0 0
  %1891 = vmatpush1.bf16.msra.mxu0 0
  %1892 = vmatprep.subr.bf16.mxu0 0
  %1893 = vmatpush1.bf16.msra.mxu0 0
  %1894 = vmatprep.subr.bf16.mxu0 0
  %1895 = vmatpush1.bf16.msra.mxu0 0
  %1896 = vmatprep.subr.bf16.mxu0 0
  %1897 = vmatpush1.bf16.msra.mxu0 0
  %1898 = vmatprep.subr.bf16.mxu0 0
  %1899 = vmatpush1.bf16.msra.mxu0 0
  %1900 = vmatprep.subr.bf16.mxu0 0
  %1901 = vmatpush1.bf16.msra.mxu0 0
  %1902 = vmatprep.mubr.bf16.mxu0 0
  %1903 = vmatmul.mubr.bf16.gmra.mrb[0].mxu0 %v1859
  %v1904 = vpop.f32.mrb[0].mxu0
  %v1905 = vadd.f32 %v1801, %v1904
  %v1906 = vpop.f32.mrb[0].mxu0
  %v1907 = vpop.f32.mrb[0].mxu0
  %v1908 = vadd.f32 %v1806, %v1907
  %v1909 = vpop.f32.mrb[0].mxu0
  %1910 = vmatprep.mubr.bf16.mxu0 0
  %1911 = vmatmul.mubr.bf16.gmra.mrb[0].mxu0 %v1862
  %v1912 = vpop.f32.mrb[0].mxu0
  %v1913 = vadd.f32 %v1811, %v1912
  %v1914 = vpop.f32.mrb[0].mxu0
  %v1915 = vpop.f32.mrb[0].mxu0
  %v1916 = vadd.f32 %v1816, %v1915
  %v1917 = vpop.f32.mrb[0].mxu0
  %1918 = vmatprep.mubr.bf16.mxu0 0
  %1919 = vmatmul.mubr.bf16.gmra.mrb[0].mxu0 %v1865
  %v1920 = vpop.f32.mrb[0].mxu0
  %v1921 = vadd.f32 %v1821, %v1920
  %v1922 = vpop.f32.mrb[0].mxu0
  %v1923 = vpop.f32.mrb[0].mxu0
  %v1924 = vadd.f32 %v1826, %v1923
  %v1925 = vpop.f32.mrb[0].mxu0
  %1926 = vmatprep.mubr.bf16.mxu0 0
  %1927 = vmatmul.mubr.bf16.gmra.mrb[0].mxu0 %v1868
  %v1928 = vpop.f32.mrb[0].mxu0
  %v1929 = vadd.f32 %v1831, %v1928
  %v1930 = vpop.f32.mrb[0].mxu0
  %v1931 = vpop.f32.mrb[0].mxu0
  %v1932 = vadd.f32 %v1836, %v1931
  %v1933 = vpop.f32.mrb[0].mxu0
  %1934 = vdwg.mxu0
  %v1935 = vtanh.pop %v1905
  %v1936 = vtanh.pop %v1908
  %v1937 = vtanh.pop %v1913
  %v1938 = vtanh.pop %v1916
  %v1939 = vtanh.pop %v1921
  %v1940 = vtanh.pop %v1924
  %v1941 = vtanh.pop %v1929
  %v1942 = vtanh.pop %v1932
  %v1943 = vpack.c.bf16 %v1936, %v1935
  %v1944 = vpack.c.bf16 %v1938, %v1937
  %v1945 = vpack.c.bf16 %v1940, %v1939
  %v1946 = vpack.c.bf16 %v1942, %v1941
  %1947 = vst [vmem:[#allocation2 + $0x140] sm:$0xff] %v1943
  %1948 = vst [vmem:[#allocation2 + $0x148] sm:$0xff] %v1944
  %1949 = vst [vmem:[#allocation2 + $0x150] sm:$0xff] %v1945
  %1950 = vst [vmem:[#allocation2 + $0x158] sm:$0xff] %v1946
  %v1951 = vld [vmem:[%s1 + $0x160] sm:$0xf]
  %v1952 = vld [vmem:[%s1 + $0x164] sm:$0xf]
  %v1953 = vld [vmem:[%s1 + $0x168] sm:$0xf]
  %v1954 = vld [vmem:[%s1 + $0x16c] sm:$0xf]
  %v1955 = vld [vmem:[%s1 + $0x170] sm:$0xf]
  %v1956 = vld [vmem:[%s1 + $0x174] sm:$0xf]
  %v1957 = vld [vmem:[%s1 + $0x178] sm:$0xf]
  %v1958 = vld [vmem:[%s1 + $0x17c] sm:$0xf]
  %v1959 = vld [vmem:[%s2 + $0x2c0] sm:$0xff]
  %v1960 = vld [vmem:[%s2 + $0x2c8] sm:$0xff]
  %v1961 = vld [vmem:[%s2 + $0x2d0] sm:$0xff]
  %v1962 = vld [vmem:[%s2 + $0x2d8] sm:$0xff]
  %v1963 = vld [vmem:[%s2 + $0x2e0] sm:$0xff]
  %v1964 = vld [vmem:[%s2 + $0x2e8] sm:$0xff]
  %v1965 = vld [vmem:[%s2 + $0x2f0] sm:$0xff]
  %v1966 = vld [vmem:[%s2 + $0x2f8] sm:$0xff]
  %1968 = vset.pattern.permute.xlu0 0
  %1969 = vperm.xlu0 %1968, %v1959
  %v1970 = vpop.permute.xlu0 %1969
  %1973 = vset.pattern.permute.xlu0 0
  %1974 = vperm.xlu0 %1973, %v1960
  %v1975 = vpop.permute.xlu0 %1974
  %1978 = vset.pattern.permute.xlu0 0
  %1979 = vperm.xlu0 %1978, %v1961
  %v1980 = vpop.permute.xlu0 %1979
  %1983 = vset.pattern.permute.xlu0 0
  %1984 = vperm.xlu0 %1983, %v1962
  %v1985 = vpop.permute.xlu0 %1984
  %1988 = vset.pattern.permute.xlu0 0
  %1989 = vperm.xlu0 %1988, %v1963
  %v1990 = vpop.permute.xlu0 %1989
  %1993 = vset.pattern.permute.xlu0 0
  %1994 = vperm.xlu0 %1993, %v1964
  %v1995 = vpop.permute.xlu0 %1994
  %1998 = vset.pattern.permute.xlu0 0
  %1999 = vperm.xlu0 %1998, %v1965
  %v2000 = vpop.permute.xlu0 %1999
  %2003 = vset.pattern.permute.xlu0 0
  %2004 = vperm.xlu0 %2003, %v1966
  %v2005 = vpop.permute.xlu0 %2004
  %v2015 = vunpack.c.l.b16 %v1951
  %v2016 = vunpack.c.l.b16 %v1952
  %v2017 = vunpack.c.l.b16 %v1953
  %v2018 = vunpack.c.l.b16 %v1954
  %v2019 = vunpack.c.l.b16 %v1955
  %v2020 = vunpack.c.l.b16 %v1956
  %v2021 = vunpack.c.l.b16 %v1957
  %v2022 = vunpack.c.l.b16 %v1958
  %v2023 = vpack.c.b16 %v2016, %v2015
  %v2024 = vpack.c.b16 %v2018, %v2017
  %v2025 = vpack.c.b16 %v2020, %v2019
  %v2026 = vpack.c.b16 %v2022, %v2021
  %v2028 = vsel %vm167, %v2023, 0
  %v2031 = vsel %vm167, %v2024, 0
  %v2034 = vsel %vm167, %v2025, 0
  %v2037 = vsel %vm167, %v2026, 0
  %2039 = vmatprep.subr.bf16.mxu0 0
  %2040 = vmatpush1.bf16.msra.mxu0 %v87
  %2041 = vmatprep.subr.bf16.mxu0 0
  %2042 = vmatpush1.bf16.msra.mxu0 %v88
  %2043 = vmatprep.subr.bf16.mxu0 0
  %2044 = vmatpush1.bf16.msra.mxu0 %v89
  %2045 = vmatprep.subr.bf16.mxu0 0
  %2046 = vmatpush1.bf16.msra.mxu0 %v90
  %2047 = vmatprep.subr.bf16.mxu0 0
  %2048 = vmatpush1.bf16.msra.mxu0 0
  %2049 = vmatprep.subr.bf16.mxu0 0
  %2050 = vmatpush1.bf16.msra.mxu0 0
  %2051 = vmatprep.subr.bf16.mxu0 0
  %2052 = vmatpush1.bf16.msra.mxu0 0
  %2053 = vmatprep.subr.bf16.mxu0 0
  %2054 = vmatpush1.bf16.msra.mxu0 0
  %2055 = vmatprep.subr.bf16.mxu0 0
  %2056 = vmatpush1.bf16.msra.mxu0 0
  %2057 = vmatprep.subr.bf16.mxu0 0
  %2058 = vmatpush1.bf16.msra.mxu0 0
  %2059 = vmatprep.subr.bf16.mxu0 0
  %2060 = vmatpush1.bf16.msra.mxu0 0
  %2061 = vmatprep.subr.bf16.mxu0 0
  %2062 = vmatpush1.bf16.msra.mxu0 0
  %2063 = vmatprep.subr.bf16.mxu0 0
  %2064 = vmatpush1.bf16.msra.mxu0 0
  %2065 = vmatprep.subr.bf16.mxu0 0
  %2066 = vmatpush1.bf16.msra.mxu0 0
  %2067 = vmatprep.subr.bf16.mxu0 0
  %2068 = vmatpush1.bf16.msra.mxu0 0
  %2069 = vmatprep.subr.bf16.mxu0 0
  %2070 = vmatpush1.bf16.msra.mxu0 0
  %2071 = vmatprep.mubr.bf16.mxu0 0
  %2072 = vmatmul.mubr.bf16.gmra.mrb[0].mxu0 %v2028
  %v2073 = vpop.f32.mrb[0].mxu0
  %v2074 = vadd.f32 %v1970, %v2073
  %v2075 = vpop.f32.mrb[0].mxu0
  %v2076 = vpop.f32.mrb[0].mxu0
  %v2077 = vadd.f32 %v1975, %v2076
  %v2078 = vpop.f32.mrb[0].mxu0
  %2079 = vmatprep.mubr.bf16.mxu0 0
  %2080 = vmatmul.mubr.bf16.gmra.mrb[0].mxu0 %v2031
  %v2081 = vpop.f32.mrb[0].mxu0
  %v2082 = vadd.f32 %v1980, %v2081
  %v2083 = vpop.f32.mrb[0].mxu0
  %v2084 = vpop.f32.mrb[0].mxu0
  %v2085 = vadd.f32 %v1985, %v2084
  %v2086 = vpop.f32.mrb[0].mxu0
  %2087 = vmatprep.mubr.bf16.mxu0 0
  %2088 = vmatmul.mubr.bf16.gmra.mrb[0].mxu0 %v2034
  %v2089 = vpop.f32.mrb[0].mxu0
  %v2090 = vadd.f32 %v1990, %v2089
  %v2091 = vpop.f32.mrb[0].mxu0
  %v2092 = vpop.f32.mrb[0].mxu0
  %v2093 = vadd.f32 %v1995, %v2092
  %v2094 = vpop.f32.mrb[0].mxu0
  %2095 = vmatprep.mubr.bf16.mxu0 0
  %2096 = vmatmul.mubr.bf16.gmra.mrb[0].mxu0 %v2037
  %v2097 = vpop.f32.mrb[0].mxu0
  %v2098 = vadd.f32 %v2000, %v2097
  %v2099 = vpop.f32.mrb[0].mxu0
  %v2100 = vpop.f32.mrb[0].mxu0
  %v2101 = vadd.f32 %v2005, %v2100
  %v2102 = vpop.f32.mrb[0].mxu0
  %2103 = vdwg.mxu0
  %v2104 = vtanh.pop %v2074
  %v2105 = vtanh.pop %v2077
  %v2106 = vtanh.pop %v2082
  %v2107 = vtanh.pop %v2085
  %v2108 = vtanh.pop %v2090
  %v2109 = vtanh.pop %v2093
  %v2110 = vtanh.pop %v2098
  %v2111 = vtanh.pop %v2101
  %v2112 = vpack.c.bf16 %v2105, %v2104
  %v2113 = vpack.c.bf16 %v2107, %v2106
  %v2114 = vpack.c.bf16 %v2109, %v2108
  %v2115 = vpack.c.bf16 %v2111, %v2110
  %2116 = vst [vmem:[#allocation2 + $0x160] sm:$0xff] %v2112
  %2117 = vst [vmem:[#allocation2 + $0x168] sm:$0xff] %v2113
  %2118 = vst [vmem:[#allocation2 + $0x170] sm:$0xff] %v2114
  %2119 = vst [vmem:[#allocation2 + $0x178] sm:$0xff] %v2115
  %v2120 = vld [vmem:[%s1 + $0x180] sm:$0xf]
  %v2121 = vld [vmem:[%s1 + $0x184] sm:$0xf]
  %v2122 = vld [vmem:[%s1 + $0x188] sm:$0xf]
  %v2123 = vld [vmem:[%s1 + $0x18c] sm:$0xf]
  %v2124 = vld [vmem:[%s1 + $0x190] sm:$0xf]
  %v2125 = vld [vmem:[%s1 + $0x194] sm:$0xf]
  %v2126 = vld [vmem:[%s1 + $0x198] sm:$0xf]
  %v2127 = vld [vmem:[%s1 + $0x19c] sm:$0xf]
  %v2128 = vld [vmem:[%s2 + $0x300] sm:$0xff]
  %v2129 = vld [vmem:[%s2 + $0x308] sm:$0xff]
  %v2130 = vld [vmem:[%s2 + $0x310] sm:$0xff]
  %v2131 = vld [vmem:[%s2 + $0x318] sm:$0xff]
  %v2132 = vld [vmem:[%s2 + $0x320] sm:$0xff]
  %v2133 = vld [vmem:[%s2 + $0x328] sm:$0xff]
  %v2134 = vld [vmem:[%s2 + $0x330] sm:$0xff]
  %v2135 = vld [vmem:[%s2 + $0x338] sm:$0xff]
  %2137 = vset.pattern.permute.xlu0 0
  %2138 = vperm.xlu0 %2137, %v2128
  %v2139 = vpop.permute.xlu0 %2138
  %2142 = vset.pattern.permute.xlu0 0
  %2143 = vperm.xlu0 %2142, %v2129
  %v2144 = vpop.permute.xlu0 %2143
  %2147 = vset.pattern.permute.xlu0 0
  %2148 = vperm.xlu0 %2147, %v2130
  %v2149 = vpop.permute.xlu0 %2148
  %2152 = vset.pattern.permute.xlu0 0
  %2153 = vperm.xlu0 %2152, %v2131
  %v2154 = vpop.permute.xlu0 %2153
  %2157 = vset.pattern.permute.xlu0 0
  %2158 = vperm.xlu0 %2157, %v2132
  %v2159 = vpop.permute.xlu0 %2158
  %2162 = vset.pattern.permute.xlu0 0
  %2163 = vperm.xlu0 %2162, %v2133
  %v2164 = vpop.permute.xlu0 %2163
  %2167 = vset.pattern.permute.xlu0 0
  %2168 = vperm.xlu0 %2167, %v2134
  %v2169 = vpop.permute.xlu0 %2168
  %2172 = vset.pattern.permute.xlu0 0
  %2173 = vperm.xlu0 %2172, %v2135
  %v2174 = vpop.permute.xlu0 %2173
  %v2184 = vunpack.c.l.b16 %v2120
  %v2185 = vunpack.c.l.b16 %v2121
  %v2186 = vunpack.c.l.b16 %v2122
  %v2187 = vunpack.c.l.b16 %v2123
  %v2188 = vunpack.c.l.b16 %v2124
  %v2189 = vunpack.c.l.b16 %v2125
  %v2190 = vunpack.c.l.b16 %v2126
  %v2191 = vunpack.c.l.b16 %v2127
  %v2192 = vpack.c.b16 %v2185, %v2184
  %v2193 = vpack.c.b16 %v2187, %v2186
  %v2194 = vpack.c.b16 %v2189, %v2188
  %v2195 = vpack.c.b16 %v2191, %v2190
  %v2197 = vsel %vm167, %v2192, 0
  %v2200 = vsel %vm167, %v2193, 0
  %v2203 = vsel %vm167, %v2194, 0
  %v2206 = vsel %vm167, %v2195, 0
  %2208 = vmatprep.subr.bf16.mxu0 0
  %2209 = vmatpush1.bf16.msra.mxu0 %v87
  %2210 = vmatprep.subr.bf16.mxu0 0
  %2211 = vmatpush1.bf16.msra.mxu0 %v88
  %2212 = vmatprep.subr.bf16.mxu0 0
  %2213 = vmatpush1.bf16.msra.mxu0 %v89
  %2214 = vmatprep.subr.bf16.mxu0 0
  %2215 = vmatpush1.bf16.msra.mxu0 %v90
  %2216 = vmatprep.subr.bf16.mxu0 0
  %2217 = vmatpush1.bf16.msra.mxu0 0
  %2218 = vmatprep.subr.bf16.mxu0 0
  %2219 = vmatpush1.bf16.msra.mxu0 0
  %2220 = vmatprep.subr.bf16.mxu0 0
  %2221 = vmatpush1.bf16.msra.mxu0 0
  %2222 = vmatprep.subr.bf16.mxu0 0
  %2223 = vmatpush1.bf16.msra.mxu0 0
  %2224 = vmatprep.subr.bf16.mxu0 0
  %2225 = vmatpush1.bf16.msra.mxu0 0
  %2226 = vmatprep.subr.bf16.mxu0 0
  %2227 = vmatpush1.bf16.msra.mxu0 0
  %2228 = vmatprep.subr.bf16.mxu0 0
  %2229 = vmatpush1.bf16.msra.mxu0 0
  %2230 = vmatprep.subr.bf16.mxu0 0
  %2231 = vmatpush1.bf16.msra.mxu0 0
  %2232 = vmatprep.subr.bf16.mxu0 0
  %2233 = vmatpush1.bf16.msra.mxu0 0
  %2234 = vmatprep.subr.bf16.mxu0 0
  %2235 = vmatpush1.bf16.msra.mxu0 0
  %2236 = vmatprep.subr.bf16.mxu0 0
  %2237 = vmatpush1.bf16.msra.mxu0 0
  %2238 = vmatprep.subr.bf16.mxu0 0
  %2239 = vmatpush1.bf16.msra.mxu0 0
  %2240 = vmatprep.mubr.bf16.mxu0 0
  %2241 = vmatmul.mubr.bf16.gmra.mrb[0].mxu0 %v2197
  %v2242 = vpop.f32.mrb[0].mxu0
  %v2243 = vadd.f32 %v2139, %v2242
  %v2244 = vpop.f32.mrb[0].mxu0
  %v2245 = vpop.f32.mrb[0].mxu0
  %v2246 = vadd.f32 %v2144, %v2245
  %v2247 = vpop.f32.mrb[0].mxu0
  %2248 = vmatprep.mubr.bf16.mxu0 0
  %2249 = vmatmul.mubr.bf16.gmra.mrb[0].mxu0 %v2200
  %v2250 = vpop.f32.mrb[0].mxu0
  %v2251 = vadd.f32 %v2149, %v2250
  %v2252 = vpop.f32.mrb[0].mxu0
  %v2253 = vpop.f32.mrb[0].mxu0
  %v2254 = vadd.f32 %v2154, %v2253
  %v2255 = vpop.f32.mrb[0].mxu0
  %2256 = vmatprep.mubr.bf16.mxu0 0
  %2257 = vmatmul.mubr.bf16.gmra.mrb[0].mxu0 %v2203
  %v2258 = vpop.f32.mrb[0].mxu0
  %v2259 = vadd.f32 %v2159, %v2258
  %v2260 = vpop.f32.mrb[0].mxu0
  %v2261 = vpop.f32.mrb[0].mxu0
  %v2262 = vadd.f32 %v2164, %v2261
  %v2263 = vpop.f32.mrb[0].mxu0
  %2264 = vmatprep.mubr.bf16.mxu0 0
  %2265 = vmatmul.mubr.bf16.gmra.mrb[0].mxu0 %v2206
  %v2266 = vpop.f32.mrb[0].mxu0
  %v2267 = vadd.f32 %v2169, %v2266
  %v2268 = vpop.f32.mrb[0].mxu0
  %v2269 = vpop.f32.mrb[0].mxu0
  %v2270 = vadd.f32 %v2174, %v2269
  %v2271 = vpop.f32.mrb[0].mxu0
  %2272 = vdwg.mxu0
  %v2273 = vtanh.pop %v2243
  %v2274 = vtanh.pop %v2246
  %v2275 = vtanh.pop %v2251
  %v2276 = vtanh.pop %v2254
  %v2277 = vtanh.pop %v2259
  %v2278 = vtanh.pop %v2262
  %v2279 = vtanh.pop %v2267
  %v2280 = vtanh.pop %v2270
  %v2281 = vpack.c.bf16 %v2274, %v2273
  %v2282 = vpack.c.bf16 %v2276, %v2275
  %v2283 = vpack.c.bf16 %v2278, %v2277
  %v2284 = vpack.c.bf16 %v2280, %v2279
  %2285 = vst [vmem:[#allocation2 + $0x180] sm:$0xff] %v2281
  %2286 = vst [vmem:[#allocation2 + $0x188] sm:$0xff] %v2282
  %2287 = vst [vmem:[#allocation2 + $0x190] sm:$0xff] %v2283
  %2288 = vst [vmem:[#allocation2 + $0x198] sm:$0xff] %v2284
  %v2289 = vld [vmem:[%s1 + $0x1a0] sm:$0xf]
  %v2290 = vld [vmem:[%s1 + $0x1a4] sm:$0xf]
  %v2291 = vld [vmem:[%s1 + $0x1a8] sm:$0xf]
  %v2292 = vld [vmem:[%s1 + $0x1ac] sm:$0xf]
  %v2293 = vld [vmem:[%s1 + $0x1b0] sm:$0xf]
  %v2294 = vld [vmem:[%s1 + $0x1b4] sm:$0xf]
  %v2295 = vld [vmem:[%s1 + $0x1b8] sm:$0xf]
  %v2296 = vld [vmem:[%s1 + $0x1bc] sm:$0xf]
  %v2297 = vld [vmem:[%s2 + $0x340] sm:$0xff]
  %v2298 = vld [vmem:[%s2 + $0x348] sm:$0xff]
  %v2299 = vld [vmem:[%s2 + $0x350] sm:$0xff]
  %v2300 = vld [vmem:[%s2 + $0x358] sm:$0xff]
  %v2301 = vld [vmem:[%s2 + $0x360] sm:$0xff]
  %v2302 = vld [vmem:[%s2 + $0x368] sm:$0xff]
  %v2303 = vld [vmem:[%s2 + $0x370] sm:$0xff]
  %v2304 = vld [vmem:[%s2 + $0x378] sm:$0xff]
  %2306 = vset.pattern.permute.xlu0 0
  %2307 = vperm.xlu0 %2306, %v2297
  %v2308 = vpop.permute.xlu0 %2307
  %2311 = vset.pattern.permute.xlu0 0
  %2312 = vperm.xlu0 %2311, %v2298
  %v2313 = vpop.permute.xlu0 %2312
  %2316 = vset.pattern.permute.xlu0 0
  %2317 = vperm.xlu0 %2316, %v2299
  %v2318 = vpop.permute.xlu0 %2317
  %2321 = vset.pattern.permute.xlu0 0
  %2322 = vperm.xlu0 %2321, %v2300
  %v2323 = vpop.permute.xlu0 %2322
  %2326 = vset.pattern.permute.xlu0 0
  %2327 = vperm.xlu0 %2326, %v2301
  %v2328 = vpop.permute.xlu0 %2327
  %2331 = vset.pattern.permute.xlu0 0
  %2332 = vperm.xlu0 %2331, %v2302
  %v2333 = vpop.permute.xlu0 %2332
  %2336 = vset.pattern.permute.xlu0 0
  %2337 = vperm.xlu0 %2336, %v2303
  %v2338 = vpop.permute.xlu0 %2337
  %2341 = vset.pattern.permute.xlu0 0
  %2342 = vperm.xlu0 %2341, %v2304
  %v2343 = vpop.permute.xlu0 %2342
  %v2353 = vunpack.c.l.b16 %v2289
  %v2354 = vunpack.c.l.b16 %v2290
  %v2355 = vunpack.c.l.b16 %v2291
  %v2356 = vunpack.c.l.b16 %v2292
  %v2357 = vunpack.c.l.b16 %v2293
  %v2358 = vunpack.c.l.b16 %v2294
  %v2359 = vunpack.c.l.b16 %v2295
  %v2360 = vunpack.c.l.b16 %v2296
  %v2361 = vpack.c.b16 %v2354, %v2353
  %v2362 = vpack.c.b16 %v2356, %v2355
  %v2363 = vpack.c.b16 %v2358, %v2357
  %v2364 = vpack.c.b16 %v2360, %v2359
  %v2366 = vsel %vm167, %v2361, 0
  %v2369 = vsel %vm167, %v2362, 0
  %v2372 = vsel %vm167, %v2363, 0
  %v2375 = vsel %vm167, %v2364, 0
  %2377 = vmatprep.subr.bf16.mxu0 0
  %2378 = vmatpush1.bf16.msra.mxu0 %v87
  %2379 = vmatprep.subr.bf16.mxu0 0
  %2380 = vmatpush1.bf16.msra.mxu0 %v88
  %2381 = vmatprep.subr.bf16.mxu0 0
  %2382 = vmatpush1.bf16.msra.mxu0 %v89
  %2383 = vmatprep.subr.bf16.mxu0 0
  %2384 = vmatpush1.bf16.msra.mxu0 %v90
  %2385 = vmatprep.subr.bf16.mxu0 0
  %2386 = vmatpush1.bf16.msra.mxu0 0
  %2387 = vmatprep.subr.bf16.mxu0 0
  %2388 = vmatpush1.bf16.msra.mxu0 0
  %2389 = vmatprep.subr.bf16.mxu0 0
  %2390 = vmatpush1.bf16.msra.mxu0 0
  %2391 = vmatprep.subr.bf16.mxu0 0
  %2392 = vmatpush1.bf16.msra.mxu0 0
  %2393 = vmatprep.subr.bf16.mxu0 0
  %2394 = vmatpush1.bf16.msra.mxu0 0
  %2395 = vmatprep.subr.bf16.mxu0 0
  %2396 = vmatpush1.bf16.msra.mxu0 0
  %2397 = vmatprep.subr.bf16.mxu0 0
  %2398 = vmatpush1.bf16.msra.mxu0 0
  %2399 = vmatprep.subr.bf16.mxu0 0
  %2400 = vmatpush1.bf16.msra.mxu0 0
  %2401 = vmatprep.subr.bf16.mxu0 0
  %2402 = vmatpush1.bf16.msra.mxu0 0
  %2403 = vmatprep.subr.bf16.mxu0 0
  %2404 = vmatpush1.bf16.msra.mxu0 0
  %2405 = vmatprep.subr.bf16.mxu0 0
  %2406 = vmatpush1.bf16.msra.mxu0 0
  %2407 = vmatprep.subr.bf16.mxu0 0
  %2408 = vmatpush1.bf16.msra.mxu0 0
  %2409 = vmatprep.mubr.bf16.mxu0 0
  %2410 = vmatmul.mubr.bf16.gmra.mrb[0].mxu0 %v2366
  %v2411 = vpop.f32.mrb[0].mxu0
  %v2412 = vadd.f32 %v2308, %v2411
  %v2413 = vpop.f32.mrb[0].mxu0
  %v2414 = vpop.f32.mrb[0].mxu0
  %v2415 = vadd.f32 %v2313, %v2414
  %v2416 = vpop.f32.mrb[0].mxu0
  %2417 = vmatprep.mubr.bf16.mxu0 0
  %2418 = vmatmul.mubr.bf16.gmra.mrb[0].mxu0 %v2369
  %v2419 = vpop.f32.mrb[0].mxu0
  %v2420 = vadd.f32 %v2318, %v2419
  %v2421 = vpop.f32.mrb[0].mxu0
  %v2422 = vpop.f32.mrb[0].mxu0
  %v2423 = vadd.f32 %v2323, %v2422
  %v2424 = vpop.f32.mrb[0].mxu0
  %2425 = vmatprep.mubr.bf16.mxu0 0
  %2426 = vmatmul.mubr.bf16.gmra.mrb[0].mxu0 %v2372
  %v2427 = vpop.f32.mrb[0].mxu0
  %v2428 = vadd.f32 %v2328, %v2427
  %v2429 = vpop.f32.mrb[0].mxu0
  %v2430 = vpop.f32.mrb[0].mxu0
  %v2431 = vadd.f32 %v2333, %v2430
  %v2432 = vpop.f32.mrb[0].mxu0
  %2433 = vmatprep.mubr.bf16.mxu0 0
  %2434 = vmatmul.mubr.bf16.gmra.mrb[0].mxu0 %v2375
  %v2435 = vpop.f32.mrb[0].mxu0
  %v2436 = vadd.f32 %v2338, %v2435
  %v2437 = vpop.f32.mrb[0].mxu0
  %v2438 = vpop.f32.mrb[0].mxu0
  %v2439 = vadd.f32 %v2343, %v2438
  %v2440 = vpop.f32.mrb[0].mxu0
  %2441 = vdwg.mxu0
  %v2442 = vtanh.pop %v2412
  %v2443 = vtanh.pop %v2415
  %v2444 = vtanh.pop %v2420
  %v2445 = vtanh.pop %v2423
  %v2446 = vtanh.pop %v2428
  %v2447 = vtanh.pop %v2431
  %v2448 = vtanh.pop %v2436
  %v2449 = vtanh.pop %v2439
  %v2450 = vpack.c.bf16 %v2443, %v2442
  %v2451 = vpack.c.bf16 %v2445, %v2444
  %v2452 = vpack.c.bf16 %v2447, %v2446
  %v2453 = vpack.c.bf16 %v2449, %v2448
  %2454 = vst [vmem:[#allocation2 + $0x1a0] sm:$0xff] %v2450
  %2455 = vst [vmem:[#allocation2 + $0x1a8] sm:$0xff] %v2451
  %2456 = vst [vmem:[#allocation2 + $0x1b0] sm:$0xff] %v2452
  %2457 = vst [vmem:[#allocation2 + $0x1b8] sm:$0xff] %v2453
  %v2458 = vld [vmem:[%s1 + $0x1c0] sm:$0xf]
  %v2459 = vld [vmem:[%s1 + $0x1c4] sm:$0xf]
  %v2460 = vld [vmem:[%s1 + $0x1c8] sm:$0xf]
  %v2461 = vld [vmem:[%s1 + $0x1cc] sm:$0xf]
  %v2462 = vld [vmem:[%s1 + $0x1d0] sm:$0xf]
  %v2463 = vld [vmem:[%s1 + $0x1d4] sm:$0xf]
  %v2464 = vld [vmem:[%s1 + $0x1d8] sm:$0xf]
  %v2465 = vld [vmem:[%s1 + $0x1dc] sm:$0xf]
  %v2466 = vld [vmem:[%s2 + $0x380] sm:$0xff]
  %v2467 = vld [vmem:[%s2 + $0x388] sm:$0xff]
  %v2468 = vld [vmem:[%s2 + $0x390] sm:$0xff]
  %v2469 = vld [vmem:[%s2 + $0x398] sm:$0xff]
  %v2470 = vld [vmem:[%s2 + $0x3a0] sm:$0xff]
  %v2471 = vld [vmem:[%s2 + $0x3a8] sm:$0xff]
  %v2472 = vld [vmem:[%s2 + $0x3b0] sm:$0xff]
  %v2473 = vld [vmem:[%s2 + $0x3b8] sm:$0xff]
  %2475 = vset.pattern.permute.xlu0 0
  %2476 = vperm.xlu0 %2475, %v2466
  %v2477 = vpop.permute.xlu0 %2476
  %2480 = vset.pattern.permute.xlu0 0
  %2481 = vperm.xlu0 %2480, %v2467
  %v2482 = vpop.permute.xlu0 %2481
  %2485 = vset.pattern.permute.xlu0 0
  %2486 = vperm.xlu0 %2485, %v2468
  %v2487 = vpop.permute.xlu0 %2486
  %2490 = vset.pattern.permute.xlu0 0
  %2491 = vperm.xlu0 %2490, %v2469
  %v2492 = vpop.permute.xlu0 %2491
  %2495 = vset.pattern.permute.xlu0 0
  %2496 = vperm.xlu0 %2495, %v2470
  %v2497 = vpop.permute.xlu0 %2496
  %2500 = vset.pattern.permute.xlu0 0
  %2501 = vperm.xlu0 %2500, %v2471
  %v2502 = vpop.permute.xlu0 %2501
  %2505 = vset.pattern.permute.xlu0 0
  %2506 = vperm.xlu0 %2505, %v2472
  %v2507 = vpop.permute.xlu0 %2506
  %2510 = vset.pattern.permute.xlu0 0
  %2511 = vperm.xlu0 %2510, %v2473
  %v2512 = vpop.permute.xlu0 %2511
  %v2522 = vunpack.c.l.b16 %v2458
  %v2523 = vunpack.c.l.b16 %v2459
  %v2524 = vunpack.c.l.b16 %v2460
  %v2525 = vunpack.c.l.b16 %v2461
  %v2526 = vunpack.c.l.b16 %v2462
  %v2527 = vunpack.c.l.b16 %v2463
  %v2528 = vunpack.c.l.b16 %v2464
  %v2529 = vunpack.c.l.b16 %v2465
  %v2530 = vpack.c.b16 %v2523, %v2522
  %v2531 = vpack.c.b16 %v2525, %v2524
  %v2532 = vpack.c.b16 %v2527, %v2526
  %v2533 = vpack.c.b16 %v2529, %v2528
  %v2535 = vsel %vm167, %v2530, 0
  %v2538 = vsel %vm167, %v2531, 0
  %v2541 = vsel %vm167, %v2532, 0
  %v2544 = vsel %vm167, %v2533, 0
  %2546 = vmatprep.subr.bf16.mxu0 0
  %2547 = vmatpush1.bf16.msra.mxu0 %v87
  %2548 = vmatprep.subr.bf16.mxu0 0
  %2549 = vmatpush1.bf16.msra.mxu0 %v88
  %2550 = vmatprep.subr.bf16.mxu0 0
  %2551 = vmatpush1.bf16.msra.mxu0 %v89
  %2552 = vmatprep.subr.bf16.mxu0 0
  %2553 = vmatpush1.bf16.msra.mxu0 %v90
  %2554 = vmatprep.subr.bf16.mxu0 0
  %2555 = vmatpush1.bf16.msra.mxu0 0
  %2556 = vmatprep.subr.bf16.mxu0 0
  %2557 = vmatpush1.bf16.msra.mxu0 0
  %2558 = vmatprep.subr.bf16.mxu0 0
  %2559 = vmatpush1.bf16.msra.mxu0 0
  %2560 = vmatprep.subr.bf16.mxu0 0
  %2561 = vmatpush1.bf16.msra.mxu0 0
  %2562 = vmatprep.subr.bf16.mxu0 0
  %2563 = vmatpush1.bf16.msra.mxu0 0
  %2564 = vmatprep.subr.bf16.mxu0 0
  %2565 = vmatpush1.bf16.msra.mxu0 0
  %2566 = vmatprep.subr.bf16.mxu0 0
  %2567 = vmatpush1.bf16.msra.mxu0 0
  %2568 = vmatprep.subr.bf16.mxu0 0
  %2569 = vmatpush1.bf16.msra.mxu0 0
  %2570 = vmatprep.subr.bf16.mxu0 0
  %2571 = vmatpush1.bf16.msra.mxu0 0
  %2572 = vmatprep.subr.bf16.mxu0 0
  %2573 = vmatpush1.bf16.msra.mxu0 0
  %2574 = vmatprep.subr.bf16.mxu0 0
  %2575 = vmatpush1.bf16.msra.mxu0 0
  %2576 = vmatprep.subr.bf16.mxu0 0
  %2577 = vmatpush1.bf16.msra.mxu0 0
  %2578 = vmatprep.mubr.bf16.mxu0 0
  %2579 = vmatmul.mubr.bf16.gmra.mrb[0].mxu0 %v2535
  %v2580 = vpop.f32.mrb[0].mxu0
  %v2581 = vadd.f32 %v2477, %v2580
  %v2582 = vpop.f32.mrb[0].mxu0
  %v2583 = vpop.f32.mrb[0].mxu0
  %v2584 = vadd.f32 %v2482, %v2583
  %v2585 = vpop.f32.mrb[0].mxu0
  %2586 = vmatprep.mubr.bf16.mxu0 0
  %2587 = vmatmul.mubr.bf16.gmra.mrb[0].mxu0 %v2538
  %v2588 = vpop.f32.mrb[0].mxu0
  %v2589 = vadd.f32 %v2487, %v2588
  %v2590 = vpop.f32.mrb[0].mxu0
  %v2591 = vpop.f32.mrb[0].mxu0
  %v2592 = vadd.f32 %v2492, %v2591
  %v2593 = vpop.f32.mrb[0].mxu0
  %2594 = vmatprep.mubr.bf16.mxu0 0
  %2595 = vmatmul.mubr.bf16.gmra.mrb[0].mxu0 %v2541
  %v2596 = vpop.f32.mrb[0].mxu0
  %v2597 = vadd.f32 %v2497, %v2596
  %v2598 = vpop.f32.mrb[0].mxu0
  %v2599 = vpop.f32.mrb[0].mxu0
  %v2600 = vadd.f32 %v2502, %v2599
  %v2601 = vpop.f32.mrb[0].mxu0
  %2602 = vmatprep.mubr.bf16.mxu0 0
  %2603 = vmatmul.mubr.bf16.gmra.mrb[0].mxu0 %v2544
  %v2604 = vpop.f32.mrb[0].mxu0
  %v2605 = vadd.f32 %v2507, %v2604
  %v2606 = vpop.f32.mrb[0].mxu0
  %v2607 = vpop.f32.mrb[0].mxu0
  %v2608 = vadd.f32 %v2512, %v2607
  %v2609 = vpop.f32.mrb[0].mxu0
  %2610 = vdwg.mxu0
  %v2611 = vtanh.pop %v2581
  %v2612 = vtanh.pop %v2584
  %v2613 = vtanh.pop %v2589
  %v2614 = vtanh.pop %v2592
  %v2615 = vtanh.pop %v2597
  %v2616 = vtanh.pop %v2600
  %v2617 = vtanh.pop %v2605
  %v2618 = vtanh.pop %v2608
  %v2619 = vpack.c.bf16 %v2612, %v2611
  %v2620 = vpack.c.bf16 %v2614, %v2613
  %v2621 = vpack.c.bf16 %v2616, %v2615
  %v2622 = vpack.c.bf16 %v2618, %v2617
  %2623 = vst [vmem:[#allocation2 + $0x1c0] sm:$0xff] %v2619
  %2624 = vst [vmem:[#allocation2 + $0x1c8] sm:$0xff] %v2620
  %2625 = vst [vmem:[#allocation2 + $0x1d0] sm:$0xff] %v2621
  %2626 = vst [vmem:[#allocation2 + $0x1d8] sm:$0xff] %v2622
  %v2627 = vld [vmem:[%s1 + $0x1e0] sm:$0xf]
  %v2628 = vld [vmem:[%s1 + $0x1e4] sm:$0xf]
  %v2629 = vld [vmem:[%s1 + $0x1e8] sm:$0xf]
  %v2630 = vld [vmem:[%s1 + $0x1ec] sm:$0xf]
  %v2631 = vld [vmem:[%s1 + $0x1f0] sm:$0xf]
  %v2632 = vld [vmem:[%s1 + $0x1f4] sm:$0xf]
  %v2633 = vld [vmem:[%s1 + $0x1f8] sm:$0xf]
  %v2634 = vld [vmem:[%s1 + $0x1fc] sm:$0xf]
  %v2635 = vld [vmem:[%s2 + $0x3c0] sm:$0xff]
  %v2636 = vld [vmem:[%s2 + $0x3c8] sm:$0xff]
  %v2637 = vld [vmem:[%s2 + $0x3d0] sm:$0xff]
  %v2638 = vld [vmem:[%s2 + $0x3d8] sm:$0xff]
  %v2639 = vld [vmem:[%s2 + $0x3e0] sm:$0xff]
  %v2640 = vld [vmem:[%s2 + $0x3e8] sm:$0xff]
  %v2641 = vld [vmem:[%s2 + $0x3f0] sm:$0xff]
  %v2642 = vld [vmem:[%s2 + $0x3f8] sm:$0xff]
  %2644 = vset.pattern.permute.xlu0 0
  %2645 = vperm.xlu0 %2644, %v2635
  %v2646 = vpop.permute.xlu0 %2645
  %2649 = vset.pattern.permute.xlu0 0
  %2650 = vperm.xlu0 %2649, %v2636
  %v2651 = vpop.permute.xlu0 %2650
  %2654 = vset.pattern.permute.xlu0 0
  %2655 = vperm.xlu0 %2654, %v2637
  %v2656 = vpop.permute.xlu0 %2655
  %2659 = vset.pattern.permute.xlu0 0
  %2660 = vperm.xlu0 %2659, %v2638
  %v2661 = vpop.permute.xlu0 %2660
  %2664 = vset.pattern.permute.xlu0 0
  %2665 = vperm.xlu0 %2664, %v2639
  %v2666 = vpop.permute.xlu0 %2665
  %2669 = vset.pattern.permute.xlu0 0
  %2670 = vperm.xlu0 %2669, %v2640
  %v2671 = vpop.permute.xlu0 %2670
  %2674 = vset.pattern.permute.xlu0 0
  %2675 = vperm.xlu0 %2674, %v2641
  %v2676 = vpop.permute.xlu0 %2675
  %2679 = vset.pattern.permute.xlu0 0
  %2680 = vperm.xlu0 %2679, %v2642
  %v2681 = vpop.permute.xlu0 %2680
  %v2691 = vunpack.c.l.b16 %v2627
  %v2692 = vunpack.c.l.b16 %v2628
  %v2693 = vunpack.c.l.b16 %v2629
  %v2694 = vunpack.c.l.b16 %v2630
  %v2695 = vunpack.c.l.b16 %v2631
  %v2696 = vunpack.c.l.b16 %v2632
  %v2697 = vunpack.c.l.b16 %v2633
  %v2698 = vunpack.c.l.b16 %v2634
  %v2699 = vpack.c.b16 %v2692, %v2691
  %v2700 = vpack.c.b16 %v2694, %v2693
  %v2701 = vpack.c.b16 %v2696, %v2695
  %v2702 = vpack.c.b16 %v2698, %v2697
  %v2704 = vsel %vm167, %v2699, 0
  %v2707 = vsel %vm167, %v2700, 0
  %v2710 = vsel %vm167, %v2701, 0
  %v2713 = vsel %vm167, %v2702, 0
  %2715 = vmatprep.subr.bf16.mxu0 0
  %2716 = vmatpush1.bf16.msra.mxu0 %v87
  %2717 = vmatprep.subr.bf16.mxu0 0
  %2718 = vmatpush1.bf16.msra.mxu0 %v88
  %2719 = vmatprep.subr.bf16.mxu0 0
  %2720 = vmatpush1.bf16.msra.mxu0 %v89
  %2721 = vmatprep.subr.bf16.mxu0 0
  %2722 = vmatpush1.bf16.msra.mxu0 %v90
  %2723 = vmatprep.subr.bf16.mxu0 0
  %2724 = vmatpush1.bf16.msra.mxu0 0
  %2725 = vmatprep.subr.bf16.mxu0 0
  %2726 = vmatpush1.bf16.msra.mxu0 0
  %2727 = vmatprep.subr.bf16.mxu0 0
  %2728 = vmatpush1.bf16.msra.mxu0 0
  %2729 = vmatprep.subr.bf16.mxu0 0
  %2730 = vmatpush1.bf16.msra.mxu0 0
  %2731 = vmatprep.subr.bf16.mxu0 0
  %2732 = vmatpush1.bf16.msra.mxu0 0
  %2733 = vmatprep.subr.bf16.mxu0 0
  %2734 = vmatpush1.bf16.msra.mxu0 0
  %2735 = vmatprep.subr.bf16.mxu0 0
  %2736 = vmatpush1.bf16.msra.mxu0 0
  %2737 = vmatprep.subr.bf16.mxu0 0
  %2738 = vmatpush1.bf16.msra.mxu0 0
  %2739 = vmatprep.subr.bf16.mxu0 0
  %2740 = vmatpush1.bf16.msra.mxu0 0
  %2741 = vmatprep.subr.bf16.mxu0 0
  %2742 = vmatpush1.bf16.msra.mxu0 0
  %2743 = vmatprep.subr.bf16.mxu0 0
  %2744 = vmatpush1.bf16.msra.mxu0 0
  %2745 = vmatprep.subr.bf16.mxu0 0
  %2746 = vmatpush1.bf16.msra.mxu0 0
  %2747 = vmatprep.mubr.bf16.mxu0 0
  %2748 = vmatmul.mubr.bf16.gmra.mrb[0].mxu0 %v2704
  %v2749 = vpop.f32.mrb[0].mxu0
  %v2750 = vadd.f32 %v2646, %v2749
  %v2751 = vpop.f32.mrb[0].mxu0
  %v2752 = vpop.f32.mrb[0].mxu0
  %v2753 = vadd.f32 %v2651, %v2752
  %v2754 = vpop.f32.mrb[0].mxu0
  %2755 = vmatprep.mubr.bf16.mxu0 0
  %2756 = vmatmul.mubr.bf16.gmra.mrb[0].mxu0 %v2707
  %v2757 = vpop.f32.mrb[0].mxu0
  %v2758 = vadd.f32 %v2656, %v2757
  %v2759 = vpop.f32.mrb[0].mxu0
  %v2760 = vpop.f32.mrb[0].mxu0
  %v2761 = vadd.f32 %v2661, %v2760
  %v2762 = vpop.f32.mrb[0].mxu0
  %2763 = vmatprep.mubr.bf16.mxu0 0
  %2764 = vmatmul.mubr.bf16.gmra.mrb[0].mxu0 %v2710
  %v2765 = vpop.f32.mrb[0].mxu0
  %v2766 = vadd.f32 %v2666, %v2765
  %v2767 = vpop.f32.mrb[0].mxu0
  %v2768 = vpop.f32.mrb[0].mxu0
  %v2769 = vadd.f32 %v2671, %v2768
  %v2770 = vpop.f32.mrb[0].mxu0
  %2771 = vmatprep.mubr.bf16.mxu0 0
  %2772 = vmatmul.mubr.bf16.gmra.mrb[0].mxu0 %v2713
  %v2773 = vpop.f32.mrb[0].mxu0
  %v2774 = vadd.f32 %v2676, %v2773
  %v2775 = vpop.f32.mrb[0].mxu0
  %v2776 = vpop.f32.mrb[0].mxu0
  %v2777 = vadd.f32 %v2681, %v2776
  %v2778 = vpop.f32.mrb[0].mxu0
  %2779 = vdwg.mxu0
  %v2780 = vtanh.pop %v2750
  %v2781 = vtanh.pop %v2753
  %v2782 = vtanh.pop %v2758
  %v2783 = vtanh.pop %v2761
  %v2784 = vtanh.pop %v2766
  %v2785 = vtanh.pop %v2769
  %v2786 = vtanh.pop %v2774
  %v2787 = vtanh.pop %v2777
  %v2788 = vpack.c.bf16 %v2781, %v2780
  %v2789 = vpack.c.bf16 %v2783, %v2782
  %v2790 = vpack.c.bf16 %v2785, %v2784
  %v2791 = vpack.c.bf16 %v2787, %v2786
  %2792 = vst [vmem:[#allocation2 + $0x1e0] sm:$0xff] %v2788
  %2793 = vst [vmem:[#allocation2 + $0x1e8] sm:$0xff] %v2789
  %2794 = vst [vmem:[#allocation2 + $0x1f0] sm:$0xff] %v2790
  %2795 = vst [vmem:[#allocation2 + $0x1f8] sm:$0xff] %v2791
  %v2796 = vld [vmem:[%s4] sm:$0xff]
  %v2797 = vld [vmem:[%s4 + $0x8] sm:$0xff]
  %v2798 = vld [vmem:[%s4 + $0x10] sm:$0xff]
  %v2799 = vld [vmem:[%s4 + $0x18] sm:$0xff]
  %2801 = vset.pattern.permute.xlu0 0
  %2802 = vperm.xlu0 %2801, %v2796
  %v2803 = vpop.permute.xlu0 %2802
  %2806 = vset.pattern.permute.xlu0 0
  %2807 = vperm.xlu0 %2806, %v2797
  %v2808 = vpop.permute.xlu0 %2807
  %2811 = vset.pattern.permute.xlu0 0
  %2812 = vperm.xlu0 %2811, %v2798
  %v2813 = vpop.permute.xlu0 %2812
  %2816 = vset.pattern.permute.xlu0 0
  %2817 = vperm.xlu0 %2816, %v2799
  %v2818 = vpop.permute.xlu0 %2817
  %v2820 = vld [vmem:[#allocation2] sm:$0xff]
  %v2821 = vld [vmem:[#allocation2 + $0x8] sm:$0xff]
  %s2822 = scalar_lea.vmem %s3, 16
  %v2823 = vld [vmem:[%s2822] sm:$0xf]
  %v2824 = vld [vmem:[%s2822 + $0x4] sm:$0xf]
  %v2825 = vld [vmem:[%s2822 + $0x8] sm:$0xf]
  %v2826 = vld [vmem:[%s2822 + $0xc] sm:$0xf]
  %v2831 = vunpack.c.l.b16 %v2823
  %v2832 = vunpack.c.l.b16 %v2824
  %v2833 = vunpack.c.l.b16 %v2825
  %v2834 = vunpack.c.l.b16 %v2826
  %v2835 = vpack.c.b16 %v2832, %v2831
  %v2836 = vpack.c.b16 %v2834, %v2833
  %2837 = vrot.lane.b32.xlu0 %v2835, 112
  %v2838 = vpop.permute.xlu0 %2837
  %2839 = vrot.lane.b32.xlu0 %v2836, 112
  %v2840 = vpop.permute.xlu0 %2839
  %vm2841 = vcmask 261120
  %v2843 = vsel %vm2841, %v2838, 0
  %v2846 = vsel %vm2841, %v2840, 0
  %2848 = vmatprep.subr.bf16.mxu0 0
  %2849 = vmatpush1.bf16.msra.mxu0 %v2820
  %2850 = vmatprep.subr.bf16.mxu0 0
  %2851 = vmatpush1.bf16.msra.mxu0 %v2821
  %2852 = vmatprep.subr.bf16.mxu0 0
  %2853 = vmatpush1.bf16.msra.mxu0 0
  %2854 = vmatprep.subr.bf16.mxu0 0
  %2855 = vmatpush1.bf16.msra.mxu0 0
  %2856 = vmatprep.subr.bf16.mxu0 0
  %2857 = vmatpush1.bf16.msra.mxu0 0
  %2858 = vmatprep.subr.bf16.mxu0 0
  %2859 = vmatpush1.bf16.msra.mxu0 0
  %2860 = vmatprep.subr.bf16.mxu0 0
  %2861 = vmatpush1.bf16.msra.mxu0 0
  %2862 = vmatprep.subr.bf16.mxu0 0
  %2863 = vmatpush1.bf16.msra.mxu0 0
  %2864 = vmatprep.subr.bf16.mxu0 0
  %2865 = vmatpush1.bf16.msra.mxu0 0
  %2866 = vmatprep.subr.bf16.mxu0 0
  %2867 = vmatpush1.bf16.msra.mxu0 0
  %2868 = vmatprep.subr.bf16.mxu0 0
  %2869 = vmatpush1.bf16.msra.mxu0 0
  %2870 = vmatprep.subr.bf16.mxu0 0
  %2871 = vmatpush1.bf16.msra.mxu0 0
  %2872 = vmatprep.subr.bf16.mxu0 0
  %2873 = vmatpush1.bf16.msra.mxu0 0
  %2874 = vmatprep.subr.bf16.mxu0 0
  %2875 = vmatpush1.bf16.msra.mxu0 0
  %2876 = vmatprep.subr.bf16.mxu0 0
  %2877 = vmatpush1.bf16.msra.mxu0 0
  %2878 = vmatprep.subr.bf16.mxu0 0
  %2879 = vmatpush1.bf16.msra.mxu0 0
  %2880 = vmatprep.mubr.bf16.mxu0 0
  %2881 = vmatmul.mubr.bf16.gmra.mrb[0].mxu0 %v2843
  %v2882 = vpop.f32.mrb[0].mxu0
  %v2883 = vadd.f32 0.0, %v2882
  %v2884 = vpop.f32.mrb[0].mxu0
  %v2885 = vpop.f32.mrb[0].mxu0
  %v2886 = vadd.f32 0.0, %v2885
  %v2887 = vpop.f32.mrb[0].mxu0
  %2888 = vmatprep.mubr.bf16.mxu0 0
  %2889 = vmatmul.mubr.bf16.gmra.mrb[0].mxu0 %v2846
  %v2890 = vpop.f32.mrb[0].mxu0
  %v2891 = vadd.f32 0.0, %v2890
  %v2892 = vpop.f32.mrb[0].mxu0
  %v2893 = vpop.f32.mrb[0].mxu0
  %v2894 = vadd.f32 0.0, %v2893
  %v2895 = vpop.f32.mrb[0].mxu0
  %2896 = vdwg.mxu0
  %v2897 = vadd.f32 %v2803, %v2883
  %v2898 = vadd.f32 %v2808, %v2886
  %v2899 = vadd.f32 %v2813, %v2891
  %v2900 = vadd.f32 %v2818, %v2894
  %v2901 = vld [vmem:[#allocation2 + $0x40] sm:$0xff]
  %v2902 = vld [vmem:[#allocation2 + $0x48] sm:$0xff]
  %s2903 = scalar_lea.vmem %s3, 32
  %v2904 = vld [vmem:[%s2903] sm:$0xf]
  %v2905 = vld [vmem:[%s2903 + $0x4] sm:$0xf]
  %v2906 = vld [vmem:[%s2903 + $0x8] sm:$0xf]
  %v2907 = vld [vmem:[%s2903 + $0xc] sm:$0xf]
  %v2912 = vunpack.c.l.b16 %v2904
  %v2913 = vunpack.c.l.b16 %v2905
  %v2914 = vunpack.c.l.b16 %v2906
  %v2915 = vunpack.c.l.b16 %v2907
  %v2916 = vpack.c.b16 %v2913, %v2912
  %v2917 = vpack.c.b16 %v2915, %v2914
  %2918 = vrot.lane.b32.xlu0 %v2916, 112
  %v2919 = vpop.permute.xlu0 %2918
  %2920 = vrot.lane.b32.xlu0 %v2917, 112
  %v2921 = vpop.permute.xlu0 %2920
  %v2923 = vsel %vm2841, %v2919, 0
  %v2926 = vsel %vm2841, %v2921, 0
  %2928 = vmatprep.subr.bf16.mxu0 0
  %2929 = vmatpush1.bf16.msra.mxu0 %v2901
  %2930 = vmatprep.subr.bf16.mxu0 0
  %2931 = vmatpush1.bf16.msra.mxu0 %v2902
  %2932 = vmatprep.subr.bf16.mxu0 0
  %2933 = vmatpush1.bf16.msra.mxu0 0
  %2934 = vmatprep.subr.bf16.mxu0 0
  %2935 = vmatpush1.bf16.msra.mxu0 0
  %2936 = vmatprep.subr.bf16.mxu0 0
  %2937 = vmatpush1.bf16.msra.mxu0 0
  %2938 = vmatprep.subr.bf16.mxu0 0
  %2939 = vmatpush1.bf16.msra.mxu0 0
  %2940 = vmatprep.subr.bf16.mxu0 0
  %2941 = vmatpush1.bf16.msra.mxu0 0
  %2942 = vmatprep.subr.bf16.mxu0 0
  %2943 = vmatpush1.bf16.msra.mxu0 0
  %2944 = vmatprep.subr.bf16.mxu0 0
  %2945 = vmatpush1.bf16.msra.mxu0 0
  %2946 = vmatprep.subr.bf16.mxu0 0
  %2947 = vmatpush1.bf16.msra.mxu0 0
  %2948 = vmatprep.subr.bf16.mxu0 0
  %2949 = vmatpush1.bf16.msra.mxu0 0
  %2950 = vmatprep.subr.bf16.mxu0 0
  %2951 = vmatpush1.bf16.msra.mxu0 0
  %2952 = vmatprep.subr.bf16.mxu0 0
  %2953 = vmatpush1.bf16.msra.mxu0 0
  %2954 = vmatprep.subr.bf16.mxu0 0
  %2955 = vmatpush1.bf16.msra.mxu0 0
  %2956 = vmatprep.subr.bf16.mxu0 0
  %2957 = vmatpush1.bf16.msra.mxu0 0
  %2958 = vmatprep.subr.bf16.mxu0 0
  %2959 = vmatpush1.bf16.msra.mxu0 0
  %2960 = vmatprep.mubr.bf16.mxu0 0
  %2961 = vmatmul.mubr.bf16.gmra.mrb[0].mxu0 %v2923
  %v2962 = vpop.f32.mrb[0].mxu0
  %v2963 = vadd.f32 0.0, %v2962
  %v2964 = vpop.f32.mrb[0].mxu0
  %v2965 = vpop.f32.mrb[0].mxu0
  %v2966 = vadd.f32 0.0, %v2965
  %v2967 = vpop.f32.mrb[0].mxu0
  %2968 = vmatprep.mubr.bf16.mxu0 0
  %2969 = vmatmul.mubr.bf16.gmra.mrb[0].mxu0 %v2926
  %v2970 = vpop.f32.mrb[0].mxu0
  %v2971 = vadd.f32 0.0, %v2970
  %v2972 = vpop.f32.mrb[0].mxu0
  %v2973 = vpop.f32.mrb[0].mxu0
  %v2974 = vadd.f32 0.0, %v2973
  %v2975 = vpop.f32.mrb[0].mxu0
  %2976 = vdwg.mxu0
  %v2977 = vadd.f32 %v2897, %v2963
  %v2978 = vadd.f32 %v2898, %v2966
  %v2979 = vadd.f32 %v2899, %v2971
  %v2980 = vadd.f32 %v2900, %v2974
  %v2981 = vtanh.pop %v2977
  %v2982 = vtanh.pop %v2978
  %v2983 = vtanh.pop %v2979
  %v2984 = vtanh.pop %v2980
  %v2985 = vpack.c.bf16 %v2982, %v2981
  %v2986 = vpack.c.bf16 %v2984, %v2983
  %2987 = vst [vmem:[#allocation3] sm:$0xff] %v2985
  %2988 = vst [vmem:[#allocation3 + $0x8] sm:$0xff] %v2986
  %v2989 = vld [vmem:[#allocation2 + $0x8] sm:$0xff]
  %v2990 = vld [vmem:[#allocation2 + $0x10] sm:$0xff]
  %v2991 = vld [vmem:[#allocation2 + $0x18] sm:$0xff]
  %v2992 = vld [vmem:[%s2822] sm:$0xf]
  %v2993 = vld [vmem:[%s2822 + $0x4] sm:$0xf]
  %v2994 = vld [vmem:[%s2822 + $0x8] sm:$0xf]
  %v2995 = vld [vmem:[%s2822 + $0xc] sm:$0xf]
  %v3000 = vunpack.c.l.b16 %v2992
  %v3001 = vunpack.c.l.b16 %v2993
  %v3002 = vunpack.c.l.b16 %v2994
  %v3003 = vunpack.c.l.b16 %v2995
  %v3004 = vpack.c.b16 %v3001, %v3000
  %v3005 = vpack.c.b16 %v3003, %v3002
  %vm3006 = vcmask 392192
  %v3008 = vsel %vm3006, %v3004, 0
  %v3011 = vsel %vm3006, %v3005, 0
  %3013 = vmatprep.subr.bf16.mxu0 0
  %3014 = vmatpush1.bf16.msra.mxu0 %v2989
  %3015 = vmatprep.subr.bf16.mxu0 0
  %3016 = vmatpush1.bf16.msra.mxu0 %v2990
  %3017 = vmatprep.subr.bf16.mxu0 0
  %3018 = vmatpush1.bf16.msra.mxu0 %v2991
  %3019 = vmatprep.subr.bf16.mxu0 0
  %3020 = vmatpush1.bf16.msra.mxu0 0
  %3021 = vmatprep.subr.bf16.mxu0 0
  %3022 = vmatpush1.bf16.msra.mxu0 0
  %3023 = vmatprep.subr.bf16.mxu0 0
  %3024 = vmatpush1.bf16.msra.mxu0 0
  %3025 = vmatprep.subr.bf16.mxu0 0
  %3026 = vmatpush1.bf16.msra.mxu0 0
  %3027 = vmatprep.subr.bf16.mxu0 0
  %3028 = vmatpush1.bf16.msra.mxu0 0
  %3029 = vmatprep.subr.bf16.mxu0 0
  %3030 = vmatpush1.bf16.msra.mxu0 0
  %3031 = vmatprep.subr.bf16.mxu0 0
  %3032 = vmatpush1.bf16.msra.mxu0 0
  %3033 = vmatprep.subr.bf16.mxu0 0
  %3034 = vmatpush1.bf16.msra.mxu0 0
  %3035 = vmatprep.subr.bf16.mxu0 0
  %3036 = vmatpush1.bf16.msra.mxu0 0
  %3037 = vmatprep.subr.bf16.mxu0 0
  %3038 = vmatpush1.bf16.msra.mxu0 0
  %3039 = vmatprep.subr.bf16.mxu0 0
  %3040 = vmatpush1.bf16.msra.mxu0 0
  %3041 = vmatprep.subr.bf16.mxu0 0
  %3042 = vmatpush1.bf16.msra.mxu0 0
  %3043 = vmatprep.subr.bf16.mxu0 0
  %3044 = vmatpush1.bf16.msra.mxu0 0
  %3045 = vmatprep.mubr.bf16.mxu0 0
  %3046 = vmatmul.mubr.bf16.gmra.mrb[0].mxu0 %v3008
  %v3047 = vpop.f32.mrb[0].mxu0
  %v3048 = vadd.f32 0.0, %v3047
  %v3049 = vpop.f32.mrb[0].mxu0
  %v3050 = vpop.f32.mrb[0].mxu0
  %v3051 = vadd.f32 0.0, %v3050
  %v3052 = vpop.f32.mrb[0].mxu0
  %3053 = vmatprep.mubr.bf16.mxu0 0
  %3054 = vmatmul.mubr.bf16.gmra.mrb[0].mxu0 %v3011
  %v3055 = vpop.f32.mrb[0].mxu0
  %v3056 = vadd.f32 0.0, %v3055
  %v3057 = vpop.f32.mrb[0].mxu0
  %v3058 = vpop.f32.mrb[0].mxu0
  %v3059 = vadd.f32 0.0, %v3058
  %v3060 = vpop.f32.mrb[0].mxu0
  %3061 = vdwg.mxu0
  %v3062 = vadd.f32 %v2803, %v3048
  %v3063 = vadd.f32 %v2808, %v3051
  %v3064 = vadd.f32 %v2813, %v3056
  %v3065 = vadd.f32 %v2818, %v3059
  %v3066 = vld [vmem:[#allocation2 + $0x48] sm:$0xff]
  %v3067 = vld [vmem:[#allocation2 + $0x50] sm:$0xff]
  %v3068 = vld [vmem:[#allocation2 + $0x58] sm:$0xff]
  %v3069 = vld [vmem:[%s2903] sm:$0xf]
  %v3070 = vld [vmem:[%s2903 + $0x4] sm:$0xf]
  %v3071 = vld [vmem:[%s2903 + $0x8] sm:$0xf]
  %v3072 = vld [vmem:[%s2903 + $0xc] sm:$0xf]
  %v3077 = vunpack.c.l.b16 %v3069
  %v3078 = vunpack.c.l.b16 %v3070
  %v3079 = vunpack.c.l.b16 %v3071
  %v3080 = vunpack.c.l.b16 %v3072
  %v3081 = vpack.c.b16 %v3078, %v3077
  %v3082 = vpack.c.b16 %v3080, %v3079
  %v3084 = vsel %vm3006, %v3081, 0
  %v3087 = vsel %vm3006, %v3082, 0
  %3089 = vmatprep.subr.bf16.mxu0 0
  %3090 = vmatpush1.bf16.msra.mxu0 %v3066
  %3091 = vmatprep.subr.bf16.mxu0 0
  %3092 = vmatpush1.bf16.msra.mxu0 %v3067
  %3093 = vmatprep.subr.bf16.mxu0 0
  %3094 = vmatpush1.bf16.msra.mxu0 %v3068
  %3095 = vmatprep.subr.bf16.mxu0 0
  %3096 = vmatpush1.bf16.msra.mxu0 0
  %3097 = vmatprep.subr.bf16.mxu0 0
  %3098 = vmatpush1.bf16.msra.mxu0 0
  %3099 = vmatprep.subr.bf16.mxu0 0
  %3100 = vmatpush1.bf16.msra.mxu0 0
  %3101 = vmatprep.subr.bf16.mxu0 0
  %3102 = vmatpush1.bf16.msra.mxu0 0
  %3103 = vmatprep.subr.bf16.mxu0 0
  %3104 = vmatpush1.bf16.msra.mxu0 0
  %3105 = vmatprep.subr.bf16.mxu0 0
  %3106 = vmatpush1.bf16.msra.mxu0 0
  %3107 = vmatprep.subr.bf16.mxu0 0
  %3108 = vmatpush1.bf16.msra.mxu0 0
  %3109 = vmatprep.subr.bf16.mxu0 0
  %3110 = vmatpush1.bf16.msra.mxu0 0
  %3111 = vmatprep.subr.bf16.mxu0 0
  %3112 = vmatpush1.bf16.msra.mxu0 0
  %3113 = vmatprep.subr.bf16.mxu0 0
  %3114 = vmatpush1.bf16.msra.mxu0 0
  %3115 = vmatprep.subr.bf16.mxu0 0
  %3116 = vmatpush1.bf16.msra.mxu0 0
  %3117 = vmatprep.subr.bf16.mxu0 0
  %3118 = vmatpush1.bf16.msra.mxu0 0
  %3119 = vmatprep.subr.bf16.mxu0 0
  %3120 = vmatpush1.bf16.msra.mxu0 0
  %3121 = vmatprep.mubr.bf16.mxu0 0
  %3122 = vmatmul.mubr.bf16.gmra.mrb[0].mxu0 %v3084
  %v3123 = vpop.f32.mrb[0].mxu0
  %v3124 = vadd.f32 0.0, %v3123
  %v3125 = vpop.f32.mrb[0].mxu0
  %v3126 = vpop.f32.mrb[0].mxu0
  %v3127 = vadd.f32 0.0, %v3126
  %v3128 = vpop.f32.mrb[0].mxu0
  %3129 = vmatprep.mubr.bf16.mxu0 0
  %3130 = vmatmul.mubr.bf16.gmra.mrb[0].mxu0 %v3087
  %v3131 = vpop.f32.mrb[0].mxu0
  %v3132 = vadd.f32 0.0, %v3131
  %v3133 = vpop.f32.mrb[0].mxu0
  %v3134 = vpop.f32.mrb[0].mxu0
  %v3135 = vadd.f32 0.0, %v3134
  %v3136 = vpop.f32.mrb[0].mxu0
  %3137 = vdwg.mxu0
  %v3138 = vadd.f32 %v3062, %v3124
  %v3139 = vadd.f32 %v3063, %v3127
  %v3140 = vadd.f32 %v3064, %v3132
  %v3141 = vadd.f32 %v3065, %v3135
  %v3142 = vtanh.pop %v3138
  %v3143 = vtanh.pop %v3139
  %v3144 = vtanh.pop %v3140
  %v3145 = vtanh.pop %v3141
  %v3146 = vpack.c.bf16 %v3143, %v3142
  %v3147 = vpack.c.bf16 %v3145, %v3144
  %3148 = vst [vmem:[#allocation3 + $0x10] sm:$0xff] %v3146
  %3149 = vst [vmem:[#allocation3 + $0x18] sm:$0xff] %v3147
  %v3150 = vld [vmem:[#allocation2 + $0x18] sm:$0xff]
  %v3151 = vld [vmem:[#allocation2 + $0x20] sm:$0xff]
  %v3152 = vld [vmem:[#allocation2 + $0x28] sm:$0xff]
  %v3153 = vld [vmem:[%s2822] sm:$0xf]
  %v3154 = vld [vmem:[%s2822 + $0x4] sm:$0xf]
  %v3155 = vld [vmem:[%s2822 + $0x8] sm:$0xf]
  %v3156 = vld [vmem:[%s2822 + $0xc] sm:$0xf]
  %v3161 = vunpack.c.l.b16 %v3153
  %v3162 = vunpack.c.l.b16 %v3154
  %v3163 = vunpack.c.l.b16 %v3155
  %v3164 = vunpack.c.l.b16 %v3156
  %v3165 = vpack.c.b16 %v3162, %v3161
  %v3166 = vpack.c.b16 %v3164, %v3163
  %v3168 = vsel %vm3006, %v3165, 0
  %v3171 = vsel %vm3006, %v3166, 0
  %3173 = vmatprep.subr.bf16.mxu0 0
  %3174 = vmatpush1.bf16.msra.mxu0 %v3150
  %3175 = vmatprep.subr.bf16.mxu0 0
  %3176 = vmatpush1.bf16.msra.mxu0 %v3151
  %3177 = vmatprep.subr.bf16.mxu0 0
  %3178 = vmatpush1.bf16.msra.mxu0 %v3152
  %3179 = vmatprep.subr.bf16.mxu0 0
  %3180 = vmatpush1.bf16.msra.mxu0 0
  %3181 = vmatprep.subr.bf16.mxu0 0
  %3182 = vmatpush1.bf16.msra.mxu0 0
  %3183 = vmatprep.subr.bf16.mxu0 0
  %3184 = vmatpush1.bf16.msra.mxu0 0
  %3185 = vmatprep.subr.bf16.mxu0 0
  %3186 = vmatpush1.bf16.msra.mxu0 0
  %3187 = vmatprep.subr.bf16.mxu0 0
  %3188 = vmatpush1.bf16.msra.mxu0 0
  %3189 = vmatprep.subr.bf16.mxu0 0
  %3190 = vmatpush1.bf16.msra.mxu0 0
  %3191 = vmatprep.subr.bf16.mxu0 0
  %3192 = vmatpush1.bf16.msra.mxu0 0
  %3193 = vmatprep.subr.bf16.mxu0 0
  %3194 = vmatpush1.bf16.msra.mxu0 0
  %3195 = vmatprep.subr.bf16.mxu0 0
  %3196 = vmatpush1.bf16.msra.mxu0 0
  %3197 = vmatprep.subr.bf16.mxu0 0
  %3198 = vmatpush1.bf16.msra.mxu0 0
  %3199 = vmatprep.subr.bf16.mxu0 0
  %3200 = vmatpush1.bf16.msra.mxu0 0
  %3201 = vmatprep.subr.bf16.mxu0 0
  %3202 = vmatpush1.bf16.msra.mxu0 0
  %3203 = vmatprep.subr.bf16.mxu0 0
  %3204 = vmatpush1.bf16.msra.mxu0 0
  %3205 = vmatprep.mubr.bf16.mxu0 0
  %3206 = vmatmul.mubr.bf16.gmra.mrb[0].mxu0 %v3168
  %v3207 = vpop.f32.mrb[0].mxu0
  %v3208 = vadd.f32 0.0, %v3207
  %v3209 = vpop.f32.mrb[0].mxu0
  %v3210 = vpop.f32.mrb[0].mxu0
  %v3211 = vadd.f32 0.0, %v3210
  %v3212 = vpop.f32.mrb[0].mxu0
  %3213 = vmatprep.mubr.bf16.mxu0 0
  %3214 = vmatmul.mubr.bf16.gmra.mrb[0].mxu0 %v3171
  %v3215 = vpop.f32.mrb[0].mxu0
  %v3216 = vadd.f32 0.0, %v3215
  %v3217 = vpop.f32.mrb[0].mxu0
  %v3218 = vpop.f32.mrb[0].mxu0
  %v3219 = vadd.f32 0.0, %v3218
  %v3220 = vpop.f32.mrb[0].mxu0
  %3221 = vdwg.mxu0
  %v3222 = vadd.f32 %v2803, %v3208
  %v3223 = vadd.f32 %v2808, %v3211
  %v3224 = vadd.f32 %v2813, %v3216
  %v3225 = vadd.f32 %v2818, %v3219
  %v3226 = vld [vmem:[#allocation2 + $0x58] sm:$0xff]
  %v3227 = vld [vmem:[#allocation2 + $0x60] sm:$0xff]
  %v3228 = vld [vmem:[#allocation2 + $0x68] sm:$0xff]
  %v3229 = vld [vmem:[%s2903] sm:$0xf]
  %v3230 = vld [vmem:[%s2903 + $0x4] sm:$0xf]
  %v3231 = vld [vmem:[%s2903 + $0x8] sm:$0xf]
  %v3232 = vld [vmem:[%s2903 + $0xc] sm:$0xf]
  %v3237 = vunpack.c.l.b16 %v3229
  %v3238 = vunpack.c.l.b16 %v3230
  %v3239 = vunpack.c.l.b16 %v3231
  %v3240 = vunpack.c.l.b16 %v3232
  %v3241 = vpack.c.b16 %v3238, %v3237
  %v3242 = vpack.c.b16 %v3240, %v3239
  %v3244 = vsel %vm3006, %v3241, 0
  %v3247 = vsel %vm3006, %v3242, 0
  %3249 = vmatprep.subr.bf16.mxu0 0
  %3250 = vmatpush1.bf16.msra.mxu0 %v3226
  %3251 = vmatprep.subr.bf16.mxu0 0
  %3252 = vmatpush1.bf16.msra.mxu0 %v3227
  %3253 = vmatprep.subr.bf16.mxu0 0
  %3254 = vmatpush1.bf16.msra.mxu0 %v3228
  %3255 = vmatprep.subr.bf16.mxu0 0
  %3256 = vmatpush1.bf16.msra.mxu0 0
  %3257 = vmatprep.subr.bf16.mxu0 0
  %3258 = vmatpush1.bf16.msra.mxu0 0
  %3259 = vmatprep.subr.bf16.mxu0 0
  %3260 = vmatpush1.bf16.msra.mxu0 0
  %3261 = vmatprep.subr.bf16.mxu0 0
  %3262 = vmatpush1.bf16.msra.mxu0 0
  %3263 = vmatprep.subr.bf16.mxu0 0
  %3264 = vmatpush1.bf16.msra.mxu0 0
  %3265 = vmatprep.subr.bf16.mxu0 0
  %3266 = vmatpush1.bf16.msra.mxu0 0
  %3267 = vmatprep.subr.bf16.mxu0 0
  %3268 = vmatpush1.bf16.msra.mxu0 0
  %3269 = vmatprep.subr.bf16.mxu0 0
  %3270 = vmatpush1.bf16.msra.mxu0 0
  %3271 = vmatprep.subr.bf16.mxu0 0
  %3272 = vmatpush1.bf16.msra.mxu0 0
  %3273 = vmatprep.subr.bf16.mxu0 0
  %3274 = vmatpush1.bf16.msra.mxu0 0
  %3275 = vmatprep.subr.bf16.mxu0 0
  %3276 = vmatpush1.bf16.msra.mxu0 0
  %3277 = vmatprep.subr.bf16.mxu0 0
  %3278 = vmatpush1.bf16.msra.mxu0 0
  %3279 = vmatprep.subr.bf16.mxu0 0
  %3280 = vmatpush1.bf16.msra.mxu0 0
  %3281 = vmatprep.mubr.bf16.mxu0 0
  %3282 = vmatmul.mubr.bf16.gmra.mrb[0].mxu0 %v3244
  %v3283 = vpop.f32.mrb[0].mxu0
  %v3284 = vadd.f32 0.0, %v3283
  %v3285 = vpop.f32.mrb[0].mxu0
  %v3286 = vpop.f32.mrb[0].mxu0
  %v3287 = vadd.f32 0.0, %v3286
  %v3288 = vpop.f32.mrb[0].mxu0
  %3289 = vmatprep.mubr.bf16.mxu0 0
  %3290 = vmatmul.mubr.bf16.gmra.mrb[0].mxu0 %v3247
  %v3291 = vpop.f32.mrb[0].mxu0
  %v3292 = vadd.f32 0.0, %v3291
  %v3293 = vpop.f32.mrb[0].mxu0
  %v3294 = vpop.f32.mrb[0].mxu0
  %v3295 = vadd.f32 0.0, %v3294
  %v3296 = vpop.f32.mrb[0].mxu0
  %3297 = vdwg.mxu0
  %v3298 = vadd.f32 %v3222, %v3284
  %v3299 = vadd.f32 %v3223, %v3287
  %v3300 = vadd.f32 %v3224, %v3292
  %v3301 = vadd.f32 %v3225, %v3295
  %v3302 = vtanh.pop %v3298
  %v3303 = vtanh.pop %v3299
  %v3304 = vtanh.pop %v3300
  %v3305 = vtanh.pop %v3301
  %v3306 = vpack.c.bf16 %v3303, %v3302
  %v3307 = vpack.c.bf16 %v3305, %v3304
  %3308 = vst [vmem:[#allocation3 + $0x20] sm:$0xff] %v3306
  %3309 = vst [vmem:[#allocation3 + $0x28] sm:$0xff] %v3307
  %v3310 = vld [vmem:[#allocation2 + $0x28] sm:$0xff]
  %v3311 = vld [vmem:[#allocation2 + $0x30] sm:$0xff]
  %v3312 = vld [vmem:[#allocation2 + $0x38] sm:$0xff]
  %v3313 = vld [vmem:[%s2822] sm:$0xf]
  %v3314 = vld [vmem:[%s2822 + $0x4] sm:$0xf]
  %v3315 = vld [vmem:[%s2822 + $0x8] sm:$0xf]
  %v3316 = vld [vmem:[%s2822 + $0xc] sm:$0xf]
  %v3321 = vunpack.c.l.b16 %v3313
  %v3322 = vunpack.c.l.b16 %v3314
  %v3323 = vunpack.c.l.b16 %v3315
  %v3324 = vunpack.c.l.b16 %v3316
  %v3325 = vpack.c.b16 %v3322, %v3321
  %v3326 = vpack.c.b16 %v3324, %v3323
  %v3328 = vsel %vm3006, %v3325, 0
  %v3331 = vsel %vm3006, %v3326, 0
  %3333 = vmatprep.subr.bf16.mxu0 0
  %3334 = vmatpush1.bf16.msra.mxu0 %v3310
  %3335 = vmatprep.subr.bf16.mxu0 0
  %3336 = vmatpush1.bf16.msra.mxu0 %v3311
  %3337 = vmatprep.subr.bf16.mxu0 0
  %3338 = vmatpush1.bf16.msra.mxu0 %v3312
  %3339 = vmatprep.subr.bf16.mxu0 0
  %3340 = vmatpush1.bf16.msra.mxu0 0
  %3341 = vmatprep.subr.bf16.mxu0 0
  %3342 = vmatpush1.bf16.msra.mxu0 0
  %3343 = vmatprep.subr.bf16.mxu0 0
  %3344 = vmatpush1.bf16.msra.mxu0 0
  %3345 = vmatprep.subr.bf16.mxu0 0
  %3346 = vmatpush1.bf16.msra.mxu0 0
  %3347 = vmatprep.subr.bf16.mxu0 0
  %3348 = vmatpush1.bf16.msra.mxu0 0
  %3349 = vmatprep.subr.bf16.mxu0 0
  %3350 = vmatpush1.bf16.msra.mxu0 0
  %3351 = vmatprep.subr.bf16.mxu0 0
  %3352 = vmatpush1.bf16.msra.mxu0 0
  %3353 = vmatprep.subr.bf16.mxu0 0
  %3354 = vmatpush1.bf16.msra.mxu0 0
  %3355 = vmatprep.subr.bf16.mxu0 0
  %3356 = vmatpush1.bf16.msra.mxu0 0
  %3357 = vmatprep.subr.bf16.mxu0 0
  %3358 = vmatpush1.bf16.msra.mxu0 0
  %3359 = vmatprep.subr.bf16.mxu0 0
  %3360 = vmatpush1.bf16.msra.mxu0 0
  %3361 = vmatprep.subr.bf16.mxu0 0
  %3362 = vmatpush1.bf16.msra.mxu0 0
  %3363 = vmatprep.subr.bf16.mxu0 0
  %3364 = vmatpush1.bf16.msra.mxu0 0
  %3365 = vmatprep.mubr.bf16.mxu0 0
  %3366 = vmatmul.mubr.bf16.gmra.mrb[0].mxu0 %v3328
  %v3367 = vpop.f32.mrb[0].mxu0
  %v3368 = vadd.f32 0.0, %v3367
  %v3369 = vpop.f32.mrb[0].mxu0
  %v3370 = vpop.f32.mrb[0].mxu0
  %v3371 = vadd.f32 0.0, %v3370
  %v3372 = vpop.f32.mrb[0].mxu0
  %3373 = vmatprep.mubr.bf16.mxu0 0
  %3374 = vmatmul.mubr.bf16.gmra.mrb[0].mxu0 %v3331
  %v3375 = vpop.f32.mrb[0].mxu0
  %v3376 = vadd.f32 0.0, %v3375
  %v3377 = vpop.f32.mrb[0].mxu0
  %v3378 = vpop.f32.mrb[0].mxu0
  %v3379 = vadd.f32 0.0, %v3378
  %v3380 = vpop.f32.mrb[0].mxu0
  %3381 = vdwg.mxu0
  %v3382 = vadd.f32 %v2803, %v3368
  %v3383 = vadd.f32 %v2808, %v3371
  %v3384 = vadd.f32 %v2813, %v3376
  %v3385 = vadd.f32 %v2818, %v3379
  %v3386 = vld [vmem:[#allocation2 + $0x68] sm:$0xff]
  %v3387 = vld [vmem:[#allocation2 + $0x70] sm:$0xff]
  %v3388 = vld [vmem:[#allocation2 + $0x78] sm:$0xff]
  %v3389 = vld [vmem:[%s2903] sm:$0xf]
  %v3390 = vld [vmem:[%s2903 + $0x4] sm:$0xf]
  %v3391 = vld [vmem:[%s2903 + $0x8] sm:$0xf]
  %v3392 = vld [vmem:[%s2903 + $0xc] sm:$0xf]
  %v3397 = vunpack.c.l.b16 %v3389
  %v3398 = vunpack.c.l.b16 %v3390
  %v3399 = vunpack.c.l.b16 %v3391
  %v3400 = vunpack.c.l.b16 %v3392
  %v3401 = vpack.c.b16 %v3398, %v3397
  %v3402 = vpack.c.b16 %v3400, %v3399
  %v3404 = vsel %vm3006, %v3401, 0
  %v3407 = vsel %vm3006, %v3402, 0
  %3409 = vmatprep.subr.bf16.mxu0 0
  %3410 = vmatpush1.bf16.msra.mxu0 %v3386
  %3411 = vmatprep.subr.bf16.mxu0 0
  %3412 = vmatpush1.bf16.msra.mxu0 %v3387
  %3413 = vmatprep.subr.bf16.mxu0 0
  %3414 = vmatpush1.bf16.msra.mxu0 %v3388
  %3415 = vmatprep.subr.bf16.mxu0 0
  %3416 = vmatpush1.bf16.msra.mxu0 0
  %3417 = vmatprep.subr.bf16.mxu0 0
  %3418 = vmatpush1.bf16.msra.mxu0 0
  %3419 = vmatprep.subr.bf16.mxu0 0
  %3420 = vmatpush1.bf16.msra.mxu0 0
  %3421 = vmatprep.subr.bf16.mxu0 0
  %3422 = vmatpush1.bf16.msra.mxu0 0
  %3423 = vmatprep.subr.bf16.mxu0 0
  %3424 = vmatpush1.bf16.msra.mxu0 0
  %3425 = vmatprep.subr.bf16.mxu0 0
  %3426 = vmatpush1.bf16.msra.mxu0 0
  %3427 = vmatprep.subr.bf16.mxu0 0
  %3428 = vmatpush1.bf16.msra.mxu0 0
  %3429 = vmatprep.subr.bf16.mxu0 0
  %3430 = vmatpush1.bf16.msra.mxu0 0
  %3431 = vmatprep.subr.bf16.mxu0 0
  %3432 = vmatpush1.bf16.msra.mxu0 0
  %3433 = vmatprep.subr.bf16.mxu0 0
  %3434 = vmatpush1.bf16.msra.mxu0 0
  %3435 = vmatprep.subr.bf16.mxu0 0
  %3436 = vmatpush1.bf16.msra.mxu0 0
  %3437 = vmatprep.subr.bf16.mxu0 0
  %3438 = vmatpush1.bf16.msra.mxu0 0
  %3439 = vmatprep.subr.bf16.mxu0 0
  %3440 = vmatpush1.bf16.msra.mxu0 0
  %3441 = vmatprep.mubr.bf16.mxu0 0
  %3442 = vmatmul.mubr.bf16.gmra.mrb[0].mxu0 %v3404
  %v3443 = vpop.f32.mrb[0].mxu0
  %v3444 = vadd.f32 0.0, %v3443
  %v3445 = vpop.f32.mrb[0].mxu0
  %v3446 = vpop.f32.mrb[0].mxu0
  %v3447 = vadd.f32 0.0, %v3446
  %v3448 = vpop.f32.mrb[0].mxu0
  %3449 = vmatprep.mubr.bf16.mxu0 0
  %3450 = vmatmul.mubr.bf16.gmra.mrb[0].mxu0 %v3407
  %v3451 = vpop.f32.mrb[0].mxu0
  %v3452 = vadd.f32 0.0, %v3451
  %v3453 = vpop.f32.mrb[0].mxu0
  %v3454 = vpop.f32.mrb[0].mxu0
  %v3455 = vadd.f32 0.0, %v3454
  %v3456 = vpop.f32.mrb[0].mxu0
  %3457 = vdwg.mxu0
  %v3458 = vadd.f32 %v3382, %v3444
  %v3459 = vadd.f32 %v3383, %v3447
  %v3460 = vadd.f32 %v3384, %v3452
  %v3461 = vadd.f32 %v3385, %v3455
  %v3462 = vtanh.pop %v3458
  %v3463 = vtanh.pop %v3459
  %v3464 = vtanh.pop %v3460
  %v3465 = vtanh.pop %v3461
  %v3466 = vpack.c.bf16 %v3463, %v3462
  %v3467 = vpack.c.bf16 %v3465, %v3464
  %3468 = vst [vmem:[#allocation3 + $0x30] sm:$0xff] %v3466
  %3469 = vst [vmem:[#allocation3 + $0x38] sm:$0xff] %v3467
  %v3470 = vld [vmem:[#allocation2 + $0x40] sm:$0xff]
  %v3471 = vld [vmem:[#allocation2 + $0x48] sm:$0xff]
  %v3472 = vld [vmem:[%s3] sm:$0xf]
  %v3473 = vld [vmem:[%s3 + $0x4] sm:$0xf]
  %v3474 = vld [vmem:[%s3 + $0x8] sm:$0xf]
  %v3475 = vld [vmem:[%s3 + $0xc] sm:$0xf]
  %v3480 = vunpack.c.l.b16 %v3472
  %v3481 = vunpack.c.l.b16 %v3473
  %v3482 = vunpack.c.l.b16 %v3474
  %v3483 = vunpack.c.l.b16 %v3475
  %v3484 = vpack.c.b16 %v3481, %v3480
  %v3485 = vpack.c.b16 %v3483, %v3482
  %3486 = vrot.lane.b32.xlu0 %v3484, 112
  %v3487 = vpop.permute.xlu0 %3486
  %3488 = vrot.lane.b32.xlu0 %v3485, 112
  %v3489 = vpop.permute.xlu0 %3488
  %v3491 = vsel %vm2841, %v3487, 0
  %v3494 = vsel %vm2841, %v3489, 0
  %3496 = vmatprep.subr.bf16.mxu0 0
  %3497 = vmatpush1.bf16.msra.mxu0 %v3470
  %3498 = vmatprep.subr.bf16.mxu0 0
  %3499 = vmatpush1.bf16.msra.mxu0 %v3471
  %3500 = vmatprep.subr.bf16.mxu0 0
  %3501 = vmatpush1.bf16.msra.mxu0 0
  %3502 = vmatprep.subr.bf16.mxu0 0
  %3503 = vmatpush1.bf16.msra.mxu0 0
  %3504 = vmatprep.subr.bf16.mxu0 0
  %3505 = vmatpush1.bf16.msra.mxu0 0
  %3506 = vmatprep.subr.bf16.mxu0 0
  %3507 = vmatpush1.bf16.msra.mxu0 0
  %3508 = vmatprep.subr.bf16.mxu0 0
  %3509 = vmatpush1.bf16.msra.mxu0 0
  %3510 = vmatprep.subr.bf16.mxu0 0
  %3511 = vmatpush1.bf16.msra.mxu0 0
  %3512 = vmatprep.subr.bf16.mxu0 0
  %3513 = vmatpush1.bf16.msra.mxu0 0
  %3514 = vmatprep.subr.bf16.mxu0 0
  %3515 = vmatpush1.bf16.msra.mxu0 0
  %3516 = vmatprep.subr.bf16.mxu0 0
  %3517 = vmatpush1.bf16.msra.mxu0 0
  %3518 = vmatprep.subr.bf16.mxu0 0
  %3519 = vmatpush1.bf16.msra.mxu0 0
  %3520 = vmatprep.subr.bf16.mxu0 0
  %3521 = vmatpush1.bf16.msra.mxu0 0
  %3522 = vmatprep.subr.bf16.mxu0 0
  %3523 = vmatpush1.bf16.msra.mxu0 0
  %3524 = vmatprep.subr.bf16.mxu0 0
  %3525 = vmatpush1.bf16.msra.mxu0 0
  %3526 = vmatprep.subr.bf16.mxu0 0
  %3527 = vmatpush1.bf16.msra.mxu0 0
  %3528 = vmatprep.mubr.bf16.mxu0 0
  %3529 = vmatmul.mubr.bf16.gmra.mrb[0].mxu0 %v3491
  %v3530 = vpop.f32.mrb[0].mxu0
  %v3531 = vadd.f32 0.0, %v3530
  %v3532 = vpop.f32.mrb[0].mxu0
  %v3533 = vpop.f32.mrb[0].mxu0
  %v3534 = vadd.f32 0.0, %v3533
  %v3535 = vpop.f32.mrb[0].mxu0
  %3536 = vmatprep.mubr.bf16.mxu0 0
  %3537 = vmatmul.mubr.bf16.gmra.mrb[0].mxu0 %v3494
  %v3538 = vpop.f32.mrb[0].mxu0
  %v3539 = vadd.f32 0.0, %v3538
  %v3540 = vpop.f32.mrb[0].mxu0
  %v3541 = vpop.f32.mrb[0].mxu0
  %v3542 = vadd.f32 0.0, %v3541
  %v3543 = vpop.f32.mrb[0].mxu0
  %3544 = vdwg.mxu0
  %v3545 = vadd.f32 %v2803, %v3531
  %v3546 = vadd.f32 %v2808, %v3534
  %v3547 = vadd.f32 %v2813, %v3539
  %v3548 = vadd.f32 %v2818, %v3542
  %v3549 = vld [vmem:[#allocation2 + $0x80] sm:$0xff]
  %v3550 = vld [vmem:[#allocation2 + $0x88] sm:$0xff]
  %v3551 = vld [vmem:[%s2822] sm:$0xf]
  %v3552 = vld [vmem:[%s2822 + $0x4] sm:$0xf]
  %v3553 = vld [vmem:[%s2822 + $0x8] sm:$0xf]
  %v3554 = vld [vmem:[%s2822 + $0xc] sm:$0xf]
  %v3559 = vunpack.c.l.b16 %v3551
  %v3560 = vunpack.c.l.b16 %v3552
  %v3561 = vunpack.c.l.b16 %v3553
  %v3562 = vunpack.c.l.b16 %v3554
  %v3563 = vpack.c.b16 %v3560, %v3559
  %v3564 = vpack.c.b16 %v3562, %v3561
  %3565 = vrot.lane.b32.xlu0 %v3563, 112
  %v3566 = vpop.permute.xlu0 %3565
  %3567 = vrot.lane.b32.xlu0 %v3564, 112
  %v3568 = vpop.permute.xlu0 %3567
  %v3570 = vsel %vm2841, %v3566, 0
  %v3573 = vsel %vm2841, %v3568, 0
  %3575 = vmatprep.subr.bf16.mxu0 0
  %3576 = vmatpush1.bf16.msra.mxu0 %v3549
  %3577 = vmatprep.subr.bf16.mxu0 0
  %3578 = vmatpush1.bf16.msra.mxu0 %v3550
  %3579 = vmatprep.subr.bf16.mxu0 0
  %3580 = vmatpush1.bf16.msra.mxu0 0
  %3581 = vmatprep.subr.bf16.mxu0 0
  %3582 = vmatpush1.bf16.msra.mxu0 0
  %3583 = vmatprep.subr.bf16.mxu0 0
  %3584 = vmatpush1.bf16.msra.mxu0 0
  %3585 = vmatprep.subr.bf16.mxu0 0
  %3586 = vmatpush1.bf16.msra.mxu0 0
  %3587 = vmatprep.subr.bf16.mxu0 0
  %3588 = vmatpush1.bf16.msra.mxu0 0
  %3589 = vmatprep.subr.bf16.mxu0 0
  %3590 = vmatpush1.bf16.msra.mxu0 0
  %3591 = vmatprep.subr.bf16.mxu0 0
  %3592 = vmatpush1.bf16.msra.mxu0 0
  %3593 = vmatprep.subr.bf16.mxu0 0
  %3594 = vmatpush1.bf16.msra.mxu0 0
  %3595 = vmatprep.subr.bf16.mxu0 0
  %3596 = vmatpush1.bf16.msra.mxu0 0
  %3597 = vmatprep.subr.bf16.mxu0 0
  %3598 = vmatpush1.bf16.msra.mxu0 0
  %3599 = vmatprep.subr.bf16.mxu0 0
  %3600 = vmatpush1.bf16.msra.mxu0 0
  %3601 = vmatprep.subr.bf16.mxu0 0
  %3602 = vmatpush1.bf16.msra.mxu0 0
  %3603 = vmatprep.subr.bf16.mxu0 0
  %3604 = vmatpush1.bf16.msra.mxu0 0
  %3605 = vmatprep.subr.bf16.mxu0 0
  %3606 = vmatpush1.bf16.msra.mxu0 0
  %3607 = vmatprep.mubr.bf16.mxu0 0
  %3608 = vmatmul.mubr.bf16.gmra.mrb[0].mxu0 %v3570
  %v3609 = vpop.f32.mrb[0].mxu0
  %v3610 = vadd.f32 0.0, %v3609
  %v3611 = vpop.f32.mrb[0].mxu0
  %v3612 = vpop.f32.mrb[0].mxu0
  %v3613 = vadd.f32 0.0, %v3612
  %v3614 = vpop.f32.mrb[0].mxu0
  %3615 = vmatprep.mubr.bf16.mxu0 0
  %3616 = vmatmul.mubr.bf16.gmra.mrb[0].mxu0 %v3573
  %v3617 = vpop.f32.mrb[0].mxu0
  %v3618 = vadd.f32 0.0, %v3617
  %v3619 = vpop.f32.mrb[0].mxu0
  %v3620 = vpop.f32.mrb[0].mxu0
  %v3621 = vadd.f32 0.0, %v3620
  %v3622 = vpop.f32.mrb[0].mxu0
  %3623 = vdwg.mxu0
  %v3624 = vadd.f32 %v3545, %v3610
  %v3625 = vadd.f32 %v3546, %v3613
  %v3626 = vadd.f32 %v3547, %v3618
  %v3627 = vadd.f32 %v3548, %v3621
  %v3628 = vld [vmem:[#allocation2 + $0xc0] sm:$0xff]
  %v3629 = vld [vmem:[#allocation2 + $0xc8] sm:$0xff]
  %v3630 = vld [vmem:[%s2903] sm:$0xf]
  %v3631 = vld [vmem:[%s2903 + $0x4] sm:$0xf]
  %v3632 = vld [vmem:[%s2903 + $0x8] sm:$0xf]
  %v3633 = vld [vmem:[%s2903 + $0xc] sm:$0xf]
  %v3638 = vunpack.c.l.b16 %v3630
  %v3639 = vunpack.c.l.b16 %v3631
  %v3640 = vunpack.c.l.b16 %v3632
  %v3641 = vunpack.c.l.b16 %v3633
  %v3642 = vpack.c.b16 %v3639, %v3638
  %v3643 = vpack.c.b16 %v3641, %v3640
  %3644 = vrot.lane.b32.xlu0 %v3642, 112
  %v3645 = vpop.permute.xlu0 %3644
  %3646 = vrot.lane.b32.xlu0 %v3643, 112
  %v3647 = vpop.permute.xlu0 %3646
  %v3649 = vsel %vm2841, %v3645, 0
  %v3652 = vsel %vm2841, %v3647, 0
  %3654 = vmatprep.subr.bf16.mxu0 0
  %3655 = vmatpush1.bf16.msra.mxu0 %v3628
  %3656 = vmatprep.subr.bf16.mxu0 0
  %3657 = vmatpush1.bf16.msra.mxu0 %v3629
  %3658 = vmatprep.subr.bf16.mxu0 0
  %3659 = vmatpush1.bf16.msra.mxu0 0
  %3660 = vmatprep.subr.bf16.mxu0 0
  %3661 = vmatpush1.bf16.msra.mxu0 0
  %3662 = vmatprep.subr.bf16.mxu0 0
  %3663 = vmatpush1.bf16.msra.mxu0 0
  %3664 = vmatprep.subr.bf16.mxu0 0
  %3665 = vmatpush1.bf16.msra.mxu0 0
  %3666 = vmatprep.subr.bf16.mxu0 0
  %3667 = vmatpush1.bf16.msra.mxu0 0
  %3668 = vmatprep.subr.bf16.mxu0 0
  %3669 = vmatpush1.bf16.msra.mxu0 0
  %3670 = vmatprep.subr.bf16.mxu0 0
  %3671 = vmatpush1.bf16.msra.mxu0 0
  %3672 = vmatprep.subr.bf16.mxu0 0
  %3673 = vmatpush1.bf16.msra.mxu0 0
  %3674 = vmatprep.subr.bf16.mxu0 0
  %3675 = vmatpush1.bf16.msra.mxu0 0
  %3676 = vmatprep.subr.bf16.mxu0 0
  %3677 = vmatpush1.bf16.msra.mxu0 0
  %3678 = vmatprep.subr.bf16.mxu0 0
  %3679 = vmatpush1.bf16.msra.mxu0 0
  %3680 = vmatprep.subr.bf16.mxu0 0
  %3681 = vmatpush1.bf16.msra.mxu0 0
  %3682 = vmatprep.subr.bf16.mxu0 0
  %3683 = vmatpush1.bf16.msra.mxu0 0
  %3684 = vmatprep.subr.bf16.mxu0 0
  %3685 = vmatpush1.bf16.msra.mxu0 0
  %3686 = vmatprep.mubr.bf16.mxu0 0
  %3687 = vmatmul.mubr.bf16.gmra.mrb[0].mxu0 %v3649
  %v3688 = vpop.f32.mrb[0].mxu0
  %v3689 = vadd.f32 0.0, %v3688
  %v3690 = vpop.f32.mrb[0].mxu0
  %v3691 = vpop.f32.mrb[0].mxu0
  %v3692 = vadd.f32 0.0, %v3691
  %v3693 = vpop.f32.mrb[0].mxu0
  %3694 = vmatprep.mubr.bf16.mxu0 0
  %3695 = vmatmul.mubr.bf16.gmra.mrb[0].mxu0 %v3652
  %v3696 = vpop.f32.mrb[0].mxu0
  %v3697 = vadd.f32 0.0, %v3696
  %v3698 = vpop.f32.mrb[0].mxu0
  %v3699 = vpop.f32.mrb[0].mxu0
  %v3700 = vadd.f32 0.0, %v3699
  %v3701 = vpop.f32.mrb[0].mxu0
  %3702 = vdwg.mxu0
  %v3703 = vadd.f32 %v3624, %v3689
  %v3704 = vadd.f32 %v3625, %v3692
  %v3705 = vadd.f32 %v3626, %v3697
  %v3706 = vadd.f32 %v3627, %v3700
  %v3707 = vtanh.pop %v3703
  %v3708 = vtanh.pop %v3704
  %v3709 = vtanh.pop %v3705
  %v3710 = vtanh.pop %v3706
  %v3711 = vpack.c.bf16 %v3708, %v3707
  %v3712 = vpack.c.bf16 %v3710, %v3709
  %3713 = vst [vmem:[#allocation3 + $0x40] sm:$0xff] %v3711
  %3714 = vst [vmem:[#allocation3 + $0x48] sm:$0xff] %v3712
  %v3715 = vld [vmem:[#allocation2 + $0x48] sm:$0xff]
  %v3716 = vld [vmem:[#allocation2 + $0x50] sm:$0xff]
  %v3717 = vld [vmem:[#allocation2 + $0x58] sm:$0xff]
  %v3718 = vld [vmem:[%s3] sm:$0xf]
  %v3719 = vld [vmem:[%s3 + $0x4] sm:$0xf]
  %v3720 = vld [vmem:[%s3 + $0x8] sm:$0xf]
  %v3721 = vld [vmem:[%s3 + $0xc] sm:$0xf]
  %v3726 = vunpack.c.l.b16 %v3718
  %v3727 = vunpack.c.l.b16 %v3719
  %v3728 = vunpack.c.l.b16 %v3720
  %v3729 = vunpack.c.l.b16 %v3721
  %v3730 = vpack.c.b16 %v3727, %v3726
  %v3731 = vpack.c.b16 %v3729, %v3728
  %v3733 = vsel %vm3006, %v3730, 0
  %v3736 = vsel %vm3006, %v3731, 0
  %3738 = vmatprep.subr.bf16.mxu0 0
  %3739 = vmatpush1.bf16.msra.mxu0 %v3715
  %3740 = vmatprep.subr.bf16.mxu0 0
  %3741 = vmatpush1.bf16.msra.mxu0 %v3716
  %3742 = vmatprep.subr.bf16.mxu0 0
  %3743 = vmatpush1.bf16.msra.mxu0 %v3717
  %3744 = vmatprep.subr.bf16.mxu0 0
  %3745 = vmatpush1.bf16.msra.mxu0 0
  %3746 = vmatprep.subr.bf16.mxu0 0
  %3747 = vmatpush1.bf16.msra.mxu0 0
  %3748 = vmatprep.subr.bf16.mxu0 0
  %3749 = vmatpush1.bf16.msra.mxu0 0
  %3750 = vmatprep.subr.bf16.mxu0 0
  %3751 = vmatpush1.bf16.msra.mxu0 0
  %3752 = vmatprep.subr.bf16.mxu0 0
  %3753 = vmatpush1.bf16.msra.mxu0 0
  %3754 = vmatprep.subr.bf16.mxu0 0
  %3755 = vmatpush1.bf16.msra.mxu0 0
  %3756 = vmatprep.subr.bf16.mxu0 0
  %3757 = vmatpush1.bf16.msra.mxu0 0
  %3758 = vmatprep.subr.bf16.mxu0 0
  %3759 = vmatpush1.bf16.msra.mxu0 0
  %3760 = vmatprep.subr.bf16.mxu0 0
  %3761 = vmatpush1.bf16.msra.mxu0 0
  %3762 = vmatprep.subr.bf16.mxu0 0
  %3763 = vmatpush1.bf16.msra.mxu0 0
  %3764 = vmatprep.subr.bf16.mxu0 0
  %3765 = vmatpush1.bf16.msra.mxu0 0
  %3766 = vmatprep.subr.bf16.mxu0 0
  %3767 = vmatpush1.bf16.msra.mxu0 0
  %3768 = vmatprep.subr.bf16.mxu0 0
  %3769 = vmatpush1.bf16.msra.mxu0 0
  %3770 = vmatprep.mubr.bf16.mxu0 0
  %3771 = vmatmul.mubr.bf16.gmra.mrb[0].mxu0 %v3733
  %v3772 = vpop.f32.mrb[0].mxu0
  %v3773 = vadd.f32 0.0, %v3772
  %v3774 = vpop.f32.mrb[0].mxu0
  %v3775 = vpop.f32.mrb[0].mxu0
  %v3776 = vadd.f32 0.0, %v3775
  %v3777 = vpop.f32.mrb[0].mxu0
  %3778 = vmatprep.mubr.bf16.mxu0 0
  %3779 = vmatmul.mubr.bf16.gmra.mrb[0].mxu0 %v3736
  %v3780 = vpop.f32.mrb[0].mxu0
  %v3781 = vadd.f32 0.0, %v3780
  %v3782 = vpop.f32.mrb[0].mxu0
  %v3783 = vpop.f32.mrb[0].mxu0
  %v3784 = vadd.f32 0.0, %v3783
  %v3785 = vpop.f32.mrb[0].mxu0
  %3786 = vdwg.mxu0
  %v3787 = vadd.f32 %v2803, %v3773
  %v3788 = vadd.f32 %v2808, %v3776
  %v3789 = vadd.f32 %v2813, %v3781
  %v3790 = vadd.f32 %v2818, %v3784
  %v3791 = vld [vmem:[#allocation2 + $0x88] sm:$0xff]
  %v3792 = vld [vmem:[#allocation2 + $0x90] sm:$0xff]
  %v3793 = vld [vmem:[#allocation2 + $0x98] sm:$0xff]
  %v3794 = vld [vmem:[%s2822] sm:$0xf]
  %v3795 = vld [vmem:[%s2822 + $0x4] sm:$0xf]
  %v3796 = vld [vmem:[%s2822 + $0x8] sm:$0xf]
  %v3797 = vld [vmem:[%s2822 + $0xc] sm:$0xf]
  %v3802 = vunpack.c.l.b16 %v3794
  %v3803 = vunpack.c.l.b16 %v3795
  %v3804 = vunpack.c.l.b16 %v3796
  %v3805 = vunpack.c.l.b16 %v3797
  %v3806 = vpack.c.b16 %v3803, %v3802
  %v3807 = vpack.c.b16 %v3805, %v3804
  %v3809 = vsel %vm3006, %v3806, 0
  %v3812 = vsel %vm3006, %v3807, 0
  %3814 = vmatprep.subr.bf16.mxu0 0
  %3815 = vmatpush1.bf16.msra.mxu0 %v3791
  %3816 = vmatprep.subr.bf16.mxu0 0
  %3817 = vmatpush1.bf16.msra.mxu0 %v3792
  %3818 = vmatprep.subr.bf16.mxu0 0
  %3819 = vmatpush1.bf16.msra.mxu0 %v3793
  %3820 = vmatprep.subr.bf16.mxu0 0
  %3821 = vmatpush1.bf16.msra.mxu0 0
  %3822 = vmatprep.subr.bf16.mxu0 0
  %3823 = vmatpush1.bf16.msra.mxu0 0
  %3824 = vmatprep.subr.bf16.mxu0 0
  %3825 = vmatpush1.bf16.msra.mxu0 0
  %3826 = vmatprep.subr.bf16.mxu0 0
  %3827 = vmatpush1.bf16.msra.mxu0 0
  %3828 = vmatprep.subr.bf16.mxu0 0
  %3829 = vmatpush1.bf16.msra.mxu0 0
  %3830 = vmatprep.subr.bf16.mxu0 0
  %3831 = vmatpush1.bf16.msra.mxu0 0
  %3832 = vmatprep.subr.bf16.mxu0 0
  %3833 = vmatpush1.bf16.msra.mxu0 0
  %3834 = vmatprep.subr.bf16.mxu0 0
  %3835 = vmatpush1.bf16.msra.mxu0 0
  %3836 = vmatprep.subr.bf16.mxu0 0
  %3837 = vmatpush1.bf16.msra.mxu0 0
  %3838 = vmatprep.subr.bf16.mxu0 0
  %3839 = vmatpush1.bf16.msra.mxu0 0
  %3840 = vmatprep.subr.bf16.mxu0 0
  %3841 = vmatpush1.bf16.msra.mxu0 0
  %3842 = vmatprep.subr.bf16.mxu0 0
  %3843 = vmatpush1.bf16.msra.mxu0 0
  %3844 = vmatprep.subr.bf16.mxu0 0
  %3845 = vmatpush1.bf16.msra.mxu0 0
  %3846 = vmatprep.mubr.bf16.mxu0 0
  %3847 = vmatmul.mubr.bf16.gmra.mrb[0].mxu0 %v3809
  %v3848 = vpop.f32.mrb[0].mxu0
  %v3849 = vadd.f32 0.0, %v3848
  %v3850 = vpop.f32.mrb[0].mxu0
  %v3851 = vpop.f32.mrb[0].mxu0
  %v3852 = vadd.f32 0.0, %v3851
  %v3853 = vpop.f32.mrb[0].mxu0
  %3854 = vmatprep.mubr.bf16.mxu0 0
  %3855 = vmatmul.mubr.bf16.gmra.mrb[0].mxu0 %v3812
  %v3856 = vpop.f32.mrb[0].mxu0
  %v3857 = vadd.f32 0.0, %v3856
  %v3858 = vpop.f32.mrb[0].mxu0
  %v3859 = vpop.f32.mrb[0].mxu0
  %v3860 = vadd.f32 0.0, %v3859
  %v3861 = vpop.f32.mrb[0].mxu0
  %3862 = vdwg.mxu0
  %v3863 = vadd.f32 %v3787, %v3849
  %v3864 = vadd.f32 %v3788, %v3852
  %v3865 = vadd.f32 %v3789, %v3857
  %v3866 = vadd.f32 %v3790, %v3860
  %v3867 = vld [vmem:[#allocation2 + $0xc8] sm:$0xff]
  %v3868 = vld [vmem:[#allocation2 + $0xd0] sm:$0xff]
  %v3869 = vld [vmem:[#allocation2 + $0xd8] sm:$0xff]
  %v3870 = vld [vmem:[%s2903] sm:$0xf]
  %v3871 = vld [vmem:[%s2903 + $0x4] sm:$0xf]
  %v3872 = vld [vmem:[%s2903 + $0x8] sm:$0xf]
  %v3873 = vld [vmem:[%s2903 + $0xc] sm:$0xf]
  %v3878 = vunpack.c.l.b16 %v3870
  %v3879 = vunpack.c.l.b16 %v3871
  %v3880 = vunpack.c.l.b16 %v3872
  %v3881 = vunpack.c.l.b16 %v3873
  %v3882 = vpack.c.b16 %v3879, %v3878
  %v3883 = vpack.c.b16 %v3881, %v3880
  %v3885 = vsel %vm3006, %v3882, 0
  %v3888 = vsel %vm3006, %v3883, 0
  %3890 = vmatprep.subr.bf16.mxu0 0
  %3891 = vmatpush1.bf16.msra.mxu0 %v3867
  %3892 = vmatprep.subr.bf16.mxu0 0
  %3893 = vmatpush1.bf16.msra.mxu0 %v3868
  %3894 = vmatprep.subr.bf16.mxu0 0
  %3895 = vmatpush1.bf16.msra.mxu0 %v3869
  %3896 = vmatprep.subr.bf16.mxu0 0
  %3897 = vmatpush1.bf16.msra.mxu0 0
  %3898 = vmatprep.subr.bf16.mxu0 0
  %3899 = vmatpush1.bf16.msra.mxu0 0
  %3900 = vmatprep.subr.bf16.mxu0 0
  %3901 = vmatpush1.bf16.msra.mxu0 0
  %3902 = vmatprep.subr.bf16.mxu0 0
  %3903 = vmatpush1.bf16.msra.mxu0 0
  %3904 = vmatprep.subr.bf16.mxu0 0
  %3905 = vmatpush1.bf16.msra.mxu0 0
  %3906 = vmatprep.subr.bf16.mxu0 0
  %3907 = vmatpush1.bf16.msra.mxu0 0
  %3908 = vmatprep.subr.bf16.mxu0 0
  %3909 = vmatpush1.bf16.msra.mxu0 0
  %3910 = vmatprep.subr.bf16.mxu0 0
  %3911 = vmatpush1.bf16.msra.mxu0 0
  %3912 = vmatprep.subr.bf16.mxu0 0
  %3913 = vmatpush1.bf16.msra.mxu0 0
  %3914 = vmatprep.subr.bf16.mxu0 0
  %3915 = vmatpush1.bf16.msra.mxu0 0
  %3916 = vmatprep.subr.bf16.mxu0 0
  %3917 = vmatpush1.bf16.msra.mxu0 0
  %3918 = vmatprep.subr.bf16.mxu0 0
  %3919 = vmatpush1.bf16.msra.mxu0 0
  %3920 = vmatprep.subr.bf16.mxu0 0
  %3921 = vmatpush1.bf16.msra.mxu0 0
  %3922 = vmatprep.mubr.bf16.mxu0 0
  %3923 = vmatmul.mubr.bf16.gmra.mrb[0].mxu0 %v3885
  %v3924 = vpop.f32.mrb[0].mxu0
  %v3925 = vadd.f32 0.0, %v3924
  %v3926 = vpop.f32.mrb[0].mxu0
  %v3927 = vpop.f32.mrb[0].mxu0
  %v3928 = vadd.f32 0.0, %v3927
  %v3929 = vpop.f32.mrb[0].mxu0
  %3930 = vmatprep.mubr.bf16.mxu0 0
  %3931 = vmatmul.mubr.bf16.gmra.mrb[0].mxu0 %v3888
  %v3932 = vpop.f32.mrb[0].mxu0
  %v3933 = vadd.f32 0.0, %v3932
  %v3934 = vpop.f32.mrb[0].mxu0
  %v3935 = vpop.f32.mrb[0].mxu0
  %v3936 = vadd.f32 0.0, %v3935
  %v3937 = vpop.f32.mrb[0].mxu0
  %3938 = vdwg.mxu0
  %v3939 = vadd.f32 %v3863, %v3925
  %v3940 = vadd.f32 %v3864, %v3928
  %v3941 = vadd.f32 %v3865, %v3933
  %v3942 = vadd.f32 %v3866, %v3936
  %v3943 = vtanh.pop %v3939
  %v3944 = vtanh.pop %v3940
  %v3945 = vtanh.pop %v3941
  %v3946 = vtanh.pop %v3942
  %v3947 = vpack.c.bf16 %v3944, %v3943
  %v3948 = vpack.c.bf16 %v3946, %v3945
  %3949 = vst [vmem:[#allocation3 + $0x50] sm:$0xff] %v3947
  %3950 = vst [vmem:[#allocation3 + $0x58] sm:$0xff] %v3948
  %v3951 = vld [vmem:[#allocation2 + $0x58] sm:$0xff]
  %v3952 = vld [vmem:[#allocation2 + $0x60] sm:$0xff]
  %v3953 = vld [vmem:[#allocation2 + $0x68] sm:$0xff]
  %v3954 = vld [vmem:[%s3] sm:$0xf]
  %v3955 = vld [vmem:[%s3 + $0x4] sm:$0xf]
  %v3956 = vld [vmem:[%s3 + $0x8] sm:$0xf]
  %v3957 = vld [vmem:[%s3 + $0xc] sm:$0xf]
  %v3962 = vunpack.c.l.b16 %v3954
  %v3963 = vunpack.c.l.b16 %v3955
  %v3964 = vunpack.c.l.b16 %v3956
  %v3965 = vunpack.c.l.b16 %v3957
  %v3966 = vpack.c.b16 %v3963, %v3962
  %v3967 = vpack.c.b16 %v3965, %v3964
  %v3969 = vsel %vm3006, %v3966, 0
  %v3972 = vsel %vm3006, %v3967, 0
  %3974 = vmatprep.subr.bf16.mxu0 0
  %3975 = vmatpush1.bf16.msra.mxu0 %v3951
  %3976 = vmatprep.subr.bf16.mxu0 0
  %3977 = vmatpush1.bf16.msra.mxu0 %v3952
  %3978 = vmatprep.subr.bf16.mxu0 0
  %3979 = vmatpush1.bf16.msra.mxu0 %v3953
  %3980 = vmatprep.subr.bf16.mxu0 0
  %3981 = vmatpush1.bf16.msra.mxu0 0
  %3982 = vmatprep.subr.bf16.mxu0 0
  %3983 = vmatpush1.bf16.msra.mxu0 0
  %3984 = vmatprep.subr.bf16.mxu0 0
  %3985 = vmatpush1.bf16.msra.mxu0 0
  %3986 = vmatprep.subr.bf16.mxu0 0
  %3987 = vmatpush1.bf16.msra.mxu0 0
  %3988 = vmatprep.subr.bf16.mxu0 0
  %3989 = vmatpush1.bf16.msra.mxu0 0
  %3990 = vmatprep.subr.bf16.mxu0 0
  %3991 = vmatpush1.bf16.msra.mxu0 0
  %3992 = vmatprep.subr.bf16.mxu0 0
  %3993 = vmatpush1.bf16.msra.mxu0 0
  %3994 = vmatprep.subr.bf16.mxu0 0
  %3995 = vmatpush1.bf16.msra.mxu0 0
  %3996 = vmatprep.subr.bf16.mxu0 0
  %3997 = vmatpush1.bf16.msra.mxu0 0
  %3998 = vmatprep.subr.bf16.mxu0 0
  %3999 = vmatpush1.bf16.msra.mxu0 0
  %4000 = vmatprep.subr.bf16.mxu0 0
  %4001 = vmatpush1.bf16.msra.mxu0 0
  %4002 = vmatprep.subr.bf16.mxu0 0
  %4003 = vmatpush1.bf16.msra.mxu0 0
  %4004 = vmatprep.subr.bf16.mxu0 0
  %4005 = vmatpush1.bf16.msra.mxu0 0
  %4006 = vmatprep.mubr.bf16.mxu0 0
  %4007 = vmatmul.mubr.bf16.gmra.mrb[0].mxu0 %v3969
  %v4008 = vpop.f32.mrb[0].mxu0
  %v4009 = vadd.f32 0.0, %v4008
  %v4010 = vpop.f32.mrb[0].mxu0
  %v4011 = vpop.f32.mrb[0].mxu0
  %v4012 = vadd.f32 0.0, %v4011
  %v4013 = vpop.f32.mrb[0].mxu0
  %4014 = vmatprep.mubr.bf16.mxu0 0
  %4015 = vmatmul.mubr.bf16.gmra.mrb[0].mxu0 %v3972
  %v4016 = vpop.f32.mrb[0].mxu0
  %v4017 = vadd.f32 0.0, %v4016
  %v4018 = vpop.f32.mrb[0].mxu0
  %v4019 = vpop.f32.mrb[0].mxu0
  %v4020 = vadd.f32 0.0, %v4019
  %v4021 = vpop.f32.mrb[0].mxu0
  %4022 = vdwg.mxu0
  %v4023 = vadd.f32 %v2803, %v4009
  %v4024 = vadd.f32 %v2808, %v4012
  %v4025 = vadd.f32 %v2813, %v4017
  %v4026 = vadd.f32 %v2818, %v4020
  %v4027 = vld [vmem:[#allocation2 + $0x98] sm:$0xff]
  %v4028 = vld [vmem:[#allocation2 + $0xa0] sm:$0xff]
  %v4029 = vld [vmem:[#allocation2 + $0xa8] sm:$0xff]
  %v4030 = vld [vmem:[%s2822] sm:$0xf]
  %v4031 = vld [vmem:[%s2822 + $0x4] sm:$0xf]
  %v4032 = vld [vmem:[%s2822 + $0x8] sm:$0xf]
  %v4033 = vld [vmem:[%s2822 + $0xc] sm:$0xf]
  %v4038 = vunpack.c.l.b16 %v4030
  %v4039 = vunpack.c.l.b16 %v4031
  %v4040 = vunpack.c.l.b16 %v4032
  %v4041 = vunpack.c.l.b16 %v4033
  %v4042 = vpack.c.b16 %v4039, %v4038
  %v4043 = vpack.c.b16 %v4041, %v4040
  %v4045 = vsel %vm3006, %v4042, 0
  %v4048 = vsel %vm3006, %v4043, 0
  %4050 = vmatprep.subr.bf16.mxu0 0
  %4051 = vmatpush1.bf16.msra.mxu0 %v4027
  %4052 = vmatprep.subr.bf16.mxu0 0
  %4053 = vmatpush1.bf16.msra.mxu0 %v4028
  %4054 = vmatprep.subr.bf16.mxu0 0
  %4055 = vmatpush1.bf16.msra.mxu0 %v4029
  %4056 = vmatprep.subr.bf16.mxu0 0
  %4057 = vmatpush1.bf16.msra.mxu0 0
  %4058 = vmatprep.subr.bf16.mxu0 0
  %4059 = vmatpush1.bf16.msra.mxu0 0
  %4060 = vmatprep.subr.bf16.mxu0 0
  %4061 = vmatpush1.bf16.msra.mxu0 0
  %4062 = vmatprep.subr.bf16.mxu0 0
  %4063 = vmatpush1.bf16.msra.mxu0 0
  %4064 = vmatprep.subr.bf16.mxu0 0
  %4065 = vmatpush1.bf16.msra.mxu0 0
  %4066 = vmatprep.subr.bf16.mxu0 0
  %4067 = vmatpush1.bf16.msra.mxu0 0
  %4068 = vmatprep.subr.bf16.mxu0 0
  %4069 = vmatpush1.bf16.msra.mxu0 0
  %4070 = vmatprep.subr.bf16.mxu0 0
  %4071 = vmatpush1.bf16.msra.mxu0 0
  %4072 = vmatprep.subr.bf16.mxu0 0
  %4073 = vmatpush1.bf16.msra.mxu0 0
  %4074 = vmatprep.subr.bf16.mxu0 0
  %4075 = vmatpush1.bf16.msra.mxu0 0
  %4076 = vmatprep.subr.bf16.mxu0 0
  %4077 = vmatpush1.bf16.msra.mxu0 0
  %4078 = vmatprep.subr.bf16.mxu0 0
  %4079 = vmatpush1.bf16.msra.mxu0 0
  %4080 = vmatprep.subr.bf16.mxu0 0
  %4081 = vmatpush1.bf16.msra.mxu0 0
  %4082 = vmatprep.mubr.bf16.mxu0 0
  %4083 = vmatmul.mubr.bf16.gmra.mrb[0].mxu0 %v4045
  %v4084 = vpop.f32.mrb[0].mxu0
  %v4085 = vadd.f32 0.0, %v4084
  %v4086 = vpop.f32.mrb[0].mxu0
  %v4087 = vpop.f32.mrb[0].mxu0
  %v4088 = vadd.f32 0.0, %v4087
  %v4089 = vpop.f32.mrb[0].mxu0
  %4090 = vmatprep.mubr.bf16.mxu0 0
  %4091 = vmatmul.mubr.bf16.gmra.mrb[0].mxu0 %v4048
  %v4092 = vpop.f32.mrb[0].mxu0
  %v4093 = vadd.f32 0.0, %v4092
  %v4094 = vpop.f32.mrb[0].mxu0
  %v4095 = vpop.f32.mrb[0].mxu0
  %v4096 = vadd.f32 0.0, %v4095
  %v4097 = vpop.f32.mrb[0].mxu0
  %4098 = vdwg.mxu0
  %v4099 = vadd.f32 %v4023, %v4085
  %v4100 = vadd.f32 %v4024, %v4088
  %v4101 = vadd.f32 %v4025, %v4093
  %v4102 = vadd.f32 %v4026, %v4096
  %v4103 = vld [vmem:[#allocation2 + $0xd8] sm:$0xff]
  %v4104 = vld [vmem:[#allocation2 + $0xe0] sm:$0xff]
  %v4105 = vld [vmem:[#allocation2 + $0xe8] sm:$0xff]
  %v4106 = vld [vmem:[%s2903] sm:$0xf]
  %v4107 = vld [vmem:[%s2903 + $0x4] sm:$0xf]
  %v4108 = vld [vmem:[%s2903 + $0x8] sm:$0xf]
  %v4109 = vld [vmem:[%s2903 + $0xc] sm:$0xf]
  %v4114 = vunpack.c.l.b16 %v4106
  %v4115 = vunpack.c.l.b16 %v4107
  %v4116 = vunpack.c.l.b16 %v4108
  %v4117 = vunpack.c.l.b16 %v4109
  %v4118 = vpack.c.b16 %v4115, %v4114
  %v4119 = vpack.c.b16 %v4117, %v4116
  %v4121 = vsel %vm3006, %v4118, 0
  %v4124 = vsel %vm3006, %v4119, 0
  %4126 = vmatprep.subr.bf16.mxu0 0
  %4127 = vmatpush1.bf16.msra.mxu0 %v4103
  %4128 = vmatprep.subr.bf16.mxu0 0
  %4129 = vmatpush1.bf16.msra.mxu0 %v4104
  %4130 = vmatprep.subr.bf16.mxu0 0
  %4131 = vmatpush1.bf16.msra.mxu0 %v4105
  %4132 = vmatprep.subr.bf16.mxu0 0
  %4133 = vmatpush1.bf16.msra.mxu0 0
  %4134 = vmatprep.subr.bf16.mxu0 0
  %4135 = vmatpush1.bf16.msra.mxu0 0
  %4136 = vmatprep.subr.bf16.mxu0 0
  %4137 = vmatpush1.bf16.msra.mxu0 0
  %4138 = vmatprep.subr.bf16.mxu0 0
  %4139 = vmatpush1.bf16.msra.mxu0 0
  %4140 = vmatprep.subr.bf16.mxu0 0
  %4141 = vmatpush1.bf16.msra.mxu0 0
  %4142 = vmatprep.subr.bf16.mxu0 0
  %4143 = vmatpush1.bf16.msra.mxu0 0
  %4144 = vmatprep.subr.bf16.mxu0 0
  %4145 = vmatpush1.bf16.msra.mxu0 0
  %4146 = vmatprep.subr.bf16.mxu0 0
  %4147 = vmatpush1.bf16.msra.mxu0 0
  %4148 = vmatprep.subr.bf16.mxu0 0
  %4149 = vmatpush1.bf16.msra.mxu0 0
  %4150 = vmatprep.subr.bf16.mxu0 0
  %4151 = vmatpush1.bf16.msra.mxu0 0
  %4152 = vmatprep.subr.bf16.mxu0 0
  %4153 = vmatpush1.bf16.msra.mxu0 0
  %4154 = vmatprep.subr.bf16.mxu0 0
  %4155 = vmatpush1.bf16.msra.mxu0 0
  %4156 = vmatprep.subr.bf16.mxu0 0
  %4157 = vmatpush1.bf16.msra.mxu0 0
  %4158 = vmatprep.mubr.bf16.mxu0 0
  %4159 = vmatmul.mubr.bf16.gmra.mrb[0].mxu0 %v4121
  %v4160 = vpop.f32.mrb[0].mxu0
  %v4161 = vadd.f32 0.0, %v4160
  %v4162 = vpop.f32.mrb[0].mxu0
  %v4163 = vpop.f32.mrb[0].mxu0
  %v4164 = vadd.f32 0.0, %v4163
  %v4165 = vpop.f32.mrb[0].mxu0
  %4166 = vmatprep.mubr.bf16.mxu0 0
  %4167 = vmatmul.mubr.bf16.gmra.mrb[0].mxu0 %v4124
  %v4168 = vpop.f32.mrb[0].mxu0
  %v4169 = vadd.f32 0.0, %v4168
  %v4170 = vpop.f32.mrb[0].mxu0
  %v4171 = vpop.f32.mrb[0].mxu0
  %v4172 = vadd.f32 0.0, %v4171
  %v4173 = vpop.f32.mrb[0].mxu0
  %4174 = vdwg.mxu0
  %v4175 = vadd.f32 %v4099, %v4161
  %v4176 = vadd.f32 %v4100, %v4164
  %v4177 = vadd.f32 %v4101, %v4169
  %v4178 = vadd.f32 %v4102, %v4172
  %v4179 = vtanh.pop %v4175
  %v4180 = vtanh.pop %v4176
  %v4181 = vtanh.pop %v4177
  %v4182 = vtanh.pop %v4178
  %v4183 = vpack.c.bf16 %v4180, %v4179
  %v4184 = vpack.c.bf16 %v4182, %v4181
  %4185 = vst [vmem:[#allocation3 + $0x60] sm:$0xff] %v4183
  %4186 = vst [vmem:[#allocation3 + $0x68] sm:$0xff] %v4184
  %v4187 = vld [vmem:[#allocation2 + $0x68] sm:$0xff]
  %v4188 = vld [vmem:[#allocation2 + $0x70] sm:$0xff]
  %v4189 = vld [vmem:[#allocation2 + $0x78] sm:$0xff]
  %v4190 = vld [vmem:[%s3] sm:$0xf]
  %v4191 = vld [vmem:[%s3 + $0x4] sm:$0xf]
  %v4192 = vld [vmem:[%s3 + $0x8] sm:$0xf]
  %v4193 = vld [vmem:[%s3 + $0xc] sm:$0xf]
  %v4198 = vunpack.c.l.b16 %v4190
  %v4199 = vunpack.c.l.b16 %v4191
  %v4200 = vunpack.c.l.b16 %v4192
  %v4201 = vunpack.c.l.b16 %v4193
  %v4202 = vpack.c.b16 %v4199, %v4198
  %v4203 = vpack.c.b16 %v4201, %v4200
  %v4205 = vsel %vm3006, %v4202, 0
  %v4208 = vsel %vm3006, %v4203, 0
  %4210 = vmatprep.subr.bf16.mxu0 0
  %4211 = vmatpush1.bf16.msra.mxu0 %v4187
  %4212 = vmatprep.subr.bf16.mxu0 0
  %4213 = vmatpush1.bf16.msra.mxu0 %v4188
  %4214 = vmatprep.subr.bf16.mxu0 0
  %4215 = vmatpush1.bf16.msra.mxu0 %v4189
  %4216 = vmatprep.subr.bf16.mxu0 0
  %4217 = vmatpush1.bf16.msra.mxu0 0
  %4218 = vmatprep.subr.bf16.mxu0 0
  %4219 = vmatpush1.bf16.msra.mxu0 0
  %4220 = vmatprep.subr.bf16.mxu0 0
  %4221 = vmatpush1.bf16.msra.mxu0 0
  %4222 = vmatprep.subr.bf16.mxu0 0
  %4223 = vmatpush1.bf16.msra.mxu0 0
  %4224 = vmatprep.subr.bf16.mxu0 0
  %4225 = vmatpush1.bf16.msra.mxu0 0
  %4226 = vmatprep.subr.bf16.mxu0 0
  %4227 = vmatpush1.bf16.msra.mxu0 0
  %4228 = vmatprep.subr.bf16.mxu0 0
  %4229 = vmatpush1.bf16.msra.mxu0 0
  %4230 = vmatprep.subr.bf16.mxu0 0
  %4231 = vmatpush1.bf16.msra.mxu0 0
  %4232 = vmatprep.subr.bf16.mxu0 0
  %4233 = vmatpush1.bf16.msra.mxu0 0
  %4234 = vmatprep.subr.bf16.mxu0 0
  %4235 = vmatpush1.bf16.msra.mxu0 0
  %4236 = vmatprep.subr.bf16.mxu0 0
  %4237 = vmatpush1.bf16.msra.mxu0 0
  %4238 = vmatprep.subr.bf16.mxu0 0
  %4239 = vmatpush1.bf16.msra.mxu0 0
  %4240 = vmatprep.subr.bf16.mxu0 0
  %4241 = vmatpush1.bf16.msra.mxu0 0
  %4242 = vmatprep.mubr.bf16.mxu0 0
  %4243 = vmatmul.mubr.bf16.gmra.mrb[0].mxu0 %v4205
  %v4244 = vpop.f32.mrb[0].mxu0
  %v4245 = vadd.f32 0.0, %v4244
  %v4246 = vpop.f32.mrb[0].mxu0
  %v4247 = vpop.f32.mrb[0].mxu0
  %v4248 = vadd.f32 0.0, %v4247
  %v4249 = vpop.f32.mrb[0].mxu0
  %4250 = vmatprep.mubr.bf16.mxu0 0
  %4251 = vmatmul.mubr.bf16.gmra.mrb[0].mxu0 %v4208
  %v4252 = vpop.f32.mrb[0].mxu0
  %v4253 = vadd.f32 0.0, %v4252
  %v4254 = vpop.f32.mrb[0].mxu0
  %v4255 = vpop.f32.mrb[0].mxu0
  %v4256 = vadd.f32 0.0, %v4255
  %v4257 = vpop.f32.mrb[0].mxu0
  %4258 = vdwg.mxu0
  %v4259 = vadd.f32 %v2803, %v4245
  %v4260 = vadd.f32 %v2808, %v4248
  %v4261 = vadd.f32 %v2813, %v4253
  %v4262 = vadd.f32 %v2818, %v4256
  %v4263 = vld [vmem:[#allocation2 + $0xa8] sm:$0xff]
  %v4264 = vld [vmem:[#allocation2 + $0xb0] sm:$0xff]
  %v4265 = vld [vmem:[#allocation2 + $0xb8] sm:$0xff]
  %v4266 = vld [vmem:[%s2822] sm:$0xf]
  %v4267 = vld [vmem:[%s2822 + $0x4] sm:$0xf]
  %v4268 = vld [vmem:[%s2822 + $0x8] sm:$0xf]
  %v4269 = vld [vmem:[%s2822 + $0xc] sm:$0xf]
  %v4274 = vunpack.c.l.b16 %v4266
  %v4275 = vunpack.c.l.b16 %v4267
  %v4276 = vunpack.c.l.b16 %v4268
  %v4277 = vunpack.c.l.b16 %v4269
  %v4278 = vpack.c.b16 %v4275, %v4274
  %v4279 = vpack.c.b16 %v4277, %v4276
  %v4281 = vsel %vm3006, %v4278, 0
  %v4284 = vsel %vm3006, %v4279, 0
  %4286 = vmatprep.subr.bf16.mxu0 0
  %4287 = vmatpush1.bf16.msra.mxu0 %v4263
  %4288 = vmatprep.subr.bf16.mxu0 0
  %4289 = vmatpush1.bf16.msra.mxu0 %v4264
  %4290 = vmatprep.subr.bf16.mxu0 0
  %4291 = vmatpush1.bf16.msra.mxu0 %v4265
  %4292 = vmatprep.subr.bf16.mxu0 0
  %4293 = vmatpush1.bf16.msra.mxu0 0
  %4294 = vmatprep.subr.bf16.mxu0 0
  %4295 = vmatpush1.bf16.msra.mxu0 0
  %4296 = vmatprep.subr.bf16.mxu0 0
  %4297 = vmatpush1.bf16.msra.mxu0 0
  %4298 = vmatprep.subr.bf16.mxu0 0
  %4299 = vmatpush1.bf16.msra.mxu0 0
  %4300 = vmatprep.subr.bf16.mxu0 0
  %4301 = vmatpush1.bf16.msra.mxu0 0
  %4302 = vmatprep.subr.bf16.mxu0 0
  %4303 = vmatpush1.bf16.msra.mxu0 0
  %4304 = vmatprep.subr.bf16.mxu0 0
  %4305 = vmatpush1.bf16.msra.mxu0 0
  %4306 = vmatprep.subr.bf16.mxu0 0
  %4307 = vmatpush1.bf16.msra.mxu0 0
  %4308 = vmatprep.subr.bf16.mxu0 0
  %4309 = vmatpush1.bf16.msra.mxu0 0
  %4310 = vmatprep.subr.bf16.mxu0 0
  %4311 = vmatpush1.bf16.msra.mxu0 0
  %4312 = vmatprep.subr.bf16.mxu0 0
  %4313 = vmatpush1.bf16.msra.mxu0 0
  %4314 = vmatprep.subr.bf16.mxu0 0
  %4315 = vmatpush1.bf16.msra.mxu0 0
  %4316 = vmatprep.subr.bf16.mxu0 0
  %4317 = vmatpush1.bf16.msra.mxu0 0
  %4318 = vmatprep.mubr.bf16.mxu0 0
  %4319 = vmatmul.mubr.bf16.gmra.mrb[0].mxu0 %v4281
  %v4320 = vpop.f32.mrb[0].mxu0
  %v4321 = vadd.f32 0.0, %v4320
  %v4322 = vpop.f32.mrb[0].mxu0
  %v4323 = vpop.f32.mrb[0].mxu0
  %v4324 = vadd.f32 0.0, %v4323
  %v4325 = vpop.f32.mrb[0].mxu0
  %4326 = vmatprep.mubr.bf16.mxu0 0
  %4327 = vmatmul.mubr.bf16.gmra.mrb[0].mxu0 %v4284
  %v4328 = vpop.f32.mrb[0].mxu0
  %v4329 = vadd.f32 0.0, %v4328
  %v4330 = vpop.f32.mrb[0].mxu0
  %v4331 = vpop.f32.mrb[0].mxu0
  %v4332 = vadd.f32 0.0, %v4331
  %v4333 = vpop.f32.mrb[0].mxu0
  %4334 = vdwg.mxu0
  %v4335 = vadd.f32 %v4259, %v4321
  %v4336 = vadd.f32 %v4260, %v4324
  %v4337 = vadd.f32 %v4261, %v4329
  %v4338 = vadd.f32 %v4262, %v4332
  %v4339 = vld [vmem:[#allocation2 + $0xe8] sm:$0xff]
  %v4340 = vld [vmem:[#allocation2 + $0xf0] sm:$0xff]
  %v4341 = vld [vmem:[#allocation2 + $0xf8] sm:$0xff]
  %v4342 = vld [vmem:[%s2903] sm:$0xf]
  %v4343 = vld [vmem:[%s2903 + $0x4] sm:$0xf]
  %v4344 = vld [vmem:[%s2903 + $0x8] sm:$0xf]
  %v4345 = vld [vmem:[%s2903 + $0xc] sm:$0xf]
  %v4350 = vunpack.c.l.b16 %v4342
  %v4351 = vunpack.c.l.b16 %v4343
  %v4352 = vunpack.c.l.b16 %v4344
  %v4353 = vunpack.c.l.b16 %v4345
  %v4354 = vpack.c.b16 %v4351, %v4350
  %v4355 = vpack.c.b16 %v4353, %v4352
  %v4357 = vsel %vm3006, %v4354, 0
  %v4360 = vsel %vm3006, %v4355, 0
  %4362 = vmatprep.subr.bf16.mxu0 0
  %4363 = vmatpush1.bf16.msra.mxu0 %v4339
  %4364 = vmatprep.subr.bf16.mxu0 0
  %4365 = vmatpush1.bf16.msra.mxu0 %v4340
  %4366 = vmatprep.subr.bf16.mxu0 0
  %4367 = vmatpush1.bf16.msra.mxu0 %v4341
  %4368 = vmatprep.subr.bf16.mxu0 0
  %4369 = vmatpush1.bf16.msra.mxu0 0
  %4370 = vmatprep.subr.bf16.mxu0 0
  %4371 = vmatpush1.bf16.msra.mxu0 0
  %4372 = vmatprep.subr.bf16.mxu0 0
  %4373 = vmatpush1.bf16.msra.mxu0 0
  %4374 = vmatprep.subr.bf16.mxu0 0
  %4375 = vmatpush1.bf16.msra.mxu0 0
  %4376 = vmatprep.subr.bf16.mxu0 0
  %4377 = vmatpush1.bf16.msra.mxu0 0
  %4378 = vmatprep.subr.bf16.mxu0 0
  %4379 = vmatpush1.bf16.msra.mxu0 0
  %4380 = vmatprep.subr.bf16.mxu0 0
  %4381 = vmatpush1.bf16.msra.mxu0 0
  %4382 = vmatprep.subr.bf16.mxu0 0
  %4383 = vmatpush1.bf16.msra.mxu0 0
  %4384 = vmatprep.subr.bf16.mxu0 0
  %4385 = vmatpush1.bf16.msra.mxu0 0
  %4386 = vmatprep.subr.bf16.mxu0 0
  %4387 = vmatpush1.bf16.msra.mxu0 0
  %4388 = vmatprep.subr.bf16.mxu0 0
  %4389 = vmatpush1.bf16.msra.mxu0 0
  %4390 = vmatprep.subr.bf16.mxu0 0
  %4391 = vmatpush1.bf16.msra.mxu0 0
  %4392 = vmatprep.subr.bf16.mxu0 0
  %4393 = vmatpush1.bf16.msra.mxu0 0
  %4394 = vmatprep.mubr.bf16.mxu0 0
  %4395 = vmatmul.mubr.bf16.gmra.mrb[0].mxu0 %v4357
  %v4396 = vpop.f32.mrb[0].mxu0
  %v4397 = vadd.f32 0.0, %v4396
  %v4398 = vpop.f32.mrb[0].mxu0
  %v4399 = vpop.f32.mrb[0].mxu0
  %v4400 = vadd.f32 0.0, %v4399
  %v4401 = vpop.f32.mrb[0].mxu0
  %4402 = vmatprep.mubr.bf16.mxu0 0
  %4403 = vmatmul.mubr.bf16.gmra.mrb[0].mxu0 %v4360
  %v4404 = vpop.f32.mrb[0].mxu0
  %v4405 = vadd.f32 0.0, %v4404
  %v4406 = vpop.f32.mrb[0].mxu0
  %v4407 = vpop.f32.mrb[0].mxu0
  %v4408 = vadd.f32 0.0, %v4407
  %v4409 = vpop.f32.mrb[0].mxu0
  %4410 = vdwg.mxu0
  %v4411 = vadd.f32 %v4335, %v4397
  %v4412 = vadd.f32 %v4336, %v4400
  %v4413 = vadd.f32 %v4337, %v4405
  %v4414 = vadd.f32 %v4338, %v4408
  %v4415 = vtanh.pop %v4411
  %v4416 = vtanh.pop %v4412
  %v4417 = vtanh.pop %v4413
  %v4418 = vtanh.pop %v4414
  %v4419 = vpack.c.bf16 %v4416, %v4415
  %v4420 = vpack.c.bf16 %v4418, %v4417
  %4421 = vst [vmem:[#allocation3 + $0x70] sm:$0xff] %v4419
  %4422 = vst [vmem:[#allocation3 + $0x78] sm:$0xff] %v4420
  %v4423 = vld [vmem:[#allocation2 + $0xc0] sm:$0xff]
  %v4424 = vld [vmem:[#allocation2 + $0xc8] sm:$0xff]
  %v4425 = vld [vmem:[%s3] sm:$0xf]
  %v4426 = vld [vmem:[%s3 + $0x4] sm:$0xf]
  %v4427 = vld [vmem:[%s3 + $0x8] sm:$0xf]
  %v4428 = vld [vmem:[%s3 + $0xc] sm:$0xf]
  %v4433 = vunpack.c.l.b16 %v4425
  %v4434 = vunpack.c.l.b16 %v4426
  %v4435 = vunpack.c.l.b16 %v4427
  %v4436 = vunpack.c.l.b16 %v4428
  %v4437 = vpack.c.b16 %v4434, %v4433
  %v4438 = vpack.c.b16 %v4436, %v4435
  %4439 = vrot.lane.b32.xlu0 %v4437, 112
  %v4440 = vpop.permute.xlu0 %4439
  %4441 = vrot.lane.b32.xlu0 %v4438, 112
  %v4442 = vpop.permute.xlu0 %4441
  %v4444 = vsel %vm2841, %v4440, 0
  %v4447 = vsel %vm2841, %v4442, 0
  %4449 = vmatprep.subr.bf16.mxu0 0
  %4450 = vmatpush1.bf16.msra.mxu0 %v4423
  %4451 = vmatprep.subr.bf16.mxu0 0
  %4452 = vmatpush1.bf16.msra.mxu0 %v4424
  %4453 = vmatprep.subr.bf16.mxu0 0
  %4454 = vmatpush1.bf16.msra.mxu0 0
  %4455 = vmatprep.subr.bf16.mxu0 0
  %4456 = vmatpush1.bf16.msra.mxu0 0
  %4457 = vmatprep.subr.bf16.mxu0 0
  %4458 = vmatpush1.bf16.msra.mxu0 0
  %4459 = vmatprep.subr.bf16.mxu0 0
  %4460 = vmatpush1.bf16.msra.mxu0 0
  %4461 = vmatprep.subr.bf16.mxu0 0
  %4462 = vmatpush1.bf16.msra.mxu0 0
  %4463 = vmatprep.subr.bf16.mxu0 0
  %4464 = vmatpush1.bf16.msra.mxu0 0
  %4465 = vmatprep.subr.bf16.mxu0 0
  %4466 = vmatpush1.bf16.msra.mxu0 0
  %4467 = vmatprep.subr.bf16.mxu0 0
  %4468 = vmatpush1.bf16.msra.mxu0 0
  %4469 = vmatprep.subr.bf16.mxu0 0
  %4470 = vmatpush1.bf16.msra.mxu0 0
  %4471 = vmatprep.subr.bf16.mxu0 0
  %4472 = vmatpush1.bf16.msra.mxu0 0
  %4473 = vmatprep.subr.bf16.mxu0 0
  %4474 = vmatpush1.bf16.msra.mxu0 0
  %4475 = vmatprep.subr.bf16.mxu0 0
  %4476 = vmatpush1.bf16.msra.mxu0 0
  %4477 = vmatprep.subr.bf16.mxu0 0
  %4478 = vmatpush1.bf16.msra.mxu0 0
  %4479 = vmatprep.subr.bf16.mxu0 0
  %4480 = vmatpush1.bf16.msra.mxu0 0
  %4481 = vmatprep.mubr.bf16.mxu0 0
  %4482 = vmatmul.mubr.bf16.gmra.mrb[0].mxu0 %v4444
  %v4483 = vpop.f32.mrb[0].mxu0
  %v4484 = vadd.f32 0.0, %v4483
  %v4485 = vpop.f32.mrb[0].mxu0
  %v4486 = vpop.f32.mrb[0].mxu0
  %v4487 = vadd.f32 0.0, %v4486
  %v4488 = vpop.f32.mrb[0].mxu0
  %4489 = vmatprep.mubr.bf16.mxu0 0
  %4490 = vmatmul.mubr.bf16.gmra.mrb[0].mxu0 %v4447
  %v4491 = vpop.f32.mrb[0].mxu0
  %v4492 = vadd.f32 0.0, %v4491
  %v4493 = vpop.f32.mrb[0].mxu0
  %v4494 = vpop.f32.mrb[0].mxu0
  %v4495 = vadd.f32 0.0, %v4494
  %v4496 = vpop.f32.mrb[0].mxu0
  %4497 = vdwg.mxu0
  %v4498 = vadd.f32 %v2803, %v4484
  %v4499 = vadd.f32 %v2808, %v4487
  %v4500 = vadd.f32 %v2813, %v4492
  %v4501 = vadd.f32 %v2818, %v4495
  %v4502 = vld [vmem:[#allocation2 + $0x100] sm:$0xff]
  %v4503 = vld [vmem:[#allocation2 + $0x108] sm:$0xff]
  %v4504 = vld [vmem:[%s2822] sm:$0xf]
  %v4505 = vld [vmem:[%s2822 + $0x4] sm:$0xf]
  %v4506 = vld [vmem:[%s2822 + $0x8] sm:$0xf]
  %v4507 = vld [vmem:[%s2822 + $0xc] sm:$0xf]
  %v4512 = vunpack.c.l.b16 %v4504
  %v4513 = vunpack.c.l.b16 %v4505
  %v4514 = vunpack.c.l.b16 %v4506
  %v4515 = vunpack.c.l.b16 %v4507
  %v4516 = vpack.c.b16 %v4513, %v4512
  %v4517 = vpack.c.b16 %v4515, %v4514
  %4518 = vrot.lane.b32.xlu0 %v4516, 112
  %v4519 = vpop.permute.xlu0 %4518
  %4520 = vrot.lane.b32.xlu0 %v4517, 112
  %v4521 = vpop.permute.xlu0 %4520
  %v4523 = vsel %vm2841, %v4519, 0
  %v4526 = vsel %vm2841, %v4521, 0
  %4528 = vmatprep.subr.bf16.mxu0 0
  %4529 = vmatpush1.bf16.msra.mxu0 %v4502
  %4530 = vmatprep.subr.bf16.mxu0 0
  %4531 = vmatpush1.bf16.msra.mxu0 %v4503
  %4532 = vmatprep.subr.bf16.mxu0 0
  %4533 = vmatpush1.bf16.msra.mxu0 0
  %4534 = vmatprep.subr.bf16.mxu0 0
  %4535 = vmatpush1.bf16.msra.mxu0 0
  %4536 = vmatprep.subr.bf16.mxu0 0
  %4537 = vmatpush1.bf16.msra.mxu0 0
  %4538 = vmatprep.subr.bf16.mxu0 0
  %4539 = vmatpush1.bf16.msra.mxu0 0
  %4540 = vmatprep.subr.bf16.mxu0 0
  %4541 = vmatpush1.bf16.msra.mxu0 0
  %4542 = vmatprep.subr.bf16.mxu0 0
  %4543 = vmatpush1.bf16.msra.mxu0 0
  %4544 = vmatprep.subr.bf16.mxu0 0
  %4545 = vmatpush1.bf16.msra.mxu0 0
  %4546 = vmatprep.subr.bf16.mxu0 0
  %4547 = vmatpush1.bf16.msra.mxu0 0
  %4548 = vmatprep.subr.bf16.mxu0 0
  %4549 = vmatpush1.bf16.msra.mxu0 0
  %4550 = vmatprep.subr.bf16.mxu0 0
  %4551 = vmatpush1.bf16.msra.mxu0 0
  %4552 = vmatprep.subr.bf16.mxu0 0
  %4553 = vmatpush1.bf16.msra.mxu0 0
  %4554 = vmatprep.subr.bf16.mxu0 0
  %4555 = vmatpush1.bf16.msra.mxu0 0
  %4556 = vmatprep.subr.bf16.mxu0 0
  %4557 = vmatpush1.bf16.msra.mxu0 0
  %4558 = vmatprep.subr.bf16.mxu0 0
  %4559 = vmatpush1.bf16.msra.mxu0 0
  %4560 = vmatprep.mubr.bf16.mxu0 0
  %4561 = vmatmul.mubr.bf16.gmra.mrb[0].mxu0 %v4523
  %v4562 = vpop.f32.mrb[0].mxu0
  %v4563 = vadd.f32 0.0, %v4562
  %v4564 = vpop.f32.mrb[0].mxu0
  %v4565 = vpop.f32.mrb[0].mxu0
  %v4566 = vadd.f32 0.0, %v4565
  %v4567 = vpop.f32.mrb[0].mxu0
  %4568 = vmatprep.mubr.bf16.mxu0 0
  %4569 = vmatmul.mubr.bf16.gmra.mrb[0].mxu0 %v4526
  %v4570 = vpop.f32.mrb[0].mxu0
  %v4571 = vadd.f32 0.0, %v4570
  %v4572 = vpop.f32.mrb[0].mxu0
  %v4573 = vpop.f32.mrb[0].mxu0
  %v4574 = vadd.f32 0.0, %v4573
  %v4575 = vpop.f32.mrb[0].mxu0
  %4576 = vdwg.mxu0
  %v4577 = vadd.f32 %v4498, %v4563
  %v4578 = vadd.f32 %v4499, %v4566
  %v4579 = vadd.f32 %v4500, %v4571
  %v4580 = vadd.f32 %v4501, %v4574
  %v4581 = vld [vmem:[#allocation2 + $0x140] sm:$0xff]
  %v4582 = vld [vmem:[#allocation2 + $0x148] sm:$0xff]
  %v4583 = vld [vmem:[%s2903] sm:$0xf]
  %v4584 = vld [vmem:[%s2903 + $0x4] sm:$0xf]
  %v4585 = vld [vmem:[%s2903 + $0x8] sm:$0xf]
  %v4586 = vld [vmem:[%s2903 + $0xc] sm:$0xf]
  %v4591 = vunpack.c.l.b16 %v4583
  %v4592 = vunpack.c.l.b16 %v4584
  %v4593 = vunpack.c.l.b16 %v4585
  %v4594 = vunpack.c.l.b16 %v4586
  %v4595 = vpack.c.b16 %v4592, %v4591
  %v4596 = vpack.c.b16 %v4594, %v4593
  %4597 = vrot.lane.b32.xlu0 %v4595, 112
  %v4598 = vpop.permute.xlu0 %4597
  %4599 = vrot.lane.b32.xlu0 %v4596, 112
  %v4600 = vpop.permute.xlu0 %4599
  %v4602 = vsel %vm2841, %v4598, 0
  %v4605 = vsel %vm2841, %v4600, 0
  %4607 = vmatprep.subr.bf16.mxu0 0
  %4608 = vmatpush1.bf16.msra.mxu0 %v4581
  %4609 = vmatprep.subr.bf16.mxu0 0
  %4610 = vmatpush1.bf16.msra.mxu0 %v4582
  %4611 = vmatprep.subr.bf16.mxu0 0
  %4612 = vmatpush1.bf16.msra.mxu0 0
  %4613 = vmatprep.subr.bf16.mxu0 0
  %4614 = vmatpush1.bf16.msra.mxu0 0
  %4615 = vmatprep.subr.bf16.mxu0 0
  %4616 = vmatpush1.bf16.msra.mxu0 0
  %4617 = vmatprep.subr.bf16.mxu0 0
  %4618 = vmatpush1.bf16.msra.mxu0 0
  %4619 = vmatprep.subr.bf16.mxu0 0
  %4620 = vmatpush1.bf16.msra.mxu0 0
  %4621 = vmatprep.subr.bf16.mxu0 0
  %4622 = vmatpush1.bf16.msra.mxu0 0
  %4623 = vmatprep.subr.bf16.mxu0 0
  %4624 = vmatpush1.bf16.msra.mxu0 0
  %4625 = vmatprep.subr.bf16.mxu0 0
  %4626 = vmatpush1.bf16.msra.mxu0 0
  %4627 = vmatprep.subr.bf16.mxu0 0
  %4628 = vmatpush1.bf16.msra.mxu0 0
  %4629 = vmatprep.subr.bf16.mxu0 0
  %4630 = vmatpush1.bf16.msra.mxu0 0
  %4631 = vmatprep.subr.bf16.mxu0 0
  %4632 = vmatpush1.bf16.msra.mxu0 0
  %4633 = vmatprep.subr.bf16.mxu0 0
  %4634 = vmatpush1.bf16.msra.mxu0 0
  %4635 = vmatprep.subr.bf16.mxu0 0
  %4636 = vmatpush1.bf16.msra.mxu0 0
  %4637 = vmatprep.subr.bf16.mxu0 0
  %4638 = vmatpush1.bf16.msra.mxu0 0
  %4639 = vmatprep.mubr.bf16.mxu0 0
  %4640 = vmatmul.mubr.bf16.gmra.mrb[0].mxu0 %v4602
  %v4641 = vpop.f32.mrb[0].mxu0
  %v4642 = vadd.f32 0.0, %v4641
  %v4643 = vpop.f32.mrb[0].mxu0
  %v4644 = vpop.f32.mrb[0].mxu0
  %v4645 = vadd.f32 0.0, %v4644
  %v4646 = vpop.f32.mrb[0].mxu0
  %4647 = vmatprep.mubr.bf16.mxu0 0
  %4648 = vmatmul.mubr.bf16.gmra.mrb[0].mxu0 %v4605
  %v4649 = vpop.f32.mrb[0].mxu0
  %v4650 = vadd.f32 0.0, %v4649
  %v4651 = vpop.f32.mrb[0].mxu0
  %v4652 = vpop.f32.mrb[0].mxu0
  %v4653 = vadd.f32 0.0, %v4652
  %v4654 = vpop.f32.mrb[0].mxu0
  %4655 = vdwg.mxu0
  %v4656 = vadd.f32 %v4577, %v4642
  %v4657 = vadd.f32 %v4578, %v4645
  %v4658 = vadd.f32 %v4579, %v4650
  %v4659 = vadd.f32 %v4580, %v4653
  %v4660 = vtanh.pop %v4656
  %v4661 = vtanh.pop %v4657
  %v4662 = vtanh.pop %v4658
  %v4663 = vtanh.pop %v4659
  %v4664 = vpack.c.bf16 %v4661, %v4660
  %v4665 = vpack.c.bf16 %v4663, %v4662
  %4666 = vst [vmem:[#allocation3 + $0x80] sm:$0xff] %v4664
  %4667 = vst [vmem:[#allocation3 + $0x88] sm:$0xff] %v4665
  %v4668 = vld [vmem:[#allocation2 + $0xc8] sm:$0xff]
  %v4669 = vld [vmem:[#allocation2 + $0xd0] sm:$0xff]
  %v4670 = vld [vmem:[#allocation2 + $0xd8] sm:$0xff]
  %v4671 = vld [vmem:[%s3] sm:$0xf]
  %v4672 = vld [vmem:[%s3 + $0x4] sm:$0xf]
  %v4673 = vld [vmem:[%s3 + $0x8] sm:$0xf]
  %v4674 = vld [vmem:[%s3 + $0xc] sm:$0xf]
  %v4679 = vunpack.c.l.b16 %v4671
  %v4680 = vunpack.c.l.b16 %v4672
  %v4681 = vunpack.c.l.b16 %v4673
  %v4682 = vunpack.c.l.b16 %v4674
  %v4683 = vpack.c.b16 %v4680, %v4679
  %v4684 = vpack.c.b16 %v4682, %v4681
  %v4686 = vsel %vm3006, %v4683, 0
  %v4689 = vsel %vm3006, %v4684, 0
  %4691 = vmatprep.subr.bf16.mxu0 0
  %4692 = vmatpush1.bf16.msra.mxu0 %v4668
  %4693 = vmatprep.subr.bf16.mxu0 0
  %4694 = vmatpush1.bf16.msra.mxu0 %v4669
  %4695 = vmatprep.subr.bf16.mxu0 0
  %4696 = vmatpush1.bf16.msra.mxu0 %v4670
  %4697 = vmatprep.subr.bf16.mxu0 0
  %4698 = vmatpush1.bf16.msra.mxu0 0
  %4699 = vmatprep.subr.bf16.mxu0 0
  %4700 = vmatpush1.bf16.msra.mxu0 0
  %4701 = vmatprep.subr.bf16.mxu0 0
  %4702 = vmatpush1.bf16.msra.mxu0 0
  %4703 = vmatprep.subr.bf16.mxu0 0
  %4704 = vmatpush1.bf16.msra.mxu0 0
  %4705 = vmatprep.subr.bf16.mxu0 0
  %4706 = vmatpush1.bf16.msra.mxu0 0
  %4707 = vmatprep.subr.bf16.mxu0 0
  %4708 = vmatpush1.bf16.msra.mxu0 0
  %4709 = vmatprep.subr.bf16.mxu0 0
  %4710 = vmatpush1.bf16.msra.mxu0 0
  %4711 = vmatprep.subr.bf16.mxu0 0
  %4712 = vmatpush1.bf16.msra.mxu0 0
  %4713 = vmatprep.subr.bf16.mxu0 0
  %4714 = vmatpush1.bf16.msra.mxu0 0
  %4715 = vmatprep.subr.bf16.mxu0 0
  %4716 = vmatpush1.bf16.msra.mxu0 0
  %4717 = vmatprep.subr.bf16.mxu0 0
  %4718 = vmatpush1.bf16.msra.mxu0 0
  %4719 = vmatprep.subr.bf16.mxu0 0
  %4720 = vmatpush1.bf16.msra.mxu0 0
  %4721 = vmatprep.subr.bf16.mxu0 0
  %4722 = vmatpush1.bf16.msra.mxu0 0
  %4723 = vmatprep.mubr.bf16.mxu0 0
  %4724 = vmatmul.mubr.bf16.gmra.mrb[0].mxu0 %v4686
  %v4725 = vpop.f32.mrb[0].mxu0
  %v4726 = vadd.f32 0.0, %v4725
  %v4727 = vpop.f32.mrb[0].mxu0
  %v4728 = vpop.f32.mrb[0].mxu0
  %v4729 = vadd.f32 0.0, %v4728
  %v4730 = vpop.f32.mrb[0].mxu0
  %4731 = vmatprep.mubr.bf16.mxu0 0
  %4732 = vmatmul.mubr.bf16.gmra.mrb[0].mxu0 %v4689
  %v4733 = vpop.f32.mrb[0].mxu0
  %v4734 = vadd.f32 0.0, %v4733
  %v4735 = vpop.f32.mrb[0].mxu0
  %v4736 = vpop.f32.mrb[0].mxu0
  %v4737 = vadd.f32 0.0, %v4736
  %v4738 = vpop.f32.mrb[0].mxu0
  %4739 = vdwg.mxu0
  %v4740 = vadd.f32 %v2803, %v4726
  %v4741 = vadd.f32 %v2808, %v4729
  %v4742 = vadd.f32 %v2813, %v4734
  %v4743 = vadd.f32 %v2818, %v4737
  %v4744 = vld [vmem:[#allocation2 + $0x108] sm:$0xff]
  %v4745 = vld [vmem:[#allocation2 + $0x110] sm:$0xff]
  %v4746 = vld [vmem:[#allocation2 + $0x118] sm:$0xff]
  %v4747 = vld [vmem:[%s2822] sm:$0xf]
  %v4748 = vld [vmem:[%s2822 + $0x4] sm:$0xf]
  %v4749 = vld [vmem:[%s2822 + $0x8] sm:$0xf]
  %v4750 = vld [vmem:[%s2822 + $0xc] sm:$0xf]
  %v4755 = vunpack.c.l.b16 %v4747
  %v4756 = vunpack.c.l.b16 %v4748
  %v4757 = vunpack.c.l.b16 %v4749
  %v4758 = vunpack.c.l.b16 %v4750
  %v4759 = vpack.c.b16 %v4756, %v4755
  %v4760 = vpack.c.b16 %v4758, %v4757
  %v4762 = vsel %vm3006, %v4759, 0
  %v4765 = vsel %vm3006, %v4760, 0
  %4767 = vmatprep.subr.bf16.mxu0 0
  %4768 = vmatpush1.bf16.msra.mxu0 %v4744
  %4769 = vmatprep.subr.bf16.mxu0 0
  %4770 = vmatpush1.bf16.msra.mxu0 %v4745
  %4771 = vmatprep.subr.bf16.mxu0 0
  %4772 = vmatpush1.bf16.msra.mxu0 %v4746
  %4773 = vmatprep.subr.bf16.mxu0 0
  %4774 = vmatpush1.bf16.msra.mxu0 0
  %4775 = vmatprep.subr.bf16.mxu0 0
  %4776 = vmatpush1.bf16.msra.mxu0 0
  %4777 = vmatprep.subr.bf16.mxu0 0
  %4778 = vmatpush1.bf16.msra.mxu0 0
  %4779 = vmatprep.subr.bf16.mxu0 0
  %4780 = vmatpush1.bf16.msra.mxu0 0
  %4781 = vmatprep.subr.bf16.mxu0 0
  %4782 = vmatpush1.bf16.msra.mxu0 0
  %4783 = vmatprep.subr.bf16.mxu0 0
  %4784 = vmatpush1.bf16.msra.mxu0 0
  %4785 = vmatprep.subr.bf16.mxu0 0
  %4786 = vmatpush1.bf16.msra.mxu0 0
  %4787 = vmatprep.subr.bf16.mxu0 0
  %4788 = vmatpush1.bf16.msra.mxu0 0
  %4789 = vmatprep.subr.bf16.mxu0 0
  %4790 = vmatpush1.bf16.msra.mxu0 0
  %4791 = vmatprep.subr.bf16.mxu0 0
  %4792 = vmatpush1.bf16.msra.mxu0 0
  %4793 = vmatprep.subr.bf16.mxu0 0
  %4794 = vmatpush1.bf16.msra.mxu0 0
  %4795 = vmatprep.subr.bf16.mxu0 0
  %4796 = vmatpush1.bf16.msra.mxu0 0
  %4797 = vmatprep.subr.bf16.mxu0 0
  %4798 = vmatpush1.bf16.msra.mxu0 0
  %4799 = vmatprep.mubr.bf16.mxu0 0
  %4800 = vmatmul.mubr.bf16.gmra.mrb[0].mxu0 %v4762
  %v4801 = vpop.f32.mrb[0].mxu0
  %v4802 = vadd.f32 0.0, %v4801
  %v4803 = vpop.f32.mrb[0].mxu0
  %v4804 = vpop.f32.mrb[0].mxu0
  %v4805 = vadd.f32 0.0, %v4804
  %v4806 = vpop.f32.mrb[0].mxu0
  %4807 = vmatprep.mubr.bf16.mxu0 0
  %4808 = vmatmul.mubr.bf16.gmra.mrb[0].mxu0 %v4765
  %v4809 = vpop.f32.mrb[0].mxu0
  %v4810 = vadd.f32 0.0, %v4809
  %v4811 = vpop.f32.mrb[0].mxu0
  %v4812 = vpop.f32.mrb[0].mxu0
  %v4813 = vadd.f32 0.0, %v4812
  %v4814 = vpop.f32.mrb[0].mxu0
  %4815 = vdwg.mxu0
  %v4816 = vadd.f32 %v4740, %v4802
  %v4817 = vadd.f32 %v4741, %v4805
  %v4818 = vadd.f32 %v4742, %v4810
  %v4819 = vadd.f32 %v4743, %v4813
  %v4820 = vld [vmem:[#allocation2 + $0x148] sm:$0xff]
  %v4821 = vld [vmem:[#allocation2 + $0x150] sm:$0xff]
  %v4822 = vld [vmem:[#allocation2 + $0x158] sm:$0xff]
  %v4823 = vld [vmem:[%s2903] sm:$0xf]
  %v4824 = vld [vmem:[%s2903 + $0x4] sm:$0xf]
  %v4825 = vld [vmem:[%s2903 + $0x8] sm:$0xf]
  %v4826 = vld [vmem:[%s2903 + $0xc] sm:$0xf]
  %v4831 = vunpack.c.l.b16 %v4823
  %v4832 = vunpack.c.l.b16 %v4824
  %v4833 = vunpack.c.l.b16 %v4825
  %v4834 = vunpack.c.l.b16 %v4826
  %v4835 = vpack.c.b16 %v4832, %v4831
  %v4836 = vpack.c.b16 %v4834, %v4833
  %v4838 = vsel %vm3006, %v4835, 0
  %v4841 = vsel %vm3006, %v4836, 0
  %4843 = vmatprep.subr.bf16.mxu0 0
  %4844 = vmatpush1.bf16.msra.mxu0 %v4820
  %4845 = vmatprep.subr.bf16.mxu0 0
  %4846 = vmatpush1.bf16.msra.mxu0 %v4821
  %4847 = vmatprep.subr.bf16.mxu0 0
  %4848 = vmatpush1.bf16.msra.mxu0 %v4822
  %4849 = vmatprep.subr.bf16.mxu0 0
  %4850 = vmatpush1.bf16.msra.mxu0 0
  %4851 = vmatprep.subr.bf16.mxu0 0
  %4852 = vmatpush1.bf16.msra.mxu0 0
  %4853 = vmatprep.subr.bf16.mxu0 0
  %4854 = vmatpush1.bf16.msra.mxu0 0
  %4855 = vmatprep.subr.bf16.mxu0 0
  %4856 = vmatpush1.bf16.msra.mxu0 0
  %4857 = vmatprep.subr.bf16.mxu0 0
  %4858 = vmatpush1.bf16.msra.mxu0 0
  %4859 = vmatprep.subr.bf16.mxu0 0
  %4860 = vmatpush1.bf16.msra.mxu0 0
  %4861 = vmatprep.subr.bf16.mxu0 0
  %4862 = vmatpush1.bf16.msra.mxu0 0
  %4863 = vmatprep.subr.bf16.mxu0 0
  %4864 = vmatpush1.bf16.msra.mxu0 0
  %4865 = vmatprep.subr.bf16.mxu0 0
  %4866 = vmatpush1.bf16.msra.mxu0 0
  %4867 = vmatprep.subr.bf16.mxu0 0
  %4868 = vmatpush1.bf16.msra.mxu0 0
  %4869 = vmatprep.subr.bf16.mxu0 0
  %4870 = vmatpush1.bf16.msra.mxu0 0
  %4871 = vmatprep.subr.bf16.mxu0 0
  %4872 = vmatpush1.bf16.msra.mxu0 0
  %4873 = vmatprep.subr.bf16.mxu0 0
  %4874 = vmatpush1.bf16.msra.mxu0 0
  %4875 = vmatprep.mubr.bf16.mxu0 0
  %4876 = vmatmul.mubr.bf16.gmra.mrb[0].mxu0 %v4838
  %v4877 = vpop.f32.mrb[0].mxu0
  %v4878 = vadd.f32 0.0, %v4877
  %v4879 = vpop.f32.mrb[0].mxu0
  %v4880 = vpop.f32.mrb[0].mxu0
  %v4881 = vadd.f32 0.0, %v4880
  %v4882 = vpop.f32.mrb[0].mxu0
  %4883 = vmatprep.mubr.bf16.mxu0 0
  %4884 = vmatmul.mubr.bf16.gmra.mrb[0].mxu0 %v4841
  %v4885 = vpop.f32.mrb[0].mxu0
  %v4886 = vadd.f32 0.0, %v4885
  %v4887 = vpop.f32.mrb[0].mxu0
  %v4888 = vpop.f32.mrb[0].mxu0
  %v4889 = vadd.f32 0.0, %v4888
  %v4890 = vpop.f32.mrb[0].mxu0
  %4891 = vdwg.mxu0
  %v4892 = vadd.f32 %v4816, %v4878
  %v4893 = vadd.f32 %v4817, %v4881
  %v4894 = vadd.f32 %v4818, %v4886
  %v4895 = vadd.f32 %v4819, %v4889
  %v4896 = vtanh.pop %v4892
  %v4897 = vtanh.pop %v4893
  %v4898 = vtanh.pop %v4894
  %v4899 = vtanh.pop %v4895
  %v4900 = vpack.c.bf16 %v4897, %v4896
  %v4901 = vpack.c.bf16 %v4899, %v4898
  %4902 = vst [vmem:[#allocation3 + $0x90] sm:$0xff] %v4900
  %4903 = vst [vmem:[#allocation3 + $0x98] sm:$0xff] %v4901
  %v4904 = vld [vmem:[#allocation2 + $0xd8] sm:$0xff]
  %v4905 = vld [vmem:[#allocation2 + $0xe0] sm:$0xff]
  %v4906 = vld [vmem:[#allocation2 + $0xe8] sm:$0xff]
  %v4907 = vld [vmem:[%s3] sm:$0xf]
  %v4908 = vld [vmem:[%s3 + $0x4] sm:$0xf]
  %v4909 = vld [vmem:[%s3 + $0x8] sm:$0xf]
  %v4910 = vld [vmem:[%s3 + $0xc] sm:$0xf]
  %v4915 = vunpack.c.l.b16 %v4907
  %v4916 = vunpack.c.l.b16 %v4908
  %v4917 = vunpack.c.l.b16 %v4909
  %v4918 = vunpack.c.l.b16 %v4910
  %v4919 = vpack.c.b16 %v4916, %v4915
  %v4920 = vpack.c.b16 %v4918, %v4917
  %v4922 = vsel %vm3006, %v4919, 0
  %v4925 = vsel %vm3006, %v4920, 0
  %4927 = vmatprep.subr.bf16.mxu0 0
  %4928 = vmatpush1.bf16.msra.mxu0 %v4904
  %4929 = vmatprep.subr.bf16.mxu0 0
  %4930 = vmatpush1.bf16.msra.mxu0 %v4905
  %4931 = vmatprep.subr.bf16.mxu0 0
  %4932 = vmatpush1.bf16.msra.mxu0 %v4906
  %4933 = vmatprep.subr.bf16.mxu0 0
  %4934 = vmatpush1.bf16.msra.mxu0 0
  %4935 = vmatprep.subr.bf16.mxu0 0
  %4936 = vmatpush1.bf16.msra.mxu0 0
  %4937 = vmatprep.subr.bf16.mxu0 0
  %4938 = vmatpush1.bf16.msra.mxu0 0
  %4939 = vmatprep.subr.bf16.mxu0 0
  %4940 = vmatpush1.bf16.msra.mxu0 0
  %4941 = vmatprep.subr.bf16.mxu0 0
  %4942 = vmatpush1.bf16.msra.mxu0 0
  %4943 = vmatprep.subr.bf16.mxu0 0
  %4944 = vmatpush1.bf16.msra.mxu0 0
  %4945 = vmatprep.subr.bf16.mxu0 0
  %4946 = vmatpush1.bf16.msra.mxu0 0
  %4947 = vmatprep.subr.bf16.mxu0 0
  %4948 = vmatpush1.bf16.msra.mxu0 0
  %4949 = vmatprep.subr.bf16.mxu0 0
  %4950 = vmatpush1.bf16.msra.mxu0 0
  %4951 = vmatprep.subr.bf16.mxu0 0
  %4952 = vmatpush1.bf16.msra.mxu0 0
  %4953 = vmatprep.subr.bf16.mxu0 0
  %4954 = vmatpush1.bf16.msra.mxu0 0
  %4955 = vmatprep.subr.bf16.mxu0 0
  %4956 = vmatpush1.bf16.msra.mxu0 0
  %4957 = vmatprep.subr.bf16.mxu0 0
  %4958 = vmatpush1.bf16.msra.mxu0 0
  %4959 = vmatprep.mubr.bf16.mxu0 0
  %4960 = vmatmul.mubr.bf16.gmra.mrb[0].mxu0 %v4922
  %v4961 = vpop.f32.mrb[0].mxu0
  %v4962 = vadd.f32 0.0, %v4961
  %v4963 = vpop.f32.mrb[0].mxu0
  %v4964 = vpop.f32.mrb[0].mxu0
  %v4965 = vadd.f32 0.0, %v4964
  %v4966 = vpop.f32.mrb[0].mxu0
  %4967 = vmatprep.mubr.bf16.mxu0 0
  %4968 = vmatmul.mubr.bf16.gmra.mrb[0].mxu0 %v4925
  %v4969 = vpop.f32.mrb[0].mxu0
  %v4970 = vadd.f32 0.0, %v4969
  %v4971 = vpop.f32.mrb[0].mxu0
  %v4972 = vpop.f32.mrb[0].mxu0
  %v4973 = vadd.f32 0.0, %v4972
  %v4974 = vpop.f32.mrb[0].mxu0
  %4975 = vdwg.mxu0
  %v4976 = vadd.f32 %v2803, %v4962
  %v4977 = vadd.f32 %v2808, %v4965
  %v4978 = vadd.f32 %v2813, %v4970
  %v4979 = vadd.f32 %v2818, %v4973
  %v4980 = vld [vmem:[#allocation2 + $0x118] sm:$0xff]
  %v4981 = vld [vmem:[#allocation2 + $0x120] sm:$0xff]
  %v4982 = vld [vmem:[#allocation2 + $0x128] sm:$0xff]
  %v4983 = vld [vmem:[%s2822] sm:$0xf]
  %v4984 = vld [vmem:[%s2822 + $0x4] sm:$0xf]
  %v4985 = vld [vmem:[%s2822 + $0x8] sm:$0xf]
  %v4986 = vld [vmem:[%s2822 + $0xc] sm:$0xf]
  %v4991 = vunpack.c.l.b16 %v4983
  %v4992 = vunpack.c.l.b16 %v4984
  %v4993 = vunpack.c.l.b16 %v4985
  %v4994 = vunpack.c.l.b16 %v4986
  %v4995 = vpack.c.b16 %v4992, %v4991
  %v4996 = vpack.c.b16 %v4994, %v4993
  %v4998 = vsel %vm3006, %v4995, 0
  %v5001 = vsel %vm3006, %v4996, 0
  %5003 = vmatprep.subr.bf16.mxu0 0
  %5004 = vmatpush1.bf16.msra.mxu0 %v4980
  %5005 = vmatprep.subr.bf16.mxu0 0
  %5006 = vmatpush1.bf16.msra.mxu0 %v4981
  %5007 = vmatprep.subr.bf16.mxu0 0
  %5008 = vmatpush1.bf16.msra.mxu0 %v4982
  %5009 = vmatprep.subr.bf16.mxu0 0
  %5010 = vmatpush1.bf16.msra.mxu0 0
  %5011 = vmatprep.subr.bf16.mxu0 0
  %5012 = vmatpush1.bf16.msra.mxu0 0
  %5013 = vmatprep.subr.bf16.mxu0 0
  %5014 = vmatpush1.bf16.msra.mxu0 0
  %5015 = vmatprep.subr.bf16.mxu0 0
  %5016 = vmatpush1.bf16.msra.mxu0 0
  %5017 = vmatprep.subr.bf16.mxu0 0
  %5018 = vmatpush1.bf16.msra.mxu0 0
  %5019 = vmatprep.subr.bf16.mxu0 0
  %5020 = vmatpush1.bf16.msra.mxu0 0
  %5021 = vmatprep.subr.bf16.mxu0 0
  %5022 = vmatpush1.bf16.msra.mxu0 0
  %5023 = vmatprep.subr.bf16.mxu0 0
  %5024 = vmatpush1.bf16.msra.mxu0 0
  %5025 = vmatprep.subr.bf16.mxu0 0
  %5026 = vmatpush1.bf16.msra.mxu0 0
  %5027 = vmatprep.subr.bf16.mxu0 0
  %5028 = vmatpush1.bf16.msra.mxu0 0
  %5029 = vmatprep.subr.bf16.mxu0 0
  %5030 = vmatpush1.bf16.msra.mxu0 0
  %5031 = vmatprep.subr.bf16.mxu0 0
  %5032 = vmatpush1.bf16.msra.mxu0 0
  %5033 = vmatprep.subr.bf16.mxu0 0
  %5034 = vmatpush1.bf16.msra.mxu0 0
  %5035 = vmatprep.mubr.bf16.mxu0 0
  %5036 = vmatmul.mubr.bf16.gmra.mrb[0].mxu0 %v4998
  %v5037 = vpop.f32.mrb[0].mxu0
  %v5038 = vadd.f32 0.0, %v5037
  %v5039 = vpop.f32.mrb[0].mxu0
  %v5040 = vpop.f32.mrb[0].mxu0
  %v5041 = vadd.f32 0.0, %v5040
  %v5042 = vpop.f32.mrb[0].mxu0
  %5043 = vmatprep.mubr.bf16.mxu0 0
  %5044 = vmatmul.mubr.bf16.gmra.mrb[0].mxu0 %v5001
  %v5045 = vpop.f32.mrb[0].mxu0
  %v5046 = vadd.f32 0.0, %v5045
  %v5047 = vpop.f32.mrb[0].mxu0
  %v5048 = vpop.f32.mrb[0].mxu0
  %v5049 = vadd.f32 0.0, %v5048
  %v5050 = vpop.f32.mrb[0].mxu0
  %5051 = vdwg.mxu0
  %v5052 = vadd.f32 %v4976, %v5038
  %v5053 = vadd.f32 %v4977, %v5041
  %v5054 = vadd.f32 %v4978, %v5046
  %v5055 = vadd.f32 %v4979, %v5049
  %v5056 = vld [vmem:[#allocation2 + $0x158] sm:$0xff]
  %v5057 = vld [vmem:[#allocation2 + $0x160] sm:$0xff]
  %v5058 = vld [vmem:[#allocation2 + $0x168] sm:$0xff]
  %v5059 = vld [vmem:[%s2903] sm:$0xf]
  %v5060 = vld [vmem:[%s2903 + $0x4] sm:$0xf]
  %v5061 = vld [vmem:[%s2903 + $0x8] sm:$0xf]
  %v5062 = vld [vmem:[%s2903 + $0xc] sm:$0xf]
  %v5067 = vunpack.c.l.b16 %v5059
  %v5068 = vunpack.c.l.b16 %v5060
  %v5069 = vunpack.c.l.b16 %v5061
  %v5070 = vunpack.c.l.b16 %v5062
  %v5071 = vpack.c.b16 %v5068, %v5067
  %v5072 = vpack.c.b16 %v5070, %v5069
  %v5074 = vsel %vm3006, %v5071, 0
  %v5077 = vsel %vm3006, %v5072, 0
  %5079 = vmatprep.subr.bf16.mxu0 0
  %5080 = vmatpush1.bf16.msra.mxu0 %v5056
  %5081 = vmatprep.subr.bf16.mxu0 0
  %5082 = vmatpush1.bf16.msra.mxu0 %v5057
  %5083 = vmatprep.subr.bf16.mxu0 0
  %5084 = vmatpush1.bf16.msra.mxu0 %v5058
  %5085 = vmatprep.subr.bf16.mxu0 0
  %5086 = vmatpush1.bf16.msra.mxu0 0
  %5087 = vmatprep.subr.bf16.mxu0 0
  %5088 = vmatpush1.bf16.msra.mxu0 0
  %5089 = vmatprep.subr.bf16.mxu0 0
  %5090 = vmatpush1.bf16.msra.mxu0 0
  %5091 = vmatprep.subr.bf16.mxu0 0
  %5092 = vmatpush1.bf16.msra.mxu0 0
  %5093 = vmatprep.subr.bf16.mxu0 0
  %5094 = vmatpush1.bf16.msra.mxu0 0
  %5095 = vmatprep.subr.bf16.mxu0 0
  %5096 = vmatpush1.bf16.msra.mxu0 0
  %5097 = vmatprep.subr.bf16.mxu0 0
  %5098 = vmatpush1.bf16.msra.mxu0 0
  %5099 = vmatprep.subr.bf16.mxu0 0
  %5100 = vmatpush1.bf16.msra.mxu0 0
  %5101 = vmatprep.subr.bf16.mxu0 0
  %5102 = vmatpush1.bf16.msra.mxu0 0
  %5103 = vmatprep.subr.bf16.mxu0 0
  %5104 = vmatpush1.bf16.msra.mxu0 0
  %5105 = vmatprep.subr.bf16.mxu0 0
  %5106 = vmatpush1.bf16.msra.mxu0 0
  %5107 = vmatprep.subr.bf16.mxu0 0
  %5108 = vmatpush1.bf16.msra.mxu0 0
  %5109 = vmatprep.subr.bf16.mxu0 0
  %5110 = vmatpush1.bf16.msra.mxu0 0
  %5111 = vmatprep.mubr.bf16.mxu0 0
  %5112 = vmatmul.mubr.bf16.gmra.mrb[0].mxu0 %v5074
  %v5113 = vpop.f32.mrb[0].mxu0
  %v5114 = vadd.f32 0.0, %v5113
  %v5115 = vpop.f32.mrb[0].mxu0
  %v5116 = vpop.f32.mrb[0].mxu0
  %v5117 = vadd.f32 0.0, %v5116
  %v5118 = vpop.f32.mrb[0].mxu0
  %5119 = vmatprep.mubr.bf16.mxu0 0
  %5120 = vmatmul.mubr.bf16.gmra.mrb[0].mxu0 %v5077
  %v5121 = vpop.f32.mrb[0].mxu0
  %v5122 = vadd.f32 0.0, %v5121
  %v5123 = vpop.f32.mrb[0].mxu0
  %v5124 = vpop.f32.mrb[0].mxu0
  %v5125 = vadd.f32 0.0, %v5124
  %v5126 = vpop.f32.mrb[0].mxu0
  %5127 = vdwg.mxu0
  %v5128 = vadd.f32 %v5052, %v5114
  %v5129 = vadd.f32 %v5053, %v5117
  %v5130 = vadd.f32 %v5054, %v5122
  %v5131 = vadd.f32 %v5055, %v5125
  %v5132 = vtanh.pop %v5128
  %v5133 = vtanh.pop %v5129
  %v5134 = vtanh.pop %v5130
  %v5135 = vtanh.pop %v5131
  %v5136 = vpack.c.bf16 %v5133, %v5132
  %v5137 = vpack.c.bf16 %v5135, %v5134
  %5138 = vst [vmem:[#allocation3 + $0xa0] sm:$0xff] %v5136
  %5139 = vst [vmem:[#allocation3 + $0xa8] sm:$0xff] %v5137
  %v5140 = vld [vmem:[#allocation2 + $0xe8] sm:$0xff]
  %v5141 = vld [vmem:[#allocation2 + $0xf0] sm:$0xff]
  %v5142 = vld [vmem:[#allocation2 + $0xf8] sm:$0xff]
  %v5143 = vld [vmem:[%s3] sm:$0xf]
  %v5144 = vld [vmem:[%s3 + $0x4] sm:$0xf]
  %v5145 = vld [vmem:[%s3 + $0x8] sm:$0xf]
  %v5146 = vld [vmem:[%s3 + $0xc] sm:$0xf]
  %v5151 = vunpack.c.l.b16 %v5143
  %v5152 = vunpack.c.l.b16 %v5144
  %v5153 = vunpack.c.l.b16 %v5145
  %v5154 = vunpack.c.l.b16 %v5146
  %v5155 = vpack.c.b16 %v5152, %v5151
  %v5156 = vpack.c.b16 %v5154, %v5153
  %v5158 = vsel %vm3006, %v5155, 0
  %v5161 = vsel %vm3006, %v5156, 0
  %5163 = vmatprep.subr.bf16.mxu0 0
  %5164 = vmatpush1.bf16.msra.mxu0 %v5140
  %5165 = vmatprep.subr.bf16.mxu0 0
  %5166 = vmatpush1.bf16.msra.mxu0 %v5141
  %5167 = vmatprep.subr.bf16.mxu0 0
  %5168 = vmatpush1.bf16.msra.mxu0 %v5142
  %5169 = vmatprep.subr.bf16.mxu0 0
  %5170 = vmatpush1.bf16.msra.mxu0 0
  %5171 = vmatprep.subr.bf16.mxu0 0
  %5172 = vmatpush1.bf16.msra.mxu0 0
  %5173 = vmatprep.subr.bf16.mxu0 0
  %5174 = vmatpush1.bf16.msra.mxu0 0
  %5175 = vmatprep.subr.bf16.mxu0 0
  %5176 = vmatpush1.bf16.msra.mxu0 0
  %5177 = vmatprep.subr.bf16.mxu0 0
  %5178 = vmatpush1.bf16.msra.mxu0 0
  %5179 = vmatprep.subr.bf16.mxu0 0
  %5180 = vmatpush1.bf16.msra.mxu0 0
  %5181 = vmatprep.subr.bf16.mxu0 0
  %5182 = vmatpush1.bf16.msra.mxu0 0
  %5183 = vmatprep.subr.bf16.mxu0 0
  %5184 = vmatpush1.bf16.msra.mxu0 0
  %5185 = vmatprep.subr.bf16.mxu0 0
  %5186 = vmatpush1.bf16.msra.mxu0 0
  %5187 = vmatprep.subr.bf16.mxu0 0
  %5188 = vmatpush1.bf16.msra.mxu0 0
  %5189 = vmatprep.subr.bf16.mxu0 0
  %5190 = vmatpush1.bf16.msra.mxu0 0
  %5191 = vmatprep.subr.bf16.mxu0 0
  %5192 = vmatpush1.bf16.msra.mxu0 0
  %5193 = vmatprep.subr.bf16.mxu0 0
  %5194 = vmatpush1.bf16.msra.mxu0 0
  %5195 = vmatprep.mubr.bf16.mxu0 0
  %5196 = vmatmul.mubr.bf16.gmra.mrb[0].mxu0 %v5158
  %v5197 = vpop.f32.mrb[0].mxu0
  %v5198 = vadd.f32 0.0, %v5197
  %v5199 = vpop.f32.mrb[0].mxu0
  %v5200 = vpop.f32.mrb[0].mxu0
  %v5201 = vadd.f32 0.0, %v5200
  %v5202 = vpop.f32.mrb[0].mxu0
  %5203 = vmatprep.mubr.bf16.mxu0 0
  %5204 = vmatmul.mubr.bf16.gmra.mrb[0].mxu0 %v5161
  %v5205 = vpop.f32.mrb[0].mxu0
  %v5206 = vadd.f32 0.0, %v5205
  %v5207 = vpop.f32.mrb[0].mxu0
  %v5208 = vpop.f32.mrb[0].mxu0
  %v5209 = vadd.f32 0.0, %v5208
  %v5210 = vpop.f32.mrb[0].mxu0
  %5211 = vdwg.mxu0
  %v5212 = vadd.f32 %v2803, %v5198
  %v5213 = vadd.f32 %v2808, %v5201
  %v5214 = vadd.f32 %v2813, %v5206
  %v5215 = vadd.f32 %v2818, %v5209
  %v5216 = vld [vmem:[#allocation2 + $0x128] sm:$0xff]
  %v5217 = vld [vmem:[#allocation2 + $0x130] sm:$0xff]
  %v5218 = vld [vmem:[#allocation2 + $0x138] sm:$0xff]
  %v5219 = vld [vmem:[%s2822] sm:$0xf]
  %v5220 = vld [vmem:[%s2822 + $0x4] sm:$0xf]
  %v5221 = vld [vmem:[%s2822 + $0x8] sm:$0xf]
  %v5222 = vld [vmem:[%s2822 + $0xc] sm:$0xf]
  %v5227 = vunpack.c.l.b16 %v5219
  %v5228 = vunpack.c.l.b16 %v5220
  %v5229 = vunpack.c.l.b16 %v5221
  %v5230 = vunpack.c.l.b16 %v5222
  %v5231 = vpack.c.b16 %v5228, %v5227
  %v5232 = vpack.c.b16 %v5230, %v5229
  %v5234 = vsel %vm3006, %v5231, 0
  %v5237 = vsel %vm3006, %v5232, 0
  %5239 = vmatprep.subr.bf16.mxu0 0
  %5240 = vmatpush1.bf16.msra.mxu0 %v5216
  %5241 = vmatprep.subr.bf16.mxu0 0
  %5242 = vmatpush1.bf16.msra.mxu0 %v5217
  %5243 = vmatprep.subr.bf16.mxu0 0
  %5244 = vmatpush1.bf16.msra.mxu0 %v5218
  %5245 = vmatprep.subr.bf16.mxu0 0
  %5246 = vmatpush1.bf16.msra.mxu0 0
  %5247 = vmatprep.subr.bf16.mxu0 0
  %5248 = vmatpush1.bf16.msra.mxu0 0
  %5249 = vmatprep.subr.bf16.mxu0 0
  %5250 = vmatpush1.bf16.msra.mxu0 0
  %5251 = vmatprep.subr.bf16.mxu0 0
  %5252 = vmatpush1.bf16.msra.mxu0 0
  %5253 = vmatprep.subr.bf16.mxu0 0
  %5254 = vmatpush1.bf16.msra.mxu0 0
  %5255 = vmatprep.subr.bf16.mxu0 0
  %5256 = vmatpush1.bf16.msra.mxu0 0
  %5257 = vmatprep.subr.bf16.mxu0 0
  %5258 = vmatpush1.bf16.msra.mxu0 0
  %5259 = vmatprep.subr.bf16.mxu0 0
  %5260 = vmatpush1.bf16.msra.mxu0 0
  %5261 = vmatprep.subr.bf16.mxu0 0
  %5262 = vmatpush1.bf16.msra.mxu0 0
  %5263 = vmatprep.subr.bf16.mxu0 0
  %5264 = vmatpush1.bf16.msra.mxu0 0
  %5265 = vmatprep.subr.bf16.mxu0 0
  %5266 = vmatpush1.bf16.msra.mxu0 0
  %5267 = vmatprep.subr.bf16.mxu0 0
  %5268 = vmatpush1.bf16.msra.mxu0 0
  %5269 = vmatprep.subr.bf16.mxu0 0
  %5270 = vmatpush1.bf16.msra.mxu0 0
  %5271 = vmatprep.mubr.bf16.mxu0 0
  %5272 = vmatmul.mubr.bf16.gmra.mrb[0].mxu0 %v5234
  %v5273 = vpop.f32.mrb[0].mxu0
  %v5274 = vadd.f32 0.0, %v5273
  %v5275 = vpop.f32.mrb[0].mxu0
  %v5276 = vpop.f32.mrb[0].mxu0
  %v5277 = vadd.f32 0.0, %v5276
  %v5278 = vpop.f32.mrb[0].mxu0
  %5279 = vmatprep.mubr.bf16.mxu0 0
  %5280 = vmatmul.mubr.bf16.gmra.mrb[0].mxu0 %v5237
  %v5281 = vpop.f32.mrb[0].mxu0
  %v5282 = vadd.f32 0.0, %v5281
  %v5283 = vpop.f32.mrb[0].mxu0
  %v5284 = vpop.f32.mrb[0].mxu0
  %v5285 = vadd.f32 0.0, %v5284
  %v5286 = vpop.f32.mrb[0].mxu0
  %5287 = vdwg.mxu0
  %v5288 = vadd.f32 %v5212, %v5274
  %v5289 = vadd.f32 %v5213, %v5277
  %v5290 = vadd.f32 %v5214, %v5282
  %v5291 = vadd.f32 %v5215, %v5285
  %v5292 = vld [vmem:[#allocation2 + $0x168] sm:$0xff]
  %v5293 = vld [vmem:[#allocation2 + $0x170] sm:$0xff]
  %v5294 = vld [vmem:[#allocation2 + $0x178] sm:$0xff]
  %v5295 = vld [vmem:[%s2903] sm:$0xf]
  %v5296 = vld [vmem:[%s2903 + $0x4] sm:$0xf]
  %v5297 = vld [vmem:[%s2903 + $0x8] sm:$0xf]
  %v5298 = vld [vmem:[%s2903 + $0xc] sm:$0xf]
  %v5303 = vunpack.c.l.b16 %v5295
  %v5304 = vunpack.c.l.b16 %v5296
  %v5305 = vunpack.c.l.b16 %v5297
  %v5306 = vunpack.c.l.b16 %v5298
  %v5307 = vpack.c.b16 %v5304, %v5303
  %v5308 = vpack.c.b16 %v5306, %v5305
  %v5310 = vsel %vm3006, %v5307, 0
  %v5313 = vsel %vm3006, %v5308, 0
  %5315 = vmatprep.subr.bf16.mxu0 0
  %5316 = vmatpush1.bf16.msra.mxu0 %v5292
  %5317 = vmatprep.subr.bf16.mxu0 0
  %5318 = vmatpush1.bf16.msra.mxu0 %v5293
  %5319 = vmatprep.subr.bf16.mxu0 0
  %5320 = vmatpush1.bf16.msra.mxu0 %v5294
  %5321 = vmatprep.subr.bf16.mxu0 0
  %5322 = vmatpush1.bf16.msra.mxu0 0
  %5323 = vmatprep.subr.bf16.mxu0 0
  %5324 = vmatpush1.bf16.msra.mxu0 0
  %5325 = vmatprep.subr.bf16.mxu0 0
  %5326 = vmatpush1.bf16.msra.mxu0 0
  %5327 = vmatprep.subr.bf16.mxu0 0
  %5328 = vmatpush1.bf16.msra.mxu0 0
  %5329 = vmatprep.subr.bf16.mxu0 0
  %5330 = vmatpush1.bf16.msra.mxu0 0
  %5331 = vmatprep.subr.bf16.mxu0 0
  %5332 = vmatpush1.bf16.msra.mxu0 0
  %5333 = vmatprep.subr.bf16.mxu0 0
  %5334 = vmatpush1.bf16.msra.mxu0 0
  %5335 = vmatprep.subr.bf16.mxu0 0
  %5336 = vmatpush1.bf16.msra.mxu0 0
  %5337 = vmatprep.subr.bf16.mxu0 0
  %5338 = vmatpush1.bf16.msra.mxu0 0
  %5339 = vmatprep.subr.bf16.mxu0 0
  %5340 = vmatpush1.bf16.msra.mxu0 0
  %5341 = vmatprep.subr.bf16.mxu0 0
  %5342 = vmatpush1.bf16.msra.mxu0 0
  %5343 = vmatprep.subr.bf16.mxu0 0
  %5344 = vmatpush1.bf16.msra.mxu0 0
  %5345 = vmatprep.subr.bf16.mxu0 0
  %5346 = vmatpush1.bf16.msra.mxu0 0
  %5347 = vmatprep.mubr.bf16.mxu0 0
  %5348 = vmatmul.mubr.bf16.gmra.mrb[0].mxu0 %v5310
  %v5349 = vpop.f32.mrb[0].mxu0
  %v5350 = vadd.f32 0.0, %v5349
  %v5351 = vpop.f32.mrb[0].mxu0
  %v5352 = vpop.f32.mrb[0].mxu0
  %v5353 = vadd.f32 0.0, %v5352
  %v5354 = vpop.f32.mrb[0].mxu0
  %5355 = vmatprep.mubr.bf16.mxu0 0
  %5356 = vmatmul.mubr.bf16.gmra.mrb[0].mxu0 %v5313
  %v5357 = vpop.f32.mrb[0].mxu0
  %v5358 = vadd.f32 0.0, %v5357
  %v5359 = vpop.f32.mrb[0].mxu0
  %v5360 = vpop.f32.mrb[0].mxu0
  %v5361 = vadd.f32 0.0, %v5360
  %v5362 = vpop.f32.mrb[0].mxu0
  %5363 = vdwg.mxu0
  %v5364 = vadd.f32 %v5288, %v5350
  %v5365 = vadd.f32 %v5289, %v5353
  %v5366 = vadd.f32 %v5290, %v5358
  %v5367 = vadd.f32 %v5291, %v5361
  %v5368 = vtanh.pop %v5364
  %v5369 = vtanh.pop %v5365
  %v5370 = vtanh.pop %v5366
  %v5371 = vtanh.pop %v5367
  %v5372 = vpack.c.bf16 %v5369, %v5368
  %v5373 = vpack.c.bf16 %v5371, %v5370
  %5374 = vst [vmem:[#allocation3 + $0xb0] sm:$0xff] %v5372
  %5375 = vst [vmem:[#allocation3 + $0xb8] sm:$0xff] %v5373
  %v5376 = vld [vmem:[#allocation2 + $0x140] sm:$0xff]
  %v5377 = vld [vmem:[#allocation2 + $0x148] sm:$0xff]
  %v5378 = vld [vmem:[%s3] sm:$0xf]
  %v5379 = vld [vmem:[%s3 + $0x4] sm:$0xf]
  %v5380 = vld [vmem:[%s3 + $0x8] sm:$0xf]
  %v5381 = vld [vmem:[%s3 + $0xc] sm:$0xf]
  %v5386 = vunpack.c.l.b16 %v5378
  %v5387 = vunpack.c.l.b16 %v5379
  %v5388 = vunpack.c.l.b16 %v5380
  %v5389 = vunpack.c.l.b16 %v5381
  %v5390 = vpack.c.b16 %v5387, %v5386
  %v5391 = vpack.c.b16 %v5389, %v5388
  %5392 = vrot.lane.b32.xlu0 %v5390, 112
  %v5393 = vpop.permute.xlu0 %5392
  %5394 = vrot.lane.b32.xlu0 %v5391, 112
  %v5395 = vpop.permute.xlu0 %5394
  %v5397 = vsel %vm2841, %v5393, 0
  %v5400 = vsel %vm2841, %v5395, 0
  %5402 = vmatprep.subr.bf16.mxu0 0
  %5403 = vmatpush1.bf16.msra.mxu0 %v5376
  %5404 = vmatprep.subr.bf16.mxu0 0
  %5405 = vmatpush1.bf16.msra.mxu0 %v5377
  %5406 = vmatprep.subr.bf16.mxu0 0
  %5407 = vmatpush1.bf16.msra.mxu0 0
  %5408 = vmatprep.subr.bf16.mxu0 0
  %5409 = vmatpush1.bf16.msra.mxu0 0
  %5410 = vmatprep.subr.bf16.mxu0 0
  %5411 = vmatpush1.bf16.msra.mxu0 0
  %5412 = vmatprep.subr.bf16.mxu0 0
  %5413 = vmatpush1.bf16.msra.mxu0 0
  %5414 = vmatprep.subr.bf16.mxu0 0
  %5415 = vmatpush1.bf16.msra.mxu0 0
  %5416 = vmatprep.subr.bf16.mxu0 0
  %5417 = vmatpush1.bf16.msra.mxu0 0
  %5418 = vmatprep.subr.bf16.mxu0 0
  %5419 = vmatpush1.bf16.msra.mxu0 0
  %5420 = vmatprep.subr.bf16.mxu0 0
  %5421 = vmatpush1.bf16.msra.mxu0 0
  %5422 = vmatprep.subr.bf16.mxu0 0
  %5423 = vmatpush1.bf16.msra.mxu0 0
  %5424 = vmatprep.subr.bf16.mxu0 0
  %5425 = vmatpush1.bf16.msra.mxu0 0
  %5426 = vmatprep.subr.bf16.mxu0 0
  %5427 = vmatpush1.bf16.msra.mxu0 0
  %5428 = vmatprep.subr.bf16.mxu0 0
  %5429 = vmatpush1.bf16.msra.mxu0 0
  %5430 = vmatprep.subr.bf16.mxu0 0
  %5431 = vmatpush1.bf16.msra.mxu0 0
  %5432 = vmatprep.subr.bf16.mxu0 0
  %5433 = vmatpush1.bf16.msra.mxu0 0
  %5434 = vmatprep.mubr.bf16.mxu0 0
  %5435 = vmatmul.mubr.bf16.gmra.mrb[0].mxu0 %v5397
  %v5436 = vpop.f32.mrb[0].mxu0
  %v5437 = vadd.f32 0.0, %v5436
  %v5438 = vpop.f32.mrb[0].mxu0
  %v5439 = vpop.f32.mrb[0].mxu0
  %v5440 = vadd.f32 0.0, %v5439
  %v5441 = vpop.f32.mrb[0].mxu0
  %5442 = vmatprep.mubr.bf16.mxu0 0
  %5443 = vmatmul.mubr.bf16.gmra.mrb[0].mxu0 %v5400
  %v5444 = vpop.f32.mrb[0].mxu0
  %v5445 = vadd.f32 0.0, %v5444
  %v5446 = vpop.f32.mrb[0].mxu0
  %v5447 = vpop.f32.mrb[0].mxu0
  %v5448 = vadd.f32 0.0, %v5447
  %v5449 = vpop.f32.mrb[0].mxu0
  %5450 = vdwg.mxu0
  %v5451 = vadd.f32 %v2803, %v5437
  %v5452 = vadd.f32 %v2808, %v5440
  %v5453 = vadd.f32 %v2813, %v5445
  %v5454 = vadd.f32 %v2818, %v5448
  %v5455 = vld [vmem:[#allocation2 + $0x180] sm:$0xff]
  %v5456 = vld [vmem:[#allocation2 + $0x188] sm:$0xff]
  %v5457 = vld [vmem:[%s2822] sm:$0xf]
  %v5458 = vld [vmem:[%s2822 + $0x4] sm:$0xf]
  %v5459 = vld [vmem:[%s2822 + $0x8] sm:$0xf]
  %v5460 = vld [vmem:[%s2822 + $0xc] sm:$0xf]
  %v5465 = vunpack.c.l.b16 %v5457
  %v5466 = vunpack.c.l.b16 %v5458
  %v5467 = vunpack.c.l.b16 %v5459
  %v5468 = vunpack.c.l.b16 %v5460
  %v5469 = vpack.c.b16 %v5466, %v5465
  %v5470 = vpack.c.b16 %v5468, %v5467
  %5471 = vrot.lane.b32.xlu0 %v5469, 112
  %v5472 = vpop.permute.xlu0 %5471
  %5473 = vrot.lane.b32.xlu0 %v5470, 112
  %v5474 = vpop.permute.xlu0 %5473
  %v5476 = vsel %vm2841, %v5472, 0
  %v5479 = vsel %vm2841, %v5474, 0
  %5481 = vmatprep.subr.bf16.mxu0 0
  %5482 = vmatpush1.bf16.msra.mxu0 %v5455
  %5483 = vmatprep.subr.bf16.mxu0 0
  %5484 = vmatpush1.bf16.msra.mxu0 %v5456
  %5485 = vmatprep.subr.bf16.mxu0 0
  %5486 = vmatpush1.bf16.msra.mxu0 0
  %5487 = vmatprep.subr.bf16.mxu0 0
  %5488 = vmatpush1.bf16.msra.mxu0 0
  %5489 = vmatprep.subr.bf16.mxu0 0
  %5490 = vmatpush1.bf16.msra.mxu0 0
  %5491 = vmatprep.subr.bf16.mxu0 0
  %5492 = vmatpush1.bf16.msra.mxu0 0
  %5493 = vmatprep.subr.bf16.mxu0 0
  %5494 = vmatpush1.bf16.msra.mxu0 0
  %5495 = vmatprep.subr.bf16.mxu0 0
  %5496 = vmatpush1.bf16.msra.mxu0 0
  %5497 = vmatprep.subr.bf16.mxu0 0
  %5498 = vmatpush1.bf16.msra.mxu0 0
  %5499 = vmatprep.subr.bf16.mxu0 0
  %5500 = vmatpush1.bf16.msra.mxu0 0
  %5501 = vmatprep.subr.bf16.mxu0 0
  %5502 = vmatpush1.bf16.msra.mxu0 0
  %5503 = vmatprep.subr.bf16.mxu0 0
  %5504 = vmatpush1.bf16.msra.mxu0 0
  %5505 = vmatprep.subr.bf16.mxu0 0
  %5506 = vmatpush1.bf16.msra.mxu0 0
  %5507 = vmatprep.subr.bf16.mxu0 0
  %5508 = vmatpush1.bf16.msra.mxu0 0
  %5509 = vmatprep.subr.bf16.mxu0 0
  %5510 = vmatpush1.bf16.msra.mxu0 0
  %5511 = vmatprep.subr.bf16.mxu0 0
  %5512 = vmatpush1.bf16.msra.mxu0 0
  %5513 = vmatprep.mubr.bf16.mxu0 0
  %5514 = vmatmul.mubr.bf16.gmra.mrb[0].mxu0 %v5476
  %v5515 = vpop.f32.mrb[0].mxu0
  %v5516 = vadd.f32 0.0, %v5515
  %v5517 = vpop.f32.mrb[0].mxu0
  %v5518 = vpop.f32.mrb[0].mxu0
  %v5519 = vadd.f32 0.0, %v5518
  %v5520 = vpop.f32.mrb[0].mxu0
  %5521 = vmatprep.mubr.bf16.mxu0 0
  %5522 = vmatmul.mubr.bf16.gmra.mrb[0].mxu0 %v5479
  %v5523 = vpop.f32.mrb[0].mxu0
  %v5524 = vadd.f32 0.0, %v5523
  %v5525 = vpop.f32.mrb[0].mxu0
  %v5526 = vpop.f32.mrb[0].mxu0
  %v5527 = vadd.f32 0.0, %v5526
  %v5528 = vpop.f32.mrb[0].mxu0
  %5529 = vdwg.mxu0
  %v5530 = vadd.f32 %v5451, %v5516
  %v5531 = vadd.f32 %v5452, %v5519
  %v5532 = vadd.f32 %v5453, %v5524
  %v5533 = vadd.f32 %v5454, %v5527
  %v5534 = vld [vmem:[#allocation2 + $0x1c0] sm:$0xff]
  %v5535 = vld [vmem:[#allocation2 + $0x1c8] sm:$0xff]
  %v5536 = vld [vmem:[%s2903] sm:$0xf]
  %v5537 = vld [vmem:[%s2903 + $0x4] sm:$0xf]
  %v5538 = vld [vmem:[%s2903 + $0x8] sm:$0xf]
  %v5539 = vld [vmem:[%s2903 + $0xc] sm:$0xf]
  %v5544 = vunpack.c.l.b16 %v5536
  %v5545 = vunpack.c.l.b16 %v5537
  %v5546 = vunpack.c.l.b16 %v5538
  %v5547 = vunpack.c.l.b16 %v5539
  %v5548 = vpack.c.b16 %v5545, %v5544
  %v5549 = vpack.c.b16 %v5547, %v5546
  %5550 = vrot.lane.b32.xlu0 %v5548, 112
  %v5551 = vpop.permute.xlu0 %5550
  %5552 = vrot.lane.b32.xlu0 %v5549, 112
  %v5553 = vpop.permute.xlu0 %5552
  %v5555 = vsel %vm2841, %v5551, 0
  %v5558 = vsel %vm2841, %v5553, 0
  %5560 = vmatprep.subr.bf16.mxu0 0
  %5561 = vmatpush1.bf16.msra.mxu0 %v5534
  %5562 = vmatprep.subr.bf16.mxu0 0
  %5563 = vmatpush1.bf16.msra.mxu0 %v5535
  %5564 = vmatprep.subr.bf16.mxu0 0
  %5565 = vmatpush1.bf16.msra.mxu0 0
  %5566 = vmatprep.subr.bf16.mxu0 0
  %5567 = vmatpush1.bf16.msra.mxu0 0
  %5568 = vmatprep.subr.bf16.mxu0 0
  %5569 = vmatpush1.bf16.msra.mxu0 0
  %5570 = vmatprep.subr.bf16.mxu0 0
  %5571 = vmatpush1.bf16.msra.mxu0 0
  %5572 = vmatprep.subr.bf16.mxu0 0
  %5573 = vmatpush1.bf16.msra.mxu0 0
  %5574 = vmatprep.subr.bf16.mxu0 0
  %5575 = vmatpush1.bf16.msra.mxu0 0
  %5576 = vmatprep.subr.bf16.mxu0 0
  %5577 = vmatpush1.bf16.msra.mxu0 0
  %5578 = vmatprep.subr.bf16.mxu0 0
  %5579 = vmatpush1.bf16.msra.mxu0 0
  %5580 = vmatprep.subr.bf16.mxu0 0
  %5581 = vmatpush1.bf16.msra.mxu0 0
  %5582 = vmatprep.subr.bf16.mxu0 0
  %5583 = vmatpush1.bf16.msra.mxu0 0
  %5584 = vmatprep.subr.bf16.mxu0 0
  %5585 = vmatpush1.bf16.msra.mxu0 0
  %5586 = vmatprep.subr.bf16.mxu0 0
  %5587 = vmatpush1.bf16.msra.mxu0 0
  %5588 = vmatprep.subr.bf16.mxu0 0
  %5589 = vmatpush1.bf16.msra.mxu0 0
  %5590 = vmatprep.subr.bf16.mxu0 0
  %5591 = vmatpush1.bf16.msra.mxu0 0
  %5592 = vmatprep.mubr.bf16.mxu0 0
  %5593 = vmatmul.mubr.bf16.gmra.mrb[0].mxu0 %v5555
  %v5594 = vpop.f32.mrb[0].mxu0
  %v5595 = vadd.f32 0.0, %v5594
  %v5596 = vpop.f32.mrb[0].mxu0
  %v5597 = vpop.f32.mrb[0].mxu0
  %v5598 = vadd.f32 0.0, %v5597
  %v5599 = vpop.f32.mrb[0].mxu0
  %5600 = vmatprep.mubr.bf16.mxu0 0
  %5601 = vmatmul.mubr.bf16.gmra.mrb[0].mxu0 %v5558
  %v5602 = vpop.f32.mrb[0].mxu0
  %v5603 = vadd.f32 0.0, %v5602
  %v5604 = vpop.f32.mrb[0].mxu0
  %v5605 = vpop.f32.mrb[0].mxu0
  %v5606 = vadd.f32 0.0, %v5605
  %v5607 = vpop.f32.mrb[0].mxu0
  %5608 = vdwg.mxu0
  %v5609 = vadd.f32 %v5530, %v5595
  %v5610 = vadd.f32 %v5531, %v5598
  %v5611 = vadd.f32 %v5532, %v5603
  %v5612 = vadd.f32 %v5533, %v5606
  %v5613 = vtanh.pop %v5609
  %v5614 = vtanh.pop %v5610
  %v5615 = vtanh.pop %v5611
  %v5616 = vtanh.pop %v5612
  %v5617 = vpack.c.bf16 %v5614, %v5613
  %v5618 = vpack.c.bf16 %v5616, %v5615
  %5619 = vst [vmem:[#allocation3 + $0xc0] sm:$0xff] %v5617
  %5620 = vst [vmem:[#allocation3 + $0xc8] sm:$0xff] %v5618
  %v5621 = vld [vmem:[#allocation2 + $0x148] sm:$0xff]
  %v5622 = vld [vmem:[#allocation2 + $0x150] sm:$0xff]
  %v5623 = vld [vmem:[#allocation2 + $0x158] sm:$0xff]
  %v5624 = vld [vmem:[%s3] sm:$0xf]
  %v5625 = vld [vmem:[%s3 + $0x4] sm:$0xf]
  %v5626 = vld [vmem:[%s3 + $0x8] sm:$0xf]
  %v5627 = vld [vmem:[%s3 + $0xc] sm:$0xf]
  %v5632 = vunpack.c.l.b16 %v5624
  %v5633 = vunpack.c.l.b16 %v5625
  %v5634 = vunpack.c.l.b16 %v5626
  %v5635 = vunpack.c.l.b16 %v5627
  %v5636 = vpack.c.b16 %v5633, %v5632
  %v5637 = vpack.c.b16 %v5635, %v5634
  %v5639 = vsel %vm3006, %v5636, 0
  %v5642 = vsel %vm3006, %v5637, 0
  %5644 = vmatprep.subr.bf16.mxu0 0
  %5645 = vmatpush1.bf16.msra.mxu0 %v5621
  %5646 = vmatprep.subr.bf16.mxu0 0
  %5647 = vmatpush1.bf16.msra.mxu0 %v5622
  %5648 = vmatprep.subr.bf16.mxu0 0
  %5649 = vmatpush1.bf16.msra.mxu0 %v5623
  %5650 = vmatprep.subr.bf16.mxu0 0
  %5651 = vmatpush1.bf16.msra.mxu0 0
  %5652 = vmatprep.subr.bf16.mxu0 0
  %5653 = vmatpush1.bf16.msra.mxu0 0
  %5654 = vmatprep.subr.bf16.mxu0 0
  %5655 = vmatpush1.bf16.msra.mxu0 0
  %5656 = vmatprep.subr.bf16.mxu0 0
  %5657 = vmatpush1.bf16.msra.mxu0 0
  %5658 = vmatprep.subr.bf16.mxu0 0
  %5659 = vmatpush1.bf16.msra.mxu0 0
  %5660 = vmatprep.subr.bf16.mxu0 0
  %5661 = vmatpush1.bf16.msra.mxu0 0
  %5662 = vmatprep.subr.bf16.mxu0 0
  %5663 = vmatpush1.bf16.msra.mxu0 0
  %5664 = vmatprep.subr.bf16.mxu0 0
  %5665 = vmatpush1.bf16.msra.mxu0 0
  %5666 = vmatprep.subr.bf16.mxu0 0
  %5667 = vmatpush1.bf16.msra.mxu0 0
  %5668 = vmatprep.subr.bf16.mxu0 0
  %5669 = vmatpush1.bf16.msra.mxu0 0
  %5670 = vmatprep.subr.bf16.mxu0 0
  %5671 = vmatpush1.bf16.msra.mxu0 0
  %5672 = vmatprep.subr.bf16.mxu0 0
  %5673 = vmatpush1.bf16.msra.mxu0 0
  %5674 = vmatprep.subr.bf16.mxu0 0
  %5675 = vmatpush1.bf16.msra.mxu0 0
  %5676 = vmatprep.mubr.bf16.mxu0 0
  %5677 = vmatmul.mubr.bf16.gmra.mrb[0].mxu0 %v5639
  %v5678 = vpop.f32.mrb[0].mxu0
  %v5679 = vadd.f32 0.0, %v5678
  %v5680 = vpop.f32.mrb[0].mxu0
  %v5681 = vpop.f32.mrb[0].mxu0
  %v5682 = vadd.f32 0.0, %v5681
  %v5683 = vpop.f32.mrb[0].mxu0
  %5684 = vmatprep.mubr.bf16.mxu0 0
  %5685 = vmatmul.mubr.bf16.gmra.mrb[0].mxu0 %v5642
  %v5686 = vpop.f32.mrb[0].mxu0
  %v5687 = vadd.f32 0.0, %v5686
  %v5688 = vpop.f32.mrb[0].mxu0
  %v5689 = vpop.f32.mrb[0].mxu0
  %v5690 = vadd.f32 0.0, %v5689
  %v5691 = vpop.f32.mrb[0].mxu0
  %5692 = vdwg.mxu0
  %v5693 = vadd.f32 %v2803, %v5679
  %v5694 = vadd.f32 %v2808, %v5682
  %v5695 = vadd.f32 %v2813, %v5687
  %v5696 = vadd.f32 %v2818, %v5690
  %v5697 = vld [vmem:[#allocation2 + $0x188] sm:$0xff]
  %v5698 = vld [vmem:[#allocation2 + $0x190] sm:$0xff]
  %v5699 = vld [vmem:[#allocation2 + $0x198] sm:$0xff]
  %v5700 = vld [vmem:[%s2822] sm:$0xf]
  %v5701 = vld [vmem:[%s2822 + $0x4] sm:$0xf]
  %v5702 = vld [vmem:[%s2822 + $0x8] sm:$0xf]
  %v5703 = vld [vmem:[%s2822 + $0xc] sm:$0xf]
  %v5708 = vunpack.c.l.b16 %v5700
  %v5709 = vunpack.c.l.b16 %v5701
  %v5710 = vunpack.c.l.b16 %v5702
  %v5711 = vunpack.c.l.b16 %v5703
  %v5712 = vpack.c.b16 %v5709, %v5708
  %v5713 = vpack.c.b16 %v5711, %v5710
  %v5715 = vsel %vm3006, %v5712, 0
  %v5718 = vsel %vm3006, %v5713, 0
  %5720 = vmatprep.subr.bf16.mxu0 0
  %5721 = vmatpush1.bf16.msra.mxu0 %v5697
  %5722 = vmatprep.subr.bf16.mxu0 0
  %5723 = vmatpush1.bf16.msra.mxu0 %v5698
  %5724 = vmatprep.subr.bf16.mxu0 0
  %5725 = vmatpush1.bf16.msra.mxu0 %v5699
  %5726 = vmatprep.subr.bf16.mxu0 0
  %5727 = vmatpush1.bf16.msra.mxu0 0
  %5728 = vmatprep.subr.bf16.mxu0 0
  %5729 = vmatpush1.bf16.msra.mxu0 0
  %5730 = vmatprep.subr.bf16.mxu0 0
  %5731 = vmatpush1.bf16.msra.mxu0 0
  %5732 = vmatprep.subr.bf16.mxu0 0
  %5733 = vmatpush1.bf16.msra.mxu0 0
  %5734 = vmatprep.subr.bf16.mxu0 0
  %5735 = vmatpush1.bf16.msra.mxu0 0
  %5736 = vmatprep.subr.bf16.mxu0 0
  %5737 = vmatpush1.bf16.msra.mxu0 0
  %5738 = vmatprep.subr.bf16.mxu0 0
  %5739 = vmatpush1.bf16.msra.mxu0 0
  %5740 = vmatprep.subr.bf16.mxu0 0
  %5741 = vmatpush1.bf16.msra.mxu0 0
  %5742 = vmatprep.subr.bf16.mxu0 0
  %5743 = vmatpush1.bf16.msra.mxu0 0
  %5744 = vmatprep.subr.bf16.mxu0 0
  %5745 = vmatpush1.bf16.msra.mxu0 0
  %5746 = vmatprep.subr.bf16.mxu0 0
  %5747 = vmatpush1.bf16.msra.mxu0 0
  %5748 = vmatprep.subr.bf16.mxu0 0
  %5749 = vmatpush1.bf16.msra.mxu0 0
  %5750 = vmatprep.subr.bf16.mxu0 0
  %5751 = vmatpush1.bf16.msra.mxu0 0
  %5752 = vmatprep.mubr.bf16.mxu0 0
  %5753 = vmatmul.mubr.bf16.gmra.mrb[0].mxu0 %v5715
  %v5754 = vpop.f32.mrb[0].mxu0
  %v5755 = vadd.f32 0.0, %v5754
  %v5756 = vpop.f32.mrb[0].mxu0
  %v5757 = vpop.f32.mrb[0].mxu0
  %v5758 = vadd.f32 0.0, %v5757
  %v5759 = vpop.f32.mrb[0].mxu0
  %5760 = vmatprep.mubr.bf16.mxu0 0
  %5761 = vmatmul.mubr.bf16.gmra.mrb[0].mxu0 %v5718
  %v5762 = vpop.f32.mrb[0].mxu0
  %v5763 = vadd.f32 0.0, %v5762
  %v5764 = vpop.f32.mrb[0].mxu0
  %v5765 = vpop.f32.mrb[0].mxu0
  %v5766 = vadd.f32 0.0, %v5765
  %v5767 = vpop.f32.mrb[0].mxu0
  %5768 = vdwg.mxu0
  %v5769 = vadd.f32 %v5693, %v5755
  %v5770 = vadd.f32 %v5694, %v5758
  %v5771 = vadd.f32 %v5695, %v5763
  %v5772 = vadd.f32 %v5696, %v5766
  %v5773 = vld [vmem:[#allocation2 + $0x1c8] sm:$0xff]
  %v5774 = vld [vmem:[#allocation2 + $0x1d0] sm:$0xff]
  %v5775 = vld [vmem:[#allocation2 + $0x1d8] sm:$0xff]
  %v5776 = vld [vmem:[%s2903] sm:$0xf]
  %v5777 = vld [vmem:[%s2903 + $0x4] sm:$0xf]
  %v5778 = vld [vmem:[%s2903 + $0x8] sm:$0xf]
  %v5779 = vld [vmem:[%s2903 + $0xc] sm:$0xf]
  %v5784 = vunpack.c.l.b16 %v5776
  %v5785 = vunpack.c.l.b16 %v5777
  %v5786 = vunpack.c.l.b16 %v5778
  %v5787 = vunpack.c.l.b16 %v5779
  %v5788 = vpack.c.b16 %v5785, %v5784
  %v5789 = vpack.c.b16 %v5787, %v5786
  %v5791 = vsel %vm3006, %v5788, 0
  %v5794 = vsel %vm3006, %v5789, 0
  %5796 = vmatprep.subr.bf16.mxu0 0
  %5797 = vmatpush1.bf16.msra.mxu0 %v5773
  %5798 = vmatprep.subr.bf16.mxu0 0
  %5799 = vmatpush1.bf16.msra.mxu0 %v5774
  %5800 = vmatprep.subr.bf16.mxu0 0
  %5801 = vmatpush1.bf16.msra.mxu0 %v5775
  %5802 = vmatprep.subr.bf16.mxu0 0
  %5803 = vmatpush1.bf16.msra.mxu0 0
  %5804 = vmatprep.subr.bf16.mxu0 0
  %5805 = vmatpush1.bf16.msra.mxu0 0
  %5806 = vmatprep.subr.bf16.mxu0 0
  %5807 = vmatpush1.bf16.msra.mxu0 0
  %5808 = vmatprep.subr.bf16.mxu0 0
  %5809 = vmatpush1.bf16.msra.mxu0 0
  %5810 = vmatprep.subr.bf16.mxu0 0
  %5811 = vmatpush1.bf16.msra.mxu0 0
  %5812 = vmatprep.subr.bf16.mxu0 0
  %5813 = vmatpush1.bf16.msra.mxu0 0
  %5814 = vmatprep.subr.bf16.mxu0 0
  %5815 = vmatpush1.bf16.msra.mxu0 0
  %5816 = vmatprep.subr.bf16.mxu0 0
  %5817 = vmatpush1.bf16.msra.mxu0 0
  %5818 = vmatprep.subr.bf16.mxu0 0
  %5819 = vmatpush1.bf16.msra.mxu0 0
  %5820 = vmatprep.subr.bf16.mxu0 0
  %5821 = vmatpush1.bf16.msra.mxu0 0
  %5822 = vmatprep.subr.bf16.mxu0 0
  %5823 = vmatpush1.bf16.msra.mxu0 0
  %5824 = vmatprep.subr.bf16.mxu0 0
  %5825 = vmatpush1.bf16.msra.mxu0 0
  %5826 = vmatprep.subr.bf16.mxu0 0
  %5827 = vmatpush1.bf16.msra.mxu0 0
  %5828 = vmatprep.mubr.bf16.mxu0 0
  %5829 = vmatmul.mubr.bf16.gmra.mrb[0].mxu0 %v5791
  %v5830 = vpop.f32.mrb[0].mxu0
  %v5831 = vadd.f32 0.0, %v5830
  %v5832 = vpop.f32.mrb[0].mxu0
  %v5833 = vpop.f32.mrb[0].mxu0
  %v5834 = vadd.f32 0.0, %v5833
  %v5835 = vpop.f32.mrb[0].mxu0
  %5836 = vmatprep.mubr.bf16.mxu0 0
  %5837 = vmatmul.mubr.bf16.gmra.mrb[0].mxu0 %v5794
  %v5838 = vpop.f32.mrb[0].mxu0
  %v5839 = vadd.f32 0.0, %v5838
  %v5840 = vpop.f32.mrb[0].mxu0
  %v5841 = vpop.f32.mrb[0].mxu0
  %v5842 = vadd.f32 0.0, %v5841
  %v5843 = vpop.f32.mrb[0].mxu0
  %5844 = vdwg.mxu0
  %v5845 = vadd.f32 %v5769, %v5831
  %v5846 = vadd.f32 %v5770, %v5834
  %v5847 = vadd.f32 %v5771, %v5839
  %v5848 = vadd.f32 %v5772, %v5842
  %v5849 = vtanh.pop %v5845
  %v5850 = vtanh.pop %v5846
  %v5851 = vtanh.pop %v5847
  %v5852 = vtanh.pop %v5848
  %v5853 = vpack.c.bf16 %v5850, %v5849
  %v5854 = vpack.c.bf16 %v5852, %v5851
  %5855 = vst [vmem:[#allocation3 + $0xd0] sm:$0xff] %v5853
  %5856 = vst [vmem:[#allocation3 + $0xd8] sm:$0xff] %v5854
  %v5857 = vld [vmem:[#allocation2 + $0x158] sm:$0xff]
  %v5858 = vld [vmem:[#allocation2 + $0x160] sm:$0xff]
  %v5859 = vld [vmem:[#allocation2 + $0x168] sm:$0xff]
  %v5860 = vld [vmem:[%s3] sm:$0xf]
  %v5861 = vld [vmem:[%s3 + $0x4] sm:$0xf]
  %v5862 = vld [vmem:[%s3 + $0x8] sm:$0xf]
  %v5863 = vld [vmem:[%s3 + $0xc] sm:$0xf]
  %v5868 = vunpack.c.l.b16 %v5860
  %v5869 = vunpack.c.l.b16 %v5861
  %v5870 = vunpack.c.l.b16 %v5862
  %v5871 = vunpack.c.l.b16 %v5863
  %v5872 = vpack.c.b16 %v5869, %v5868
  %v5873 = vpack.c.b16 %v5871, %v5870
  %v5875 = vsel %vm3006, %v5872, 0
  %v5878 = vsel %vm3006, %v5873, 0
  %5880 = vmatprep.subr.bf16.mxu0 0
  %5881 = vmatpush1.bf16.msra.mxu0 %v5857
  %5882 = vmatprep.subr.bf16.mxu0 0
  %5883 = vmatpush1.bf16.msra.mxu0 %v5858
  %5884 = vmatprep.subr.bf16.mxu0 0
  %5885 = vmatpush1.bf16.msra.mxu0 %v5859
  %5886 = vmatprep.subr.bf16.mxu0 0
  %5887 = vmatpush1.bf16.msra.mxu0 0
  %5888 = vmatprep.subr.bf16.mxu0 0
  %5889 = vmatpush1.bf16.msra.mxu0 0
  %5890 = vmatprep.subr.bf16.mxu0 0
  %5891 = vmatpush1.bf16.msra.mxu0 0
  %5892 = vmatprep.subr.bf16.mxu0 0
  %5893 = vmatpush1.bf16.msra.mxu0 0
  %5894 = vmatprep.subr.bf16.mxu0 0
  %5895 = vmatpush1.bf16.msra.mxu0 0
  %5896 = vmatprep.subr.bf16.mxu0 0
  %5897 = vmatpush1.bf16.msra.mxu0 0
  %5898 = vmatprep.subr.bf16.mxu0 0
  %5899 = vmatpush1.bf16.msra.mxu0 0
  %5900 = vmatprep.subr.bf16.mxu0 0
  %5901 = vmatpush1.bf16.msra.mxu0 0
  %5902 = vmatprep.subr.bf16.mxu0 0
  %5903 = vmatpush1.bf16.msra.mxu0 0
  %5904 = vmatprep.subr.bf16.mxu0 0
  %5905 = vmatpush1.bf16.msra.mxu0 0
  %5906 = vmatprep.subr.bf16.mxu0 0
  %5907 = vmatpush1.bf16.msra.mxu0 0
  %5908 = vmatprep.subr.bf16.mxu0 0
  %5909 = vmatpush1.bf16.msra.mxu0 0
  %5910 = vmatprep.subr.bf16.mxu0 0
  %5911 = vmatpush1.bf16.msra.mxu0 0
  %5912 = vmatprep.mubr.bf16.mxu0 0
  %5913 = vmatmul.mubr.bf16.gmra.mrb[0].mxu0 %v5875
  %v5914 = vpop.f32.mrb[0].mxu0
  %v5915 = vadd.f32 0.0, %v5914
  %v5916 = vpop.f32.mrb[0].mxu0
  %v5917 = vpop.f32.mrb[0].mxu0
  %v5918 = vadd.f32 0.0, %v5917
  %v5919 = vpop.f32.mrb[0].mxu0
  %5920 = vmatprep.mubr.bf16.mxu0 0
  %5921 = vmatmul.mubr.bf16.gmra.mrb[0].mxu0 %v5878
  %v5922 = vpop.f32.mrb[0].mxu0
  %v5923 = vadd.f32 0.0, %v5922
  %v5924 = vpop.f32.mrb[0].mxu0
  %v5925 = vpop.f32.mrb[0].mxu0
  %v5926 = vadd.f32 0.0, %v5925
  %v5927 = vpop.f32.mrb[0].mxu0
  %5928 = vdwg.mxu0
  %v5929 = vadd.f32 %v2803, %v5915
  %v5930 = vadd.f32 %v2808, %v5918
  %v5931 = vadd.f32 %v2813, %v5923
  %v5932 = vadd.f32 %v2818, %v5926
  %v5933 = vld [vmem:[#allocation2 + $0x198] sm:$0xff]
  %v5934 = vld [vmem:[#allocation2 + $0x1a0] sm:$0xff]
  %v5935 = vld [vmem:[#allocation2 + $0x1a8] sm:$0xff]
  %v5936 = vld [vmem:[%s2822] sm:$0xf]
  %v5937 = vld [vmem:[%s2822 + $0x4] sm:$0xf]
  %v5938 = vld [vmem:[%s2822 + $0x8] sm:$0xf]
  %v5939 = vld [vmem:[%s2822 + $0xc] sm:$0xf]
  %v5944 = vunpack.c.l.b16 %v5936
  %v5945 = vunpack.c.l.b16 %v5937
  %v5946 = vunpack.c.l.b16 %v5938
  %v5947 = vunpack.c.l.b16 %v5939
  %v5948 = vpack.c.b16 %v5945, %v5944
  %v5949 = vpack.c.b16 %v5947, %v5946
  %v5951 = vsel %vm3006, %v5948, 0
  %v5954 = vsel %vm3006, %v5949, 0
  %5956 = vmatprep.subr.bf16.mxu0 0
  %5957 = vmatpush1.bf16.msra.mxu0 %v5933
  %5958 = vmatprep.subr.bf16.mxu0 0
  %5959 = vmatpush1.bf16.msra.mxu0 %v5934
  %5960 = vmatprep.subr.bf16.mxu0 0
  %5961 = vmatpush1.bf16.msra.mxu0 %v5935
  %5962 = vmatprep.subr.bf16.mxu0 0
  %5963 = vmatpush1.bf16.msra.mxu0 0
  %5964 = vmatprep.subr.bf16.mxu0 0
  %5965 = vmatpush1.bf16.msra.mxu0 0
  %5966 = vmatprep.subr.bf16.mxu0 0
  %5967 = vmatpush1.bf16.msra.mxu0 0
  %5968 = vmatprep.subr.bf16.mxu0 0
  %5969 = vmatpush1.bf16.msra.mxu0 0
  %5970 = vmatprep.subr.bf16.mxu0 0
  %5971 = vmatpush1.bf16.msra.mxu0 0
  %5972 = vmatprep.subr.bf16.mxu0 0
  %5973 = vmatpush1.bf16.msra.mxu0 0
  %5974 = vmatprep.subr.bf16.mxu0 0
  %5975 = vmatpush1.bf16.msra.mxu0 0
  %5976 = vmatprep.subr.bf16.mxu0 0
  %5977 = vmatpush1.bf16.msra.mxu0 0
  %5978 = vmatprep.subr.bf16.mxu0 0
  %5979 = vmatpush1.bf16.msra.mxu0 0
  %5980 = vmatprep.subr.bf16.mxu0 0
  %5981 = vmatpush1.bf16.msra.mxu0 0
  %5982 = vmatprep.subr.bf16.mxu0 0
  %5983 = vmatpush1.bf16.msra.mxu0 0
  %5984 = vmatprep.subr.bf16.mxu0 0
  %5985 = vmatpush1.bf16.msra.mxu0 0
  %5986 = vmatprep.subr.bf16.mxu0 0
  %5987 = vmatpush1.bf16.msra.mxu0 0
  %5988 = vmatprep.mubr.bf16.mxu0 0
  %5989 = vmatmul.mubr.bf16.gmra.mrb[0].mxu0 %v5951
  %v5990 = vpop.f32.mrb[0].mxu0
  %v5991 = vadd.f32 0.0, %v5990
  %v5992 = vpop.f32.mrb[0].mxu0
  %v5993 = vpop.f32.mrb[0].mxu0
  %v5994 = vadd.f32 0.0, %v5993
  %v5995 = vpop.f32.mrb[0].mxu0
  %5996 = vmatprep.mubr.bf16.mxu0 0
  %5997 = vmatmul.mubr.bf16.gmra.mrb[0].mxu0 %v5954
  %v5998 = vpop.f32.mrb[0].mxu0
  %v5999 = vadd.f32 0.0, %v5998
  %v6000 = vpop.f32.mrb[0].mxu0
  %v6001 = vpop.f32.mrb[0].mxu0
  %v6002 = vadd.f32 0.0, %v6001
  %v6003 = vpop.f32.mrb[0].mxu0
  %6004 = vdwg.mxu0
  %v6005 = vadd.f32 %v5929, %v5991
  %v6006 = vadd.f32 %v5930, %v5994
  %v6007 = vadd.f32 %v5931, %v5999
  %v6008 = vadd.f32 %v5932, %v6002
  %v6009 = vld [vmem:[#allocation2 + $0x1d8] sm:$0xff]
  %v6010 = vld [vmem:[#allocation2 + $0x1e0] sm:$0xff]
  %v6011 = vld [vmem:[#allocation2 + $0x1e8] sm:$0xff]
  %v6012 = vld [vmem:[%s2903] sm:$0xf]
  %v6013 = vld [vmem:[%s2903 + $0x4] sm:$0xf]
  %v6014 = vld [vmem:[%s2903 + $0x8] sm:$0xf]
  %v6015 = vld [vmem:[%s2903 + $0xc] sm:$0xf]
  %v6020 = vunpack.c.l.b16 %v6012
  %v6021 = vunpack.c.l.b16 %v6013
  %v6022 = vunpack.c.l.b16 %v6014
  %v6023 = vunpack.c.l.b16 %v6015
  %v6024 = vpack.c.b16 %v6021, %v6020
  %v6025 = vpack.c.b16 %v6023, %v6022
  %v6027 = vsel %vm3006, %v6024, 0
  %v6030 = vsel %vm3006, %v6025, 0
  %6032 = vmatprep.subr.bf16.mxu0 0
  %6033 = vmatpush1.bf16.msra.mxu0 %v6009
  %6034 = vmatprep.subr.bf16.mxu0 0
  %6035 = vmatpush1.bf16.msra.mxu0 %v6010
  %6036 = vmatprep.subr.bf16.mxu0 0
  %6037 = vmatpush1.bf16.msra.mxu0 %v6011
  %6038 = vmatprep.subr.bf16.mxu0 0
  %6039 = vmatpush1.bf16.msra.mxu0 0
  %6040 = vmatprep.subr.bf16.mxu0 0
  %6041 = vmatpush1.bf16.msra.mxu0 0
  %6042 = vmatprep.subr.bf16.mxu0 0
  %6043 = vmatpush1.bf16.msra.mxu0 0
  %6044 = vmatprep.subr.bf16.mxu0 0
  %6045 = vmatpush1.bf16.msra.mxu0 0
  %6046 = vmatprep.subr.bf16.mxu0 0
  %6047 = vmatpush1.bf16.msra.mxu0 0
  %6048 = vmatprep.subr.bf16.mxu0 0
  %6049 = vmatpush1.bf16.msra.mxu0 0
  %6050 = vmatprep.subr.bf16.mxu0 0
  %6051 = vmatpush1.bf16.msra.mxu0 0
  %6052 = vmatprep.subr.bf16.mxu0 0
  %6053 = vmatpush1.bf16.msra.mxu0 0
  %6054 = vmatprep.subr.bf16.mxu0 0
  %6055 = vmatpush1.bf16.msra.mxu0 0
  %6056 = vmatprep.subr.bf16.mxu0 0
  %6057 = vmatpush1.bf16.msra.mxu0 0
  %6058 = vmatprep.subr.bf16.mxu0 0
  %6059 = vmatpush1.bf16.msra.mxu0 0
  %6060 = vmatprep.subr.bf16.mxu0 0
  %6061 = vmatpush1.bf16.msra.mxu0 0
  %6062 = vmatprep.subr.bf16.mxu0 0
  %6063 = vmatpush1.bf16.msra.mxu0 0
  %6064 = vmatprep.mubr.bf16.mxu0 0
  %6065 = vmatmul.mubr.bf16.gmra.mrb[0].mxu0 %v6027
  %v6066 = vpop.f32.mrb[0].mxu0
  %v6067 = vadd.f32 0.0, %v6066
  %v6068 = vpop.f32.mrb[0].mxu0
  %v6069 = vpop.f32.mrb[0].mxu0
  %v6070 = vadd.f32 0.0, %v6069
  %v6071 = vpop.f32.mrb[0].mxu0
  %6072 = vmatprep.mubr.bf16.mxu0 0
  %6073 = vmatmul.mubr.bf16.gmra.mrb[0].mxu0 %v6030
  %v6074 = vpop.f32.mrb[0].mxu0
  %v6075 = vadd.f32 0.0, %v6074
  %v6076 = vpop.f32.mrb[0].mxu0
  %v6077 = vpop.f32.mrb[0].mxu0
  %v6078 = vadd.f32 0.0, %v6077
  %v6079 = vpop.f32.mrb[0].mxu0
  %6080 = vdwg.mxu0
  %v6081 = vadd.f32 %v6005, %v6067
  %v6082 = vadd.f32 %v6006, %v6070
  %v6083 = vadd.f32 %v6007, %v6075
  %v6084 = vadd.f32 %v6008, %v6078
  %v6085 = vtanh.pop %v6081
  %v6086 = vtanh.pop %v6082
  %v6087 = vtanh.pop %v6083
  %v6088 = vtanh.pop %v6084
  %v6089 = vpack.c.bf16 %v6086, %v6085
  %v6090 = vpack.c.bf16 %v6088, %v6087
  %6091 = vst [vmem:[#allocation3 + $0xe0] sm:$0xff] %v6089
  %6092 = vst [vmem:[#allocation3 + $0xe8] sm:$0xff] %v6090
  %v6093 = vld [vmem:[#allocation2 + $0x168] sm:$0xff]
  %v6094 = vld [vmem:[#allocation2 + $0x170] sm:$0xff]
  %v6095 = vld [vmem:[#allocation2 + $0x178] sm:$0xff]
  %v6096 = vld [vmem:[%s3] sm:$0xf]
  %v6097 = vld [vmem:[%s3 + $0x4] sm:$0xf]
  %v6098 = vld [vmem:[%s3 + $0x8] sm:$0xf]
  %v6099 = vld [vmem:[%s3 + $0xc] sm:$0xf]
  %v6104 = vunpack.c.l.b16 %v6096
  %v6105 = vunpack.c.l.b16 %v6097
  %v6106 = vunpack.c.l.b16 %v6098
  %v6107 = vunpack.c.l.b16 %v6099
  %v6108 = vpack.c.b16 %v6105, %v6104
  %v6109 = vpack.c.b16 %v6107, %v6106
  %v6111 = vsel %vm3006, %v6108, 0
  %v6114 = vsel %vm3006, %v6109, 0
  %6116 = vmatprep.subr.bf16.mxu0 0
  %6117 = vmatpush1.bf16.msra.mxu0 %v6093
  %6118 = vmatprep.subr.bf16.mxu0 0
  %6119 = vmatpush1.bf16.msra.mxu0 %v6094
  %6120 = vmatprep.subr.bf16.mxu0 0
  %6121 = vmatpush1.bf16.msra.mxu0 %v6095
  %6122 = vmatprep.subr.bf16.mxu0 0
  %6123 = vmatpush1.bf16.msra.mxu0 0
  %6124 = vmatprep.subr.bf16.mxu0 0
  %6125 = vmatpush1.bf16.msra.mxu0 0
  %6126 = vmatprep.subr.bf16.mxu0 0
  %6127 = vmatpush1.bf16.msra.mxu0 0
  %6128 = vmatprep.subr.bf16.mxu0 0
  %6129 = vmatpush1.bf16.msra.mxu0 0
  %6130 = vmatprep.subr.bf16.mxu0 0
  %6131 = vmatpush1.bf16.msra.mxu0 0
  %6132 = vmatprep.subr.bf16.mxu0 0
  %6133 = vmatpush1.bf16.msra.mxu0 0
  %6134 = vmatprep.subr.bf16.mxu0 0
  %6135 = vmatpush1.bf16.msra.mxu0 0
  %6136 = vmatprep.subr.bf16.mxu0 0
  %6137 = vmatpush1.bf16.msra.mxu0 0
  %6138 = vmatprep.subr.bf16.mxu0 0
  %6139 = vmatpush1.bf16.msra.mxu0 0
  %6140 = vmatprep.subr.bf16.mxu0 0
  %6141 = vmatpush1.bf16.msra.mxu0 0
  %6142 = vmatprep.subr.bf16.mxu0 0
  %6143 = vmatpush1.bf16.msra.mxu0 0
  %6144 = vmatprep.subr.bf16.mxu0 0
  %6145 = vmatpush1.bf16.msra.mxu0 0
  %6146 = vmatprep.subr.bf16.mxu0 0
  %6147 = vmatpush1.bf16.msra.mxu0 0
  %6148 = vmatprep.mubr.bf16.mxu0 0
  %6149 = vmatmul.mubr.bf16.gmra.mrb[0].mxu0 %v6111
  %v6150 = vpop.f32.mrb[0].mxu0
  %v6151 = vadd.f32 0.0, %v6150
  %v6152 = vpop.f32.mrb[0].mxu0
  %v6153 = vpop.f32.mrb[0].mxu0
  %v6154 = vadd.f32 0.0, %v6153
  %v6155 = vpop.f32.mrb[0].mxu0
  %6156 = vmatprep.mubr.bf16.mxu0 0
  %6157 = vmatmul.mubr.bf16.gmra.mrb[0].mxu0 %v6114
  %v6158 = vpop.f32.mrb[0].mxu0
  %v6159 = vadd.f32 0.0, %v6158
  %v6160 = vpop.f32.mrb[0].mxu0
  %v6161 = vpop.f32.mrb[0].mxu0
  %v6162 = vadd.f32 0.0, %v6161
  %v6163 = vpop.f32.mrb[0].mxu0
  %6164 = vdwg.mxu0
  %v6165 = vadd.f32 %v2803, %v6151
  %v6166 = vadd.f32 %v2808, %v6154
  %v6167 = vadd.f32 %v2813, %v6159
  %v6168 = vadd.f32 %v2818, %v6162
  %v6169 = vld [vmem:[#allocation2 + $0x1a8] sm:$0xff]
  %v6170 = vld [vmem:[#allocation2 + $0x1b0] sm:$0xff]
  %v6171 = vld [vmem:[#allocation2 + $0x1b8] sm:$0xff]
  %v6172 = vld [vmem:[%s2822] sm:$0xf]
  %v6173 = vld [vmem:[%s2822 + $0x4] sm:$0xf]
  %v6174 = vld [vmem:[%s2822 + $0x8] sm:$0xf]
  %v6175 = vld [vmem:[%s2822 + $0xc] sm:$0xf]
  %v6180 = vunpack.c.l.b16 %v6172
  %v6181 = vunpack.c.l.b16 %v6173
  %v6182 = vunpack.c.l.b16 %v6174
  %v6183 = vunpack.c.l.b16 %v6175
  %v6184 = vpack.c.b16 %v6181, %v6180
  %v6185 = vpack.c.b16 %v6183, %v6182
  %v6187 = vsel %vm3006, %v6184, 0
  %v6190 = vsel %vm3006, %v6185, 0
  %6192 = vmatprep.subr.bf16.mxu0 0
  %6193 = vmatpush1.bf16.msra.mxu0 %v6169
  %6194 = vmatprep.subr.bf16.mxu0 0
  %6195 = vmatpush1.bf16.msra.mxu0 %v6170
  %6196 = vmatprep.subr.bf16.mxu0 0
  %6197 = vmatpush1.bf16.msra.mxu0 %v6171
  %6198 = vmatprep.subr.bf16.mxu0 0
  %6199 = vmatpush1.bf16.msra.mxu0 0
  %6200 = vmatprep.subr.bf16.mxu0 0
  %6201 = vmatpush1.bf16.msra.mxu0 0
  %6202 = vmatprep.subr.bf16.mxu0 0
  %6203 = vmatpush1.bf16.msra.mxu0 0
  %6204 = vmatprep.subr.bf16.mxu0 0
  %6205 = vmatpush1.bf16.msra.mxu0 0
  %6206 = vmatprep.subr.bf16.mxu0 0
  %6207 = vmatpush1.bf16.msra.mxu0 0
  %6208 = vmatprep.subr.bf16.mxu0 0
  %6209 = vmatpush1.bf16.msra.mxu0 0
  %6210 = vmatprep.subr.bf16.mxu0 0
  %6211 = vmatpush1.bf16.msra.mxu0 0
  %6212 = vmatprep.subr.bf16.mxu0 0
  %6213 = vmatpush1.bf16.msra.mxu0 0
  %6214 = vmatprep.subr.bf16.mxu0 0
  %6215 = vmatpush1.bf16.msra.mxu0 0
  %6216 = vmatprep.subr.bf16.mxu0 0
  %6217 = vmatpush1.bf16.msra.mxu0 0
  %6218 = vmatprep.subr.bf16.mxu0 0
  %6219 = vmatpush1.bf16.msra.mxu0 0
  %6220 = vmatprep.subr.bf16.mxu0 0
  %6221 = vmatpush1.bf16.msra.mxu0 0
  %6222 = vmatprep.subr.bf16.mxu0 0
  %6223 = vmatpush1.bf16.msra.mxu0 0
  %6224 = vmatprep.mubr.bf16.mxu0 0
  %6225 = vmatmul.mubr.bf16.gmra.mrb[0].mxu0 %v6187
  %v6226 = vpop.f32.mrb[0].mxu0
  %v6227 = vadd.f32 0.0, %v6226
  %v6228 = vpop.f32.mrb[0].mxu0
  %v6229 = vpop.f32.mrb[0].mxu0
  %v6230 = vadd.f32 0.0, %v6229
  %v6231 = vpop.f32.mrb[0].mxu0
  %6232 = vmatprep.mubr.bf16.mxu0 0
  %6233 = vmatmul.mubr.bf16.gmra.mrb[0].mxu0 %v6190
  %v6234 = vpop.f32.mrb[0].mxu0
  %v6235 = vadd.f32 0.0, %v6234
  %v6236 = vpop.f32.mrb[0].mxu0
  %v6237 = vpop.f32.mrb[0].mxu0
  %v6238 = vadd.f32 0.0, %v6237
  %v6239 = vpop.f32.mrb[0].mxu0
  %6240 = vdwg.mxu0
  %v6241 = vadd.f32 %v6165, %v6227
  %v6242 = vadd.f32 %v6166, %v6230
  %v6243 = vadd.f32 %v6167, %v6235
  %v6244 = vadd.f32 %v6168, %v6238
  %v6245 = vld [vmem:[#allocation2 + $0x1e8] sm:$0xff]
  %v6246 = vld [vmem:[#allocation2 + $0x1f0] sm:$0xff]
  %v6247 = vld [vmem:[#allocation2 + $0x1f8] sm:$0xff]
  %v6248 = vld [vmem:[%s2903] sm:$0xf]
  %v6249 = vld [vmem:[%s2903 + $0x4] sm:$0xf]
  %v6250 = vld [vmem:[%s2903 + $0x8] sm:$0xf]
  %v6251 = vld [vmem:[%s2903 + $0xc] sm:$0xf]
  %v6256 = vunpack.c.l.b16 %v6248
  %v6257 = vunpack.c.l.b16 %v6249
  %v6258 = vunpack.c.l.b16 %v6250
  %v6259 = vunpack.c.l.b16 %v6251
  %v6260 = vpack.c.b16 %v6257, %v6256
  %v6261 = vpack.c.b16 %v6259, %v6258
  %v6263 = vsel %vm3006, %v6260, 0
  %v6266 = vsel %vm3006, %v6261, 0
  %6268 = vmatprep.subr.bf16.mxu0 0
  %6269 = vmatpush1.bf16.msra.mxu0 %v6245
  %6270 = vmatprep.subr.bf16.mxu0 0
  %6271 = vmatpush1.bf16.msra.mxu0 %v6246
  %6272 = vmatprep.subr.bf16.mxu0 0
  %6273 = vmatpush1.bf16.msra.mxu0 %v6247
  %6274 = vmatprep.subr.bf16.mxu0 0
  %6275 = vmatpush1.bf16.msra.mxu0 0
  %6276 = vmatprep.subr.bf16.mxu0 0
  %6277 = vmatpush1.bf16.msra.mxu0 0
  %6278 = vmatprep.subr.bf16.mxu0 0
  %6279 = vmatpush1.bf16.msra.mxu0 0
  %6280 = vmatprep.subr.bf16.mxu0 0
  %6281 = vmatpush1.bf16.msra.mxu0 0
  %6282 = vmatprep.subr.bf16.mxu0 0
  %6283 = vmatpush1.bf16.msra.mxu0 0
  %6284 = vmatprep.subr.bf16.mxu0 0
  %6285 = vmatpush1.bf16.msra.mxu0 0
  %6286 = vmatprep.subr.bf16.mxu0 0
  %6287 = vmatpush1.bf16.msra.mxu0 0
  %6288 = vmatprep.subr.bf16.mxu0 0
  %6289 = vmatpush1.bf16.msra.mxu0 0
  %6290 = vmatprep.subr.bf16.mxu0 0
  %6291 = vmatpush1.bf16.msra.mxu0 0
  %6292 = vmatprep.subr.bf16.mxu0 0
  %6293 = vmatpush1.bf16.msra.mxu0 0
  %6294 = vmatprep.subr.bf16.mxu0 0
  %6295 = vmatpush1.bf16.msra.mxu0 0
  %6296 = vmatprep.subr.bf16.mxu0 0
  %6297 = vmatpush1.bf16.msra.mxu0 0
  %6298 = vmatprep.subr.bf16.mxu0 0
  %6299 = vmatpush1.bf16.msra.mxu0 0
  %6300 = vmatprep.mubr.bf16.mxu0 0
  %6301 = vmatmul.mubr.bf16.gmra.mrb[0].mxu0 %v6263
  %v6302 = vpop.f32.mrb[0].mxu0
  %v6303 = vadd.f32 0.0, %v6302
  %v6304 = vpop.f32.mrb[0].mxu0
  %v6305 = vpop.f32.mrb[0].mxu0
  %v6306 = vadd.f32 0.0, %v6305
  %v6307 = vpop.f32.mrb[0].mxu0
  %6308 = vmatprep.mubr.bf16.mxu0 0
  %6309 = vmatmul.mubr.bf16.gmra.mrb[0].mxu0 %v6266
  %v6310 = vpop.f32.mrb[0].mxu0
  %v6311 = vadd.f32 0.0, %v6310
  %v6312 = vpop.f32.mrb[0].mxu0
  %v6313 = vpop.f32.mrb[0].mxu0
  %v6314 = vadd.f32 0.0, %v6313
  %v6315 = vpop.f32.mrb[0].mxu0
  %6316 = vdwg.mxu0
  %v6317 = vadd.f32 %v6241, %v6303
  %v6318 = vadd.f32 %v6242, %v6306
  %v6319 = vadd.f32 %v6243, %v6311
  %v6320 = vadd.f32 %v6244, %v6314
  %v6321 = vtanh.pop %v6317
  %v6322 = vtanh.pop %v6318
  %v6323 = vtanh.pop %v6319
  %v6324 = vtanh.pop %v6320
  %v6325 = vpack.c.bf16 %v6322, %v6321
  %v6326 = vpack.c.bf16 %v6324, %v6323
  %6327 = vst [vmem:[#allocation3 + $0xf0] sm:$0xff] %v6325
  %6328 = vst [vmem:[#allocation3 + $0xf8] sm:$0xff] %v6326
  %v6329 = vld [vmem:[%s6] sm:$0xff]
  %v6330 = vld [vmem:[%s6 + $0x8] sm:$0xff]
  %6332 = vset.pattern.permute.xlu0 0
  %6333 = vperm.xlu0 %6332, %v6329
  %v6334 = vpop.permute.xlu0 %6333
  %6337 = vset.pattern.permute.xlu0 0
  %6338 = vperm.xlu0 %6337, %v6330
  %v6339 = vpop.permute.xlu0 %6338
  %v6341 = vld [vmem:[#allocation3] sm:$0xff]
  %v6342 = vld [vmem:[#allocation3 + $0x8] sm:$0xff]
  %v6343 = vld [vmem:[#allocation3 + $0x10] sm:$0xff]
  %v6344 = vld [vmem:[#allocation3 + $0x18] sm:$0xff]
  %s6345 = scalar_lea.vmem %s5, 8
  %v6346 = vld [vmem:[%s6345] sm:$0xf]
  %v6347 = vld [vmem:[%s6345 + $0x4] sm:$0xf]
  %v6350 = vunpack.c.l.b16 %v6346
  %v6351 = vunpack.c.l.b16 %v6347
  %v6352 = vpack.c.b16 %v6351, %v6350
  %6353 = vrot.lane.b32.xlu0 %v6352, 96
  %v6354 = vpop.permute.xlu0 %6353
  %v6356 = vsel %vm167, %v6354, 0
  %6358 = vmatprep.subr.bf16.mxu0 0
  %6359 = vmatpush1.bf16.msra.mxu0 %v6341
  %6360 = vmatprep.subr.bf16.mxu0 0
  %6361 = vmatpush1.bf16.msra.mxu0 %v6342
  %6362 = vmatprep.subr.bf16.mxu0 0
  %6363 = vmatpush1.bf16.msra.mxu0 %v6343
  %6364 = vmatprep.subr.bf16.mxu0 0
  %6365 = vmatpush1.bf16.msra.mxu0 %v6344
  %6366 = vmatprep.subr.bf16.mxu0 0
  %6367 = vmatpush1.bf16.msra.mxu0 0
  %6368 = vmatprep.subr.bf16.mxu0 0
  %6369 = vmatpush1.bf16.msra.mxu0 0
  %6370 = vmatprep.subr.bf16.mxu0 0
  %6371 = vmatpush1.bf16.msra.mxu0 0
  %6372 = vmatprep.subr.bf16.mxu0 0
  %6373 = vmatpush1.bf16.msra.mxu0 0
  %6374 = vmatprep.subr.bf16.mxu0 0
  %6375 = vmatpush1.bf16.msra.mxu0 0
  %6376 = vmatprep.subr.bf16.mxu0 0
  %6377 = vmatpush1.bf16.msra.mxu0 0
  %6378 = vmatprep.subr.bf16.mxu0 0
  %6379 = vmatpush1.bf16.msra.mxu0 0
  %6380 = vmatprep.subr.bf16.mxu0 0
  %6381 = vmatpush1.bf16.msra.mxu0 0
  %6382 = vmatprep.subr.bf16.mxu0 0
  %6383 = vmatpush1.bf16.msra.mxu0 0
  %6384 = vmatprep.subr.bf16.mxu0 0
  %6385 = vmatpush1.bf16.msra.mxu0 0
  %6386 = vmatprep.subr.bf16.mxu0 0
  %6387 = vmatpush1.bf16.msra.mxu0 0
  %6388 = vmatprep.subr.bf16.mxu0 0
  %6389 = vmatpush1.bf16.msra.mxu0 0
  %6390 = vmatprep.mubr.bf16.mxu0 0
  %6391 = vmatmul.mubr.bf16.gmra.mrb[0].mxu0 %v6356
  %v6392 = vpop.f32.mrb[0].mxu0
  %v6393 = vadd.f32 0.0, %v6392
  %v6394 = vpop.f32.mrb[0].mxu0
  %v6395 = vpop.f32.mrb[0].mxu0
  %v6396 = vadd.f32 0.0, %v6395
  %v6397 = vpop.f32.mrb[0].mxu0
  %6398 = vdwg.mxu0
  %v6399 = vadd.f32 %v6334, %v6393
  %v6400 = vadd.f32 %v6339, %v6396
  %v6401 = vld [vmem:[#allocation3 + $0x40] sm:$0xff]
  %v6402 = vld [vmem:[#allocation3 + $0x48] sm:$0xff]
  %v6403 = vld [vmem:[#allocation3 + $0x50] sm:$0xff]
  %v6404 = vld [vmem:[#allocation3 + $0x58] sm:$0xff]
  %s6405 = scalar_lea.vmem %s5, 16
  %v6406 = vld [vmem:[%s6405] sm:$0xf]
  %v6407 = vld [vmem:[%s6405 + $0x4] sm:$0xf]
  %v6410 = vunpack.c.l.b16 %v6406
  %v6411 = vunpack.c.l.b16 %v6407
  %v6412 = vpack.c.b16 %v6411, %v6410
  %6413 = vrot.lane.b32.xlu0 %v6412, 96
  %v6414 = vpop.permute.xlu0 %6413
  %v6416 = vsel %vm167, %v6414, 0
  %6418 = vmatprep.subr.bf16.mxu0 0
  %6419 = vmatpush1.bf16.msra.mxu0 %v6401
  %6420 = vmatprep.subr.bf16.mxu0 0
  %6421 = vmatpush1.bf16.msra.mxu0 %v6402
  %6422 = vmatprep.subr.bf16.mxu0 0
  %6423 = vmatpush1.bf16.msra.mxu0 %v6403
  %6424 = vmatprep.subr.bf16.mxu0 0
  %6425 = vmatpush1.bf16.msra.mxu0 %v6404
  %6426 = vmatprep.subr.bf16.mxu0 0
  %6427 = vmatpush1.bf16.msra.mxu0 0
  %6428 = vmatprep.subr.bf16.mxu0 0
  %6429 = vmatpush1.bf16.msra.mxu0 0
  %6430 = vmatprep.subr.bf16.mxu0 0
  %6431 = vmatpush1.bf16.msra.mxu0 0
  %6432 = vmatprep.subr.bf16.mxu0 0
  %6433 = vmatpush1.bf16.msra.mxu0 0
  %6434 = vmatprep.subr.bf16.mxu0 0
  %6435 = vmatpush1.bf16.msra.mxu0 0
  %6436 = vmatprep.subr.bf16.mxu0 0
  %6437 = vmatpush1.bf16.msra.mxu0 0
  %6438 = vmatprep.subr.bf16.mxu0 0
  %6439 = vmatpush1.bf16.msra.mxu0 0
  %6440 = vmatprep.subr.bf16.mxu0 0
  %6441 = vmatpush1.bf16.msra.mxu0 0
  %6442 = vmatprep.subr.bf16.mxu0 0
  %6443 = vmatpush1.bf16.msra.mxu0 0
  %6444 = vmatprep.subr.bf16.mxu0 0
  %6445 = vmatpush1.bf16.msra.mxu0 0
  %6446 = vmatprep.subr.bf16.mxu0 0
  %6447 = vmatpush1.bf16.msra.mxu0 0
  %6448 = vmatprep.subr.bf16.mxu0 0
  %6449 = vmatpush1.bf16.msra.mxu0 0
  %6450 = vmatprep.mubr.bf16.mxu0 0
  %6451 = vmatmul.mubr.bf16.gmra.mrb[0].mxu0 %v6416
  %v6452 = vpop.f32.mrb[0].mxu0
  %v6453 = vadd.f32 0.0, %v6452
  %v6454 = vpop.f32.mrb[0].mxu0
  %v6455 = vpop.f32.mrb[0].mxu0
  %v6456 = vadd.f32 0.0, %v6455
  %v6457 = vpop.f32.mrb[0].mxu0
  %6458 = vdwg.mxu0
  %v6459 = vadd.f32 %v6399, %v6453
  %v6460 = vadd.f32 %v6400, %v6456
  %v6461 = vtanh.pop %v6459
  %v6462 = vtanh.pop %v6460
  %v6463 = vpack.c.bf16 %v6462, %v6461
  %6464 = vst [vmem:[#allocation4] sm:$0xff] %v6463
  %v6465 = vld [vmem:[#allocation3 + $0x10] sm:$0xff]
  %v6466 = vld [vmem:[#allocation3 + $0x18] sm:$0xff]
  %v6467 = vld [vmem:[#allocation3 + $0x20] sm:$0xff]
  %v6468 = vld [vmem:[#allocation3 + $0x28] sm:$0xff]
  %v6469 = vld [vmem:[#allocation3 + $0x30] sm:$0xff]
  %v6470 = vld [vmem:[#allocation3 + $0x38] sm:$0xff]
  %v6471 = vld [vmem:[%s6345] sm:$0xf]
  %v6472 = vld [vmem:[%s6345 + $0x4] sm:$0xf]
  %v6475 = vunpack.c.l.b16 %v6471
  %v6476 = vunpack.c.l.b16 %v6472
  %v6477 = vpack.c.b16 %v6476, %v6475
  %vm6478 = vcmask 785408
  %v6480 = vsel %vm6478, %v6477, 0
  %6482 = vmatprep.subr.bf16.mxu0 0
  %6483 = vmatpush1.bf16.msra.mxu0 %v6465
  %6484 = vmatprep.subr.bf16.mxu0 0
  %6485 = vmatpush1.bf16.msra.mxu0 %v6466
  %6486 = vmatprep.subr.bf16.mxu0 0
  %6487 = vmatpush1.bf16.msra.mxu0 %v6467
  %6488 = vmatprep.subr.bf16.mxu0 0
  %6489 = vmatpush1.bf16.msra.mxu0 %v6468
  %6490 = vmatprep.subr.bf16.mxu0 0
  %6491 = vmatpush1.bf16.msra.mxu0 %v6469
  %6492 = vmatprep.subr.bf16.mxu0 0
  %6493 = vmatpush1.bf16.msra.mxu0 %v6470
  %6494 = vmatprep.subr.bf16.mxu0 0
  %6495 = vmatpush1.bf16.msra.mxu0 0
  %6496 = vmatprep.subr.bf16.mxu0 0
  %6497 = vmatpush1.bf16.msra.mxu0 0
  %6498 = vmatprep.subr.bf16.mxu0 0
  %6499 = vmatpush1.bf16.msra.mxu0 0
  %6500 = vmatprep.subr.bf16.mxu0 0
  %6501 = vmatpush1.bf16.msra.mxu0 0
  %6502 = vmatprep.subr.bf16.mxu0 0
  %6503 = vmatpush1.bf16.msra.mxu0 0
  %6504 = vmatprep.subr.bf16.mxu0 0
  %6505 = vmatpush1.bf16.msra.mxu0 0
  %6506 = vmatprep.subr.bf16.mxu0 0
  %6507 = vmatpush1.bf16.msra.mxu0 0
  %6508 = vmatprep.subr.bf16.mxu0 0
  %6509 = vmatpush1.bf16.msra.mxu0 0
  %6510 = vmatprep.subr.bf16.mxu0 0
  %6511 = vmatpush1.bf16.msra.mxu0 0
  %6512 = vmatprep.subr.bf16.mxu0 0
  %6513 = vmatpush1.bf16.msra.mxu0 0
  %6514 = vmatprep.mubr.bf16.mxu0 0
  %6515 = vmatmul.mubr.bf16.gmra.mrb[0].mxu0 %v6480
  %v6516 = vpop.f32.mrb[0].mxu0
  %v6517 = vadd.f32 0.0, %v6516
  %v6518 = vpop.f32.mrb[0].mxu0
  %v6519 = vpop.f32.mrb[0].mxu0
  %v6520 = vadd.f32 0.0, %v6519
  %v6521 = vpop.f32.mrb[0].mxu0
  %6522 = vdwg.mxu0
  %v6523 = vadd.f32 %v6334, %v6517
  %v6524 = vadd.f32 %v6339, %v6520
  %v6525 = vld [vmem:[#allocation3 + $0x50] sm:$0xff]
  %v6526 = vld [vmem:[#allocation3 + $0x58] sm:$0xff]
  %v6527 = vld [vmem:[#allocation3 + $0x60] sm:$0xff]
  %v6528 = vld [vmem:[#allocation3 + $0x68] sm:$0xff]
  %v6529 = vld [vmem:[#allocation3 + $0x70] sm:$0xff]
  %v6530 = vld [vmem:[#allocation3 + $0x78] sm:$0xff]
  %v6531 = vld [vmem:[%s6405] sm:$0xf]
  %v6532 = vld [vmem:[%s6405 + $0x4] sm:$0xf]
  %v6535 = vunpack.c.l.b16 %v6531
  %v6536 = vunpack.c.l.b16 %v6532
  %v6537 = vpack.c.b16 %v6536, %v6535
  %v6539 = vsel %vm6478, %v6537, 0
  %6541 = vmatprep.subr.bf16.mxu0 0
  %6542 = vmatpush1.bf16.msra.mxu0 %v6525
  %6543 = vmatprep.subr.bf16.mxu0 0
  %6544 = vmatpush1.bf16.msra.mxu0 %v6526
  %6545 = vmatprep.subr.bf16.mxu0 0
  %6546 = vmatpush1.bf16.msra.mxu0 %v6527
  %6547 = vmatprep.subr.bf16.mxu0 0
  %6548 = vmatpush1.bf16.msra.mxu0 %v6528
  %6549 = vmatprep.subr.bf16.mxu0 0
  %6550 = vmatpush1.bf16.msra.mxu0 %v6529
  %6551 = vmatprep.subr.bf16.mxu0 0
  %6552 = vmatpush1.bf16.msra.mxu0 %v6530
  %6553 = vmatprep.subr.bf16.mxu0 0
  %6554 = vmatpush1.bf16.msra.mxu0 0
  %6555 = vmatprep.subr.bf16.mxu0 0
  %6556 = vmatpush1.bf16.msra.mxu0 0
  %6557 = vmatprep.subr.bf16.mxu0 0
  %6558 = vmatpush1.bf16.msra.mxu0 0
  %6559 = vmatprep.subr.bf16.mxu0 0
  %6560 = vmatpush1.bf16.msra.mxu0 0
  %6561 = vmatprep.subr.bf16.mxu0 0
  %6562 = vmatpush1.bf16.msra.mxu0 0
  %6563 = vmatprep.subr.bf16.mxu0 0
  %6564 = vmatpush1.bf16.msra.mxu0 0
  %6565 = vmatprep.subr.bf16.mxu0 0
  %6566 = vmatpush1.bf16.msra.mxu0 0
  %6567 = vmatprep.subr.bf16.mxu0 0
  %6568 = vmatpush1.bf16.msra.mxu0 0
  %6569 = vmatprep.subr.bf16.mxu0 0
  %6570 = vmatpush1.bf16.msra.mxu0 0
  %6571 = vmatprep.subr.bf16.mxu0 0
  %6572 = vmatpush1.bf16.msra.mxu0 0
  %6573 = vmatprep.mubr.bf16.mxu0 0
  %6574 = vmatmul.mubr.bf16.gmra.mrb[0].mxu0 %v6539
  %v6575 = vpop.f32.mrb[0].mxu0
  %v6576 = vadd.f32 0.0, %v6575
  %v6577 = vpop.f32.mrb[0].mxu0
  %v6578 = vpop.f32.mrb[0].mxu0
  %v6579 = vadd.f32 0.0, %v6578
  %v6580 = vpop.f32.mrb[0].mxu0
  %6581 = vdwg.mxu0
  %v6582 = vadd.f32 %v6523, %v6576
  %v6583 = vadd.f32 %v6524, %v6579
  %v6584 = vtanh.pop %v6582
  %v6585 = vtanh.pop %v6583
  %v6586 = vpack.c.bf16 %v6585, %v6584
  %6587 = vst [vmem:[#allocation4 + $0x8] sm:$0xff] %v6586
  %v6588 = vld [vmem:[#allocation3 + $0x40] sm:$0xff]
  %v6589 = vld [vmem:[#allocation3 + $0x48] sm:$0xff]
  %v6590 = vld [vmem:[#allocation3 + $0x50] sm:$0xff]
  %v6591 = vld [vmem:[#allocation3 + $0x58] sm:$0xff]
  %v6592 = vld [vmem:[%s5] sm:$0xf]
  %v6593 = vld [vmem:[%s5 + $0x4] sm:$0xf]
  %v6596 = vunpack.c.l.b16 %v6592
  %v6597 = vunpack.c.l.b16 %v6593
  %v6598 = vpack.c.b16 %v6597, %v6596
  %6599 = vrot.lane.b32.xlu0 %v6598, 96
  %v6600 = vpop.permute.xlu0 %6599
  %v6602 = vsel %vm167, %v6600, 0
  %6604 = vmatprep.subr.bf16.mxu0 0
  %6605 = vmatpush1.bf16.msra.mxu0 %v6588
  %6606 = vmatprep.subr.bf16.mxu0 0
  %6607 = vmatpush1.bf16.msra.mxu0 %v6589
  %6608 = vmatprep.subr.bf16.mxu0 0
  %6609 = vmatpush1.bf16.msra.mxu0 %v6590
  %6610 = vmatprep.subr.bf16.mxu0 0
  %6611 = vmatpush1.bf16.msra.mxu0 %v6591
  %6612 = vmatprep.subr.bf16.mxu0 0
  %6613 = vmatpush1.bf16.msra.mxu0 0
  %6614 = vmatprep.subr.bf16.mxu0 0
  %6615 = vmatpush1.bf16.msra.mxu0 0
  %6616 = vmatprep.subr.bf16.mxu0 0
  %6617 = vmatpush1.bf16.msra.mxu0 0
  %6618 = vmatprep.subr.bf16.mxu0 0
  %6619 = vmatpush1.bf16.msra.mxu0 0
  %6620 = vmatprep.subr.bf16.mxu0 0
  %6621 = vmatpush1.bf16.msra.mxu0 0
  %6622 = vmatprep.subr.bf16.mxu0 0
  %6623 = vmatpush1.bf16.msra.mxu0 0
  %6624 = vmatprep.subr.bf16.mxu0 0
  %6625 = vmatpush1.bf16.msra.mxu0 0
  %6626 = vmatprep.subr.bf16.mxu0 0
  %6627 = vmatpush1.bf16.msra.mxu0 0
  %6628 = vmatprep.subr.bf16.mxu0 0
  %6629 = vmatpush1.bf16.msra.mxu0 0
  %6630 = vmatprep.subr.bf16.mxu0 0
  %6631 = vmatpush1.bf16.msra.mxu0 0
  %6632 = vmatprep.subr.bf16.mxu0 0
  %6633 = vmatpush1.bf16.msra.mxu0 0
  %6634 = vmatprep.subr.bf16.mxu0 0
  %6635 = vmatpush1.bf16.msra.mxu0 0
  %6636 = vmatprep.mubr.bf16.mxu0 0
  %6637 = vmatmul.mubr.bf16.gmra.mrb[0].mxu0 %v6602
  %v6638 = vpop.f32.mrb[0].mxu0
  %v6639 = vadd.f32 0.0, %v6638
  %v6640 = vpop.f32.mrb[0].mxu0
  %v6641 = vpop.f32.mrb[0].mxu0
  %v6642 = vadd.f32 0.0, %v6641
  %v6643 = vpop.f32.mrb[0].mxu0
  %6644 = vdwg.mxu0
  %v6645 = vadd.f32 %v6334, %v6639
  %v6646 = vadd.f32 %v6339, %v6642
  %v6647 = vld [vmem:[#allocation3 + $0x80] sm:$0xff]
  %v6648 = vld [vmem:[#allocation3 + $0x88] sm:$0xff]
  %v6649 = vld [vmem:[#allocation3 + $0x90] sm:$0xff]
  %v6650 = vld [vmem:[#allocation3 + $0x98] sm:$0xff]
  %v6651 = vld [vmem:[%s6345] sm:$0xf]
  %v6652 = vld [vmem:[%s6345 + $0x4] sm:$0xf]
  %v6655 = vunpack.c.l.b16 %v6651
  %v6656 = vunpack.c.l.b16 %v6652
  %v6657 = vpack.c.b16 %v6656, %v6655
  %6658 = vrot.lane.b32.xlu0 %v6657, 96
  %v6659 = vpop.permute.xlu0 %6658
  %v6661 = vsel %vm167, %v6659, 0
  %6663 = vmatprep.subr.bf16.mxu0 0
  %6664 = vmatpush1.bf16.msra.mxu0 %v6647
  %6665 = vmatprep.subr.bf16.mxu0 0
  %6666 = vmatpush1.bf16.msra.mxu0 %v6648
  %6667 = vmatprep.subr.bf16.mxu0 0
  %6668 = vmatpush1.bf16.msra.mxu0 %v6649
  %6669 = vmatprep.subr.bf16.mxu0 0
  %6670 = vmatpush1.bf16.msra.mxu0 %v6650
  %6671 = vmatprep.subr.bf16.mxu0 0
  %6672 = vmatpush1.bf16.msra.mxu0 0
  %6673 = vmatprep.subr.bf16.mxu0 0
  %6674 = vmatpush1.bf16.msra.mxu0 0
  %6675 = vmatprep.subr.bf16.mxu0 0
  %6676 = vmatpush1.bf16.msra.mxu0 0
  %6677 = vmatprep.subr.bf16.mxu0 0
  %6678 = vmatpush1.bf16.msra.mxu0 0
  %6679 = vmatprep.subr.bf16.mxu0 0
  %6680 = vmatpush1.bf16.msra.mxu0 0
  %6681 = vmatprep.subr.bf16.mxu0 0
  %6682 = vmatpush1.bf16.msra.mxu0 0
  %6683 = vmatprep.subr.bf16.mxu0 0
  %6684 = vmatpush1.bf16.msra.mxu0 0
  %6685 = vmatprep.subr.bf16.mxu0 0
  %6686 = vmatpush1.bf16.msra.mxu0 0
  %6687 = vmatprep.subr.bf16.mxu0 0
  %6688 = vmatpush1.bf16.msra.mxu0 0
  %6689 = vmatprep.subr.bf16.mxu0 0
  %6690 = vmatpush1.bf16.msra.mxu0 0
  %6691 = vmatprep.subr.bf16.mxu0 0
  %6692 = vmatpush1.bf16.msra.mxu0 0
  %6693 = vmatprep.subr.bf16.mxu0 0
  %6694 = vmatpush1.bf16.msra.mxu0 0
  %6695 = vmatprep.mubr.bf16.mxu0 0
  %6696 = vmatmul.mubr.bf16.gmra.mrb[0].mxu0 %v6661
  %v6697 = vpop.f32.mrb[0].mxu0
  %v6698 = vadd.f32 0.0, %v6697
  %v6699 = vpop.f32.mrb[0].mxu0
  %v6700 = vpop.f32.mrb[0].mxu0
  %v6701 = vadd.f32 0.0, %v6700
  %v6702 = vpop.f32.mrb[0].mxu0
  %6703 = vdwg.mxu0
  %v6704 = vadd.f32 %v6645, %v6698
  %v6705 = vadd.f32 %v6646, %v6701
  %v6706 = vld [vmem:[#allocation3 + $0xc0] sm:$0xff]
  %v6707 = vld [vmem:[#allocation3 + $0xc8] sm:$0xff]
  %v6708 = vld [vmem:[#allocation3 + $0xd0] sm:$0xff]
  %v6709 = vld [vmem:[#allocation3 + $0xd8] sm:$0xff]
  %v6710 = vld [vmem:[%s6405] sm:$0xf]
  %v6711 = vld [vmem:[%s6405 + $0x4] sm:$0xf]
  %v6714 = vunpack.c.l.b16 %v6710
  %v6715 = vunpack.c.l.b16 %v6711
  %v6716 = vpack.c.b16 %v6715, %v6714
  %6717 = vrot.lane.b32.xlu0 %v6716, 96
  %v6718 = vpop.permute.xlu0 %6717
  %v6720 = vsel %vm167, %v6718, 0
  %6722 = vmatprep.subr.bf16.mxu0 0
  %6723 = vmatpush1.bf16.msra.mxu0 %v6706
  %6724 = vmatprep.subr.bf16.mxu0 0
  %6725 = vmatpush1.bf16.msra.mxu0 %v6707
  %6726 = vmatprep.subr.bf16.mxu0 0
  %6727 = vmatpush1.bf16.msra.mxu0 %v6708
  %6728 = vmatprep.subr.bf16.mxu0 0
  %6729 = vmatpush1.bf16.msra.mxu0 %v6709
  %6730 = vmatprep.subr.bf16.mxu0 0
  %6731 = vmatpush1.bf16.msra.mxu0 0
  %6732 = vmatprep.subr.bf16.mxu0 0
  %6733 = vmatpush1.bf16.msra.mxu0 0
  %6734 = vmatprep.subr.bf16.mxu0 0
  %6735 = vmatpush1.bf16.msra.mxu0 0
  %6736 = vmatprep.subr.bf16.mxu0 0
  %6737 = vmatpush1.bf16.msra.mxu0 0
  %6738 = vmatprep.subr.bf16.mxu0 0
  %6739 = vmatpush1.bf16.msra.mxu0 0
  %6740 = vmatprep.subr.bf16.mxu0 0
  %6741 = vmatpush1.bf16.msra.mxu0 0
  %6742 = vmatprep.subr.bf16.mxu0 0
  %6743 = vmatpush1.bf16.msra.mxu0 0
  %6744 = vmatprep.subr.bf16.mxu0 0
  %6745 = vmatpush1.bf16.msra.mxu0 0
  %6746 = vmatprep.subr.bf16.mxu0 0
  %6747 = vmatpush1.bf16.msra.mxu0 0
  %6748 = vmatprep.subr.bf16.mxu0 0
  %6749 = vmatpush1.bf16.msra.mxu0 0
  %6750 = vmatprep.subr.bf16.mxu0 0
  %6751 = vmatpush1.bf16.msra.mxu0 0
  %6752 = vmatprep.subr.bf16.mxu0 0
  %6753 = vmatpush1.bf16.msra.mxu0 0
  %6754 = vmatprep.mubr.bf16.mxu0 0
  %6755 = vmatmul.mubr.bf16.gmra.mrb[0].mxu0 %v6720
  %v6756 = vpop.f32.mrb[0].mxu0
  %v6757 = vadd.f32 0.0, %v6756
  %v6758 = vpop.f32.mrb[0].mxu0
  %v6759 = vpop.f32.mrb[0].mxu0
  %v6760 = vadd.f32 0.0, %v6759
  %v6761 = vpop.f32.mrb[0].mxu0
  %6762 = vdwg.mxu0
  %v6763 = vadd.f32 %v6704, %v6757
  %v6764 = vadd.f32 %v6705, %v6760
  %v6765 = vtanh.pop %v6763
  %v6766 = vtanh.pop %v6764
  %v6767 = vpack.c.bf16 %v6766, %v6765
  %6768 = vst [vmem:[#allocation4 + $0x10] sm:$0xff] %v6767
  %v6769 = vld [vmem:[#allocation3 + $0x50] sm:$0xff]
  %v6770 = vld [vmem:[#allocation3 + $0x58] sm:$0xff]
  %v6771 = vld [vmem:[#allocation3 + $0x60] sm:$0xff]
  %v6772 = vld [vmem:[#allocation3 + $0x68] sm:$0xff]
  %v6773 = vld [vmem:[#allocation3 + $0x70] sm:$0xff]
  %v6774 = vld [vmem:[#allocation3 + $0x78] sm:$0xff]
  %v6775 = vld [vmem:[%s5] sm:$0xf]
  %v6776 = vld [vmem:[%s5 + $0x4] sm:$0xf]
  %v6779 = vunpack.c.l.b16 %v6775
  %v6780 = vunpack.c.l.b16 %v6776
  %v6781 = vpack.c.b16 %v6780, %v6779
  %v6783 = vsel %vm6478, %v6781, 0
  %6785 = vmatprep.subr.bf16.mxu0 0
  %6786 = vmatpush1.bf16.msra.mxu0 %v6769
  %6787 = vmatprep.subr.bf16.mxu0 0
  %6788 = vmatpush1.bf16.msra.mxu0 %v6770
  %6789 = vmatprep.subr.bf16.mxu0 0
  %6790 = vmatpush1.bf16.msra.mxu0 %v6771
  %6791 = vmatprep.subr.bf16.mxu0 0
  %6792 = vmatpush1.bf16.msra.mxu0 %v6772
  %6793 = vmatprep.subr.bf16.mxu0 0
  %6794 = vmatpush1.bf16.msra.mxu0 %v6773
  %6795 = vmatprep.subr.bf16.mxu0 0
  %6796 = vmatpush1.bf16.msra.mxu0 %v6774
  %6797 = vmatprep.subr.bf16.mxu0 0
  %6798 = vmatpush1.bf16.msra.mxu0 0
  %6799 = vmatprep.subr.bf16.mxu0 0
  %6800 = vmatpush1.bf16.msra.mxu0 0
  %6801 = vmatprep.subr.bf16.mxu0 0
  %6802 = vmatpush1.bf16.msra.mxu0 0
  %6803 = vmatprep.subr.bf16.mxu0 0
  %6804 = vmatpush1.bf16.msra.mxu0 0
  %6805 = vmatprep.subr.bf16.mxu0 0
  %6806 = vmatpush1.bf16.msra.mxu0 0
  %6807 = vmatprep.subr.bf16.mxu0 0
  %6808 = vmatpush1.bf16.msra.mxu0 0
  %6809 = vmatprep.subr.bf16.mxu0 0
  %6810 = vmatpush1.bf16.msra.mxu0 0
  %6811 = vmatprep.subr.bf16.mxu0 0
  %6812 = vmatpush1.bf16.msra.mxu0 0
  %6813 = vmatprep.subr.bf16.mxu0 0
  %6814 = vmatpush1.bf16.msra.mxu0 0
  %6815 = vmatprep.subr.bf16.mxu0 0
  %6816 = vmatpush1.bf16.msra.mxu0 0
  %6817 = vmatprep.mubr.bf16.mxu0 0
  %6818 = vmatmul.mubr.bf16.gmra.mrb[0].mxu0 %v6783
  %v6819 = vpop.f32.mrb[0].mxu0
  %v6820 = vadd.f32 0.0, %v6819
  %v6821 = vpop.f32.mrb[0].mxu0
  %v6822 = vpop.f32.mrb[0].mxu0
  %v6823 = vadd.f32 0.0, %v6822
  %v6824 = vpop.f32.mrb[0].mxu0
  %6825 = vdwg.mxu0
  %v6826 = vadd.f32 %v6334, %v6820
  %v6827 = vadd.f32 %v6339, %v6823
  %v6828 = vld [vmem:[#allocation3 + $0x90] sm:$0xff]
  %v6829 = vld [vmem:[#allocation3 + $0x98] sm:$0xff]
  %v6830 = vld [vmem:[#allocation3 + $0xa0] sm:$0xff]
  %v6831 = vld [vmem:[#allocation3 + $0xa8] sm:$0xff]
  %v6832 = vld [vmem:[#allocation3 + $0xb0] sm:$0xff]
  %v6833 = vld [vmem:[#allocation3 + $0xb8] sm:$0xff]
  %v6834 = vld [vmem:[%s6345] sm:$0xf]
  %v6835 = vld [vmem:[%s6345 + $0x4] sm:$0xf]
  %v6838 = vunpack.c.l.b16 %v6834
  %v6839 = vunpack.c.l.b16 %v6835
  %v6840 = vpack.c.b16 %v6839, %v6838
  %v6842 = vsel %vm6478, %v6840, 0
  %6844 = vmatprep.subr.bf16.mxu0 0
  %6845 = vmatpush1.bf16.msra.mxu0 %v6828
  %6846 = vmatprep.subr.bf16.mxu0 0
  %6847 = vmatpush1.bf16.msra.mxu0 %v6829
  %6848 = vmatprep.subr.bf16.mxu0 0
  %6849 = vmatpush1.bf16.msra.mxu0 %v6830
  %6850 = vmatprep.subr.bf16.mxu0 0
  %6851 = vmatpush1.bf16.msra.mxu0 %v6831
  %6852 = vmatprep.subr.bf16.mxu0 0
  %6853 = vmatpush1.bf16.msra.mxu0 %v6832
  %6854 = vmatprep.subr.bf16.mxu0 0
  %6855 = vmatpush1.bf16.msra.mxu0 %v6833
  %6856 = vmatprep.subr.bf16.mxu0 0
  %6857 = vmatpush1.bf16.msra.mxu0 0
  %6858 = vmatprep.subr.bf16.mxu0 0
  %6859 = vmatpush1.bf16.msra.mxu0 0
  %6860 = vmatprep.subr.bf16.mxu0 0
  %6861 = vmatpush1.bf16.msra.mxu0 0
  %6862 = vmatprep.subr.bf16.mxu0 0
  %6863 = vmatpush1.bf16.msra.mxu0 0
  %6864 = vmatprep.subr.bf16.mxu0 0
  %6865 = vmatpush1.bf16.msra.mxu0 0
  %6866 = vmatprep.subr.bf16.mxu0 0
  %6867 = vmatpush1.bf16.msra.mxu0 0
  %6868 = vmatprep.subr.bf16.mxu0 0
  %6869 = vmatpush1.bf16.msra.mxu0 0
  %6870 = vmatprep.subr.bf16.mxu0 0
  %6871 = vmatpush1.bf16.msra.mxu0 0
  %6872 = vmatprep.subr.bf16.mxu0 0
  %6873 = vmatpush1.bf16.msra.mxu0 0
  %6874 = vmatprep.subr.bf16.mxu0 0
  %6875 = vmatpush1.bf16.msra.mxu0 0
  %6876 = vmatprep.mubr.bf16.mxu0 0
  %6877 = vmatmul.mubr.bf16.gmra.mrb[0].mxu0 %v6842
  %v6878 = vpop.f32.mrb[0].mxu0
  %v6879 = vadd.f32 0.0, %v6878
  %v6880 = vpop.f32.mrb[0].mxu0
  %v6881 = vpop.f32.mrb[0].mxu0
  %v6882 = vadd.f32 0.0, %v6881
  %v6883 = vpop.f32.mrb[0].mxu0
  %6884 = vdwg.mxu0
  %v6885 = vadd.f32 %v6826, %v6879
  %v6886 = vadd.f32 %v6827, %v6882
  %v6887 = vld [vmem:[#allocation3 + $0xd0] sm:$0xff]
  %v6888 = vld [vmem:[#allocation3 + $0xd8] sm:$0xff]
  %v6889 = vld [vmem:[#allocation3 + $0xe0] sm:$0xff]
  %v6890 = vld [vmem:[#allocation3 + $0xe8] sm:$0xff]
  %v6891 = vld [vmem:[#allocation3 + $0xf0] sm:$0xff]
  %v6892 = vld [vmem:[#allocation3 + $0xf8] sm:$0xff]
  %v6893 = vld [vmem:[%s6405] sm:$0xf]
  %v6894 = vld [vmem:[%s6405 + $0x4] sm:$0xf]
  %v6897 = vunpack.c.l.b16 %v6893
  %v6898 = vunpack.c.l.b16 %v6894
  %v6899 = vpack.c.b16 %v6898, %v6897
  %v6901 = vsel %vm6478, %v6899, 0
  %6903 = vmatprep.subr.bf16.mxu0 0
  %6904 = vmatpush1.bf16.msra.mxu0 %v6887
  %6905 = vmatprep.subr.bf16.mxu0 0
  %6906 = vmatpush1.bf16.msra.mxu0 %v6888
  %6907 = vmatprep.subr.bf16.mxu0 0
  %6908 = vmatpush1.bf16.msra.mxu0 %v6889
  %6909 = vmatprep.subr.bf16.mxu0 0
  %6910 = vmatpush1.bf16.msra.mxu0 %v6890
  %6911 = vmatprep.subr.bf16.mxu0 0
  %6912 = vmatpush1.bf16.msra.mxu0 %v6891
  %6913 = vmatprep.subr.bf16.mxu0 0
  %6914 = vmatpush1.bf16.msra.mxu0 %v6892
  %6915 = vmatprep.subr.bf16.mxu0 0
  %6916 = vmatpush1.bf16.msra.mxu0 0
  %6917 = vmatprep.subr.bf16.mxu0 0
  %6918 = vmatpush1.bf16.msra.mxu0 0
  %6919 = vmatprep.subr.bf16.mxu0 0
  %6920 = vmatpush1.bf16.msra.mxu0 0
  %6921 = vmatprep.subr.bf16.mxu0 0
  %6922 = vmatpush1.bf16.msra.mxu0 0
  %6923 = vmatprep.subr.bf16.mxu0 0
  %6924 = vmatpush1.bf16.msra.mxu0 0
  %6925 = vmatprep.subr.bf16.mxu0 0
  %6926 = vmatpush1.bf16.msra.mxu0 0
  %6927 = vmatprep.subr.bf16.mxu0 0
  %6928 = vmatpush1.bf16.msra.mxu0 0
  %6929 = vmatprep.subr.bf16.mxu0 0
  %6930 = vmatpush1.bf16.msra.mxu0 0
  %6931 = vmatprep.subr.bf16.mxu0 0
  %6932 = vmatpush1.bf16.msra.mxu0 0
  %6933 = vmatprep.subr.bf16.mxu0 0
  %6934 = vmatpush1.bf16.msra.mxu0 0
  %6935 = vmatprep.mubr.bf16.mxu0 0
  %6936 = vmatmul.mubr.bf16.gmra.mrb[0].mxu0 %v6901
  %v6937 = vpop.f32.mrb[0].mxu0
  %v6938 = vadd.f32 0.0, %v6937
  %v6939 = vpop.f32.mrb[0].mxu0
  %v6940 = vpop.f32.mrb[0].mxu0
  %v6941 = vadd.f32 0.0, %v6940
  %v6942 = vpop.f32.mrb[0].mxu0
  %6943 = vdwg.mxu0
  %v6944 = vadd.f32 %v6885, %v6938
  %v6945 = vadd.f32 %v6886, %v6941
  %v6946 = vtanh.pop %v6944
  %v6947 = vtanh.pop %v6945
  %v6948 = vpack.c.bf16 %v6947, %v6946
  %6949 = vst [vmem:[#allocation4 + $0x18] sm:$0xff] %v6948
  %v6950 = vld [vmem:[%s8] sm:$0xff]
  %6952 = vset.pattern.permute.xlu0 0
  %6953 = vperm.xlu0 %6952, %v6950
  %v6954 = vpop.permute.xlu0 %6953
  %v6956 = vld [vmem:[%s10] sm:$0xff]
  %v6957 = vld [vmem:[%s10 + $0x8] sm:$0x3]
  %6959 = vset.pattern.permute.xlu0 0
  %6960 = vperm.xlu0 %6959, %v6956
  %v6961 = vpop.permute.xlu0 %6960
  %6964 = vset.pattern.permute.xlu0 0
  %6965 = vperm.xlu0 %6964, %v6957
  %v6966 = vpop.permute.xlu0 %6965
  %v6968 = vld [vmem:[#allocation4] sm:$0xff]
  %v6969 = vld [vmem:[#allocation4 + $0x8] sm:$0xff]
  %s6970 = scalar_lea.vmem %s7, 4
  %v6971 = vld [vmem:[%s6970] sm:$0xf]
  %v6973 = vunpack.c.l.b16 %v6971
  %v6974 = vpack.c.b16 %v6973, %v6973
  %6975 = vrot.lane.b32.xlu0 %v6974, 112
  %v6976 = vpop.permute.xlu0 %6975
  %v6978 = vsel %vm2841, %v6976, 0
  %6980 = vmatprep.subr.bf16.mxu0 0
  %6981 = vmatpush1.bf16.msra.mxu0 %v6968
  %6982 = vmatprep.subr.bf16.mxu0 0
  %6983 = vmatpush1.bf16.msra.mxu0 %v6969
  %6984 = vmatprep.subr.bf16.mxu0 0
  %6985 = vmatpush1.bf16.msra.mxu0 0
  %6986 = vmatprep.subr.bf16.mxu0 0
  %6987 = vmatpush1.bf16.msra.mxu0 0
  %6988 = vmatprep.subr.bf16.mxu0 0
  %6989 = vmatpush1.bf16.msra.mxu0 0
  %6990 = vmatprep.subr.bf16.mxu0 0
  %6991 = vmatpush1.bf16.msra.mxu0 0
  %6992 = vmatprep.subr.bf16.mxu0 0
  %6993 = vmatpush1.bf16.msra.mxu0 0
  %6994 = vmatprep.subr.bf16.mxu0 0
  %6995 = vmatpush1.bf16.msra.mxu0 0
  %6996 = vmatprep.subr.bf16.mxu0 0
  %6997 = vmatpush1.bf16.msra.mxu0 0
  %6998 = vmatprep.subr.bf16.mxu0 0
  %6999 = vmatpush1.bf16.msra.mxu0 0
  %7000 = vmatprep.subr.bf16.mxu0 0
  %7001 = vmatpush1.bf16.msra.mxu0 0
  %7002 = vmatprep.subr.bf16.mxu0 0
  %7003 = vmatpush1.bf16.msra.mxu0 0
  %7004 = vmatprep.subr.bf16.mxu0 0
  %7005 = vmatpush1.bf16.msra.mxu0 0
  %7006 = vmatprep.subr.bf16.mxu0 0
  %7007 = vmatpush1.bf16.msra.mxu0 0
  %7008 = vmatprep.subr.bf16.mxu0 0
  %7009 = vmatpush1.bf16.msra.mxu0 0
  %7010 = vmatprep.subr.bf16.mxu0 0
  %7011 = vmatpush1.bf16.msra.mxu0 0
  %7012 = vmatprep.mubr.bf16.mxu0 0
  %7013 = vmatmul.mubr.bf16.gmra.mrb[0].mxu0 %v6978
  %v7014 = vpop.f32.mrb[0].mxu0
  %v7015 = vadd.f32 0.0, %v7014
  %v7016 = vpop.f32.mrb[0].mxu0
  %v7017 = vpop.f32.mrb[0].mxu0
  %v7018 = vpop.f32.mrb[0].mxu0
  %7019 = vdwg.mxu0
  %v7020 = vadd.f32 %v6954, %v7015
  %v7021 = vld [vmem:[#allocation4 + $0x10] sm:$0xff]
  %v7022 = vld [vmem:[#allocation4 + $0x18] sm:$0xff]
  %s7023 = scalar_lea.vmem %s7, 8
  %v7024 = vld [vmem:[%s7023] sm:$0xf]
  %v7026 = vunpack.c.l.b16 %v7024
  %v7027 = vpack.c.b16 %v7026, %v7026
  %7028 = vrot.lane.b32.xlu0 %v7027, 112
  %v7029 = vpop.permute.xlu0 %7028
  %v7031 = vsel %vm2841, %v7029, 0
  %7033 = vmatprep.subr.bf16.mxu0 0
  %7034 = vmatpush1.bf16.msra.mxu0 %v7021
  %7035 = vmatprep.subr.bf16.mxu0 0
  %7036 = vmatpush1.bf16.msra.mxu0 %v7022
  %7037 = vmatprep.subr.bf16.mxu0 0
  %7038 = vmatpush1.bf16.msra.mxu0 0
  %7039 = vmatprep.subr.bf16.mxu0 0
  %7040 = vmatpush1.bf16.msra.mxu0 0
  %7041 = vmatprep.subr.bf16.mxu0 0
  %7042 = vmatpush1.bf16.msra.mxu0 0
  %7043 = vmatprep.subr.bf16.mxu0 0
  %7044 = vmatpush1.bf16.msra.mxu0 0
  %7045 = vmatprep.subr.bf16.mxu0 0
  %7046 = vmatpush1.bf16.msra.mxu0 0
  %7047 = vmatprep.subr.bf16.mxu0 0
  %7048 = vmatpush1.bf16.msra.mxu0 0
  %7049 = vmatprep.subr.bf16.mxu0 0
  %7050 = vmatpush1.bf16.msra.mxu0 0
  %7051 = vmatprep.subr.bf16.mxu0 0
  %7052 = vmatpush1.bf16.msra.mxu0 0
  %7053 = vmatprep.subr.bf16.mxu0 0
  %7054 = vmatpush1.bf16.msra.mxu0 0
  %7055 = vmatprep.subr.bf16.mxu0 0
  %7056 = vmatpush1.bf16.msra.mxu0 0
  %7057 = vmatprep.subr.bf16.mxu0 0
  %7058 = vmatpush1.bf16.msra.mxu0 0
  %7059 = vmatprep.subr.bf16.mxu0 0
  %7060 = vmatpush1.bf16.msra.mxu0 0
  %7061 = vmatprep.subr.bf16.mxu0 0
  %7062 = vmatpush1.bf16.msra.mxu0 0
  %7063 = vmatprep.subr.bf16.mxu0 0
  %7064 = vmatpush1.bf16.msra.mxu0 0
  %7065 = vmatprep.mubr.bf16.mxu0 0
  %7066 = vmatmul.mubr.bf16.gmra.mrb[0].mxu0 %v7031
  %v7067 = vpop.f32.mrb[0].mxu0
  %v7068 = vadd.f32 0.0, %v7067
  %v7069 = vpop.f32.mrb[0].mxu0
  %v7070 = vpop.f32.mrb[0].mxu0
  %v7071 = vpop.f32.mrb[0].mxu0
  %7072 = vdwg.mxu0
  %v7073 = vadd.f32 %v7020, %v7068
  %v7074 = vld [vmem:[%s9] sm:$0xf]
  %v7075 = vld [vmem:[%s9 + $0x4] sm:$0x1]
  %v7076 = vpack.c.bf16 %v7073, %v7073
  %v7079 = vunpack.c.l.b16 %v7074
  %v7080 = vunpack.c.l.b16 %v7075
  %v7081 = vpack.c.b16 %v7080, %v7079
  %vm7082 = vcmask 64512
  %v7084 = vsel %vm7082, %v7081, 0
  %vm7086 = vcmask 1043456
  %v7088 = vsel %vm7086, %v7076, 0
  %7090 = vmatprep.subr.bf16.mxu0 0
  %7091 = vmatpush1.bf16.msra.mxu0 %v7088
  %7092 = vmatprep.subr.bf16.mxu0 0
  %7093 = vmatpush1.bf16.msra.mxu0 0
  %7094 = vmatprep.subr.bf16.mxu0 0
  %7095 = vmatpush1.bf16.msra.mxu0 0
  %7096 = vmatprep.subr.bf16.mxu0 0
  %7097 = vmatpush1.bf16.msra.mxu0 0
  %7098 = vmatprep.subr.bf16.mxu0 0
  %7099 = vmatpush1.bf16.msra.mxu0 0
  %7100 = vmatprep.subr.bf16.mxu0 0
  %7101 = vmatpush1.bf16.msra.mxu0 0
  %7102 = vmatprep.subr.bf16.mxu0 0
  %7103 = vmatpush1.bf16.msra.mxu0 0
  %7104 = vmatprep.subr.bf16.mxu0 0
  %7105 = vmatpush1.bf16.msra.mxu0 0
  %7106 = vmatprep.subr.bf16.mxu0 0
  %7107 = vmatpush1.bf16.msra.mxu0 0
  %7108 = vmatprep.subr.bf16.mxu0 0
  %7109 = vmatpush1.bf16.msra.mxu0 0
  %7110 = vmatprep.subr.bf16.mxu0 0
  %7111 = vmatpush1.bf16.msra.mxu0 0
  %7112 = vmatprep.subr.bf16.mxu0 0
  %7113 = vmatpush1.bf16.msra.mxu0 0
  %7114 = vmatprep.subr.bf16.mxu0 0
  %7115 = vmatpush1.bf16.msra.mxu0 0
  %7116 = vmatprep.subr.bf16.mxu0 0
  %7117 = vmatpush1.bf16.msra.mxu0 0
  %7118 = vmatprep.subr.bf16.mxu0 0
  %7119 = vmatpush1.bf16.msra.mxu0 0
  %7120 = vmatprep.subr.bf16.mxu0 0
  %7121 = vmatpush1.bf16.msra.mxu0 0
  %7122 = vmatprep.mubr.bf16.mxu0 0
  %7123 = vmatmul.mubr.bf16.gmra.mrb[0].mxu0 %v7084
  %v7124 = vpop.f32.mrb[0].mxu0
  %v7125 = vadd.f32 0.0, %v7124
  %v7126 = vpop.f32.mrb[0].mxu0
  %v7127 = vpop.f32.mrb[0].mxu0
  %v7128 = vadd.f32 0.0, %v7127
  %v7129 = vpop.f32.mrb[0].mxu0
  %7130 = vdwg.mxu0
  %v7131 = vadd.f32 %v6961, %v7125
  %v7132 = vadd.f32 %v6966, %v7128
  %v7134 = vsel %vm2841, %v6971, 0
  %7136 = vmatprep.subr.bf16.mxu0 0
  %7137 = vmatpush1.bf16.msra.mxu0 %v6968
  %7138 = vmatprep.subr.bf16.mxu0 0
  %7139 = vmatpush1.bf16.msra.mxu0 %v6969
  %7140 = vmatprep.subr.bf16.mxu0 0
  %7141 = vmatpush1.bf16.msra.mxu0 0
  %7142 = vmatprep.subr.bf16.mxu0 0
  %7143 = vmatpush1.bf16.msra.mxu0 0
  %7144 = vmatprep.subr.bf16.mxu0 0
  %7145 = vmatpush1.bf16.msra.mxu0 0
  %7146 = vmatprep.subr.bf16.mxu0 0
  %7147 = vmatpush1.bf16.msra.mxu0 0
  %7148 = vmatprep.subr.bf16.mxu0 0
  %7149 = vmatpush1.bf16.msra.mxu0 0
  %7150 = vmatprep.subr.bf16.mxu0 0
  %7151 = vmatpush1.bf16.msra.mxu0 0
  %7152 = vmatprep.subr.bf16.mxu0 0
  %7153 = vmatpush1.bf16.msra.mxu0 0
  %7154 = vmatprep.subr.bf16.mxu0 0
  %7155 = vmatpush1.bf16.msra.mxu0 0
  %7156 = vmatprep.subr.bf16.mxu0 0
  %7157 = vmatpush1.bf16.msra.mxu0 0
  %7158 = vmatprep.subr.bf16.mxu0 0
  %7159 = vmatpush1.bf16.msra.mxu0 0
  %7160 = vmatprep.subr.bf16.mxu0 0
  %7161 = vmatpush1.bf16.msra.mxu0 0
  %7162 = vmatprep.subr.bf16.mxu0 0
  %7163 = vmatpush1.bf16.msra.mxu0 0
  %7164 = vmatprep.subr.bf16.mxu0 0
  %7165 = vmatpush1.bf16.msra.mxu0 0
  %7166 = vmatprep.subr.bf16.mxu0 0
  %7167 = vmatpush1.bf16.msra.mxu0 0
  %7168 = vmatprep.mubr.bf16.mxu0 0
  %7169 = vmatmul.mubr.bf16.gmra.mrb[0].mxu0 %v7134
  %v7170 = vpop.f32.mrb[0].mxu0
  %v7171 = vadd.f32 0.0, %v7170
  %v7172 = vpop.f32.mrb[0].mxu0
  %v7173 = vpop.f32.mrb[0].mxu0
  %v7174 = vpop.f32.mrb[0].mxu0
  %7175 = vdwg.mxu0
  %v7176 = vadd.f32 %v6954, %v7171
  %v7178 = vsel %vm2841, %v7024, 0
  %7180 = vmatprep.subr.bf16.mxu0 0
  %7181 = vmatpush1.bf16.msra.mxu0 %v7021
  %7182 = vmatprep.subr.bf16.mxu0 0
  %7183 = vmatpush1.bf16.msra.mxu0 %v7022
  %7184 = vmatprep.subr.bf16.mxu0 0
  %7185 = vmatpush1.bf16.msra.mxu0 0
  %7186 = vmatprep.subr.bf16.mxu0 0
  %7187 = vmatpush1.bf16.msra.mxu0 0
  %7188 = vmatprep.subr.bf16.mxu0 0
  %7189 = vmatpush1.bf16.msra.mxu0 0
  %7190 = vmatprep.subr.bf16.mxu0 0
  %7191 = vmatpush1.bf16.msra.mxu0 0
  %7192 = vmatprep.subr.bf16.mxu0 0
  %7193 = vmatpush1.bf16.msra.mxu0 0
  %7194 = vmatprep.subr.bf16.mxu0 0
  %7195 = vmatpush1.bf16.msra.mxu0 0
  %7196 = vmatprep.subr.bf16.mxu0 0
  %7197 = vmatpush1.bf16.msra.mxu0 0
  %7198 = vmatprep.subr.bf16.mxu0 0
  %7199 = vmatpush1.bf16.msra.mxu0 0
  %7200 = vmatprep.subr.bf16.mxu0 0
  %7201 = vmatpush1.bf16.msra.mxu0 0
  %7202 = vmatprep.subr.bf16.mxu0 0
  %7203 = vmatpush1.bf16.msra.mxu0 0
  %7204 = vmatprep.subr.bf16.mxu0 0
  %7205 = vmatpush1.bf16.msra.mxu0 0
  %7206 = vmatprep.subr.bf16.mxu0 0
  %7207 = vmatpush1.bf16.msra.mxu0 0
  %7208 = vmatprep.subr.bf16.mxu0 0
  %7209 = vmatpush1.bf16.msra.mxu0 0
  %7210 = vmatprep.subr.bf16.mxu0 0
  %7211 = vmatpush1.bf16.msra.mxu0 0
  %7212 = vmatprep.mubr.bf16.mxu0 0
  %7213 = vmatmul.mubr.bf16.gmra.mrb[0].mxu0 %v7178
  %v7214 = vpop.f32.mrb[0].mxu0
  %v7215 = vadd.f32 0.0, %v7214
  %v7216 = vpop.f32.mrb[0].mxu0
  %v7217 = vpop.f32.mrb[0].mxu0
  %v7218 = vpop.f32.mrb[0].mxu0
  %7219 = vdwg.mxu0
  %v7220 = vadd.f32 %v7176, %v7215
  %s7221 = scalar_lea.vmem %s9, 8
  %v7222 = vld [vmem:[%s7221] sm:$0xf]
  %v7223 = vld [vmem:[%s7221 + $0x4] sm:$0x1]
  %v7224 = vpack.c.bf16 %v7220, %v7220
  %v7227 = vunpack.c.l.b16 %v7222
  %v7228 = vunpack.c.l.b16 %v7223
  %v7229 = vpack.c.b16 %v7228, %v7227
  %v7231 = vsel %vm7082, %v7229, 0
  %v7234 = vsel %vm7086, %v7224, 0
  %7236 = vmatprep.subr.bf16.mxu0 0
  %7237 = vmatpush1.bf16.msra.mxu0 %v7234
  %7238 = vmatprep.subr.bf16.mxu0 0
  %7239 = vmatpush1.bf16.msra.mxu0 0
  %7240 = vmatprep.subr.bf16.mxu0 0
  %7241 = vmatpush1.bf16.msra.mxu0 0
  %7242 = vmatprep.subr.bf16.mxu0 0
  %7243 = vmatpush1.bf16.msra.mxu0 0
  %7244 = vmatprep.subr.bf16.mxu0 0
  %7245 = vmatpush1.bf16.msra.mxu0 0
  %7246 = vmatprep.subr.bf16.mxu0 0
  %7247 = vmatpush1.bf16.msra.mxu0 0
  %7248 = vmatprep.subr.bf16.mxu0 0
  %7249 = vmatpush1.bf16.msra.mxu0 0
  %7250 = vmatprep.subr.bf16.mxu0 0
  %7251 = vmatpush1.bf16.msra.mxu0 0
  %7252 = vmatprep.subr.bf16.mxu0 0
  %7253 = vmatpush1.bf16.msra.mxu0 0
  %7254 = vmatprep.subr.bf16.mxu0 0
  %7255 = vmatpush1.bf16.msra.mxu0 0
  %7256 = vmatprep.subr.bf16.mxu0 0
  %7257 = vmatpush1.bf16.msra.mxu0 0
  %7258 = vmatprep.subr.bf16.mxu0 0
  %7259 = vmatpush1.bf16.msra.mxu0 0
  %7260 = vmatprep.subr.bf16.mxu0 0
  %7261 = vmatpush1.bf16.msra.mxu0 0
  %7262 = vmatprep.subr.bf16.mxu0 0
  %7263 = vmatpush1.bf16.msra.mxu0 0
  %7264 = vmatprep.subr.bf16.mxu0 0
  %7265 = vmatpush1.bf16.msra.mxu0 0
  %7266 = vmatprep.subr.bf16.mxu0 0
  %7267 = vmatpush1.bf16.msra.mxu0 0
  %7268 = vmatprep.mubr.bf16.mxu0 0
  %7269 = vmatmul.mubr.bf16.gmra.mrb[0].mxu0 %v7231
  %v7270 = vpop.f32.mrb[0].mxu0
  %v7271 = vadd.f32 0.0, %v7270
  %v7272 = vpop.f32.mrb[0].mxu0
  %v7273 = vpop.f32.mrb[0].mxu0
  %v7274 = vadd.f32 0.0, %v7273
  %v7275 = vpop.f32.mrb[0].mxu0
  %7276 = vdwg.mxu0
  %v7277 = vadd.f32 %v7131, %v7271
  %v7278 = vadd.f32 %v7132, %v7274
  %v7279 = vld [vmem:[%s7] sm:$0xf]
  %v7281 = vunpack.c.l.b16 %v7279
  %v7282 = vpack.c.b16 %v7281, %v7281
  %7283 = vrot.lane.b32.xlu0 %v7282, 112
  %v7284 = vpop.permute.xlu0 %7283
  %v7286 = vsel %vm2841, %v7284, 0
  %7288 = vmatprep.subr.bf16.mxu0 0
  %7289 = vmatpush1.bf16.msra.mxu0 %v6968
  %7290 = vmatprep.subr.bf16.mxu0 0
  %7291 = vmatpush1.bf16.msra.mxu0 %v6969
  %7292 = vmatprep.subr.bf16.mxu0 0
  %7293 = vmatpush1.bf16.msra.mxu0 0
  %7294 = vmatprep.subr.bf16.mxu0 0
  %7295 = vmatpush1.bf16.msra.mxu0 0
  %7296 = vmatprep.subr.bf16.mxu0 0
  %7297 = vmatpush1.bf16.msra.mxu0 0
  %7298 = vmatprep.subr.bf16.mxu0 0
  %7299 = vmatpush1.bf16.msra.mxu0 0
  %7300 = vmatprep.subr.bf16.mxu0 0
  %7301 = vmatpush1.bf16.msra.mxu0 0
  %7302 = vmatprep.subr.bf16.mxu0 0
  %7303 = vmatpush1.bf16.msra.mxu0 0
  %7304 = vmatprep.subr.bf16.mxu0 0
  %7305 = vmatpush1.bf16.msra.mxu0 0
  %7306 = vmatprep.subr.bf16.mxu0 0
  %7307 = vmatpush1.bf16.msra.mxu0 0
  %7308 = vmatprep.subr.bf16.mxu0 0
  %7309 = vmatpush1.bf16.msra.mxu0 0
  %7310 = vmatprep.subr.bf16.mxu0 0
  %7311 = vmatpush1.bf16.msra.mxu0 0
  %7312 = vmatprep.subr.bf16.mxu0 0
  %7313 = vmatpush1.bf16.msra.mxu0 0
  %7314 = vmatprep.subr.bf16.mxu0 0
  %7315 = vmatpush1.bf16.msra.mxu0 0
  %7316 = vmatprep.subr.bf16.mxu0 0
  %7317 = vmatpush1.bf16.msra.mxu0 0
  %7318 = vmatprep.subr.bf16.mxu0 0
  %7319 = vmatpush1.bf16.msra.mxu0 0
  %7320 = vmatprep.mubr.bf16.mxu0 0
  %7321 = vmatmul.mubr.bf16.gmra.mrb[0].mxu0 %v7286
  %v7322 = vpop.f32.mrb[0].mxu0
  %v7323 = vadd.f32 0.0, %v7322
  %v7324 = vpop.f32.mrb[0].mxu0
  %v7325 = vpop.f32.mrb[0].mxu0
  %v7326 = vpop.f32.mrb[0].mxu0
  %7327 = vdwg.mxu0
  %v7328 = vadd.f32 %v6954, %v7323
  %7329 = vmatprep.subr.bf16.mxu0 0
  %7330 = vmatpush1.bf16.msra.mxu0 %v7021
  %7331 = vmatprep.subr.bf16.mxu0 0
  %7332 = vmatpush1.bf16.msra.mxu0 %v7022
  %7333 = vmatprep.subr.bf16.mxu0 0
  %7334 = vmatpush1.bf16.msra.mxu0 0
  %7335 = vmatprep.subr.bf16.mxu0 0
  %7336 = vmatpush1.bf16.msra.mxu0 0
  %7337 = vmatprep.subr.bf16.mxu0 0
  %7338 = vmatpush1.bf16.msra.mxu0 0
  %7339 = vmatprep.subr.bf16.mxu0 0
  %7340 = vmatpush1.bf16.msra.mxu0 0
  %7341 = vmatprep.subr.bf16.mxu0 0
  %7342 = vmatpush1.bf16.msra.mxu0 0
  %7343 = vmatprep.subr.bf16.mxu0 0
  %7344 = vmatpush1.bf16.msra.mxu0 0
  %7345 = vmatprep.subr.bf16.mxu0 0
  %7346 = vmatpush1.bf16.msra.mxu0 0
  %7347 = vmatprep.subr.bf16.mxu0 0
  %7348 = vmatpush1.bf16.msra.mxu0 0
  %7349 = vmatprep.subr.bf16.mxu0 0
  %7350 = vmatpush1.bf16.msra.mxu0 0
  %7351 = vmatprep.subr.bf16.mxu0 0
  %7352 = vmatpush1.bf16.msra.mxu0 0
  %7353 = vmatprep.subr.bf16.mxu0 0
  %7354 = vmatpush1.bf16.msra.mxu0 0
  %7355 = vmatprep.subr.bf16.mxu0 0
  %7356 = vmatpush1.bf16.msra.mxu0 0
  %7357 = vmatprep.subr.bf16.mxu0 0
  %7358 = vmatpush1.bf16.msra.mxu0 0
  %7359 = vmatprep.subr.bf16.mxu0 0
  %7360 = vmatpush1.bf16.msra.mxu0 0
  %7361 = vmatprep.mubr.bf16.mxu0 0
  %7362 = vmatmul.mubr.bf16.gmra.mrb[0].mxu0 %v6978
  %v7363 = vpop.f32.mrb[0].mxu0
  %v7364 = vadd.f32 0.0, %v7363
  %v7365 = vpop.f32.mrb[0].mxu0
  %v7366 = vpop.f32.mrb[0].mxu0
  %v7367 = vpop.f32.mrb[0].mxu0
  %7368 = vdwg.mxu0
  %v7369 = vadd.f32 %v7328, %v7364
  %s7370 = scalar_lea.vmem %s9, 16
  %v7371 = vld [vmem:[%s7370] sm:$0xf]
  %v7372 = vld [vmem:[%s7370 + $0x4] sm:$0x1]
  %v7373 = vpack.c.bf16 %v7369, %v7369
  %v7376 = vunpack.c.l.b16 %v7371
  %v7377 = vunpack.c.l.b16 %v7372
  %v7378 = vpack.c.b16 %v7377, %v7376
  %v7380 = vsel %vm7082, %v7378, 0
  %v7383 = vsel %vm7086, %v7373, 0
  %7385 = vmatprep.subr.bf16.mxu0 0
  %7386 = vmatpush1.bf16.msra.mxu0 %v7383
  %7387 = vmatprep.subr.bf16.mxu0 0
  %7388 = vmatpush1.bf16.msra.mxu0 0
  %7389 = vmatprep.subr.bf16.mxu0 0
  %7390 = vmatpush1.bf16.msra.mxu0 0
  %7391 = vmatprep.subr.bf16.mxu0 0
  %7392 = vmatpush1.bf16.msra.mxu0 0
  %7393 = vmatprep.subr.bf16.mxu0 0
  %7394 = vmatpush1.bf16.msra.mxu0 0
  %7395 = vmatprep.subr.bf16.mxu0 0
  %7396 = vmatpush1.bf16.msra.mxu0 0
  %7397 = vmatprep.subr.bf16.mxu0 0
  %7398 = vmatpush1.bf16.msra.mxu0 0
  %7399 = vmatprep.subr.bf16.mxu0 0
  %7400 = vmatpush1.bf16.msra.mxu0 0
  %7401 = vmatprep.subr.bf16.mxu0 0
  %7402 = vmatpush1.bf16.msra.mxu0 0
  %7403 = vmatprep.subr.bf16.mxu0 0
  %7404 = vmatpush1.bf16.msra.mxu0 0
  %7405 = vmatprep.subr.bf16.mxu0 0
  %7406 = vmatpush1.bf16.msra.mxu0 0
  %7407 = vmatprep.subr.bf16.mxu0 0
  %7408 = vmatpush1.bf16.msra.mxu0 0
  %7409 = vmatprep.subr.bf16.mxu0 0
  %7410 = vmatpush1.bf16.msra.mxu0 0
  %7411 = vmatprep.subr.bf16.mxu0 0
  %7412 = vmatpush1.bf16.msra.mxu0 0
  %7413 = vmatprep.subr.bf16.mxu0 0
  %7414 = vmatpush1.bf16.msra.mxu0 0
  %7415 = vmatprep.subr.bf16.mxu0 0
  %7416 = vmatpush1.bf16.msra.mxu0 0
  %7417 = vmatprep.mubr.bf16.mxu0 0
  %7418 = vmatmul.mubr.bf16.gmra.mrb[0].mxu0 %v7380
  %v7419 = vpop.f32.mrb[0].mxu0
  %v7420 = vadd.f32 0.0, %v7419
  %v7421 = vpop.f32.mrb[0].mxu0
  %v7422 = vpop.f32.mrb[0].mxu0
  %v7423 = vadd.f32 0.0, %v7422
  %v7424 = vpop.f32.mrb[0].mxu0
  %7425 = vdwg.mxu0
  %v7426 = vadd.f32 %v7277, %v7420
  %v7427 = vadd.f32 %v7278, %v7423
  %v7429 = vsel %vm2841, %v7279, 0
  %7431 = vmatprep.subr.bf16.mxu0 0
  %7432 = vmatpush1.bf16.msra.mxu0 %v6968
  %7433 = vmatprep.subr.bf16.mxu0 0
  %7434 = vmatpush1.bf16.msra.mxu0 %v6969
  %7435 = vmatprep.subr.bf16.mxu0 0
  %7436 = vmatpush1.bf16.msra.mxu0 0
  %7437 = vmatprep.subr.bf16.mxu0 0
  %7438 = vmatpush1.bf16.msra.mxu0 0
  %7439 = vmatprep.subr.bf16.mxu0 0
  %7440 = vmatpush1.bf16.msra.mxu0 0
  %7441 = vmatprep.subr.bf16.mxu0 0
  %7442 = vmatpush1.bf16.msra.mxu0 0
  %7443 = vmatprep.subr.bf16.mxu0 0
  %7444 = vmatpush1.bf16.msra.mxu0 0
  %7445 = vmatprep.subr.bf16.mxu0 0
  %7446 = vmatpush1.bf16.msra.mxu0 0
  %7447 = vmatprep.subr.bf16.mxu0 0
  %7448 = vmatpush1.bf16.msra.mxu0 0
  %7449 = vmatprep.subr.bf16.mxu0 0
  %7450 = vmatpush1.bf16.msra.mxu0 0
  %7451 = vmatprep.subr.bf16.mxu0 0
  %7452 = vmatpush1.bf16.msra.mxu0 0
  %7453 = vmatprep.subr.bf16.mxu0 0
  %7454 = vmatpush1.bf16.msra.mxu0 0
  %7455 = vmatprep.subr.bf16.mxu0 0
  %7456 = vmatpush1.bf16.msra.mxu0 0
  %7457 = vmatprep.subr.bf16.mxu0 0
  %7458 = vmatpush1.bf16.msra.mxu0 0
  %7459 = vmatprep.subr.bf16.mxu0 0
  %7460 = vmatpush1.bf16.msra.mxu0 0
  %7461 = vmatprep.subr.bf16.mxu0 0
  %7462 = vmatpush1.bf16.msra.mxu0 0
  %7463 = vmatprep.mubr.bf16.mxu0 0
  %7464 = vmatmul.mubr.bf16.gmra.mrb[0].mxu0 %v7429
  %v7465 = vpop.f32.mrb[0].mxu0
  %v7466 = vadd.f32 0.0, %v7465
  %v7467 = vpop.f32.mrb[0].mxu0
  %v7468 = vpop.f32.mrb[0].mxu0
  %v7469 = vpop.f32.mrb[0].mxu0
  %7470 = vdwg.mxu0
  %v7471 = vadd.f32 %v6954, %v7466
  %7472 = vmatprep.subr.bf16.mxu0 0
  %7473 = vmatpush1.bf16.msra.mxu0 %v7021
  %7474 = vmatprep.subr.bf16.mxu0 0
  %7475 = vmatpush1.bf16.msra.mxu0 %v7022
  %7476 = vmatprep.subr.bf16.mxu0 0
  %7477 = vmatpush1.bf16.msra.mxu0 0
  %7478 = vmatprep.subr.bf16.mxu0 0
  %7479 = vmatpush1.bf16.msra.mxu0 0
  %7480 = vmatprep.subr.bf16.mxu0 0
  %7481 = vmatpush1.bf16.msra.mxu0 0
  %7482 = vmatprep.subr.bf16.mxu0 0
  %7483 = vmatpush1.bf16.msra.mxu0 0
  %7484 = vmatprep.subr.bf16.mxu0 0
  %7485 = vmatpush1.bf16.msra.mxu0 0
  %7486 = vmatprep.subr.bf16.mxu0 0
  %7487 = vmatpush1.bf16.msra.mxu0 0
  %7488 = vmatprep.subr.bf16.mxu0 0
  %7489 = vmatpush1.bf16.msra.mxu0 0
  %7490 = vmatprep.subr.bf16.mxu0 0
  %7491 = vmatpush1.bf16.msra.mxu0 0
  %7492 = vmatprep.subr.bf16.mxu0 0
  %7493 = vmatpush1.bf16.msra.mxu0 0
  %7494 = vmatprep.subr.bf16.mxu0 0
  %7495 = vmatpush1.bf16.msra.mxu0 0
  %7496 = vmatprep.subr.bf16.mxu0 0
  %7497 = vmatpush1.bf16.msra.mxu0 0
  %7498 = vmatprep.subr.bf16.mxu0 0
  %7499 = vmatpush1.bf16.msra.mxu0 0
  %7500 = vmatprep.subr.bf16.mxu0 0
  %7501 = vmatpush1.bf16.msra.mxu0 0
  %7502 = vmatprep.subr.bf16.mxu0 0
  %7503 = vmatpush1.bf16.msra.mxu0 0
  %7504 = vmatprep.mubr.bf16.mxu0 0
  %7505 = vmatmul.mubr.bf16.gmra.mrb[0].mxu0 %v7134
  %v7506 = vpop.f32.mrb[0].mxu0
  %v7507 = vadd.f32 0.0, %v7506
  %v7508 = vpop.f32.mrb[0].mxu0
  %v7509 = vpop.f32.mrb[0].mxu0
  %v7510 = vpop.f32.mrb[0].mxu0
  %7511 = vdwg.mxu0
  %v7512 = vadd.f32 %v7471, %v7507
  %s7513 = scalar_lea.vmem %s9, 24
  %v7514 = vld [vmem:[%s7513] sm:$0xf]
  %v7515 = vld [vmem:[%s7513 + $0x4] sm:$0x1]
  %v7516 = vpack.c.bf16 %v7512, %v7512
  %v7519 = vunpack.c.l.b16 %v7514
  %v7520 = vunpack.c.l.b16 %v7515
  %v7521 = vpack.c.b16 %v7520, %v7519
  %v7523 = vsel %vm7082, %v7521, 0
  %v7526 = vsel %vm7086, %v7516, 0
  %7528 = vmatprep.subr.bf16.mxu0 0
  %7529 = vmatpush1.bf16.msra.mxu0 %v7526
  %7530 = vmatprep.subr.bf16.mxu0 0
  %7531 = vmatpush1.bf16.msra.mxu0 0
  %7532 = vmatprep.subr.bf16.mxu0 0
  %7533 = vmatpush1.bf16.msra.mxu0 0
  %7534 = vmatprep.subr.bf16.mxu0 0
  %7535 = vmatpush1.bf16.msra.mxu0 0
  %7536 = vmatprep.subr.bf16.mxu0 0
  %7537 = vmatpush1.bf16.msra.mxu0 0
  %7538 = vmatprep.subr.bf16.mxu0 0
  %7539 = vmatpush1.bf16.msra.mxu0 0
  %7540 = vmatprep.subr.bf16.mxu0 0
  %7541 = vmatpush1.bf16.msra.mxu0 0
  %7542 = vmatprep.subr.bf16.mxu0 0
  %7543 = vmatpush1.bf16.msra.mxu0 0
  %7544 = vmatprep.subr.bf16.mxu0 0
  %7545 = vmatpush1.bf16.msra.mxu0 0
  %7546 = vmatprep.subr.bf16.mxu0 0
  %7547 = vmatpush1.bf16.msra.mxu0 0
  %7548 = vmatprep.subr.bf16.mxu0 0
  %7549 = vmatpush1.bf16.msra.mxu0 0
  %7550 = vmatprep.subr.bf16.mxu0 0
  %7551 = vmatpush1.bf16.msra.mxu0 0
  %7552 = vmatprep.subr.bf16.mxu0 0
  %7553 = vmatpush1.bf16.msra.mxu0 0
  %7554 = vmatprep.subr.bf16.mxu0 0
  %7555 = vmatpush1.bf16.msra.mxu0 0
  %7556 = vmatprep.subr.bf16.mxu0 0
  %7557 = vmatpush1.bf16.msra.mxu0 0
  %7558 = vmatprep.subr.bf16.mxu0 0
  %7559 = vmatpush1.bf16.msra.mxu0 0
  %7560 = vmatprep.mubr.bf16.mxu0 0
  %7561 = vmatmul.mubr.bf16.gmra.mrb[0].mxu0 %v7523
  %v7562 = vpop.f32.mrb[0].mxu0
  %v7563 = vadd.f32 0.0, %v7562
  %v7564 = vpop.f32.mrb[0].mxu0
  %v7565 = vpop.f32.mrb[0].mxu0
  %v7566 = vadd.f32 0.0, %v7565
  %v7567 = vpop.f32.mrb[0].mxu0
  %7568 = vdwg.mxu0
  %v7569 = vadd.f32 %v7426, %v7563
  %v7570 = vadd.f32 %v7427, %v7566
  %7571 = vst [vmem:[%s11] sm:$0xff] %v7569
  %7572 = vst [vmem:[%s11 + $0x8] sm:$0x3] %v7570
  // Predicated region
  $region46: #{digit_forward.1} parent=0 // pred_check
    _
  $region47: #{digit_forward.1} parent=0 // pred_check_branch
    %7574 = sbr.rel (0) target = $region49
  $region48: #{digit_forward.1} parent=0 // pred_region
    _
  $region49: #{digit_forward.1} parent=0 // pred_fallthru
    _
  // Predicated region
  $region50: #{digit_forward.1} parent=0 // pred_check
    _
  $region51: #{digit_forward.1} parent=0 // pred_check_branch
    %7576 = sbr.rel (0) target = $region53
  $region52: #{digit_forward.1} parent=0 // pred_region
    _
  $region53: #{digit_forward.1} parent=0 // pred_fallthru
    _

</llo_original>
